<compile_context>
chip_gen: v7x
topology: tpu7x:2x2x1
jax: 0.10.0
libtpu: 0.0.40
codegen_flags: <defaults>
</compile_context>

<pallas_src>
import math
import functools

import jax
import jax.numpy as jnp
import numpy as np
from jax.experimental import pallas as pl
from jax.experimental.pallas import tpu as pltpu


def _attn_kernel(q_ref, key_ref, val_ref,
                 wk_ref, bk_ref, wv_ref, bv_ref, wo_ref, bo_ref,
                 out_ref, *, h, d_k, block_m, kv_len, softmax_approx):
    """One grid step == `block_m` key-contexts.

    Shapes inside the kernel:
      q_ref   : (h*block_m, n, d_k)   pre-projected query, broadcast over contexts
      key_ref : (block_m*K, d_model)  raw key rows (flattened in the wrapper)
      val_ref : (block_m*K, d_model)  raw value rows
      w*_ref  : (d_model, d_model)    (in, out) layout, compute dtype
      b*_ref  : (1, d_model)          float32
      out_ref : (n, block_m*d_model)  lane-dense output slab
    """
    f32 = jnp.float32
    d_model = h * d_k
    n = q_ref.shape[1]
    cdt = wk_ref.dtype                          # MXU operand dtype (f32 or bf16)
    inv_sqrt_dk = 1.0 / math.sqrt(d_k)

    # ---- fused K / V projections over the whole block (one MXU matmul each) ----
    kf = key_ref[...].astype(cdt)               # (rows, d_model)
    vf = val_ref[...].astype(cdt)
    k2 = jnp.dot(kf, wk_ref[...], preferred_element_type=f32) + bk_ref[...]
    v2 = jnp.dot(vf, wv_ref[...], preferred_element_type=f32) + bv_ref[...]

    # ---- head split (layout ops stay in f32): (rows, h*d_k) -> (h*block_m, K, d_k)
    k3 = k2.reshape(block_m, kv_len, d_model)
    v3 = v2.reshape(block_m, kv_len, d_model)
    kh = jnp.stack([k3[:, :, i * d_k:(i + 1) * d_k] for i in range(h)], axis=0)
    vh = jnp.stack([v3[:, :, i * d_k:(i + 1) * d_k] for i in range(h)], axis=0)
    kh = kh.reshape(h * block_m, kv_len, d_k)   # batch b = head*block_m + ctx
    vh = vh.reshape(h * block_m, kv_len, d_k)

    # ---- fully batched attention: ONE einsum pair over batch = heads*contexts ----
    q = q_ref[...]                              # (h*block_m, n, d_k), compute dtype
    s = jnp.einsum('bnd,bkd->bnk', q, kh.astype(cdt),
                   preferred_element_type=f32) * inv_sqrt_dk
    s = s - jnp.max(s, axis=-1, keepdims=True)
    e = jnp.exp(s)
    denom = jnp.sum(e, axis=-1, keepdims=True)
    if softmax_approx:
        p = e * pl.reciprocal(denom, approx=True)   # EUP slot, ~2^-12 rel. error
    else:
        p = e / denom
    # TODO(synk): nn.Dropout(p=0.1) on p_attn is identity in eval mode; training
    # mode stochastic dropout is not implemented here.
    ctx = jnp.einsum('bnk,bkd->bnd', p.astype(cdt), vh.astype(cdt),
                     preferred_element_type=f32)     # (h*block_m, n, d_k), f32

    # ---- head merge + ONE big output projection for the whole block ----
    ctx_tn = jnp.concatenate(
        [ctx[i * block_m:(i + 1) * block_m] for i in range(h)],
        axis=-1)                                     # (block_m, n, d_model)
    x = ctx_tn.reshape(block_m * n, d_model).astype(cdt)
    o = jnp.dot(x, wo_ref[...], preferred_element_type=f32) + bo_ref[...]

    # ---- reorder (context-major rows -> n-major lanes) and ONE dense slab store ----
    slab = jnp.concatenate([o[t * n:(t + 1) * n, :] for t in range(block_m)],
                           axis=-1)                  # (n, block_m*d_model)
    out_ref[...] = slab.astype(out_ref.dtype)


def _vmem_capacity_bytes():
    """Per-TensorCore VMEM capacity; defaults to 64 MiB (v7x) if unknown."""
    try:
        info = pltpu.get_tpu_info()
        cap = getattr(info, "vmem_capacity_bytes", None)
        if cap:
            return int(cap)
    except Exception:
        pass
    return 64 * 1024 * 1024


def _footprint_bytes(block_m, *, n, kv_len, d_model, h, cdt_bytes, out_bytes):
    """Rough per-step VMEM footprint estimate for a given block_m."""
    rows = block_m * kv_len
    d_k = d_model // h
    B = h * block_m
    kv_stream = 2 * 2 * rows * d_model * cdt_bytes        # key+value, double-buffered
    q_resident = B * n * d_k * cdt_bytes                  # broadcast q (single buffer)
    weights = 3 * d_model * d_model * cdt_bytes + 3 * d_model * 4
    out_blk = 2 * n * block_m * d_model * out_bytes
    inter = 4 * (2 * rows * d_model                       # k2, v2 (f32)
                 + 2 * B * kv_len * d_k                   # kh, vh
                 + 2 * B * n * kv_len                     # s, p
                 + B * n * d_k                            # ctx
                 + 2 * block_m * n * d_model)             # ctx_tn / o
    return kv_stream + q_resident + weights + out_blk + inter


def _pick_block_m(m, *, n, kv_len, d_model, h, cdt_bytes, out_bytes, vmem_budget):
    """Contexts per grid step: keep the output block lane-dense (mult. of 128
    lanes or the full array), fit the VMEM budget, prefer >=2 grid steps
    (v7x has 2 TensorCores), then the largest block."""
    cands = [bm for bm in range(1, m + 1) if m % bm == 0]

    def score(bm):
        conforming = ((bm * d_model) % 128 == 0) or (bm == m)
        fits = _footprint_bytes(bm, n=n, kv_len=kv_len, d_model=d_model, h=h,
                                cdt_bytes=cdt_bytes,
                                out_bytes=out_bytes) <= vmem_budget
        multi_step = (m // bm) >= 2 or m == 1
        return (conforming, fits, multi_step, bm)

    return max(cands, key=score)


def temp_ctx_attention(query, key, value, params, *, h,
                       compute_dtype=jnp.bfloat16, out_dtype=jnp.float32,
                       block_m=None, softmax_approx=True, interpret=False):
    """query: (n, d_model), key/value: (m, K, d_model) -> (n, m, d_model)."""
    n, d_model = query.shape
    m, K, _ = key.shape
    assert d_model % h == 0
    d_k = d_model // h
    wq, bq, wk, bk, wv, bv, wo, bo = params

    cdt_bytes = jnp.dtype(compute_dtype).itemsize
    out_bytes = jnp.dtype(out_dtype).itemsize
    vmem_cap = _vmem_capacity_bytes()
    if block_m is None:
        block_m = _pick_block_m(m, n=n, kv_len=K, d_model=d_model, h=h,
                                cdt_bytes=cdt_bytes, out_bytes=out_bytes,
                                vmem_budget=vmem_cap // 2)
    assert m % block_m == 0
    rows = block_m * K

    # Hoisted, grid-invariant query projection (plain XLA matmul), head-major
    # and pre-broadcast over the block_m contexts of a grid step.
    q3 = (query @ wq + bq).reshape(n, h, d_k).transpose(1, 0, 2)     # (h, n, d_k)
    qb = jnp.broadcast_to(q3[:, None], (h, block_m, n, d_k))
    qb = qb.reshape(h * block_m, n, d_k).astype(compute_dtype)

    # Stream key/value in the compute dtype (halves DMA bytes for bf16) and
    # pre-flattened so the kernel needs no load-time reshape.
    key2 = key.reshape(m * K, d_model).astype(compute_dtype)
    val2 = value.reshape(m * K, d_model).astype(compute_dtype)

    wk_c, wv_c, wo_c = (w.astype(compute_dtype) for w in (wk, wv, wo))
    bk2, bv2, bo2 = (b.reshape(1, d_model).astype(jnp.float32)
                     for b in (bk, bv, bo))

    kernel = functools.partial(_attn_kernel, h=h, d_k=d_k, block_m=block_m,
                               kv_len=K, softmax_approx=softmax_approx)

    est = _footprint_bytes(block_m, n=n, kv_len=K, d_model=d_model, h=h,
                           cdt_bytes=cdt_bytes, out_bytes=out_bytes)
    vmem_limit = int(min(vmem_cap - 8 * 2**20, max(32 * 2**20, 2 * est)))

    def build_and_run(single_buffer_resident):
        # Grid-invariant blocks (q, weights, biases) are DMA'd once; Buffered(1)
        # stops them from being double-buffered (VMEM savings, esp. on v7x).
        res = dict(pipeline_mode=pl.Buffered(1)) if single_buffer_resident else {}
        wspec = pl.BlockSpec((d_model, d_model), lambda mi: (0, 0), **res)
        bspec = pl.BlockSpec((1, d_model), lambda mi: (0, 0), **res)
        qspec = pl.BlockSpec((h * block_m, n, d_k), lambda mi: (0, 0, 0), **res)
        return pl.pallas_call(
            kernel,
            out_shape=jax.ShapeDtypeStruct((n, m * d_model), out_dtype),
            grid=(m // block_m,),
            in_specs=[
                qspec,                                                 # q (projected, broadcast)
                pl.BlockSpec((rows, d_model), lambda mi: (mi, 0)),     # key rows
                pl.BlockSpec((rows, d_model), lambda mi: (mi, 0)),     # value rows
                wspec, bspec,   # Wk, bk
                wspec, bspec,   # Wv, bv
                wspec, bspec,   # Wo, bo
            ],
            out_specs=pl.BlockSpec((n, block_m * d_model), lambda mi: (0, mi)),
            compiler_params=pltpu.CompilerParams(
                dimension_semantics=("parallel",),
                vmem_limit_bytes=vmem_limit),
            interpret=interpret,
        )(qb, key2, val2, wk_c, bk2, wv_c, bv2, wo_c, bo2)

    try:
        out_flat = build_and_run(True)
    except Exception:
        # pipeline_mode=pl.Buffered(1) is only a residency hint; fall back to
        # default double-buffering if this JAX/Mosaic build rejects it.
        out_flat = build_and_run(False)

    # (n, m*d_model) -> (n, m, d_model): pure row-major reshape, no transpose.
    return out_flat.reshape(n, m, d_model)


def init_params(rng, d_model):
    """Deterministic Linear(d_model, d_model) x 4 init (PyTorch-style uniform).

    Weights are stored already transposed to (in, out) so kernels do x @ W.
    """
    ks = jax.random.split(rng, 8)
    bound = 1.0 / math.sqrt(d_model)

    def lin(kw, kb):
        W = jax.random.uniform(kw, (d_model, d_model), jnp.float32, -bound, bound)
        b = jax.random.uniform(kb, (d_model,), jnp.float32, -bound, bound)
        return W, b

    wq, bq = lin(ks[0], ks[1])
    wk, bk = lin(ks[2], ks[3])
    wv, bv = lin(ks[4], ks[5])
    wo, bo = lin(ks[6], ks[7])
    return (wq, bq, wk, bk, wv, bv, wo, bo)


def ref_forward(query, key, value, params, *, h):
    """Plain-JAX reference matching the PyTorch forward (eval mode)."""
    wq, bq, wk, bk, wv, bv, wo, bo = params
    n, d_model = query.shape
    m, K, _ = key.shape
    d_k = d_model // h
    q = (query @ wq + bq).reshape(n, h, d_k)
    kp = (key @ wk + bk).reshape(m, K, h, d_k).transpose(0, 2, 1, 3)    # (m,h,K,d_k)
    vp = (value @ wv + bv).reshape(m, K, h, d_k).transpose(0, 2, 1, 3)  # (m,h,K,d_k)
    scores = jnp.einsum('nhd,mhkd->nmhk', q, kp) / math.sqrt(d_k)
    p = jax.nn.softmax(scores, axis=-1)
    ctx = jnp.einsum('nmhk,mhkd->nmhd', p, vp)
    x = ctx.reshape(n, m, h * d_k)
    return x @ wo + bo


if __name__ == "__main__":
    h, d_model = 4, 32
    n, m, K = 8, 4, 8

    root = jax.random.PRNGKey(0)
    kq, kk, kv, kp = jax.random.split(root, 4)
    query = jax.random.normal(kq, (n, d_model), jnp.float32)
    key_in = jax.random.normal(kk, (m, K, d_model), jnp.float32)
    value = jax.random.normal(kv, (m, K, d_model), jnp.float32)
    params = init_params(kp, d_model)

    ref = ref_forward(query, key_in, value, params, h=h)

    # float32 MXU operands + exact softmax reciprocal (parity check).
    out_f32 = jax.block_until_ready(
        temp_ctx_attention(query, key_in, value, params, h=h,
                           compute_dtype=jnp.float32, softmax_approx=False))
    assert out_f32.shape == (n, m, d_model), out_f32.shape
    np.testing.assert_allclose(np.asarray(out_f32), np.asarray(ref),
                               atol=1e-2, rtol=1e-2)

    # bfloat16 MXU operands (default, halves DMA) with f32 accumulation and the
    # approximate (EUP) softmax reciprocal: accuracy/perf trade-off.
    out_bf16 = jax.block_until_ready(
        temp_ctx_attention(query, key_in, value, params, h=h,
                           compute_dtype=jnp.bfloat16, softmax_approx=True))
    np.testing.assert_allclose(np.asarray(out_bf16), np.asarray(ref),
                               atol=8e-2, rtol=8e-2)

    print("KERNEL_OK")
</pallas_src>

<mosaic_0001>
module attributes {stable_mosaic.version = 11 : i64} {
  func.func @_attn_kernel(%arg0: i32, %arg1: memref<16x8x8xf32, #tpu.memory_space<vmem>>, %arg2: memref<32x32xf32, #tpu.memory_space<vmem>>, %arg3: memref<32x32xf32, #tpu.memory_space<vmem>>, %arg4: memref<32x32xf32, #tpu.memory_space<vmem>>, %arg5: memref<1x32xf32, #tpu.memory_space<vmem>>, %arg6: memref<32x32xf32, #tpu.memory_space<vmem>>, %arg7: memref<1x32xf32, #tpu.memory_space<vmem>>, %arg8: memref<32x32xf32, #tpu.memory_space<vmem>>, %arg9: memref<1x32xf32, #tpu.memory_space<vmem>>, %arg10: memref<8x128xf32, #tpu.memory_space<vmem>>) attributes {dimension_semantics = [#tpu.dimension_semantics<parallel>], iteration_bounds = array<i64: 1>, scalar_prefetch = 0 : i64, scratch_operands = 0 : i64, tpu.core_type = #tpu.core_type<tc>, window_params = [{pipeline_mode = #tpu.pipeline_mode<synchronous>, transform_indices = @transform_0, window_bounds = array<i64: 16, 8, 8>}, {transform_indices = @transform_1, window_bounds = array<i64: 32, 32>}, {transform_indices = @transform_2, window_bounds = array<i64: 32, 32>}, {pipeline_mode = #tpu.pipeline_mode<synchronous>, transform_indices = @transform_3, window_bounds = array<i64: 32, 32>}, {pipeline_mode = #tpu.pipeline_mode<synchronous>, transform_indices = @transform_4, window_bounds = array<i64: 1, 32>}, {pipeline_mode = #tpu.pipeline_mode<synchronous>, transform_indices = @transform_5, window_bounds = array<i64: 32, 32>}, {pipeline_mode = #tpu.pipeline_mode<synchronous>, transform_indices = @transform_6, window_bounds = array<i64: 1, 32>}, {pipeline_mode = #tpu.pipeline_mode<synchronous>, transform_indices = @transform_7, window_bounds = array<i64: 32, 32>}, {pipeline_mode = #tpu.pipeline_mode<synchronous>, transform_indices = @transform_8, window_bounds = array<i64: 1, 32>}, {transform_indices = @transform_9, window_bounds = array<i64: 8, 128>}]} {
    %c0 = arith.constant 0 : index
    %c0_0 = arith.constant 0 : index
    %0 = vector.load %arg2[%c0, %c0_0] : memref<32x32xf32, #tpu.memory_space<vmem>>, vector<32x32xf32>
    %c0_1 = arith.constant 0 : index
    %c0_2 = arith.constant 0 : index
    %1 = vector.load %arg3[%c0_1, %c0_2] : memref<32x32xf32, #tpu.memory_space<vmem>>, vector<32x32xf32>
    %c0_3 = arith.constant 0 : index
    %c0_4 = arith.constant 0 : index
    %2 = vector.load %arg4[%c0_3, %c0_4] : memref<32x32xf32, #tpu.memory_space<vmem>>, vector<32x32xf32>
    %cst = arith.constant dense<0.000000e+00> : vector<32x32xf32>
    %3 = tpu.matmul %0, %2, %cst {dimension_numbers = #tpu.dot_dimension_numbers<[1], [0], [0], [1], [0, 0, 1, 1], [], []>} : vector<32x32xf32>, vector<32x32xf32>, vector<32x32xf32> -> vector<32x32xf32>
    %c0_5 = arith.constant 0 : index
    %c0_6 = arith.constant 0 : index
    %4 = vector.load %arg5[%c0_5, %c0_6] : memref<1x32xf32, #tpu.memory_space<vmem>>, vector<1x32xf32>
    %5 = vector.broadcast %4 : vector<1x32xf32> to vector<32x32xf32>
    %6 = arith.addf %3, %5 : vector<32x32xf32>
    %c0_7 = arith.constant 0 : index
    %c0_8 = arith.constant 0 : index
    %7 = vector.load %arg6[%c0_7, %c0_8] : memref<32x32xf32, #tpu.memory_space<vmem>>, vector<32x32xf32>
    %cst_9 = arith.constant dense<0.000000e+00> : vector<32x32xf32>
    %8 = tpu.matmul %1, %7, %cst_9 {dimension_numbers = #tpu.dot_dimension_numbers<[1], [0], [0], [1], [0, 0, 1, 1], [], []>} : vector<32x32xf32>, vector<32x32xf32>, vector<32x32xf32> -> vector<32x32xf32>
    %c0_10 = arith.constant 0 : index
    %c0_11 = arith.constant 0 : index
    %9 = vector.load %arg7[%c0_10, %c0_11] : memref<1x32xf32, #tpu.memory_space<vmem>>, vector<1x32xf32>
    %10 = vector.broadcast %9 : vector<1x32xf32> to vector<32x32xf32>
    %11 = arith.addf %8, %10 : vector<32x32xf32>
    %12 = vector.shape_cast %6 : vector<32x32xf32> to vector<4x8x32xf32>
    %13 = vector.shape_cast %11 : vector<32x32xf32> to vector<4x8x32xf32>
    %14 = vector.extract_strided_slice %12 {offsets = [0, 0, 0], sizes = [4, 8, 8], strides = [1, 1, 1]} : vector<4x8x32xf32> to vector<4x8x8xf32>
    %15 = vector.extract_strided_slice %12 {offsets = [0, 0, 8], sizes = [4, 8, 8], strides = [1, 1, 1]} : vector<4x8x32xf32> to vector<4x8x8xf32>
    %16 = vector.extract_strided_slice %12 {offsets = [0, 0, 16], sizes = [4, 8, 8], strides = [1, 1, 1]} : vector<4x8x32xf32> to vector<4x8x8xf32>
    %17 = vector.extract_strided_slice %12 {offsets = [0, 0, 24], sizes = [4, 8, 8], strides = [1, 1, 1]} : vector<4x8x32xf32> to vector<4x8x8xf32>
    %18 = vector.shape_cast %14 : vector<4x8x8xf32> to vector<1x4x8x8xf32>
    %19 = vector.shape_cast %15 : vector<4x8x8xf32> to vector<1x4x8x8xf32>
    %20 = vector.shape_cast %16 : vector<4x8x8xf32> to vector<1x4x8x8xf32>
    %21 = vector.shape_cast %17 : vector<4x8x8xf32> to vector<1x4x8x8xf32>
    %22 = tpu.concatenate %18, %19, %20, %21 in 0 : vector<1x4x8x8xf32>, vector<1x4x8x8xf32>, vector<1x4x8x8xf32>, vector<1x4x8x8xf32> -> vector<4x4x8x8xf32>
    %23 = vector.extract_strided_slice %13 {offsets = [0, 0, 0], sizes = [4, 8, 8], strides = [1, 1, 1]} : vector<4x8x32xf32> to vector<4x8x8xf32>
    %24 = vector.extract_strided_slice %13 {offsets = [0, 0, 8], sizes = [4, 8, 8], strides = [1, 1, 1]} : vector<4x8x32xf32> to vector<4x8x8xf32>
    %25 = vector.extract_strided_slice %13 {offsets = [0, 0, 16], sizes = [4, 8, 8], strides = [1, 1, 1]} : vector<4x8x32xf32> to vector<4x8x8xf32>
    %26 = vector.extract_strided_slice %13 {offsets = [0, 0, 24], sizes = [4, 8, 8], strides = [1, 1, 1]} : vector<4x8x32xf32> to vector<4x8x8xf32>
    %27 = vector.shape_cast %23 : vector<4x8x8xf32> to vector<1x4x8x8xf32>
    %28 = vector.shape_cast %24 : vector<4x8x8xf32> to vector<1x4x8x8xf32>
    %29 = vector.shape_cast %25 : vector<4x8x8xf32> to vector<1x4x8x8xf32>
    %30 = vector.shape_cast %26 : vector<4x8x8xf32> to vector<1x4x8x8xf32>
    %31 = tpu.concatenate %27, %28, %29, %30 in 0 : vector<1x4x8x8xf32>, vector<1x4x8x8xf32>, vector<1x4x8x8xf32>, vector<1x4x8x8xf32> -> vector<4x4x8x8xf32>
    %32 = vector.shape_cast %22 : vector<4x4x8x8xf32> to vector<16x8x8xf32>
    %33 = vector.shape_cast %31 : vector<4x4x8x8xf32> to vector<16x8x8xf32>
    %c0_12 = arith.constant 0 : index
    %c0_13 = arith.constant 0 : index
    %c0_14 = arith.constant 0 : index
    %34 = vector.load %arg1[%c0_12, %c0_13, %c0_14] : memref<16x8x8xf32, #tpu.memory_space<vmem>>, vector<16x8x8xf32>
    "tpu.trace_start"() <{level = 10 : i32, message = "bnd,bkd->bnk"}> : () -> ()
    %cst_15 = arith.constant dense<0.000000e+00> : vector<16x8x8xf32>
    %35 = tpu.matmul %34, %32, %cst_15 {dimension_numbers = #tpu.dot_dimension_numbers<[2], [2], [1], [1], [0, 0, 0, 1, 1, 1], [0], [0]>} : vector<16x8x8xf32>, vector<16x8x8xf32>, vector<16x8x8xf32> -> vector<16x8x8xf32>
    "tpu.trace_stop"() : () -> ()
    %cst_16 = arith.constant 0.353553385 : f32
    %36 = vector.broadcast %cst_16 : f32 to vector<16x8x8xf32>
    %37 = arith.mulf %35, %36 : vector<16x8x8xf32>
    %cst_17 = arith.constant dense<0xFF800000> : vector<16x8xf32>
    %38 = vector.multi_reduction <maximumf>, %37, %cst_17 [2] : vector<16x8x8xf32> to vector<16x8xf32>
    %39 = vector.shape_cast %38 : vector<16x8xf32> to vector<16x8x1xf32>
    %40 = vector.broadcast %39 : vector<16x8x1xf32> to vector<16x8x8xf32>
    %41 = arith.subf %37, %40 : vector<16x8x8xf32>
    %42 = math.exp %41 : vector<16x8x8xf32>
    %cst_18 = arith.constant dense<0.000000e+00> : vector<16x8xf32>
    %43 = vector.multi_reduction <add>, %42, %cst_18 [2] : vector<16x8x8xf32> to vector<16x8xf32>
    %44 = vector.shape_cast %43 : vector<16x8xf32> to vector<16x8x1xf32>
    %45 = vector.broadcast %44 : vector<16x8x1xf32> to vector<16x8x8xf32>
    %46 = arith.divf %42, %45 : vector<16x8x8xf32>
    "tpu.trace_start"() <{level = 10 : i32, message = "bnk,bkd->bnd"}> : () -> ()
    %cst_19 = arith.constant dense<0.000000e+00> : vector<16x8x8xf32>
    %47 = tpu.matmul %46, %33, %cst_19 {dimension_numbers = #tpu.dot_dimension_numbers<[2], [1], [1], [2], [0, 0, 0, 1, 1, 2], [0], [0]>} : vector<16x8x8xf32>, vector<16x8x8xf32>, vector<16x8x8xf32> -> vector<16x8x8xf32>
    "tpu.trace_stop"() : () -> ()
    %48 = vector.extract_strided_slice %47 {offsets = [0, 0, 0], sizes = [4, 8, 8], strides = [1, 1, 1]} : vector<16x8x8xf32> to vector<4x8x8xf32>
    %49 = vector.extract_strided_slice %47 {offsets = [4, 0, 0], sizes = [4, 8, 8], strides = [1, 1, 1]} : vector<16x8x8xf32> to vector<4x8x8xf32>
    %50 = vector.extract_strided_slice %47 {offsets = [8, 0, 0], sizes = [4, 8, 8], strides = [1, 1, 1]} : vector<16x8x8xf32> to vector<4x8x8xf32>
    %51 = vector.extract_strided_slice %47 {offsets = [12, 0, 0], sizes = [4, 8, 8], strides = [1, 1, 1]} : vector<16x8x8xf32> to vector<4x8x8xf32>
    %52 = tpu.concatenate %48, %49, %50, %51 in 2 : vector<4x8x8xf32>, vector<4x8x8xf32>, vector<4x8x8xf32>, vector<4x8x8xf32> -> vector<4x8x32xf32>
    %53 = vector.shape_cast %52 : vector<4x8x32xf32> to vector<32x32xf32>
    %c0_20 = arith.constant 0 : index
    %c0_21 = arith.constant 0 : index
    %54 = vector.load %arg8[%c0_20, %c0_21] : memref<32x32xf32, #tpu.memory_space<vmem>>, vector<32x32xf32>
    %cst_22 = arith.constant dense<0.000000e+00> : vector<32x32xf32>
    %55 = tpu.matmul %53, %54, %cst_22 {dimension_numbers = #tpu.dot_dimension_numbers<[1], [0], [0], [1], [0, 0, 1, 1], [], []>} : vector<32x32xf32>, vector<32x32xf32>, vector<32x32xf32> -> vector<32x32xf32>
    %c0_23 = arith.constant 0 : index
    %c0_24 = arith.constant 0 : index
    %56 = vector.load %arg9[%c0_23, %c0_24] : memref<1x32xf32, #tpu.memory_space<vmem>>, vector<1x32xf32>
    %57 = vector.broadcast %56 : vector<1x32xf32> to vector<32x32xf32>
    %58 = arith.addf %55, %57 : vector<32x32xf32>
    %59 = vector.extract_strided_slice %58 {offsets = [0, 0], sizes = [8, 32], strides = [1, 1]} : vector<32x32xf32> to vector<8x32xf32>
    %60 = vector.extract_strided_slice %58 {offsets = [8, 0], sizes = [8, 32], strides = [1, 1]} : vector<32x32xf32> to vector<8x32xf32>
    %61 = vector.extract_strided_slice %58 {offsets = [16, 0], sizes = [8, 32], strides = [1, 1]} : vector<32x32xf32> to vector<8x32xf32>
    %62 = vector.extract_strided_slice %58 {offsets = [24, 0], sizes = [8, 32], strides = [1, 1]} : vector<32x32xf32> to vector<8x32xf32>
    %63 = tpu.concatenate %59, %60, %61, %62 in 1 : vector<8x32xf32>, vector<8x32xf32>, vector<8x32xf32>, vector<8x32xf32> -> vector<8x128xf32>
    %c0_25 = arith.constant 0 : index
    %c0_26 = arith.constant 0 : index
    %64 = vector.load %arg10[%c0_25, %c0_26] : memref<8x128xf32, #tpu.memory_space<vmem>>, vector<8x128xf32>
    tpu.vector_store %arg10[%c0_25, %c0_26], %63 {strides = array<i32>} : memref<8x128xf32, #tpu.memory_space<vmem>>, vector<8x128xf32>,
    return
  }
  func.func @transform_0(%arg0: i32) -> (i32, i32, i32) {
    %c0_i32 = arith.constant 0 : i32
    %c0_i32_0 = arith.constant 0 : i32
    %c0_i32_1 = arith.constant 0 : i32
    %c0_i32_2 = arith.constant 0 : i32
    return %c0_i32, %c0_i32_0, %c0_i32_1 : i32, i32, i32
  }
  func.func @transform_1(%arg0: i32) -> (i32, i32) {
    %c0_i32 = arith.constant 0 : i32
    %c0_i32_0 = arith.constant 0 : i32
    return %arg0, %c0_i32 : i32, i32
  }
  func.func @transform_2(%arg0: i32) -> (i32, i32) {
    %c0_i32 = arith.constant 0 : i32
    %c0_i32_0 = arith.constant 0 : i32
    return %arg0, %c0_i32 : i32, i32
  }
  func.func @transform_3(%arg0: i32) -> (i32, i32) {
    %c0_i32 = arith.constant 0 : i32
    %c0_i32_0 = arith.constant 0 : i32
    %c0_i32_1 = arith.constant 0 : i32
    return %c0_i32, %c0_i32_0 : i32, i32
  }
  func.func @transform_4(%arg0: i32) -> (i32, i32) {
    %c0_i32 = arith.constant 0 : i32
    %c0_i32_0 = arith.constant 0 : i32
    %c0_i32_1 = arith.constant 0 : i32
    return %c0_i32, %c0_i32_0 : i32, i32
  }
  func.func @transform_5(%arg0: i32) -> (i32, i32) {
    %c0_i32 = arith.constant 0 : i32
    %c0_i32_0 = arith.constant 0 : i32
    %c0_i32_1 = arith.constant 0 : i32
    return %c0_i32, %c0_i32_0 : i32, i32
  }
  func.func @transform_6(%arg0: i32) -> (i32, i32) {
    %c0_i32 = arith.constant 0 : i32
    %c0_i32_0 = arith.constant 0 : i32
    %c0_i32_1 = arith.constant 0 : i32
    return %c0_i32, %c0_i32_0 : i32, i32
  }
  func.func @transform_7(%arg0: i32) -> (i32, i32) {
    %c0_i32 = arith.constant 0 : i32
    %c0_i32_0 = arith.constant 0 : i32
    %c0_i32_1 = arith.constant 0 : i32
    return %c0_i32, %c0_i32_0 : i32, i32
  }
  func.func @transform_8(%arg0: i32) -> (i32, i32) {
    %c0_i32 = arith.constant 0 : i32
    %c0_i32_0 = arith.constant 0 : i32
    %c0_i32_1 = arith.constant 0 : i32
    return %c0_i32, %c0_i32_0 : i32, i32
  }
  func.func @transform_9(%arg0: i32) -> (i32, i32) {
    %c0_i32 = arith.constant 0 : i32
    %c0_i32_0 = arith.constant 0 : i32
    return %c0_i32, %arg0 : i32, i32
  }
}

module attributes {stable_mosaic.version = 11 : i64} {
  func.func @_attn_kernel(%arg0: i32, %arg1: memref<16x8x8xf32, #tpu.memory_space<vmem>>, %arg2: memref<32x32xf32, #tpu.memory_space<vmem>>, %arg3: memref<32x32xf32, #tpu.memory_space<vmem>>, %arg4: memref<32x32xf32, #tpu.memory_space<vmem>>, %arg5: memref<1x32xf32, #tpu.memory_space<vmem>>, %arg6: memref<32x32xf32, #tpu.memory_space<vmem>>, %arg7: memref<1x32xf32, #tpu.memory_space<vmem>>, %arg8: memref<32x32xf32, #tpu.memory_space<vmem>>, %arg9: memref<1x32xf32, #tpu.memory_space<vmem>>, %arg10: memref<8x128xf32, #tpu.memory_space<vmem>>) attributes {dimension_semantics = [#tpu.dimension_semantics<parallel>], iteration_bounds = array<i64: 1>, scalar_prefetch = 0 : i64, scratch_operands = 0 : i64, tpu.core_type = #tpu.core_type<tc>, window_params = [{pipeline_mode = #tpu.pipeline_mode<synchronous>, transform_indices = @transform_0, window_bounds = array<i64: 16, 8, 8>}, {transform_indices = @transform_1, window_bounds = array<i64: 32, 32>}, {transform_indices = @transform_2, window_bounds = array<i64: 32, 32>}, {pipeline_mode = #tpu.pipeline_mode<synchronous>, transform_indices = @transform_3, window_bounds = array<i64: 32, 32>}, {pipeline_mode = #tpu.pipeline_mode<synchronous>, transform_indices = @transform_4, window_bounds = array<i64: 1, 32>}, {pipeline_mode = #tpu.pipeline_mode<synchronous>, transform_indices = @transform_5, window_bounds = array<i64: 32, 32>}, {pipeline_mode = #tpu.pipeline_mode<synchronous>, transform_indices = @transform_6, window_bounds = array<i64: 1, 32>}, {pipeline_mode = #tpu.pipeline_mode<synchronous>, transform_indices = @transform_7, window_bounds = array<i64: 32, 32>}, {pipeline_mode = #tpu.pipeline_mode<synchronous>, transform_indices = @transform_8, window_bounds = array<i64: 1, 32>}, {transform_indices = @transform_9, window_bounds = array<i64: 8, 128>}]} {
    %c0 = arith.constant 0 : index
    %c0_0 = arith.constant 0 : index
    %0 = vector.load %arg2[%c0, %c0_0] : memref<32x32xf32, #tpu.memory_space<vmem>>, vector<32x32xf32>
    %c0_1 = arith.constant 0 : index
    %c0_2 = arith.constant 0 : index
    %1 = vector.load %arg3[%c0_1, %c0_2] : memref<32x32xf32, #tpu.memory_space<vmem>>, vector<32x32xf32>
    %c0_3 = arith.constant 0 : index
    %c0_4 = arith.constant 0 : index
    %2 = vector.load %arg4[%c0_3, %c0_4] : memref<32x32xf32, #tpu.memory_space<vmem>>, vector<32x32xf32>
    %cst = arith.constant dense<0.000000e+00> : vector<32x32xf32>
    %3 = tpu.matmul %0, %2, %cst {dimension_numbers = #tpu.dot_dimension_numbers<[1], [0], [0], [1], [0, 0, 1, 1], [], []>} : vector<32x32xf32>, vector<32x32xf32>, vector<32x32xf32> -> vector<32x32xf32>
    %c0_5 = arith.constant 0 : index
    %c0_6 = arith.constant 0 : index
    %4 = vector.load %arg5[%c0_5, %c0_6] : memref<1x32xf32, #tpu.memory_space<vmem>>, vector<1x32xf32>
    %5 = vector.broadcast %4 : vector<1x32xf32> to vector<32x32xf32>
    %6 = arith.addf %3, %5 : vector<32x32xf32>
    %c0_7 = arith.constant 0 : index
    %c0_8 = arith.constant 0 : index
    %7 = vector.load %arg6[%c0_7, %c0_8] : memref<32x32xf32, #tpu.memory_space<vmem>>, vector<32x32xf32>
    %cst_9 = arith.constant dense<0.000000e+00> : vector<32x32xf32>
    %8 = tpu.matmul %1, %7, %cst_9 {dimension_numbers = #tpu.dot_dimension_numbers<[1], [0], [0], [1], [0, 0, 1, 1], [], []>} : vector<32x32xf32>, vector<32x32xf32>, vector<32x32xf32> -> vector<32x32xf32>
    %c0_10 = arith.constant 0 : index
    %c0_11 = arith.constant 0 : index
    %9 = vector.load %arg7[%c0_10, %c0_11] : memref<1x32xf32, #tpu.memory_space<vmem>>, vector<1x32xf32>
    %10 = vector.broadcast %9 : vector<1x32xf32> to vector<32x32xf32>
    %11 = arith.addf %8, %10 : vector<32x32xf32>
    %12 = vector.shape_cast %6 : vector<32x32xf32> to vector<4x8x32xf32>
    %13 = vector.shape_cast %11 : vector<32x32xf32> to vector<4x8x32xf32>
    %14 = vector.extract_strided_slice %12 {offsets = [0, 0, 0], sizes = [4, 8, 8], strides = [1, 1, 1]} : vector<4x8x32xf32> to vector<4x8x8xf32>
    %15 = vector.extract_strided_slice %12 {offsets = [0, 0, 8], sizes = [4, 8, 8], strides = [1, 1, 1]} : vector<4x8x32xf32> to vector<4x8x8xf32>
    %16 = vector.extract_strided_slice %12 {offsets = [0, 0, 16], sizes = [4, 8, 8], strides = [1, 1, 1]} : vector<4x8x32xf32> to vector<4x8x8xf32>
    %17 = vector.extract_strided_slice %12 {offsets = [0, 0, 24], sizes = [4, 8, 8], strides = [1, 1, 1]} : vector<4x8x32xf32> to vector<4x8x8xf32>
    %18 = vector.shape_cast %14 : vector<4x8x8xf32> to vector<1x4x8x8xf32>
    %19 = vector.shape_cast %15 : vector<4x8x8xf32> to vector<1x4x8x8xf32>
    %20 = vector.shape_cast %16 : vector<4x8x8xf32> to vector<1x4x8x8xf32>
    %21 = vector.shape_cast %17 : vector<4x8x8xf32> to vector<1x4x8x8xf32>
    %22 = tpu.concatenate %18, %19, %20, %21 in 0 : vector<1x4x8x8xf32>, vector<1x4x8x8xf32>, vector<1x4x8x8xf32>, vector<1x4x8x8xf32> -> vector<4x4x8x8xf32>
    %23 = vector.extract_strided_slice %13 {offsets = [0, 0, 0], sizes = [4, 8, 8], strides = [1, 1, 1]} : vector<4x8x32xf32> to vector<4x8x8xf32>
    %24 = vector.extract_strided_slice %13 {offsets = [0, 0, 8], sizes = [4, 8, 8], strides = [1, 1, 1]} : vector<4x8x32xf32> to vector<4x8x8xf32>
    %25 = vector.extract_strided_slice %13 {offsets = [0, 0, 16], sizes = [4, 8, 8], strides = [1, 1, 1]} : vector<4x8x32xf32> to vector<4x8x8xf32>
    %26 = vector.extract_strided_slice %13 {offsets = [0, 0, 24], sizes = [4, 8, 8], strides = [1, 1, 1]} : vector<4x8x32xf32> to vector<4x8x8xf32>
    %27 = vector.shape_cast %23 : vector<4x8x8xf32> to vector<1x4x8x8xf32>
    %28 = vector.shape_cast %24 : vector<4x8x8xf32> to vector<1x4x8x8xf32>
    %29 = vector.shape_cast %25 : vector<4x8x8xf32> to vector<1x4x8x8xf32>
    %30 = vector.shape_cast %26 : vector<4x8x8xf32> to vector<1x4x8x8xf32>
    %31 = tpu.concatenate %27, %28, %29, %30 in 0 : vector<1x4x8x8xf32>, vector<1x4x8x8xf32>, vector<1x4x8x8xf32>, vector<1x4x8x8xf32> -> vector<4x4x8x8xf32>
    %32 = vector.shape_cast %22 : vector<4x4x8x8xf32> to vector<16x8x8xf32>
    %33 = vector.shape_cast %31 : vector<4x4x8x8xf32> to vector<16x8x8xf32>
    %c0_12 = arith.constant 0 : index
    %c0_13 = arith.constant 0 : index
    %c0_14 = arith.constant 0 : index
    %34 = vector.load %arg1[%c0_12, %c0_13, %c0_14] : memref<16x8x8xf32, #tpu.memory_space<vmem>>, vector<16x8x8xf32>
    "tpu.trace_start"() <{level = 10 : i32, message = "bnd,bkd->bnk"}> : () -> ()
    %cst_15 = arith.constant dense<0.000000e+00> : vector<16x8x8xf32>
    %35 = tpu.matmul %34, %32, %cst_15 {dimension_numbers = #tpu.dot_dimension_numbers<[2], [2], [1], [1], [0, 0, 0, 1, 1, 1], [0], [0]>} : vector<16x8x8xf32>, vector<16x8x8xf32>, vector<16x8x8xf32> -> vector<16x8x8xf32>
    "tpu.trace_stop"() : () -> ()
    %cst_16 = arith.constant 0.353553385 : f32
    %36 = vector.broadcast %cst_16 : f32 to vector<16x8x8xf32>
    %37 = arith.mulf %35, %36 : vector<16x8x8xf32>
    %cst_17 = arith.constant dense<0xFF800000> : vector<16x8xf32>
    %38 = vector.multi_reduction <maximumf>, %37, %cst_17 [2] : vector<16x8x8xf32> to vector<16x8xf32>
    %39 = vector.shape_cast %38 : vector<16x8xf32> to vector<16x8x1xf32>
    %40 = vector.broadcast %39 : vector<16x8x1xf32> to vector<16x8x8xf32>
    %41 = arith.subf %37, %40 : vector<16x8x8xf32>
    %42 = math.exp %41 : vector<16x8x8xf32>
    %cst_18 = arith.constant dense<0.000000e+00> : vector<16x8xf32>
    %43 = vector.multi_reduction <add>, %42, %cst_18 [2] : vector<16x8x8xf32> to vector<16x8xf32>
    %44 = vector.shape_cast %43 : vector<16x8xf32> to vector<16x8x1xf32>
    %45 = vector.broadcast %44 : vector<16x8x1xf32> to vector<16x8x8xf32>
    %46 = arith.divf %42, %45 : vector<16x8x8xf32>
    "tpu.trace_start"() <{level = 10 : i32, message = "bnk,bkd->bnd"}> : () -> ()
    %cst_19 = arith.constant dense<0.000000e+00> : vector<16x8x8xf32>
    %47 = tpu.matmul %46, %33, %cst_19 {dimension_numbers = #tpu.dot_dimension_numbers<[2], [1], [1], [2], [0, 0, 0, 1, 1, 2], [0], [0]>} : vector<16x8x8xf32>, vector<16x8x8xf32>, vector<16x8x8xf32> -> vector<16x8x8xf32>
    "tpu.trace_stop"() : () -> ()
    %48 = vector.extract_strided_slice %47 {offsets = [0, 0, 0], sizes = [4, 8, 8], strides = [1, 1, 1]} : vector<16x8x8xf32> to vector<4x8x8xf32>
    %49 = vector.extract_strided_slice %47 {offsets = [4, 0, 0], sizes = [4, 8, 8], strides = [1, 1, 1]} : vector<16x8x8xf32> to vector<4x8x8xf32>
    %50 = vector.extract_strided_slice %47 {offsets = [8, 0, 0], sizes = [4, 8, 8], strides = [1, 1, 1]} : vector<16x8x8xf32> to vector<4x8x8xf32>
    %51 = vector.extract_strided_slice %47 {offsets = [12, 0, 0], sizes = [4, 8, 8], strides = [1, 1, 1]} : vector<16x8x8xf32> to vector<4x8x8xf32>
    %52 = tpu.concatenate %48, %49, %50, %51 in 2 : vector<4x8x8xf32>, vector<4x8x8xf32>, vector<4x8x8xf32>, vector<4x8x8xf32> -> vector<4x8x32xf32>
    %53 = vector.shape_cast %52 : vector<4x8x32xf32> to vector<32x32xf32>
    %c0_20 = arith.constant 0 : index
    %c0_21 = arith.constant 0 : index
    %54 = vector.load %arg8[%c0_20, %c0_21] : memref<32x32xf32, #tpu.memory_space<vmem>>, vector<32x32xf32>
    %cst_22 = arith.constant dense<0.000000e+00> : vector<32x32xf32>
    %55 = tpu.matmul %53, %54, %cst_22 {dimension_numbers = #tpu.dot_dimension_numbers<[1], [0], [0], [1], [0, 0, 1, 1], [], []>} : vector<32x32xf32>, vector<32x32xf32>, vector<32x32xf32> -> vector<32x32xf32>
    %c0_23 = arith.constant 0 : index
    %c0_24 = arith.constant 0 : index
    %56 = vector.load %arg9[%c0_23, %c0_24] : memref<1x32xf32, #tpu.memory_space<vmem>>, vector<1x32xf32>
    %57 = vector.broadcast %56 : vector<1x32xf32> to vector<32x32xf32>
    %58 = arith.addf %55, %57 : vector<32x32xf32>
    %59 = vector.extract_strided_slice %58 {offsets = [0, 0], sizes = [8, 32], strides = [1, 1]} : vector<32x32xf32> to vector<8x32xf32>
    %60 = vector.extract_strided_slice %58 {offsets = [8, 0], sizes = [8, 32], strides = [1, 1]} : vector<32x32xf32> to vector<8x32xf32>
    %61 = vector.extract_strided_slice %58 {offsets = [16, 0], sizes = [8, 32], strides = [1, 1]} : vector<32x32xf32> to vector<8x32xf32>
    %62 = vector.extract_strided_slice %58 {offsets = [24, 0], sizes = [8, 32], strides = [1, 1]} : vector<32x32xf32> to vector<8x32xf32>
    %63 = tpu.concatenate %59, %60, %61, %62 in 1 : vector<8x32xf32>, vector<8x32xf32>, vector<8x32xf32>, vector<8x32xf32> -> vector<8x128xf32>
    %c0_25 = arith.constant 0 : index
    %c0_26 = arith.constant 0 : index
    %64 = vector.load %arg10[%c0_25, %c0_26] : memref<8x128xf32, #tpu.memory_space<vmem>>, vector<8x128xf32>
    tpu.vector_store %arg10[%c0_25, %c0_26], %63 {strides = array<i32>} : memref<8x128xf32, #tpu.memory_space<vmem>>, vector<8x128xf32>,
    return
  }
  func.func @transform_0(%arg0: i32) -> (i32, i32, i32) {
    %c0_i32 = arith.constant 0 : i32
    %c0_i32_0 = arith.constant 0 : i32
    %c0_i32_1 = arith.constant 0 : i32
    %c0_i32_2 = arith.constant 0 : i32
    return %c0_i32, %c0_i32_0, %c0_i32_1 : i32, i32, i32
  }
  func.func @transform_1(%arg0: i32) -> (i32, i32) {
    %c0_i32 = arith.constant 0 : i32
    %c0_i32_0 = arith.constant 0 : i32
    return %arg0, %c0_i32 : i32, i32
  }
  func.func @transform_2(%arg0: i32) -> (i32, i32) {
    %c0_i32 = arith.constant 0 : i32
    %c0_i32_0 = arith.constant 0 : i32
    return %arg0, %c0_i32 : i32, i32
  }
  func.func @transform_3(%arg0: i32) -> (i32, i32) {
    %c0_i32 = arith.constant 0 : i32
    %c0_i32_0 = arith.constant 0 : i32
    %c0_i32_1 = arith.constant 0 : i32
    return %c0_i32, %c0_i32_0 : i32, i32
  }
  func.func @transform_4(%arg0: i32) -> (i32, i32) {
    %c0_i32 = arith.constant 0 : i32
    %c0_i32_0 = arith.constant 0 : i32
    %c0_i32_1 = arith.constant 0 : i32
    return %c0_i32, %c0_i32_0 : i32, i32
  }
  func.func @transform_5(%arg0: i32) -> (i32, i32) {
    %c0_i32 = arith.constant 0 : i32
    %c0_i32_0 = arith.constant 0 : i32
    %c0_i32_1 = arith.constant 0 : i32
    return %c0_i32, %c0_i32_0 : i32, i32
  }
  func.func @transform_6(%arg0: i32) -> (i32, i32) {
    %c0_i32 = arith.constant 0 : i32
    %c0_i32_0 = arith.constant 0 : i32
    %c0_i32_1 = arith.constant 0 : i32
    return %c0_i32, %c0_i32_0 : i32, i32
  }
  func.func @transform_7(%arg0: i32) -> (i32, i32) {
    %c0_i32 = arith.constant 0 : i32
    %c0_i32_0 = arith.constant 0 : i32
    %c0_i32_1 = arith.constant 0 : i32
    return %c0_i32, %c0_i32_0 : i32, i32
  }
  func.func @transform_8(%arg0: i32) -> (i32, i32) {
    %c0_i32 = arith.constant 0 : i32
    %c0_i32_0 = arith.constant 0 : i32
    %c0_i32_1 = arith.constant 0 : i32
    return %c0_i32, %c0_i32_0 : i32, i32
  }
  func.func @transform_9(%arg0: i32) -> (i32, i32) {
    %c0_i32 = arith.constant 0 : i32
    %c0_i32_0 = arith.constant 0 : i32
    return %c0_i32, %arg0 : i32, i32
  }
}

</mosaic_0001>

<llo_original>
// kernel: tpu_custom_call.1
$region0: #{tpu_custom_call.1}
  #allocation0 [shape = 'u32[]', space=smem, size = 0x4, offset = 0x4, fixed_abs, tag = 'smem constant byte address 0x4 - core index']
  #allocation1 [shape = 'u32[144,128]{1,0:T(1,128)}', space=vmem, size = 0x12000, scoped, tag = 'internal scratch']
  %s0 = inlined_call_operand.vmem [shape: f32[16,8,8], index: 0, kind: input, shape index: {}]
  %s1 = inlined_call_operand.vmem [shape: f32[32,32], index: 1, kind: input, shape index: {}]
  %s2 = inlined_call_operand.vmem [shape: f32[32,32], index: 2, kind: input, shape index: {}]
  %s3 = inlined_call_operand.vmem [shape: f32[32,32], index: 3, kind: input, shape index: {}]
  %s4 = inlined_call_operand.vmem [shape: f32[1,32], index: 4, kind: input, shape index: {}]
  %s5 = inlined_call_operand.vmem [shape: f32[32,32], index: 5, kind: input, shape index: {}]
  %s6 = inlined_call_operand.vmem [shape: f32[1,32], index: 6, kind: input, shape index: {}]
  %s7 = inlined_call_operand.vmem [shape: f32[32,32], index: 7, kind: input, shape index: {}]
  %s8 = inlined_call_operand.vmem [shape: f32[1,32], index: 8, kind: input, shape index: {}]
  %s9 = inlined_call_operand.hbm [shape: f32[8,128], index: 9, kind: output, shape index: {}]
  %s10 = sld [smem:[#allocation0]]
  $region46: #{tpu_custom_call.1} parent=0
    _
  %s12 = ssub.s32 1, %s10
  %s13 = scalar_select 0, %s12, %s10
  $region1: #{tpu_custom_call.1} parent=0
    #allocation2 [shape = 'u8[4096]{0}', space=vmem, size = 0x1000, scoped, tag = 'output window, operand 0, single buffered']
    #allocation3 [shape = 's32[1]{0}', space=sflag, size = 0x4, scoped, tag = 'scoped memory for tpu_custom_call.1']
    %14 = vsyncpa [#allocation3], 0
    // Predicated region
    $region2: #{tpu_custom_call.1} parent=1 // pred_check
      _
    $region3: #{tpu_custom_call.1} parent=1 // pred_check_branch
      %16 = sbr.rel (0) target = $region5
    $region4: #{tpu_custom_call.1} parent=1 // pred_region
      _
    $region5: #{tpu_custom_call.1} parent=1 // pred_fallthru
      _
    // Predicated region
    $region6: #{tpu_custom_call.1} parent=1 // pred_check
      _
    $region7: #{tpu_custom_call.1} parent=1 // pred_check_branch
      %18 = sbr.rel (0) target = $region9
    $region8: #{tpu_custom_call.1} parent=1 // pred_region
      _
    $region9: #{tpu_custom_call.1} parent=1 // pred_fallthru
      _
    // Predicated region
    $region10: #{tpu_custom_call.1} parent=1 // pred_check
      _
    $region11: #{tpu_custom_call.1} parent=1 // pred_check_branch
      %20 = sbr.rel (0) target = $region13
    $region12: #{tpu_custom_call.1} parent=1 // pred_region
      _
    $region13: #{tpu_custom_call.1} parent=1 // pred_fallthru
      _
    // Predicated region
    $region14: #{tpu_custom_call.1} parent=1 // pred_check
      _
    $region15: #{tpu_custom_call.1} parent=1 // pred_check_branch
      %22 = sbr.rel (0) target = $region17
    $region16: #{tpu_custom_call.1} parent=1 // pred_region
      _
    $region17: #{tpu_custom_call.1} parent=1 // pred_fallthru
      _
    // Predicated region
    $region18: #{tpu_custom_call.1} parent=1 // pred_check
      _
    $region19: #{tpu_custom_call.1} parent=1 // pred_check_branch
      %24 = sbr.rel (0) target = $region21
    $region20: #{tpu_custom_call.1} parent=1 // pred_region
      _
    $region21: #{tpu_custom_call.1} parent=1 // pred_fallthru
      _
    // Predicated region
    $region22: #{tpu_custom_call.1} parent=1 // pred_check
      _
    $region23: #{tpu_custom_call.1} parent=1 // pred_check_branch
      %26 = sbr.rel (0) target = $region25
    $region24: #{tpu_custom_call.1} parent=1 // pred_region
      _
    $region25: #{tpu_custom_call.1} parent=1 // pred_fallthru
      _
    // Predicated region
    $region26: #{tpu_custom_call.1} parent=1 // pred_check
      _
    $region27: #{tpu_custom_call.1} parent=1 // pred_check_branch
      %28 = sbr.rel (0) target = $region29
    $region28: #{tpu_custom_call.1} parent=1 // pred_region
      _
    $region29: #{tpu_custom_call.1} parent=1 // pred_fallthru
      _
    // Predicated region
    $region30: #{tpu_custom_call.1} parent=1 // pred_check
      _
    $region31: #{tpu_custom_call.1} parent=1 // pred_check_branch
      %30 = sbr.rel (0) target = $region33
    $region32: #{tpu_custom_call.1} parent=1 // pred_region
      _
    $region33: #{tpu_custom_call.1} parent=1 // pred_fallthru
      _
    // Predicated region
    $region34: #{tpu_custom_call.1} parent=1 // pred_check
      _
    $region35: #{tpu_custom_call.1} parent=1 // pred_check_branch
      %32 = sbr.rel (0) target = $region37
    $region36: #{tpu_custom_call.1} parent=1 // pred_region
      _
    $region37: #{tpu_custom_call.1} parent=1 // pred_fallthru
      _
    %v33 = vld [vmem:[%s1] sm:$0xff]
    %v34 = vld [vmem:[%s1 + $0x8] sm:$0xff]
    %v35 = vld [vmem:[%s1 + $0x10] sm:$0xff]
    %v36 = vld [vmem:[%s1 + $0x18] sm:$0xff]
    %v37 = vld [vmem:[%s2] sm:$0xff]
    %v38 = vld [vmem:[%s2 + $0x8] sm:$0xff]
    %v39 = vld [vmem:[%s2 + $0x10] sm:$0xff]
    %v40 = vld [vmem:[%s2 + $0x18] sm:$0xff]
    %v41 = vld [vmem:[%s3] sm:$0xff]
    %v42 = vld [vmem:[%s3 + $0x8] sm:$0xff]
    %v43 = vld [vmem:[%s3 + $0x10] sm:$0xff]
    %v44 = vld [vmem:[%s3 + $0x18] sm:$0xff]
    %v45 = vld [vmem:[%s4] sm:$0x1]
    %v47 = vlaneseq
    %v48 = vshrl.u32 %v47, 7
    %v49 = vsub.s32 0, %v48
    %v50 = vrot.slane %v45, %v49
    %vm52 = vcmask 261120
    %v54 = vsel %vm52, %v33, 0
    %v57 = vsel %vm52, %v34, 0
    %v60 = vsel %vm52, %v35, 0
    %v63 = vsel %vm52, %v36, 0
    %65 = vmatprep.subr.mxu0 0.0
    %66 = vmatpush1.msra.mxu0 %v41
    %67 = vmatprep.subr.mxu0 0.0
    %68 = vmatpush1.msra.mxu0 %v42
    %69 = vmatprep.subr.mxu0 0.0
    %70 = vmatpush1.msra.mxu0 %v43
    %71 = vmatprep.subr.mxu0 0.0
    %72 = vmatpush1.msra.mxu0 %v44
    %73 = vmatprep.subr.mxu0 0.0
    %74 = vmatpush1.msra.mxu0 0.0
    %75 = vmatprep.subr.mxu0 0.0
    %76 = vmatpush1.msra.mxu0 0.0
    %77 = vmatprep.subr.mxu0 0.0
    %78 = vmatpush1.msra.mxu0 0.0
    %79 = vmatprep.subr.mxu0 0.0
    %80 = vmatpush1.msra.mxu0 0.0
    %81 = vmatprep.subr.mxu0 0.0
    %82 = vmatpush1.msra.mxu0 0.0
    %83 = vmatprep.subr.mxu0 0.0
    %84 = vmatpush1.msra.mxu0 0.0
    %85 = vmatprep.subr.mxu0 0.0
    %86 = vmatpush1.msra.mxu0 0.0
    %87 = vmatprep.subr.mxu0 0.0
    %88 = vmatpush1.msra.mxu0 0.0
    %89 = vmatprep.subr.mxu0 0.0
    %90 = vmatpush1.msra.mxu0 0.0
    %91 = vmatprep.subr.mxu0 0.0
    %92 = vmatpush1.msra.mxu0 0.0
    %93 = vmatprep.subr.mxu0 0.0
    %94 = vmatpush1.msra.mxu0 0.0
    %95 = vmatprep.subr.mxu0 0.0
    %96 = vmatpush1.msra.mxu0 0.0
    %97 = vmatprep.subr.mxu0 0.0
    %98 = vmatpush1.msra.mxu0 0.0
    %99 = vmatprep.subr.mxu0 0.0
    %100 = vmatpush1.msra.mxu0 0.0
    %101 = vmatprep.subr.mxu0 0.0
    %102 = vmatpush1.msra.mxu0 0.0
    %103 = vmatprep.subr.mxu0 0.0
    %104 = vmatpush1.msra.mxu0 0.0
    %105 = vmatprep.subr.mxu0 0.0
    %106 = vmatpush1.msra.mxu0 0.0
    %107 = vmatprep.subr.mxu0 0.0
    %108 = vmatpush1.msra.mxu0 0.0
    %109 = vmatprep.subr.mxu0 0.0
    %110 = vmatpush1.msra.mxu0 0.0
    %111 = vmatprep.subr.mxu0 0.0
    %112 = vmatpush1.msra.mxu0 0.0
    %113 = vmatprep.subr.mxu0 0.0
    %114 = vmatpush1.msra.mxu0 0.0
    %115 = vmatprep.subr.mxu0 0.0
    %116 = vmatpush1.msra.mxu0 0.0
    %117 = vmatprep.subr.mxu0 0.0
    %118 = vmatpush1.msra.mxu0 0.0
    %119 = vmatprep.subr.mxu0 0.0
    %120 = vmatpush1.msra.mxu0 0.0
    %121 = vmatprep.subr.mxu0 0.0
    %122 = vmatpush1.msra.mxu0 0.0
    %123 = vmatprep.subr.mxu0 0.0
    %124 = vmatpush1.msra.mxu0 0.0
    %125 = vmatprep.subr.mxu0 0.0
    %126 = vmatpush1.msra.mxu0 0.0
    %127 = vmatprep.subr.mxu0 0.0
    %128 = vmatpush1.msra.mxu0 0.0
    %129 = vmatprep.mubr.f32.mxu0 0.0
    %130 = vmatmul.mubr.f32.gmra.mrb[0].mxu0 %v54
    %v131 = vpop.f32.mrb[0].mxu0
    %v132 = vadd.f32 %v50, %v131
    %v133 = vpop.f32.mrb[0].mxu0
    %134 = vmatprep.mubr.f32.mxu0 0.0
    %135 = vmatmul.mubr.f32.gmra.mrb[0].mxu0 %v57
    %v136 = vpop.f32.mrb[0].mxu0
    %v137 = vadd.f32 %v50, %v136
    %v138 = vpop.f32.mrb[0].mxu0
    %139 = vmatprep.mubr.f32.mxu0 0.0
    %140 = vmatmul.mubr.f32.gmra.mrb[0].mxu0 %v60
    %v141 = vpop.f32.mrb[0].mxu0
    %v142 = vadd.f32 %v50, %v141
    %v143 = vpop.f32.mrb[0].mxu0
    %144 = vmatprep.mubr.f32.mxu0 0.0
    %145 = vmatmul.mubr.f32.gmra.mrb[0].mxu0 %v63
    %v146 = vpop.f32.mrb[0].mxu0
    %v147 = vadd.f32 %v50, %v146
    %v148 = vpop.f32.mrb[0].mxu0
    %149 = vdwg.mxu0
    %v150 = vld [vmem:[%s5] sm:$0xff]
    %v151 = vld [vmem:[%s5 + $0x8] sm:$0xff]
    %v152 = vld [vmem:[%s5 + $0x10] sm:$0xff]
    %v153 = vld [vmem:[%s5 + $0x18] sm:$0xff]
    %v154 = vld [vmem:[%s6] sm:$0x1]
    %v156 = vlaneseq
    %v157 = vshrl.u32 %v156, 7
    %v158 = vsub.s32 0, %v157
    %v159 = vrot.slane %v154, %v158
    %v162 = vsel %vm52, %v37, 0
    %v165 = vsel %vm52, %v38, 0
    %v168 = vsel %vm52, %v39, 0
    %v171 = vsel %vm52, %v40, 0
    %173 = vmatprep.subr.mxu0 0.0
    %174 = vmatpush1.msra.mxu0 %v150
    %175 = vmatprep.subr.mxu0 0.0
    %176 = vmatpush1.msra.mxu0 %v151
    %177 = vmatprep.subr.mxu0 0.0
    %178 = vmatpush1.msra.mxu0 %v152
    %179 = vmatprep.subr.mxu0 0.0
    %180 = vmatpush1.msra.mxu0 %v153
    %181 = vmatprep.subr.mxu0 0.0
    %182 = vmatpush1.msra.mxu0 0.0
    %183 = vmatprep.subr.mxu0 0.0
    %184 = vmatpush1.msra.mxu0 0.0
    %185 = vmatprep.subr.mxu0 0.0
    %186 = vmatpush1.msra.mxu0 0.0
    %187 = vmatprep.subr.mxu0 0.0
    %188 = vmatpush1.msra.mxu0 0.0
    %189 = vmatprep.subr.mxu0 0.0
    %190 = vmatpush1.msra.mxu0 0.0
    %191 = vmatprep.subr.mxu0 0.0
    %192 = vmatpush1.msra.mxu0 0.0
    %193 = vmatprep.subr.mxu0 0.0
    %194 = vmatpush1.msra.mxu0 0.0
    %195 = vmatprep.subr.mxu0 0.0
    %196 = vmatpush1.msra.mxu0 0.0
    %197 = vmatprep.subr.mxu0 0.0
    %198 = vmatpush1.msra.mxu0 0.0
    %199 = vmatprep.subr.mxu0 0.0
    %200 = vmatpush1.msra.mxu0 0.0
    %201 = vmatprep.subr.mxu0 0.0
    %202 = vmatpush1.msra.mxu0 0.0
    %203 = vmatprep.subr.mxu0 0.0
    %204 = vmatpush1.msra.mxu0 0.0
    %205 = vmatprep.subr.mxu0 0.0
    %206 = vmatpush1.msra.mxu0 0.0
    %207 = vmatprep.subr.mxu0 0.0
    %208 = vmatpush1.msra.mxu0 0.0
    %209 = vmatprep.subr.mxu0 0.0
    %210 = vmatpush1.msra.mxu0 0.0
    %211 = vmatprep.subr.mxu0 0.0
    %212 = vmatpush1.msra.mxu0 0.0
    %213 = vmatprep.subr.mxu0 0.0
    %214 = vmatpush1.msra.mxu0 0.0
    %215 = vmatprep.subr.mxu0 0.0
    %216 = vmatpush1.msra.mxu0 0.0
    %217 = vmatprep.subr.mxu0 0.0
    %218 = vmatpush1.msra.mxu0 0.0
    %219 = vmatprep.subr.mxu0 0.0
    %220 = vmatpush1.msra.mxu0 0.0
    %221 = vmatprep.subr.mxu0 0.0
    %222 = vmatpush1.msra.mxu0 0.0
    %223 = vmatprep.subr.mxu0 0.0
    %224 = vmatpush1.msra.mxu0 0.0
    %225 = vmatprep.subr.mxu0 0.0
    %226 = vmatpush1.msra.mxu0 0.0
    %227 = vmatprep.subr.mxu0 0.0
    %228 = vmatpush1.msra.mxu0 0.0
    %229 = vmatprep.subr.mxu0 0.0
    %230 = vmatpush1.msra.mxu0 0.0
    %231 = vmatprep.subr.mxu0 0.0
    %232 = vmatpush1.msra.mxu0 0.0
    %233 = vmatprep.subr.mxu0 0.0
    %234 = vmatpush1.msra.mxu0 0.0
    %235 = vmatprep.subr.mxu0 0.0
    %236 = vmatpush1.msra.mxu0 0.0
    %237 = vmatprep.mubr.f32.mxu0 0.0
    %238 = vmatmul.mubr.f32.gmra.mrb[0].mxu0 %v162
    %v239 = vpop.f32.mrb[0].mxu0
    %v240 = vadd.f32 %v159, %v239
    %v241 = vpop.f32.mrb[0].mxu0
    %242 = vmatprep.mubr.f32.mxu0 0.0
    %243 = vmatmul.mubr.f32.gmra.mrb[0].mxu0 %v165
    %v244 = vpop.f32.mrb[0].mxu0
    %v245 = vadd.f32 %v159, %v244
    %v246 = vpop.f32.mrb[0].mxu0
    %247 = vmatprep.mubr.f32.mxu0 0.0
    %248 = vmatmul.mubr.f32.gmra.mrb[0].mxu0 %v168
    %v249 = vpop.f32.mrb[0].mxu0
    %v250 = vadd.f32 %v159, %v249
    %v251 = vpop.f32.mrb[0].mxu0
    %252 = vmatprep.mubr.f32.mxu0 0.0
    %253 = vmatmul.mubr.f32.gmra.mrb[0].mxu0 %v171
    %v254 = vpop.f32.mrb[0].mxu0
    %v255 = vadd.f32 %v159, %v254
    %v256 = vpop.f32.mrb[0].mxu0
    %257 = vdwg.mxu0
    %262 = vrot.lane.b32.xlu0 %v132, 120
    %v263 = vpop.permute.xlu0 %262
    %264 = vrot.lane.b32.xlu0 %v137, 120
    %v265 = vpop.permute.xlu0 %264
    %266 = vrot.lane.b32.xlu0 %v142, 120
    %v267 = vpop.permute.xlu0 %266
    %268 = vrot.lane.b32.xlu0 %v147, 120
    %v269 = vpop.permute.xlu0 %268
    %270 = vrot.lane.b32.xlu0 %v132, 112
    %v271 = vpop.permute.xlu0 %270
    %272 = vrot.lane.b32.xlu0 %v137, 112
    %v273 = vpop.permute.xlu0 %272
    %274 = vrot.lane.b32.xlu0 %v142, 112
    %v275 = vpop.permute.xlu0 %274
    %276 = vrot.lane.b32.xlu0 %v147, 112
    %v277 = vpop.permute.xlu0 %276
    %278 = vrot.lane.b32.xlu0 %v132, 104
    %v279 = vpop.permute.xlu0 %278
    %280 = vrot.lane.b32.xlu0 %v137, 104
    %v281 = vpop.permute.xlu0 %280
    %282 = vrot.lane.b32.xlu0 %v142, 104
    %v283 = vpop.permute.xlu0 %282
    %284 = vrot.lane.b32.xlu0 %v147, 104
    %v285 = vpop.permute.xlu0 %284
    %290 = vrot.lane.b32.xlu0 %v240, 120
    %v291 = vpop.permute.xlu0 %290
    %292 = vrot.lane.b32.xlu0 %v245, 120
    %v293 = vpop.permute.xlu0 %292
    %294 = vrot.lane.b32.xlu0 %v250, 120
    %v295 = vpop.permute.xlu0 %294
    %296 = vrot.lane.b32.xlu0 %v255, 120
    %v297 = vpop.permute.xlu0 %296
    %302 = vrot.lane.b32.xlu0 %v240, 112
    %v303 = vpop.permute.xlu0 %302
    %304 = vrot.lane.b32.xlu0 %v245, 112
    %v305 = vpop.permute.xlu0 %304
    %306 = vrot.lane.b32.xlu0 %v250, 112
    %v307 = vpop.permute.xlu0 %306
    %308 = vrot.lane.b32.xlu0 %v255, 112
    %v309 = vpop.permute.xlu0 %308
    %314 = vrot.lane.b32.xlu0 %v240, 104
    %v315 = vpop.permute.xlu0 %314
    %316 = vrot.lane.b32.xlu0 %v245, 104
    %v317 = vpop.permute.xlu0 %316
    %318 = vrot.lane.b32.xlu0 %v250, 104
    %v319 = vpop.permute.xlu0 %318
    %320 = vrot.lane.b32.xlu0 %v255, 104
    %v321 = vpop.permute.xlu0 %320
    %v326 = vld [vmem:[%s0] sm:$0xff]
    %v327 = vld [vmem:[%s0 + $0x8] sm:$0xff]
    %v328 = vld [vmem:[%s0 + $0x10] sm:$0xff]
    %v329 = vld [vmem:[%s0 + $0x18] sm:$0xff]
    %v330 = vld [vmem:[%s0 + $0x20] sm:$0xff]
    %v331 = vld [vmem:[%s0 + $0x28] sm:$0xff]
    %v332 = vld [vmem:[%s0 + $0x30] sm:$0xff]
    %v333 = vld [vmem:[%s0 + $0x38] sm:$0xff]
    %v334 = vld [vmem:[%s0 + $0x40] sm:$0xff]
    %v335 = vld [vmem:[%s0 + $0x48] sm:$0xff]
    %v336 = vld [vmem:[%s0 + $0x50] sm:$0xff]
    %v337 = vld [vmem:[%s0 + $0x58] sm:$0xff]
    %v338 = vld [vmem:[%s0 + $0x60] sm:$0xff]
    %v339 = vld [vmem:[%s0 + $0x68] sm:$0xff]
    %v340 = vld [vmem:[%s0 + $0x70] sm:$0xff]
    %v341 = vld [vmem:[%s0 + $0x78] sm:$0xff]
    %vm342 = vcmask 64512
    %v344 = vsel %vm342, %v326, 0
    %v346 = vsel %vm342, %v132, 0
    %348 = vmatprep.subr.mxu0 0.0
    %349 = vmatpush1.xpose.msra.mxu0 %v346
    %350 = vmatprep.subr.mxu0 0.0
    %351 = vmatpush1.xpose.msra.mxu0 0.0
    %352 = vmatprep.subr.mxu0 0.0
    %353 = vmatpush1.xpose.msra.mxu0 0.0
    %354 = vmatprep.subr.mxu0 0.0
    %355 = vmatpush1.xpose.msra.mxu0 0.0
    %356 = vmatprep.subr.mxu0 0.0
    %357 = vmatpush1.xpose.msra.mxu0 0.0
    %358 = vmatprep.subr.mxu0 0.0
    %359 = vmatpush1.xpose.msra.mxu0 0.0
    %360 = vmatprep.subr.mxu0 0.0
    %361 = vmatpush1.xpose.msra.mxu0 0.0
    %362 = vmatprep.subr.mxu0 0.0
    %363 = vmatpush1.xpose.msra.mxu0 0.0
    %364 = vmatprep.subr.mxu0 0.0
    %365 = vmatpush1.xpose.msra.mxu0 0.0
    %366 = vmatprep.subr.mxu0 0.0
    %367 = vmatpush1.xpose.msra.mxu0 0.0
    %368 = vmatprep.subr.mxu0 0.0
    %369 = vmatpush1.xpose.msra.mxu0 0.0
    %370 = vmatprep.subr.mxu0 0.0
    %371 = vmatpush1.xpose.msra.mxu0 0.0
    %372 = vmatprep.subr.mxu0 0.0
    %373 = vmatpush1.xpose.msra.mxu0 0.0
    %374 = vmatprep.subr.mxu0 0.0
    %375 = vmatpush1.xpose.msra.mxu0 0.0
    %376 = vmatprep.subr.mxu0 0.0
    %377 = vmatpush1.xpose.msra.mxu0 0.0
    %378 = vmatprep.subr.mxu0 0.0
    %379 = vmatpush1.xpose.msra.mxu0 0.0
    %380 = vmatprep.subr.mxu0 0.0
    %381 = vmatpush1.xpose.msra.mxu0 0.0
    %382 = vmatprep.subr.mxu0 0.0
    %383 = vmatpush1.xpose.msra.mxu0 0.0
    %384 = vmatprep.subr.mxu0 0.0
    %385 = vmatpush1.xpose.msra.mxu0 0.0
    %386 = vmatprep.subr.mxu0 0.0
    %387 = vmatpush1.xpose.msra.mxu0 0.0
    %388 = vmatprep.subr.mxu0 0.0
    %389 = vmatpush1.xpose.msra.mxu0 0.0
    %390 = vmatprep.subr.mxu0 0.0
    %391 = vmatpush1.xpose.msra.mxu0 0.0
    %392 = vmatprep.subr.mxu0 0.0
    %393 = vmatpush1.xpose.msra.mxu0 0.0
    %394 = vmatprep.subr.mxu0 0.0
    %395 = vmatpush1.xpose.msra.mxu0 0.0
    %396 = vmatprep.subr.mxu0 0.0
    %397 = vmatpush1.xpose.msra.mxu0 0.0
    %398 = vmatprep.subr.mxu0 0.0
    %399 = vmatpush1.xpose.msra.mxu0 0.0
    %400 = vmatprep.subr.mxu0 0.0
    %401 = vmatpush1.xpose.msra.mxu0 0.0
    %402 = vmatprep.subr.mxu0 0.0
    %403 = vmatpush1.xpose.msra.mxu0 0.0
    %404 = vmatprep.subr.mxu0 0.0
    %405 = vmatpush1.xpose.msra.mxu0 0.0
    %406 = vmatprep.subr.mxu0 0.0
    %407 = vmatpush1.xpose.msra.mxu0 0.0
    %408 = vmatprep.subr.mxu0 0.0
    %409 = vmatpush1.xpose.msra.mxu0 0.0
    %410 = vmatprep.subr.mxu0 0.0
    %411 = vmatpush1.xpose.msra.mxu0 0.0
    %412 = vmatprep.mubr.f32.mxu0 0.0
    %413 = vmatmul.mubr.f32.gmra.mrb[0].mxu0 %v344
    %v414 = vpop.f32.mrb[0].mxu0
    %v415 = vadd.f32 0.0, %v414
    %v416 = vpop.f32.mrb[0].mxu0
    %417 = vdwg.mxu0
    %v419 = vsel %vm342, %v327, 0
    %v421 = vsel %vm342, %v137, 0
    %423 = vmatprep.subr.mxu0 0.0
    %424 = vmatpush1.xpose.msra.mxu0 %v421
    %425 = vmatprep.subr.mxu0 0.0
    %426 = vmatpush1.xpose.msra.mxu0 0.0
    %427 = vmatprep.subr.mxu0 0.0
    %428 = vmatpush1.xpose.msra.mxu0 0.0
    %429 = vmatprep.subr.mxu0 0.0
    %430 = vmatpush1.xpose.msra.mxu0 0.0
    %431 = vmatprep.subr.mxu0 0.0
    %432 = vmatpush1.xpose.msra.mxu0 0.0
    %433 = vmatprep.subr.mxu0 0.0
    %434 = vmatpush1.xpose.msra.mxu0 0.0
    %435 = vmatprep.subr.mxu0 0.0
    %436 = vmatpush1.xpose.msra.mxu0 0.0
    %437 = vmatprep.subr.mxu0 0.0
    %438 = vmatpush1.xpose.msra.mxu0 0.0
    %439 = vmatprep.subr.mxu0 0.0
    %440 = vmatpush1.xpose.msra.mxu0 0.0
    %441 = vmatprep.subr.mxu0 0.0
    %442 = vmatpush1.xpose.msra.mxu0 0.0
    %443 = vmatprep.subr.mxu0 0.0
    %444 = vmatpush1.xpose.msra.mxu0 0.0
    %445 = vmatprep.subr.mxu0 0.0
    %446 = vmatpush1.xpose.msra.mxu0 0.0
    %447 = vmatprep.subr.mxu0 0.0
    %448 = vmatpush1.xpose.msra.mxu0 0.0
    %449 = vmatprep.subr.mxu0 0.0
    %450 = vmatpush1.xpose.msra.mxu0 0.0
    %451 = vmatprep.subr.mxu0 0.0
    %452 = vmatpush1.xpose.msra.mxu0 0.0
    %453 = vmatprep.subr.mxu0 0.0
    %454 = vmatpush1.xpose.msra.mxu0 0.0
    %455 = vmatprep.subr.mxu0 0.0
    %456 = vmatpush1.xpose.msra.mxu0 0.0
    %457 = vmatprep.subr.mxu0 0.0
    %458 = vmatpush1.xpose.msra.mxu0 0.0
    %459 = vmatprep.subr.mxu0 0.0
    %460 = vmatpush1.xpose.msra.mxu0 0.0
    %461 = vmatprep.subr.mxu0 0.0
    %462 = vmatpush1.xpose.msra.mxu0 0.0
    %463 = vmatprep.subr.mxu0 0.0
    %464 = vmatpush1.xpose.msra.mxu0 0.0
    %465 = vmatprep.subr.mxu0 0.0
    %466 = vmatpush1.xpose.msra.mxu0 0.0
    %467 = vmatprep.subr.mxu0 0.0
    %468 = vmatpush1.xpose.msra.mxu0 0.0
    %469 = vmatprep.subr.mxu0 0.0
    %470 = vmatpush1.xpose.msra.mxu0 0.0
    %471 = vmatprep.subr.mxu0 0.0
    %472 = vmatpush1.xpose.msra.mxu0 0.0
    %473 = vmatprep.subr.mxu0 0.0
    %474 = vmatpush1.xpose.msra.mxu0 0.0
    %475 = vmatprep.subr.mxu0 0.0
    %476 = vmatpush1.xpose.msra.mxu0 0.0
    %477 = vmatprep.subr.mxu0 0.0
    %478 = vmatpush1.xpose.msra.mxu0 0.0
    %479 = vmatprep.subr.mxu0 0.0
    %480 = vmatpush1.xpose.msra.mxu0 0.0
    %481 = vmatprep.subr.mxu0 0.0
    %482 = vmatpush1.xpose.msra.mxu0 0.0
    %483 = vmatprep.subr.mxu0 0.0
    %484 = vmatpush1.xpose.msra.mxu0 0.0
    %485 = vmatprep.subr.mxu0 0.0
    %486 = vmatpush1.xpose.msra.mxu0 0.0
    %487 = vmatprep.mubr.f32.mxu0 0.0
    %488 = vmatmul.mubr.f32.gmra.mrb[0].mxu0 %v419
    %v489 = vpop.f32.mrb[0].mxu0
    %v490 = vadd.f32 0.0, %v489
    %v491 = vpop.f32.mrb[0].mxu0
    %492 = vdwg.mxu0
    %v494 = vsel %vm342, %v328, 0
    %v496 = vsel %vm342, %v142, 0
    %498 = vmatprep.subr.mxu0 0.0
    %499 = vmatpush1.xpose.msra.mxu0 %v496
    %500 = vmatprep.subr.mxu0 0.0
    %501 = vmatpush1.xpose.msra.mxu0 0.0
    %502 = vmatprep.subr.mxu0 0.0
    %503 = vmatpush1.xpose.msra.mxu0 0.0
    %504 = vmatprep.subr.mxu0 0.0
    %505 = vmatpush1.xpose.msra.mxu0 0.0
    %506 = vmatprep.subr.mxu0 0.0
    %507 = vmatpush1.xpose.msra.mxu0 0.0
    %508 = vmatprep.subr.mxu0 0.0
    %509 = vmatpush1.xpose.msra.mxu0 0.0
    %510 = vmatprep.subr.mxu0 0.0
    %511 = vmatpush1.xpose.msra.mxu0 0.0
    %512 = vmatprep.subr.mxu0 0.0
    %513 = vmatpush1.xpose.msra.mxu0 0.0
    %514 = vmatprep.subr.mxu0 0.0
    %515 = vmatpush1.xpose.msra.mxu0 0.0
    %516 = vmatprep.subr.mxu0 0.0
    %517 = vmatpush1.xpose.msra.mxu0 0.0
    %518 = vmatprep.subr.mxu0 0.0
    %519 = vmatpush1.xpose.msra.mxu0 0.0
    %520 = vmatprep.subr.mxu0 0.0
    %521 = vmatpush1.xpose.msra.mxu0 0.0
    %522 = vmatprep.subr.mxu0 0.0
    %523 = vmatpush1.xpose.msra.mxu0 0.0
    %524 = vmatprep.subr.mxu0 0.0
    %525 = vmatpush1.xpose.msra.mxu0 0.0
    %526 = vmatprep.subr.mxu0 0.0
    %527 = vmatpush1.xpose.msra.mxu0 0.0
    %528 = vmatprep.subr.mxu0 0.0
    %529 = vmatpush1.xpose.msra.mxu0 0.0
    %530 = vmatprep.subr.mxu0 0.0
    %531 = vmatpush1.xpose.msra.mxu0 0.0
    %532 = vmatprep.subr.mxu0 0.0
    %533 = vmatpush1.xpose.msra.mxu0 0.0
    %534 = vmatprep.subr.mxu0 0.0
    %535 = vmatpush1.xpose.msra.mxu0 0.0
    %536 = vmatprep.subr.mxu0 0.0
    %537 = vmatpush1.xpose.msra.mxu0 0.0
    %538 = vmatprep.subr.mxu0 0.0
    %539 = vmatpush1.xpose.msra.mxu0 0.0
    %540 = vmatprep.subr.mxu0 0.0
    %541 = vmatpush1.xpose.msra.mxu0 0.0
    %542 = vmatprep.subr.mxu0 0.0
    %543 = vmatpush1.xpose.msra.mxu0 0.0
    %544 = vmatprep.subr.mxu0 0.0
    %545 = vmatpush1.xpose.msra.mxu0 0.0
    %546 = vmatprep.subr.mxu0 0.0
    %547 = vmatpush1.xpose.msra.mxu0 0.0
    %548 = vmatprep.subr.mxu0 0.0
    %549 = vmatpush1.xpose.msra.mxu0 0.0
    %550 = vmatprep.subr.mxu0 0.0
    %551 = vmatpush1.xpose.msra.mxu0 0.0
    %552 = vmatprep.subr.mxu0 0.0
    %553 = vmatpush1.xpose.msra.mxu0 0.0
    %554 = vmatprep.subr.mxu0 0.0
    %555 = vmatpush1.xpose.msra.mxu0 0.0
    %556 = vmatprep.subr.mxu0 0.0
    %557 = vmatpush1.xpose.msra.mxu0 0.0
    %558 = vmatprep.subr.mxu0 0.0
    %559 = vmatpush1.xpose.msra.mxu0 0.0
    %560 = vmatprep.subr.mxu0 0.0
    %561 = vmatpush1.xpose.msra.mxu0 0.0
    %562 = vmatprep.mubr.f32.mxu0 0.0
    %563 = vmatmul.mubr.f32.gmra.mrb[0].mxu0 %v494
    %v564 = vpop.f32.mrb[0].mxu0
    %v565 = vadd.f32 0.0, %v564
    %v566 = vpop.f32.mrb[0].mxu0
    %567 = vdwg.mxu0
    %v569 = vsel %vm342, %v329, 0
    %v571 = vsel %vm342, %v147, 0
    %573 = vmatprep.subr.mxu0 0.0
    %574 = vmatpush1.xpose.msra.mxu0 %v571
    %575 = vmatprep.subr.mxu0 0.0
    %576 = vmatpush1.xpose.msra.mxu0 0.0
    %577 = vmatprep.subr.mxu0 0.0
    %578 = vmatpush1.xpose.msra.mxu0 0.0
    %579 = vmatprep.subr.mxu0 0.0
    %580 = vmatpush1.xpose.msra.mxu0 0.0
    %581 = vmatprep.subr.mxu0 0.0
    %582 = vmatpush1.xpose.msra.mxu0 0.0
    %583 = vmatprep.subr.mxu0 0.0
    %584 = vmatpush1.xpose.msra.mxu0 0.0
    %585 = vmatprep.subr.mxu0 0.0
    %586 = vmatpush1.xpose.msra.mxu0 0.0
    %587 = vmatprep.subr.mxu0 0.0
    %588 = vmatpush1.xpose.msra.mxu0 0.0
    %589 = vmatprep.subr.mxu0 0.0
    %590 = vmatpush1.xpose.msra.mxu0 0.0
    %591 = vmatprep.subr.mxu0 0.0
    %592 = vmatpush1.xpose.msra.mxu0 0.0
    %593 = vmatprep.subr.mxu0 0.0
    %594 = vmatpush1.xpose.msra.mxu0 0.0
    %595 = vmatprep.subr.mxu0 0.0
    %596 = vmatpush1.xpose.msra.mxu0 0.0
    %597 = vmatprep.subr.mxu0 0.0
    %598 = vmatpush1.xpose.msra.mxu0 0.0
    %599 = vmatprep.subr.mxu0 0.0
    %600 = vmatpush1.xpose.msra.mxu0 0.0
    %601 = vmatprep.subr.mxu0 0.0
    %602 = vmatpush1.xpose.msra.mxu0 0.0
    %603 = vmatprep.subr.mxu0 0.0
    %604 = vmatpush1.xpose.msra.mxu0 0.0
    %605 = vmatprep.subr.mxu0 0.0
    %606 = vmatpush1.xpose.msra.mxu0 0.0
    %607 = vmatprep.subr.mxu0 0.0
    %608 = vmatpush1.xpose.msra.mxu0 0.0
    %609 = vmatprep.subr.mxu0 0.0
    %610 = vmatpush1.xpose.msra.mxu0 0.0
    %611 = vmatprep.subr.mxu0 0.0
    %612 = vmatpush1.xpose.msra.mxu0 0.0
    %613 = vmatprep.subr.mxu0 0.0
    %614 = vmatpush1.xpose.msra.mxu0 0.0
    %615 = vmatprep.subr.mxu0 0.0
    %616 = vmatpush1.xpose.msra.mxu0 0.0
    %617 = vmatprep.subr.mxu0 0.0
    %618 = vmatpush1.xpose.msra.mxu0 0.0
    %619 = vmatprep.subr.mxu0 0.0
    %620 = vmatpush1.xpose.msra.mxu0 0.0
    %621 = vmatprep.subr.mxu0 0.0
    %622 = vmatpush1.xpose.msra.mxu0 0.0
    %623 = vmatprep.subr.mxu0 0.0
    %624 = vmatpush1.xpose.msra.mxu0 0.0
    %625 = vmatprep.subr.mxu0 0.0
    %626 = vmatpush1.xpose.msra.mxu0 0.0
    %627 = vmatprep.subr.mxu0 0.0
    %628 = vmatpush1.xpose.msra.mxu0 0.0
    %629 = vmatprep.subr.mxu0 0.0
    %630 = vmatpush1.xpose.msra.mxu0 0.0
    %631 = vmatprep.subr.mxu0 0.0
    %632 = vmatpush1.xpose.msra.mxu0 0.0
    %633 = vmatprep.subr.mxu0 0.0
    %634 = vmatpush1.xpose.msra.mxu0 0.0
    %635 = vmatprep.subr.mxu0 0.0
    %636 = vmatpush1.xpose.msra.mxu0 0.0
    %637 = vmatprep.mubr.f32.mxu0 0.0
    %638 = vmatmul.mubr.f32.gmra.mrb[0].mxu0 %v569
    %v639 = vpop.f32.mrb[0].mxu0
    %v640 = vadd.f32 0.0, %v639
    %v641 = vpop.f32.mrb[0].mxu0
    %642 = vdwg.mxu0
    %v644 = vsel %vm342, %v330, 0
    %v646 = vsel %vm342, %v263, 0
    %648 = vmatprep.subr.mxu0 0.0
    %649 = vmatpush1.xpose.msra.mxu0 %v646
    %650 = vmatprep.subr.mxu0 0.0
    %651 = vmatpush1.xpose.msra.mxu0 0.0
    %652 = vmatprep.subr.mxu0 0.0
    %653 = vmatpush1.xpose.msra.mxu0 0.0
    %654 = vmatprep.subr.mxu0 0.0
    %655 = vmatpush1.xpose.msra.mxu0 0.0
    %656 = vmatprep.subr.mxu0 0.0
    %657 = vmatpush1.xpose.msra.mxu0 0.0
    %658 = vmatprep.subr.mxu0 0.0
    %659 = vmatpush1.xpose.msra.mxu0 0.0
    %660 = vmatprep.subr.mxu0 0.0
    %661 = vmatpush1.xpose.msra.mxu0 0.0
    %662 = vmatprep.subr.mxu0 0.0
    %663 = vmatpush1.xpose.msra.mxu0 0.0
    %664 = vmatprep.subr.mxu0 0.0
    %665 = vmatpush1.xpose.msra.mxu0 0.0
    %666 = vmatprep.subr.mxu0 0.0
    %667 = vmatpush1.xpose.msra.mxu0 0.0
    %668 = vmatprep.subr.mxu0 0.0
    %669 = vmatpush1.xpose.msra.mxu0 0.0
    %670 = vmatprep.subr.mxu0 0.0
    %671 = vmatpush1.xpose.msra.mxu0 0.0
    %672 = vmatprep.subr.mxu0 0.0
    %673 = vmatpush1.xpose.msra.mxu0 0.0
    %674 = vmatprep.subr.mxu0 0.0
    %675 = vmatpush1.xpose.msra.mxu0 0.0
    %676 = vmatprep.subr.mxu0 0.0
    %677 = vmatpush1.xpose.msra.mxu0 0.0
    %678 = vmatprep.subr.mxu0 0.0
    %679 = vmatpush1.xpose.msra.mxu0 0.0
    %680 = vmatprep.subr.mxu0 0.0
    %681 = vmatpush1.xpose.msra.mxu0 0.0
    %682 = vmatprep.subr.mxu0 0.0
    %683 = vmatpush1.xpose.msra.mxu0 0.0
    %684 = vmatprep.subr.mxu0 0.0
    %685 = vmatpush1.xpose.msra.mxu0 0.0
    %686 = vmatprep.subr.mxu0 0.0
    %687 = vmatpush1.xpose.msra.mxu0 0.0
    %688 = vmatprep.subr.mxu0 0.0
    %689 = vmatpush1.xpose.msra.mxu0 0.0
    %690 = vmatprep.subr.mxu0 0.0
    %691 = vmatpush1.xpose.msra.mxu0 0.0
    %692 = vmatprep.subr.mxu0 0.0
    %693 = vmatpush1.xpose.msra.mxu0 0.0
    %694 = vmatprep.subr.mxu0 0.0
    %695 = vmatpush1.xpose.msra.mxu0 0.0
    %696 = vmatprep.subr.mxu0 0.0
    %697 = vmatpush1.xpose.msra.mxu0 0.0
    %698 = vmatprep.subr.mxu0 0.0
    %699 = vmatpush1.xpose.msra.mxu0 0.0
    %700 = vmatprep.subr.mxu0 0.0
    %701 = vmatpush1.xpose.msra.mxu0 0.0
    %702 = vmatprep.subr.mxu0 0.0
    %703 = vmatpush1.xpose.msra.mxu0 0.0
    %704 = vmatprep.subr.mxu0 0.0
    %705 = vmatpush1.xpose.msra.mxu0 0.0
    %706 = vmatprep.subr.mxu0 0.0
    %707 = vmatpush1.xpose.msra.mxu0 0.0
    %708 = vmatprep.subr.mxu0 0.0
    %709 = vmatpush1.xpose.msra.mxu0 0.0
    %710 = vmatprep.subr.mxu0 0.0
    %711 = vmatpush1.xpose.msra.mxu0 0.0
    %712 = vmatprep.mubr.f32.mxu0 0.0
    %713 = vmatmul.mubr.f32.gmra.mrb[0].mxu0 %v644
    %v714 = vpop.f32.mrb[0].mxu0
    %v715 = vadd.f32 0.0, %v714
    %v716 = vpop.f32.mrb[0].mxu0
    %717 = vdwg.mxu0
    %v719 = vsel %vm342, %v331, 0
    %v721 = vsel %vm342, %v265, 0
    %723 = vmatprep.subr.mxu0 0.0
    %724 = vmatpush1.xpose.msra.mxu0 %v721
    %725 = vmatprep.subr.mxu0 0.0
    %726 = vmatpush1.xpose.msra.mxu0 0.0
    %727 = vmatprep.subr.mxu0 0.0
    %728 = vmatpush1.xpose.msra.mxu0 0.0
    %729 = vmatprep.subr.mxu0 0.0
    %730 = vmatpush1.xpose.msra.mxu0 0.0
    %731 = vmatprep.subr.mxu0 0.0
    %732 = vmatpush1.xpose.msra.mxu0 0.0
    %733 = vmatprep.subr.mxu0 0.0
    %734 = vmatpush1.xpose.msra.mxu0 0.0
    %735 = vmatprep.subr.mxu0 0.0
    %736 = vmatpush1.xpose.msra.mxu0 0.0
    %737 = vmatprep.subr.mxu0 0.0
    %738 = vmatpush1.xpose.msra.mxu0 0.0
    %739 = vmatprep.subr.mxu0 0.0
    %740 = vmatpush1.xpose.msra.mxu0 0.0
    %741 = vmatprep.subr.mxu0 0.0
    %742 = vmatpush1.xpose.msra.mxu0 0.0
    %743 = vmatprep.subr.mxu0 0.0
    %744 = vmatpush1.xpose.msra.mxu0 0.0
    %745 = vmatprep.subr.mxu0 0.0
    %746 = vmatpush1.xpose.msra.mxu0 0.0
    %747 = vmatprep.subr.mxu0 0.0
    %748 = vmatpush1.xpose.msra.mxu0 0.0
    %749 = vmatprep.subr.mxu0 0.0
    %750 = vmatpush1.xpose.msra.mxu0 0.0
    %751 = vmatprep.subr.mxu0 0.0
    %752 = vmatpush1.xpose.msra.mxu0 0.0
    %753 = vmatprep.subr.mxu0 0.0
    %754 = vmatpush1.xpose.msra.mxu0 0.0
    %755 = vmatprep.subr.mxu0 0.0
    %756 = vmatpush1.xpose.msra.mxu0 0.0
    %757 = vmatprep.subr.mxu0 0.0
    %758 = vmatpush1.xpose.msra.mxu0 0.0
    %759 = vmatprep.subr.mxu0 0.0
    %760 = vmatpush1.xpose.msra.mxu0 0.0
    %761 = vmatprep.subr.mxu0 0.0
    %762 = vmatpush1.xpose.msra.mxu0 0.0
    %763 = vmatprep.subr.mxu0 0.0
    %764 = vmatpush1.xpose.msra.mxu0 0.0
    %765 = vmatprep.subr.mxu0 0.0
    %766 = vmatpush1.xpose.msra.mxu0 0.0
    %767 = vmatprep.subr.mxu0 0.0
    %768 = vmatpush1.xpose.msra.mxu0 0.0
    %769 = vmatprep.subr.mxu0 0.0
    %770 = vmatpush1.xpose.msra.mxu0 0.0
    %771 = vmatprep.subr.mxu0 0.0
    %772 = vmatpush1.xpose.msra.mxu0 0.0
    %773 = vmatprep.subr.mxu0 0.0
    %774 = vmatpush1.xpose.msra.mxu0 0.0
    %775 = vmatprep.subr.mxu0 0.0
    %776 = vmatpush1.xpose.msra.mxu0 0.0
    %777 = vmatprep.subr.mxu0 0.0
    %778 = vmatpush1.xpose.msra.mxu0 0.0
    %779 = vmatprep.subr.mxu0 0.0
    %780 = vmatpush1.xpose.msra.mxu0 0.0
    %781 = vmatprep.subr.mxu0 0.0
    %782 = vmatpush1.xpose.msra.mxu0 0.0
    %783 = vmatprep.subr.mxu0 0.0
    %784 = vmatpush1.xpose.msra.mxu0 0.0
    %785 = vmatprep.subr.mxu0 0.0
    %786 = vmatpush1.xpose.msra.mxu0 0.0
    %787 = vmatprep.mubr.f32.mxu0 0.0
    %788 = vmatmul.mubr.f32.gmra.mrb[0].mxu0 %v719
    %v789 = vpop.f32.mrb[0].mxu0
    %v790 = vadd.f32 0.0, %v789
    %v791 = vpop.f32.mrb[0].mxu0
    %792 = vdwg.mxu0
    %v794 = vsel %vm342, %v332, 0
    %v796 = vsel %vm342, %v267, 0
    %798 = vmatprep.subr.mxu0 0.0
    %799 = vmatpush1.xpose.msra.mxu0 %v796
    %800 = vmatprep.subr.mxu0 0.0
    %801 = vmatpush1.xpose.msra.mxu0 0.0
    %802 = vmatprep.subr.mxu0 0.0
    %803 = vmatpush1.xpose.msra.mxu0 0.0
    %804 = vmatprep.subr.mxu0 0.0
    %805 = vmatpush1.xpose.msra.mxu0 0.0
    %806 = vmatprep.subr.mxu0 0.0
    %807 = vmatpush1.xpose.msra.mxu0 0.0
    %808 = vmatprep.subr.mxu0 0.0
    %809 = vmatpush1.xpose.msra.mxu0 0.0
    %810 = vmatprep.subr.mxu0 0.0
    %811 = vmatpush1.xpose.msra.mxu0 0.0
    %812 = vmatprep.subr.mxu0 0.0
    %813 = vmatpush1.xpose.msra.mxu0 0.0
    %814 = vmatprep.subr.mxu0 0.0
    %815 = vmatpush1.xpose.msra.mxu0 0.0
    %816 = vmatprep.subr.mxu0 0.0
    %817 = vmatpush1.xpose.msra.mxu0 0.0
    %818 = vmatprep.subr.mxu0 0.0
    %819 = vmatpush1.xpose.msra.mxu0 0.0
    %820 = vmatprep.subr.mxu0 0.0
    %821 = vmatpush1.xpose.msra.mxu0 0.0
    %822 = vmatprep.subr.mxu0 0.0
    %823 = vmatpush1.xpose.msra.mxu0 0.0
    %824 = vmatprep.subr.mxu0 0.0
    %825 = vmatpush1.xpose.msra.mxu0 0.0
    %826 = vmatprep.subr.mxu0 0.0
    %827 = vmatpush1.xpose.msra.mxu0 0.0
    %828 = vmatprep.subr.mxu0 0.0
    %829 = vmatpush1.xpose.msra.mxu0 0.0
    %830 = vmatprep.subr.mxu0 0.0
    %831 = vmatpush1.xpose.msra.mxu0 0.0
    %832 = vmatprep.subr.mxu0 0.0
    %833 = vmatpush1.xpose.msra.mxu0 0.0
    %834 = vmatprep.subr.mxu0 0.0
    %835 = vmatpush1.xpose.msra.mxu0 0.0
    %836 = vmatprep.subr.mxu0 0.0
    %837 = vmatpush1.xpose.msra.mxu0 0.0
    %838 = vmatprep.subr.mxu0 0.0
    %839 = vmatpush1.xpose.msra.mxu0 0.0
    %840 = vmatprep.subr.mxu0 0.0
    %841 = vmatpush1.xpose.msra.mxu0 0.0
    %842 = vmatprep.subr.mxu0 0.0
    %843 = vmatpush1.xpose.msra.mxu0 0.0
    %844 = vmatprep.subr.mxu0 0.0
    %845 = vmatpush1.xpose.msra.mxu0 0.0
    %846 = vmatprep.subr.mxu0 0.0
    %847 = vmatpush1.xpose.msra.mxu0 0.0
    %848 = vmatprep.subr.mxu0 0.0
    %849 = vmatpush1.xpose.msra.mxu0 0.0
    %850 = vmatprep.subr.mxu0 0.0
    %851 = vmatpush1.xpose.msra.mxu0 0.0
    %852 = vmatprep.subr.mxu0 0.0
    %853 = vmatpush1.xpose.msra.mxu0 0.0
    %854 = vmatprep.subr.mxu0 0.0
    %855 = vmatpush1.xpose.msra.mxu0 0.0
    %856 = vmatprep.subr.mxu0 0.0
    %857 = vmatpush1.xpose.msra.mxu0 0.0
    %858 = vmatprep.subr.mxu0 0.0
    %859 = vmatpush1.xpose.msra.mxu0 0.0
    %860 = vmatprep.subr.mxu0 0.0
    %861 = vmatpush1.xpose.msra.mxu0 0.0
    %862 = vmatprep.mubr.f32.mxu0 0.0
    %863 = vmatmul.mubr.f32.gmra.mrb[0].mxu0 %v794
    %v864 = vpop.f32.mrb[0].mxu0
    %v865 = vadd.f32 0.0, %v864
    %v866 = vpop.f32.mrb[0].mxu0
    %867 = vdwg.mxu0
    %v869 = vsel %vm342, %v333, 0
    %v871 = vsel %vm342, %v269, 0
    %873 = vmatprep.subr.mxu0 0.0
    %874 = vmatpush1.xpose.msra.mxu0 %v871
    %875 = vmatprep.subr.mxu0 0.0
    %876 = vmatpush1.xpose.msra.mxu0 0.0
    %877 = vmatprep.subr.mxu0 0.0
    %878 = vmatpush1.xpose.msra.mxu0 0.0
    %879 = vmatprep.subr.mxu0 0.0
    %880 = vmatpush1.xpose.msra.mxu0 0.0
    %881 = vmatprep.subr.mxu0 0.0
    %882 = vmatpush1.xpose.msra.mxu0 0.0
    %883 = vmatprep.subr.mxu0 0.0
    %884 = vmatpush1.xpose.msra.mxu0 0.0
    %885 = vmatprep.subr.mxu0 0.0
    %886 = vmatpush1.xpose.msra.mxu0 0.0
    %887 = vmatprep.subr.mxu0 0.0
    %888 = vmatpush1.xpose.msra.mxu0 0.0
    %889 = vmatprep.subr.mxu0 0.0
    %890 = vmatpush1.xpose.msra.mxu0 0.0
    %891 = vmatprep.subr.mxu0 0.0
    %892 = vmatpush1.xpose.msra.mxu0 0.0
    %893 = vmatprep.subr.mxu0 0.0
    %894 = vmatpush1.xpose.msra.mxu0 0.0
    %895 = vmatprep.subr.mxu0 0.0
    %896 = vmatpush1.xpose.msra.mxu0 0.0
    %897 = vmatprep.subr.mxu0 0.0
    %898 = vmatpush1.xpose.msra.mxu0 0.0
    %899 = vmatprep.subr.mxu0 0.0
    %900 = vmatpush1.xpose.msra.mxu0 0.0
    %901 = vmatprep.subr.mxu0 0.0
    %902 = vmatpush1.xpose.msra.mxu0 0.0
    %903 = vmatprep.subr.mxu0 0.0
    %904 = vmatpush1.xpose.msra.mxu0 0.0
    %905 = vmatprep.subr.mxu0 0.0
    %906 = vmatpush1.xpose.msra.mxu0 0.0
    %907 = vmatprep.subr.mxu0 0.0
    %908 = vmatpush1.xpose.msra.mxu0 0.0
    %909 = vmatprep.subr.mxu0 0.0
    %910 = vmatpush1.xpose.msra.mxu0 0.0
    %911 = vmatprep.subr.mxu0 0.0
    %912 = vmatpush1.xpose.msra.mxu0 0.0
    %913 = vmatprep.subr.mxu0 0.0
    %914 = vmatpush1.xpose.msra.mxu0 0.0
    %915 = vmatprep.subr.mxu0 0.0
    %916 = vmatpush1.xpose.msra.mxu0 0.0
    %917 = vmatprep.subr.mxu0 0.0
    %918 = vmatpush1.xpose.msra.mxu0 0.0
    %919 = vmatprep.subr.mxu0 0.0
    %920 = vmatpush1.xpose.msra.mxu0 0.0
    %921 = vmatprep.subr.mxu0 0.0
    %922 = vmatpush1.xpose.msra.mxu0 0.0
    %923 = vmatprep.subr.mxu0 0.0
    %924 = vmatpush1.xpose.msra.mxu0 0.0
    %925 = vmatprep.subr.mxu0 0.0
    %926 = vmatpush1.xpose.msra.mxu0 0.0
    %927 = vmatprep.subr.mxu0 0.0
    %928 = vmatpush1.xpose.msra.mxu0 0.0
    %929 = vmatprep.subr.mxu0 0.0
    %930 = vmatpush1.xpose.msra.mxu0 0.0
    %931 = vmatprep.subr.mxu0 0.0
    %932 = vmatpush1.xpose.msra.mxu0 0.0
    %933 = vmatprep.subr.mxu0 0.0
    %934 = vmatpush1.xpose.msra.mxu0 0.0
    %935 = vmatprep.subr.mxu0 0.0
    %936 = vmatpush1.xpose.msra.mxu0 0.0
    %937 = vmatprep.mubr.f32.mxu0 0.0
    %938 = vmatmul.mubr.f32.gmra.mrb[0].mxu0 %v869
    %v939 = vpop.f32.mrb[0].mxu0
    %v940 = vadd.f32 0.0, %v939
    %v941 = vpop.f32.mrb[0].mxu0
    %942 = vdwg.mxu0
    %v944 = vsel %vm342, %v334, 0
    %v946 = vsel %vm342, %v271, 0
    %948 = vmatprep.subr.mxu0 0.0
    %949 = vmatpush1.xpose.msra.mxu0 %v946
    %950 = vmatprep.subr.mxu0 0.0
    %951 = vmatpush1.xpose.msra.mxu0 0.0
    %952 = vmatprep.subr.mxu0 0.0
    %953 = vmatpush1.xpose.msra.mxu0 0.0
    %954 = vmatprep.subr.mxu0 0.0
    %955 = vmatpush1.xpose.msra.mxu0 0.0
    %956 = vmatprep.subr.mxu0 0.0
    %957 = vmatpush1.xpose.msra.mxu0 0.0
    %958 = vmatprep.subr.mxu0 0.0
    %959 = vmatpush1.xpose.msra.mxu0 0.0
    %960 = vmatprep.subr.mxu0 0.0
    %961 = vmatpush1.xpose.msra.mxu0 0.0
    %962 = vmatprep.subr.mxu0 0.0
    %963 = vmatpush1.xpose.msra.mxu0 0.0
    %964 = vmatprep.subr.mxu0 0.0
    %965 = vmatpush1.xpose.msra.mxu0 0.0
    %966 = vmatprep.subr.mxu0 0.0
    %967 = vmatpush1.xpose.msra.mxu0 0.0
    %968 = vmatprep.subr.mxu0 0.0
    %969 = vmatpush1.xpose.msra.mxu0 0.0
    %970 = vmatprep.subr.mxu0 0.0
    %971 = vmatpush1.xpose.msra.mxu0 0.0
    %972 = vmatprep.subr.mxu0 0.0
    %973 = vmatpush1.xpose.msra.mxu0 0.0
    %974 = vmatprep.subr.mxu0 0.0
    %975 = vmatpush1.xpose.msra.mxu0 0.0
    %976 = vmatprep.subr.mxu0 0.0
    %977 = vmatpush1.xpose.msra.mxu0 0.0
    %978 = vmatprep.subr.mxu0 0.0
    %979 = vmatpush1.xpose.msra.mxu0 0.0
    %980 = vmatprep.subr.mxu0 0.0
    %981 = vmatpush1.xpose.msra.mxu0 0.0
    %982 = vmatprep.subr.mxu0 0.0
    %983 = vmatpush1.xpose.msra.mxu0 0.0
    %984 = vmatprep.subr.mxu0 0.0
    %985 = vmatpush1.xpose.msra.mxu0 0.0
    %986 = vmatprep.subr.mxu0 0.0
    %987 = vmatpush1.xpose.msra.mxu0 0.0
    %988 = vmatprep.subr.mxu0 0.0
    %989 = vmatpush1.xpose.msra.mxu0 0.0
    %990 = vmatprep.subr.mxu0 0.0
    %991 = vmatpush1.xpose.msra.mxu0 0.0
    %992 = vmatprep.subr.mxu0 0.0
    %993 = vmatpush1.xpose.msra.mxu0 0.0
    %994 = vmatprep.subr.mxu0 0.0
    %995 = vmatpush1.xpose.msra.mxu0 0.0
    %996 = vmatprep.subr.mxu0 0.0
    %997 = vmatpush1.xpose.msra.mxu0 0.0
    %998 = vmatprep.subr.mxu0 0.0
    %999 = vmatpush1.xpose.msra.mxu0 0.0
    %1000 = vmatprep.subr.mxu0 0.0
    %1001 = vmatpush1.xpose.msra.mxu0 0.0
    %1002 = vmatprep.subr.mxu0 0.0
    %1003 = vmatpush1.xpose.msra.mxu0 0.0
    %1004 = vmatprep.subr.mxu0 0.0
    %1005 = vmatpush1.xpose.msra.mxu0 0.0
    %1006 = vmatprep.subr.mxu0 0.0
    %1007 = vmatpush1.xpose.msra.mxu0 0.0
    %1008 = vmatprep.subr.mxu0 0.0
    %1009 = vmatpush1.xpose.msra.mxu0 0.0
    %1010 = vmatprep.subr.mxu0 0.0
    %1011 = vmatpush1.xpose.msra.mxu0 0.0
    %1012 = vmatprep.mubr.f32.mxu0 0.0
    %1013 = vmatmul.mubr.f32.gmra.mrb[0].mxu0 %v944
    %v1014 = vpop.f32.mrb[0].mxu0
    %v1015 = vadd.f32 0.0, %v1014
    %v1016 = vpop.f32.mrb[0].mxu0
    %1017 = vdwg.mxu0
    %v1019 = vsel %vm342, %v335, 0
    %v1021 = vsel %vm342, %v273, 0
    %1023 = vmatprep.subr.mxu0 0.0
    %1024 = vmatpush1.xpose.msra.mxu0 %v1021
    %1025 = vmatprep.subr.mxu0 0.0
    %1026 = vmatpush1.xpose.msra.mxu0 0.0
    %1027 = vmatprep.subr.mxu0 0.0
    %1028 = vmatpush1.xpose.msra.mxu0 0.0
    %1029 = vmatprep.subr.mxu0 0.0
    %1030 = vmatpush1.xpose.msra.mxu0 0.0
    %1031 = vmatprep.subr.mxu0 0.0
    %1032 = vmatpush1.xpose.msra.mxu0 0.0
    %1033 = vmatprep.subr.mxu0 0.0
    %1034 = vmatpush1.xpose.msra.mxu0 0.0
    %1035 = vmatprep.subr.mxu0 0.0
    %1036 = vmatpush1.xpose.msra.mxu0 0.0
    %1037 = vmatprep.subr.mxu0 0.0
    %1038 = vmatpush1.xpose.msra.mxu0 0.0
    %1039 = vmatprep.subr.mxu0 0.0
    %1040 = vmatpush1.xpose.msra.mxu0 0.0
    %1041 = vmatprep.subr.mxu0 0.0
    %1042 = vmatpush1.xpose.msra.mxu0 0.0
    %1043 = vmatprep.subr.mxu0 0.0
    %1044 = vmatpush1.xpose.msra.mxu0 0.0
    %1045 = vmatprep.subr.mxu0 0.0
    %1046 = vmatpush1.xpose.msra.mxu0 0.0
    %1047 = vmatprep.subr.mxu0 0.0
    %1048 = vmatpush1.xpose.msra.mxu0 0.0
    %1049 = vmatprep.subr.mxu0 0.0
    %1050 = vmatpush1.xpose.msra.mxu0 0.0
    %1051 = vmatprep.subr.mxu0 0.0
    %1052 = vmatpush1.xpose.msra.mxu0 0.0
    %1053 = vmatprep.subr.mxu0 0.0
    %1054 = vmatpush1.xpose.msra.mxu0 0.0
    %1055 = vmatprep.subr.mxu0 0.0
    %1056 = vmatpush1.xpose.msra.mxu0 0.0
    %1057 = vmatprep.subr.mxu0 0.0
    %1058 = vmatpush1.xpose.msra.mxu0 0.0
    %1059 = vmatprep.subr.mxu0 0.0
    %1060 = vmatpush1.xpose.msra.mxu0 0.0
    %1061 = vmatprep.subr.mxu0 0.0
    %1062 = vmatpush1.xpose.msra.mxu0 0.0
    %1063 = vmatprep.subr.mxu0 0.0
    %1064 = vmatpush1.xpose.msra.mxu0 0.0
    %1065 = vmatprep.subr.mxu0 0.0
    %1066 = vmatpush1.xpose.msra.mxu0 0.0
    %1067 = vmatprep.subr.mxu0 0.0
    %1068 = vmatpush1.xpose.msra.mxu0 0.0
    %1069 = vmatprep.subr.mxu0 0.0
    %1070 = vmatpush1.xpose.msra.mxu0 0.0
    %1071 = vmatprep.subr.mxu0 0.0
    %1072 = vmatpush1.xpose.msra.mxu0 0.0
    %1073 = vmatprep.subr.mxu0 0.0
    %1074 = vmatpush1.xpose.msra.mxu0 0.0
    %1075 = vmatprep.subr.mxu0 0.0
    %1076 = vmatpush1.xpose.msra.mxu0 0.0
    %1077 = vmatprep.subr.mxu0 0.0
    %1078 = vmatpush1.xpose.msra.mxu0 0.0
    %1079 = vmatprep.subr.mxu0 0.0
    %1080 = vmatpush1.xpose.msra.mxu0 0.0
    %1081 = vmatprep.subr.mxu0 0.0
    %1082 = vmatpush1.xpose.msra.mxu0 0.0
    %1083 = vmatprep.subr.mxu0 0.0
    %1084 = vmatpush1.xpose.msra.mxu0 0.0
    %1085 = vmatprep.subr.mxu0 0.0
    %1086 = vmatpush1.xpose.msra.mxu0 0.0
    %1087 = vmatprep.mubr.f32.mxu0 0.0
    %1088 = vmatmul.mubr.f32.gmra.mrb[0].mxu0 %v1019
    %v1089 = vpop.f32.mrb[0].mxu0
    %v1090 = vadd.f32 0.0, %v1089
    %v1091 = vpop.f32.mrb[0].mxu0
    %1092 = vdwg.mxu0
    %v1094 = vsel %vm342, %v336, 0
    %v1096 = vsel %vm342, %v275, 0
    %1098 = vmatprep.subr.mxu0 0.0
    %1099 = vmatpush1.xpose.msra.mxu0 %v1096
    %1100 = vmatprep.subr.mxu0 0.0
    %1101 = vmatpush1.xpose.msra.mxu0 0.0
    %1102 = vmatprep.subr.mxu0 0.0
    %1103 = vmatpush1.xpose.msra.mxu0 0.0
    %1104 = vmatprep.subr.mxu0 0.0
    %1105 = vmatpush1.xpose.msra.mxu0 0.0
    %1106 = vmatprep.subr.mxu0 0.0
    %1107 = vmatpush1.xpose.msra.mxu0 0.0
    %1108 = vmatprep.subr.mxu0 0.0
    %1109 = vmatpush1.xpose.msra.mxu0 0.0
    %1110 = vmatprep.subr.mxu0 0.0
    %1111 = vmatpush1.xpose.msra.mxu0 0.0
    %1112 = vmatprep.subr.mxu0 0.0
    %1113 = vmatpush1.xpose.msra.mxu0 0.0
    %1114 = vmatprep.subr.mxu0 0.0
    %1115 = vmatpush1.xpose.msra.mxu0 0.0
    %1116 = vmatprep.subr.mxu0 0.0
    %1117 = vmatpush1.xpose.msra.mxu0 0.0
    %1118 = vmatprep.subr.mxu0 0.0
    %1119 = vmatpush1.xpose.msra.mxu0 0.0
    %1120 = vmatprep.subr.mxu0 0.0
    %1121 = vmatpush1.xpose.msra.mxu0 0.0
    %1122 = vmatprep.subr.mxu0 0.0
    %1123 = vmatpush1.xpose.msra.mxu0 0.0
    %1124 = vmatprep.subr.mxu0 0.0
    %1125 = vmatpush1.xpose.msra.mxu0 0.0
    %1126 = vmatprep.subr.mxu0 0.0
    %1127 = vmatpush1.xpose.msra.mxu0 0.0
    %1128 = vmatprep.subr.mxu0 0.0
    %1129 = vmatpush1.xpose.msra.mxu0 0.0
    %1130 = vmatprep.subr.mxu0 0.0
    %1131 = vmatpush1.xpose.msra.mxu0 0.0
    %1132 = vmatprep.subr.mxu0 0.0
    %1133 = vmatpush1.xpose.msra.mxu0 0.0
    %1134 = vmatprep.subr.mxu0 0.0
    %1135 = vmatpush1.xpose.msra.mxu0 0.0
    %1136 = vmatprep.subr.mxu0 0.0
    %1137 = vmatpush1.xpose.msra.mxu0 0.0
    %1138 = vmatprep.subr.mxu0 0.0
    %1139 = vmatpush1.xpose.msra.mxu0 0.0
    %1140 = vmatprep.subr.mxu0 0.0
    %1141 = vmatpush1.xpose.msra.mxu0 0.0
    %1142 = vmatprep.subr.mxu0 0.0
    %1143 = vmatpush1.xpose.msra.mxu0 0.0
    %1144 = vmatprep.subr.mxu0 0.0
    %1145 = vmatpush1.xpose.msra.mxu0 0.0
    %1146 = vmatprep.subr.mxu0 0.0
    %1147 = vmatpush1.xpose.msra.mxu0 0.0
    %1148 = vmatprep.subr.mxu0 0.0
    %1149 = vmatpush1.xpose.msra.mxu0 0.0
    %1150 = vmatprep.subr.mxu0 0.0
    %1151 = vmatpush1.xpose.msra.mxu0 0.0
    %1152 = vmatprep.subr.mxu0 0.0
    %1153 = vmatpush1.xpose.msra.mxu0 0.0
    %1154 = vmatprep.subr.mxu0 0.0
    %1155 = vmatpush1.xpose.msra.mxu0 0.0
    %1156 = vmatprep.subr.mxu0 0.0
    %1157 = vmatpush1.xpose.msra.mxu0 0.0
    %1158 = vmatprep.subr.mxu0 0.0
    %1159 = vmatpush1.xpose.msra.mxu0 0.0
    %1160 = vmatprep.subr.mxu0 0.0
    %1161 = vmatpush1.xpose.msra.mxu0 0.0
    %1162 = vmatprep.mubr.f32.mxu0 0.0
    %1163 = vmatmul.mubr.f32.gmra.mrb[0].mxu0 %v1094
    %v1164 = vpop.f32.mrb[0].mxu0
    %v1165 = vadd.f32 0.0, %v1164
    %v1166 = vpop.f32.mrb[0].mxu0
    %1167 = vdwg.mxu0
    %v1169 = vsel %vm342, %v337, 0
    %v1171 = vsel %vm342, %v277, 0
    %1173 = vmatprep.subr.mxu0 0.0
    %1174 = vmatpush1.xpose.msra.mxu0 %v1171
    %1175 = vmatprep.subr.mxu0 0.0
    %1176 = vmatpush1.xpose.msra.mxu0 0.0
    %1177 = vmatprep.subr.mxu0 0.0
    %1178 = vmatpush1.xpose.msra.mxu0 0.0
    %1179 = vmatprep.subr.mxu0 0.0
    %1180 = vmatpush1.xpose.msra.mxu0 0.0
    %1181 = vmatprep.subr.mxu0 0.0
    %1182 = vmatpush1.xpose.msra.mxu0 0.0
    %1183 = vmatprep.subr.mxu0 0.0
    %1184 = vmatpush1.xpose.msra.mxu0 0.0
    %1185 = vmatprep.subr.mxu0 0.0
    %1186 = vmatpush1.xpose.msra.mxu0 0.0
    %1187 = vmatprep.subr.mxu0 0.0
    %1188 = vmatpush1.xpose.msra.mxu0 0.0
    %1189 = vmatprep.subr.mxu0 0.0
    %1190 = vmatpush1.xpose.msra.mxu0 0.0
    %1191 = vmatprep.subr.mxu0 0.0
    %1192 = vmatpush1.xpose.msra.mxu0 0.0
    %1193 = vmatprep.subr.mxu0 0.0
    %1194 = vmatpush1.xpose.msra.mxu0 0.0
    %1195 = vmatprep.subr.mxu0 0.0
    %1196 = vmatpush1.xpose.msra.mxu0 0.0
    %1197 = vmatprep.subr.mxu0 0.0
    %1198 = vmatpush1.xpose.msra.mxu0 0.0
    %1199 = vmatprep.subr.mxu0 0.0
    %1200 = vmatpush1.xpose.msra.mxu0 0.0
    %1201 = vmatprep.subr.mxu0 0.0
    %1202 = vmatpush1.xpose.msra.mxu0 0.0
    %1203 = vmatprep.subr.mxu0 0.0
    %1204 = vmatpush1.xpose.msra.mxu0 0.0
    %1205 = vmatprep.subr.mxu0 0.0
    %1206 = vmatpush1.xpose.msra.mxu0 0.0
    %1207 = vmatprep.subr.mxu0 0.0
    %1208 = vmatpush1.xpose.msra.mxu0 0.0
    %1209 = vmatprep.subr.mxu0 0.0
    %1210 = vmatpush1.xpose.msra.mxu0 0.0
    %1211 = vmatprep.subr.mxu0 0.0
    %1212 = vmatpush1.xpose.msra.mxu0 0.0
    %1213 = vmatprep.subr.mxu0 0.0
    %1214 = vmatpush1.xpose.msra.mxu0 0.0
    %1215 = vmatprep.subr.mxu0 0.0
    %1216 = vmatpush1.xpose.msra.mxu0 0.0
    %1217 = vmatprep.subr.mxu0 0.0
    %1218 = vmatpush1.xpose.msra.mxu0 0.0
    %1219 = vmatprep.subr.mxu0 0.0
    %1220 = vmatpush1.xpose.msra.mxu0 0.0
    %1221 = vmatprep.subr.mxu0 0.0
    %1222 = vmatpush1.xpose.msra.mxu0 0.0
    %1223 = vmatprep.subr.mxu0 0.0
    %1224 = vmatpush1.xpose.msra.mxu0 0.0
    %1225 = vmatprep.subr.mxu0 0.0
    %1226 = vmatpush1.xpose.msra.mxu0 0.0
    %1227 = vmatprep.subr.mxu0 0.0
    %1228 = vmatpush1.xpose.msra.mxu0 0.0
    %1229 = vmatprep.subr.mxu0 0.0
    %1230 = vmatpush1.xpose.msra.mxu0 0.0
    %1231 = vmatprep.subr.mxu0 0.0
    %1232 = vmatpush1.xpose.msra.mxu0 0.0
    %1233 = vmatprep.subr.mxu0 0.0
    %1234 = vmatpush1.xpose.msra.mxu0 0.0
    %1235 = vmatprep.subr.mxu0 0.0
    %1236 = vmatpush1.xpose.msra.mxu0 0.0
    %1237 = vmatprep.mubr.f32.mxu0 0.0
    %1238 = vmatmul.mubr.f32.gmra.mrb[0].mxu0 %v1169
    %v1239 = vpop.f32.mrb[0].mxu0
    %v1240 = vadd.f32 0.0, %v1239
    %v1241 = vpop.f32.mrb[0].mxu0
    %1242 = vdwg.mxu0
    %v1244 = vsel %vm342, %v338, 0
    %v1246 = vsel %vm342, %v279, 0
    %1248 = vmatprep.subr.mxu0 0.0
    %1249 = vmatpush1.xpose.msra.mxu0 %v1246
    %1250 = vmatprep.subr.mxu0 0.0
    %1251 = vmatpush1.xpose.msra.mxu0 0.0
    %1252 = vmatprep.subr.mxu0 0.0
    %1253 = vmatpush1.xpose.msra.mxu0 0.0
    %1254 = vmatprep.subr.mxu0 0.0
    %1255 = vmatpush1.xpose.msra.mxu0 0.0
    %1256 = vmatprep.subr.mxu0 0.0
    %1257 = vmatpush1.xpose.msra.mxu0 0.0
    %1258 = vmatprep.subr.mxu0 0.0
    %1259 = vmatpush1.xpose.msra.mxu0 0.0
    %1260 = vmatprep.subr.mxu0 0.0
    %1261 = vmatpush1.xpose.msra.mxu0 0.0
    %1262 = vmatprep.subr.mxu0 0.0
    %1263 = vmatpush1.xpose.msra.mxu0 0.0
    %1264 = vmatprep.subr.mxu0 0.0
    %1265 = vmatpush1.xpose.msra.mxu0 0.0
    %1266 = vmatprep.subr.mxu0 0.0
    %1267 = vmatpush1.xpose.msra.mxu0 0.0
    %1268 = vmatprep.subr.mxu0 0.0
    %1269 = vmatpush1.xpose.msra.mxu0 0.0
    %1270 = vmatprep.subr.mxu0 0.0
    %1271 = vmatpush1.xpose.msra.mxu0 0.0
    %1272 = vmatprep.subr.mxu0 0.0
    %1273 = vmatpush1.xpose.msra.mxu0 0.0
    %1274 = vmatprep.subr.mxu0 0.0
    %1275 = vmatpush1.xpose.msra.mxu0 0.0
    %1276 = vmatprep.subr.mxu0 0.0
    %1277 = vmatpush1.xpose.msra.mxu0 0.0
    %1278 = vmatprep.subr.mxu0 0.0
    %1279 = vmatpush1.xpose.msra.mxu0 0.0
    %1280 = vmatprep.subr.mxu0 0.0
    %1281 = vmatpush1.xpose.msra.mxu0 0.0
    %1282 = vmatprep.subr.mxu0 0.0
    %1283 = vmatpush1.xpose.msra.mxu0 0.0
    %1284 = vmatprep.subr.mxu0 0.0
    %1285 = vmatpush1.xpose.msra.mxu0 0.0
    %1286 = vmatprep.subr.mxu0 0.0
    %1287 = vmatpush1.xpose.msra.mxu0 0.0
    %1288 = vmatprep.subr.mxu0 0.0
    %1289 = vmatpush1.xpose.msra.mxu0 0.0
    %1290 = vmatprep.subr.mxu0 0.0
    %1291 = vmatpush1.xpose.msra.mxu0 0.0
    %1292 = vmatprep.subr.mxu0 0.0
    %1293 = vmatpush1.xpose.msra.mxu0 0.0
    %1294 = vmatprep.subr.mxu0 0.0
    %1295 = vmatpush1.xpose.msra.mxu0 0.0
    %1296 = vmatprep.subr.mxu0 0.0
    %1297 = vmatpush1.xpose.msra.mxu0 0.0
    %1298 = vmatprep.subr.mxu0 0.0
    %1299 = vmatpush1.xpose.msra.mxu0 0.0
    %1300 = vmatprep.subr.mxu0 0.0
    %1301 = vmatpush1.xpose.msra.mxu0 0.0
    %1302 = vmatprep.subr.mxu0 0.0
    %1303 = vmatpush1.xpose.msra.mxu0 0.0
    %1304 = vmatprep.subr.mxu0 0.0
    %1305 = vmatpush1.xpose.msra.mxu0 0.0
    %1306 = vmatprep.subr.mxu0 0.0
    %1307 = vmatpush1.xpose.msra.mxu0 0.0
    %1308 = vmatprep.subr.mxu0 0.0
    %1309 = vmatpush1.xpose.msra.mxu0 0.0
    %1310 = vmatprep.subr.mxu0 0.0
    %1311 = vmatpush1.xpose.msra.mxu0 0.0
    %1312 = vmatprep.mubr.f32.mxu0 0.0
    %1313 = vmatmul.mubr.f32.gmra.mrb[0].mxu0 %v1244
    %v1314 = vpop.f32.mrb[0].mxu0
    %v1315 = vadd.f32 0.0, %v1314
    %v1316 = vpop.f32.mrb[0].mxu0
    %1317 = vdwg.mxu0
    %v1319 = vsel %vm342, %v339, 0
    %v1321 = vsel %vm342, %v281, 0
    %1323 = vmatprep.subr.mxu0 0.0
    %1324 = vmatpush1.xpose.msra.mxu0 %v1321
    %1325 = vmatprep.subr.mxu0 0.0
    %1326 = vmatpush1.xpose.msra.mxu0 0.0
    %1327 = vmatprep.subr.mxu0 0.0
    %1328 = vmatpush1.xpose.msra.mxu0 0.0
    %1329 = vmatprep.subr.mxu0 0.0
    %1330 = vmatpush1.xpose.msra.mxu0 0.0
    %1331 = vmatprep.subr.mxu0 0.0
    %1332 = vmatpush1.xpose.msra.mxu0 0.0
    %1333 = vmatprep.subr.mxu0 0.0
    %1334 = vmatpush1.xpose.msra.mxu0 0.0
    %1335 = vmatprep.subr.mxu0 0.0
    %1336 = vmatpush1.xpose.msra.mxu0 0.0
    %1337 = vmatprep.subr.mxu0 0.0
    %1338 = vmatpush1.xpose.msra.mxu0 0.0
    %1339 = vmatprep.subr.mxu0 0.0
    %1340 = vmatpush1.xpose.msra.mxu0 0.0
    %1341 = vmatprep.subr.mxu0 0.0
    %1342 = vmatpush1.xpose.msra.mxu0 0.0
    %1343 = vmatprep.subr.mxu0 0.0
    %1344 = vmatpush1.xpose.msra.mxu0 0.0
    %1345 = vmatprep.subr.mxu0 0.0
    %1346 = vmatpush1.xpose.msra.mxu0 0.0
    %1347 = vmatprep.subr.mxu0 0.0
    %1348 = vmatpush1.xpose.msra.mxu0 0.0
    %1349 = vmatprep.subr.mxu0 0.0
    %1350 = vmatpush1.xpose.msra.mxu0 0.0
    %1351 = vmatprep.subr.mxu0 0.0
    %1352 = vmatpush1.xpose.msra.mxu0 0.0
    %1353 = vmatprep.subr.mxu0 0.0
    %1354 = vmatpush1.xpose.msra.mxu0 0.0
    %1355 = vmatprep.subr.mxu0 0.0
    %1356 = vmatpush1.xpose.msra.mxu0 0.0
    %1357 = vmatprep.subr.mxu0 0.0
    %1358 = vmatpush1.xpose.msra.mxu0 0.0
    %1359 = vmatprep.subr.mxu0 0.0
    %1360 = vmatpush1.xpose.msra.mxu0 0.0
    %1361 = vmatprep.subr.mxu0 0.0
    %1362 = vmatpush1.xpose.msra.mxu0 0.0
    %1363 = vmatprep.subr.mxu0 0.0
    %1364 = vmatpush1.xpose.msra.mxu0 0.0
    %1365 = vmatprep.subr.mxu0 0.0
    %1366 = vmatpush1.xpose.msra.mxu0 0.0
    %1367 = vmatprep.subr.mxu0 0.0
    %1368 = vmatpush1.xpose.msra.mxu0 0.0
    %1369 = vmatprep.subr.mxu0 0.0
    %1370 = vmatpush1.xpose.msra.mxu0 0.0
    %1371 = vmatprep.subr.mxu0 0.0
    %1372 = vmatpush1.xpose.msra.mxu0 0.0
    %1373 = vmatprep.subr.mxu0 0.0
    %1374 = vmatpush1.xpose.msra.mxu0 0.0
    %1375 = vmatprep.subr.mxu0 0.0
    %1376 = vmatpush1.xpose.msra.mxu0 0.0
    %1377 = vmatprep.subr.mxu0 0.0
    %1378 = vmatpush1.xpose.msra.mxu0 0.0
    %1379 = vmatprep.subr.mxu0 0.0
    %1380 = vmatpush1.xpose.msra.mxu0 0.0
    %1381 = vmatprep.subr.mxu0 0.0
    %1382 = vmatpush1.xpose.msra.mxu0 0.0
    %1383 = vmatprep.subr.mxu0 0.0
    %1384 = vmatpush1.xpose.msra.mxu0 0.0
    %1385 = vmatprep.subr.mxu0 0.0
    %1386 = vmatpush1.xpose.msra.mxu0 0.0
    %1387 = vmatprep.mubr.f32.mxu0 0.0
    %1388 = vmatmul.mubr.f32.gmra.mrb[0].mxu0 %v1319
    %v1389 = vpop.f32.mrb[0].mxu0
    %v1390 = vadd.f32 0.0, %v1389
    %v1391 = vpop.f32.mrb[0].mxu0
    %1392 = vdwg.mxu0
    %v1394 = vsel %vm342, %v340, 0
    %v1396 = vsel %vm342, %v283, 0
    %1398 = vmatprep.subr.mxu0 0.0
    %1399 = vmatpush1.xpose.msra.mxu0 %v1396
    %1400 = vmatprep.subr.mxu0 0.0
    %1401 = vmatpush1.xpose.msra.mxu0 0.0
    %1402 = vmatprep.subr.mxu0 0.0
    %1403 = vmatpush1.xpose.msra.mxu0 0.0
    %1404 = vmatprep.subr.mxu0 0.0
    %1405 = vmatpush1.xpose.msra.mxu0 0.0
    %1406 = vmatprep.subr.mxu0 0.0
    %1407 = vmatpush1.xpose.msra.mxu0 0.0
    %1408 = vmatprep.subr.mxu0 0.0
    %1409 = vmatpush1.xpose.msra.mxu0 0.0
    %1410 = vmatprep.subr.mxu0 0.0
    %1411 = vmatpush1.xpose.msra.mxu0 0.0
    %1412 = vmatprep.subr.mxu0 0.0
    %1413 = vmatpush1.xpose.msra.mxu0 0.0
    %1414 = vmatprep.subr.mxu0 0.0
    %1415 = vmatpush1.xpose.msra.mxu0 0.0
    %1416 = vmatprep.subr.mxu0 0.0
    %1417 = vmatpush1.xpose.msra.mxu0 0.0
    %1418 = vmatprep.subr.mxu0 0.0
    %1419 = vmatpush1.xpose.msra.mxu0 0.0
    %1420 = vmatprep.subr.mxu0 0.0
    %1421 = vmatpush1.xpose.msra.mxu0 0.0
    %1422 = vmatprep.subr.mxu0 0.0
    %1423 = vmatpush1.xpose.msra.mxu0 0.0
    %1424 = vmatprep.subr.mxu0 0.0
    %1425 = vmatpush1.xpose.msra.mxu0 0.0
    %1426 = vmatprep.subr.mxu0 0.0
    %1427 = vmatpush1.xpose.msra.mxu0 0.0
    %1428 = vmatprep.subr.mxu0 0.0
    %1429 = vmatpush1.xpose.msra.mxu0 0.0
    %1430 = vmatprep.subr.mxu0 0.0
    %1431 = vmatpush1.xpose.msra.mxu0 0.0
    %1432 = vmatprep.subr.mxu0 0.0
    %1433 = vmatpush1.xpose.msra.mxu0 0.0
    %1434 = vmatprep.subr.mxu0 0.0
    %1435 = vmatpush1.xpose.msra.mxu0 0.0
    %1436 = vmatprep.subr.mxu0 0.0
    %1437 = vmatpush1.xpose.msra.mxu0 0.0
    %1438 = vmatprep.subr.mxu0 0.0
    %1439 = vmatpush1.xpose.msra.mxu0 0.0
    %1440 = vmatprep.subr.mxu0 0.0
    %1441 = vmatpush1.xpose.msra.mxu0 0.0
    %1442 = vmatprep.subr.mxu0 0.0
    %1443 = vmatpush1.xpose.msra.mxu0 0.0
    %1444 = vmatprep.subr.mxu0 0.0
    %1445 = vmatpush1.xpose.msra.mxu0 0.0
    %1446 = vmatprep.subr.mxu0 0.0
    %1447 = vmatpush1.xpose.msra.mxu0 0.0
    %1448 = vmatprep.subr.mxu0 0.0
    %1449 = vmatpush1.xpose.msra.mxu0 0.0
    %1450 = vmatprep.subr.mxu0 0.0
    %1451 = vmatpush1.xpose.msra.mxu0 0.0
    %1452 = vmatprep.subr.mxu0 0.0
    %1453 = vmatpush1.xpose.msra.mxu0 0.0
    %1454 = vmatprep.subr.mxu0 0.0
    %1455 = vmatpush1.xpose.msra.mxu0 0.0
    %1456 = vmatprep.subr.mxu0 0.0
    %1457 = vmatpush1.xpose.msra.mxu0 0.0
    %1458 = vmatprep.subr.mxu0 0.0
    %1459 = vmatpush1.xpose.msra.mxu0 0.0
    %1460 = vmatprep.subr.mxu0 0.0
    %1461 = vmatpush1.xpose.msra.mxu0 0.0
    %1462 = vmatprep.mubr.f32.mxu0 0.0
    %1463 = vmatmul.mubr.f32.gmra.mrb[0].mxu0 %v1394
    %v1464 = vpop.f32.mrb[0].mxu0
    %v1465 = vadd.f32 0.0, %v1464
    %v1466 = vpop.f32.mrb[0].mxu0
    %1467 = vdwg.mxu0
    %v1469 = vsel %vm342, %v341, 0
    %v1471 = vsel %vm342, %v285, 0
    %1473 = vmatprep.subr.mxu0 0.0
    %1474 = vmatpush1.xpose.msra.mxu0 %v1471
    %1475 = vmatprep.subr.mxu0 0.0
    %1476 = vmatpush1.xpose.msra.mxu0 0.0
    %1477 = vmatprep.subr.mxu0 0.0
    %1478 = vmatpush1.xpose.msra.mxu0 0.0
    %1479 = vmatprep.subr.mxu0 0.0
    %1480 = vmatpush1.xpose.msra.mxu0 0.0
    %1481 = vmatprep.subr.mxu0 0.0
    %1482 = vmatpush1.xpose.msra.mxu0 0.0
    %1483 = vmatprep.subr.mxu0 0.0
    %1484 = vmatpush1.xpose.msra.mxu0 0.0
    %1485 = vmatprep.subr.mxu0 0.0
    %1486 = vmatpush1.xpose.msra.mxu0 0.0
    %1487 = vmatprep.subr.mxu0 0.0
    %1488 = vmatpush1.xpose.msra.mxu0 0.0
    %1489 = vmatprep.subr.mxu0 0.0
    %1490 = vmatpush1.xpose.msra.mxu0 0.0
    %1491 = vmatprep.subr.mxu0 0.0
    %1492 = vmatpush1.xpose.msra.mxu0 0.0
    %1493 = vmatprep.subr.mxu0 0.0
    %1494 = vmatpush1.xpose.msra.mxu0 0.0
    %1495 = vmatprep.subr.mxu0 0.0
    %1496 = vmatpush1.xpose.msra.mxu0 0.0
    %1497 = vmatprep.subr.mxu0 0.0
    %1498 = vmatpush1.xpose.msra.mxu0 0.0
    %1499 = vmatprep.subr.mxu0 0.0
    %1500 = vmatpush1.xpose.msra.mxu0 0.0
    %1501 = vmatprep.subr.mxu0 0.0
    %1502 = vmatpush1.xpose.msra.mxu0 0.0
    %1503 = vmatprep.subr.mxu0 0.0
    %1504 = vmatpush1.xpose.msra.mxu0 0.0
    %1505 = vmatprep.subr.mxu0 0.0
    %1506 = vmatpush1.xpose.msra.mxu0 0.0
    %1507 = vmatprep.subr.mxu0 0.0
    %1508 = vmatpush1.xpose.msra.mxu0 0.0
    %1509 = vmatprep.subr.mxu0 0.0
    %1510 = vmatpush1.xpose.msra.mxu0 0.0
    %1511 = vmatprep.subr.mxu0 0.0
    %1512 = vmatpush1.xpose.msra.mxu0 0.0
    %1513 = vmatprep.subr.mxu0 0.0
    %1514 = vmatpush1.xpose.msra.mxu0 0.0
    %1515 = vmatprep.subr.mxu0 0.0
    %1516 = vmatpush1.xpose.msra.mxu0 0.0
    %1517 = vmatprep.subr.mxu0 0.0
    %1518 = vmatpush1.xpose.msra.mxu0 0.0
    %1519 = vmatprep.subr.mxu0 0.0
    %1520 = vmatpush1.xpose.msra.mxu0 0.0
    %1521 = vmatprep.subr.mxu0 0.0
    %1522 = vmatpush1.xpose.msra.mxu0 0.0
    %1523 = vmatprep.subr.mxu0 0.0
    %1524 = vmatpush1.xpose.msra.mxu0 0.0
    %1525 = vmatprep.subr.mxu0 0.0
    %1526 = vmatpush1.xpose.msra.mxu0 0.0
    %1527 = vmatprep.subr.mxu0 0.0
    %1528 = vmatpush1.xpose.msra.mxu0 0.0
    %1529 = vmatprep.subr.mxu0 0.0
    %1530 = vmatpush1.xpose.msra.mxu0 0.0
    %1531 = vmatprep.subr.mxu0 0.0
    %1532 = vmatpush1.xpose.msra.mxu0 0.0
    %1533 = vmatprep.subr.mxu0 0.0
    %1534 = vmatpush1.xpose.msra.mxu0 0.0
    %1535 = vmatprep.subr.mxu0 0.0
    %1536 = vmatpush1.xpose.msra.mxu0 0.0
    %1537 = vmatprep.mubr.f32.mxu0 0.0
    %1538 = vmatmul.mubr.f32.gmra.mrb[0].mxu0 %v1469
    %v1539 = vpop.f32.mrb[0].mxu0
    %v1540 = vadd.f32 0.0, %v1539
    %v1541 = vpop.f32.mrb[0].mxu0
    %1542 = vdwg.mxu0
    %v1543 = vmul.f32 %v415, 0.35355338
    %v1544 = vmul.f32 %v490, 0.35355338
    %v1545 = vmul.f32 %v565, 0.35355338
    %v1546 = vmul.f32 %v640, 0.35355338
    %v1547 = vmul.f32 %v715, 0.35355338
    %v1548 = vmul.f32 %v790, 0.35355338
    %v1549 = vmul.f32 %v865, 0.35355338
    %v1550 = vmul.f32 %v940, 0.35355338
    %v1551 = vmul.f32 %v1015, 0.35355338
    %v1552 = vmul.f32 %v1090, 0.35355338
    %v1553 = vmul.f32 %v1165, 0.35355338
    %v1554 = vmul.f32 %v1240, 0.35355338
    %v1555 = vmul.f32 %v1315, 0.35355338
    %v1556 = vmul.f32 %v1390, 0.35355338
    %v1557 = vmul.f32 %v1465, 0.35355338
    %v1558 = vmul.f32 %v1540, 0.35355338
    %v1559 = vsel %vm342, %v1543, -inf
    %1560 = vmax.xlane.f32.xlu0 %v1559
    %v1561 = vpop.xlane.xlu0 %1560
    %v1562 = vsel %vm342, %v1544, -inf
    %1563 = vmax.xlane.f32.xlu0 %v1562
    %v1564 = vpop.xlane.xlu0 %1563
    %v1565 = vsel %vm342, %v1545, -inf
    %1566 = vmax.xlane.f32.xlu0 %v1565
    %v1567 = vpop.xlane.xlu0 %1566
    %v1568 = vsel %vm342, %v1546, -inf
    %1569 = vmax.xlane.f32.xlu0 %v1568
    %v1570 = vpop.xlane.xlu0 %1569
    %v1571 = vsel %vm342, %v1547, -inf
    %1572 = vmax.xlane.f32.xlu0 %v1571
    %v1573 = vpop.xlane.xlu0 %1572
    %v1574 = vsel %vm342, %v1548, -inf
    %1575 = vmax.xlane.f32.xlu0 %v1574
    %v1576 = vpop.xlane.xlu0 %1575
    %v1577 = vsel %vm342, %v1549, -inf
    %1578 = vmax.xlane.f32.xlu0 %v1577
    %v1579 = vpop.xlane.xlu0 %1578
    %v1580 = vsel %vm342, %v1550, -inf
    %1581 = vmax.xlane.f32.xlu0 %v1580
    %v1582 = vpop.xlane.xlu0 %1581
    %v1583 = vsel %vm342, %v1551, -inf
    %1584 = vmax.xlane.f32.xlu0 %v1583
    %v1585 = vpop.xlane.xlu0 %1584
    %v1586 = vsel %vm342, %v1552, -inf
    %1587 = vmax.xlane.f32.xlu0 %v1586
    %v1588 = vpop.xlane.xlu0 %1587
    %v1589 = vsel %vm342, %v1553, -inf
    %1590 = vmax.xlane.f32.xlu0 %v1589
    %v1591 = vpop.xlane.xlu0 %1590
    %v1592 = vsel %vm342, %v1554, -inf
    %1593 = vmax.xlane.f32.xlu0 %v1592
    %v1594 = vpop.xlane.xlu0 %1593
    %v1595 = vsel %vm342, %v1555, -inf
    %1596 = vmax.xlane.f32.xlu0 %v1595
    %v1597 = vpop.xlane.xlu0 %1596
    %v1598 = vsel %vm342, %v1556, -inf
    %1599 = vmax.xlane.f32.xlu0 %v1598
    %v1600 = vpop.xlane.xlu0 %1599
    %v1601 = vsel %vm342, %v1557, -inf
    %1602 = vmax.xlane.f32.xlu0 %v1601
    %v1603 = vpop.xlane.xlu0 %1602
    %v1604 = vsel %vm342, %v1558, -inf
    %1605 = vmax.xlane.f32.xlu0 %v1604
    %v1606 = vpop.xlane.xlu0 %1605
    %v1607 = vsub.f32 %v1543, %v1561
    %v1608 = vsub.f32 %v1544, %v1564
    %v1609 = vsub.f32 %v1545, %v1567
    %v1610 = vsub.f32 %v1546, %v1570
    %v1611 = vsub.f32 %v1547, %v1573
    %v1612 = vsub.f32 %v1548, %v1576
    %v1613 = vsub.f32 %v1549, %v1579
    %v1614 = vsub.f32 %v1550, %v1582
    %v1615 = vsub.f32 %v1551, %v1585
    %v1616 = vsub.f32 %v1552, %v1588
    %v1617 = vsub.f32 %v1553, %v1591
    %v1618 = vsub.f32 %v1554, %v1594
    %v1619 = vsub.f32 %v1555, %v1597
    %v1620 = vsub.f32 %v1556, %v1600
    %v1621 = vsub.f32 %v1557, %v1603
    %v1622 = vsub.f32 %v1558, %v1606
    %v1623 = vmul.f32 %v1607, 1.442695
    %v1624 = vpow.pop %v1623
    %v1625 = vmul.f32 %v1608, 1.442695
    %v1626 = vpow.pop %v1625
    %v1627 = vmul.f32 %v1609, 1.442695
    %v1628 = vpow.pop %v1627
    %v1629 = vmul.f32 %v1610, 1.442695
    %v1630 = vpow.pop %v1629
    %v1631 = vmul.f32 %v1611, 1.442695
    %v1632 = vpow.pop %v1631
    %v1633 = vmul.f32 %v1612, 1.442695
    %v1634 = vpow.pop %v1633
    %v1635 = vmul.f32 %v1613, 1.442695
    %v1636 = vpow.pop %v1635
    %v1637 = vmul.f32 %v1614, 1.442695
    %v1638 = vpow.pop %v1637
    %v1639 = vmul.f32 %v1615, 1.442695
    %v1640 = vpow.pop %v1639
    %v1641 = vmul.f32 %v1616, 1.442695
    %v1642 = vpow.pop %v1641
    %v1643 = vmul.f32 %v1617, 1.442695
    %v1644 = vpow.pop %v1643
    %v1645 = vmul.f32 %v1618, 1.442695
    %v1646 = vpow.pop %v1645
    %v1647 = vmul.f32 %v1619, 1.442695
    %v1648 = vpow.pop %v1647
    %v1649 = vmul.f32 %v1620, 1.442695
    %v1650 = vpow.pop %v1649
    %v1651 = vmul.f32 %v1621, 1.442695
    %v1652 = vpow.pop %v1651
    %v1653 = vmul.f32 %v1622, 1.442695
    %v1654 = vpow.pop %v1653
    %v1655 = vsel %vm342, %v1624, 0.0
    %1656 = vadd.xlane.f32.xlu0 %v1655
    %v1657 = vpop.xlane.xlu0 %1656
    %v1658 = vsel %vm342, %v1626, 0.0
    %1659 = vadd.xlane.f32.xlu0 %v1658
    %v1660 = vpop.xlane.xlu0 %1659
    %v1661 = vsel %vm342, %v1628, 0.0
    %1662 = vadd.xlane.f32.xlu0 %v1661
    %v1663 = vpop.xlane.xlu0 %1662
    %v1664 = vsel %vm342, %v1630, 0.0
    %1665 = vadd.xlane.f32.xlu0 %v1664
    %v1666 = vpop.xlane.xlu0 %1665
    %v1667 = vsel %vm342, %v1632, 0.0
    %1668 = vadd.xlane.f32.xlu0 %v1667
    %v1669 = vpop.xlane.xlu0 %1668
    %v1670 = vsel %vm342, %v1634, 0.0
    %1671 = vadd.xlane.f32.xlu0 %v1670
    %v1672 = vpop.xlane.xlu0 %1671
    %v1673 = vsel %vm342, %v1636, 0.0
    %1674 = vadd.xlane.f32.xlu0 %v1673
    %v1675 = vpop.xlane.xlu0 %1674
    %v1676 = vsel %vm342, %v1638, 0.0
    %1677 = vadd.xlane.f32.xlu0 %v1676
    %v1678 = vpop.xlane.xlu0 %1677
    %v1679 = vsel %vm342, %v1640, 0.0
    %1680 = vadd.xlane.f32.xlu0 %v1679
    %v1681 = vpop.xlane.xlu0 %1680
    %v1682 = vsel %vm342, %v1642, 0.0
    %1683 = vadd.xlane.f32.xlu0 %v1682
    %v1684 = vpop.xlane.xlu0 %1683
    %v1685 = vsel %vm342, %v1644, 0.0
    %1686 = vadd.xlane.f32.xlu0 %v1685
    %v1687 = vpop.xlane.xlu0 %1686
    %v1688 = vsel %vm342, %v1646, 0.0
    %1689 = vadd.xlane.f32.xlu0 %v1688
    %v1690 = vpop.xlane.xlu0 %1689
    %v1691 = vsel %vm342, %v1648, 0.0
    %1692 = vadd.xlane.f32.xlu0 %v1691
    %v1693 = vpop.xlane.xlu0 %1692
    %v1694 = vsel %vm342, %v1650, 0.0
    %1695 = vadd.xlane.f32.xlu0 %v1694
    %v1696 = vpop.xlane.xlu0 %1695
    %v1697 = vsel %vm342, %v1652, 0.0
    %1698 = vadd.xlane.f32.xlu0 %v1697
    %v1699 = vpop.xlane.xlu0 %1698
    %v1700 = vsel %vm342, %v1654, 0.0
    %1701 = vadd.xlane.f32.xlu0 %v1700
    %v1702 = vpop.xlane.xlu0 %1701
    %v1703 = vrcp.pop %v1657
    %v1704 = vmul.f32 %v1624, %v1703
    %v1705 = vrcp.pop %v1660
    %v1706 = vmul.f32 %v1626, %v1705
    %v1707 = vrcp.pop %v1663
    %v1708 = vmul.f32 %v1628, %v1707
    %v1709 = vrcp.pop %v1666
    %v1710 = vmul.f32 %v1630, %v1709
    %v1711 = vrcp.pop %v1669
    %v1712 = vmul.f32 %v1632, %v1711
    %v1713 = vrcp.pop %v1672
    %v1714 = vmul.f32 %v1634, %v1713
    %v1715 = vrcp.pop %v1675
    %v1716 = vmul.f32 %v1636, %v1715
    %v1717 = vrcp.pop %v1678
    %v1718 = vmul.f32 %v1638, %v1717
    %v1719 = vrcp.pop %v1681
    %v1720 = vmul.f32 %v1640, %v1719
    %v1721 = vrcp.pop %v1684
    %v1722 = vmul.f32 %v1642, %v1721
    %v1723 = vrcp.pop %v1687
    %v1724 = vmul.f32 %v1644, %v1723
    %v1725 = vrcp.pop %v1690
    %v1726 = vmul.f32 %v1646, %v1725
    %v1727 = vrcp.pop %v1693
    %v1728 = vmul.f32 %v1648, %v1727
    %v1729 = vrcp.pop %v1696
    %v1730 = vmul.f32 %v1650, %v1729
    %v1731 = vrcp.pop %v1699
    %v1732 = vmul.f32 %v1652, %v1731
    %v1733 = vrcp.pop %v1702
    %v1734 = vmul.f32 %v1654, %v1733
    %v1736 = vsel %vm342, %v1704, 0
    %1738 = vmatprep.subr.mxu0 0.0
    %1739 = vmatpush1.msra.mxu0 %v240
    %1740 = vmatprep.subr.mxu0 0.0
    %1741 = vmatpush1.msra.mxu0 0.0
    %1742 = vmatprep.subr.mxu0 0.0
    %1743 = vmatpush1.msra.mxu0 0.0
    %1744 = vmatprep.subr.mxu0 0.0
    %1745 = vmatpush1.msra.mxu0 0.0
    %1746 = vmatprep.subr.mxu0 0.0
    %1747 = vmatpush1.msra.mxu0 0.0
    %1748 = vmatprep.subr.mxu0 0.0
    %1749 = vmatpush1.msra.mxu0 0.0
    %1750 = vmatprep.subr.mxu0 0.0
    %1751 = vmatpush1.msra.mxu0 0.0
    %1752 = vmatprep.subr.mxu0 0.0
    %1753 = vmatpush1.msra.mxu0 0.0
    %1754 = vmatprep.subr.mxu0 0.0
    %1755 = vmatpush1.msra.mxu0 0.0
    %1756 = vmatprep.subr.mxu0 0.0
    %1757 = vmatpush1.msra.mxu0 0.0
    %1758 = vmatprep.subr.mxu0 0.0
    %1759 = vmatpush1.msra.mxu0 0.0
    %1760 = vmatprep.subr.mxu0 0.0
    %1761 = vmatpush1.msra.mxu0 0.0
    %1762 = vmatprep.subr.mxu0 0.0
    %1763 = vmatpush1.msra.mxu0 0.0
    %1764 = vmatprep.subr.mxu0 0.0
    %1765 = vmatpush1.msra.mxu0 0.0
    %1766 = vmatprep.subr.mxu0 0.0
    %1767 = vmatpush1.msra.mxu0 0.0
    %1768 = vmatprep.subr.mxu0 0.0
    %1769 = vmatpush1.msra.mxu0 0.0
    %1770 = vmatprep.subr.mxu0 0.0
    %1771 = vmatpush1.msra.mxu0 0.0
    %1772 = vmatprep.subr.mxu0 0.0
    %1773 = vmatpush1.msra.mxu0 0.0
    %1774 = vmatprep.subr.mxu0 0.0
    %1775 = vmatpush1.msra.mxu0 0.0
    %1776 = vmatprep.subr.mxu0 0.0
    %1777 = vmatpush1.msra.mxu0 0.0
    %1778 = vmatprep.subr.mxu0 0.0
    %1779 = vmatpush1.msra.mxu0 0.0
    %1780 = vmatprep.subr.mxu0 0.0
    %1781 = vmatpush1.msra.mxu0 0.0
    %1782 = vmatprep.subr.mxu0 0.0
    %1783 = vmatpush1.msra.mxu0 0.0
    %1784 = vmatprep.subr.mxu0 0.0
    %1785 = vmatpush1.msra.mxu0 0.0
    %1786 = vmatprep.subr.mxu0 0.0
    %1787 = vmatpush1.msra.mxu0 0.0
    %1788 = vmatprep.subr.mxu0 0.0
    %1789 = vmatpush1.msra.mxu0 0.0
    %1790 = vmatprep.subr.mxu0 0.0
    %1791 = vmatpush1.msra.mxu0 0.0
    %1792 = vmatprep.subr.mxu0 0.0
    %1793 = vmatpush1.msra.mxu0 0.0
    %1794 = vmatprep.subr.mxu0 0.0
    %1795 = vmatpush1.msra.mxu0 0.0
    %1796 = vmatprep.subr.mxu0 0.0
    %1797 = vmatpush1.msra.mxu0 0.0
    %1798 = vmatprep.subr.mxu0 0.0
    %1799 = vmatpush1.msra.mxu0 0.0
    %1800 = vmatprep.subr.mxu0 0.0
    %1801 = vmatpush1.msra.mxu0 0.0
    %1802 = vmatprep.mubr.f32.mxu0 0.0
    %1803 = vmatmul.mubr.f32.gmra.mrb[0].mxu0 %v1736
    %v1804 = vpop.f32.mrb[0].mxu0
    %v1805 = vadd.f32 0.0, %v1804
    %v1806 = vpop.f32.mrb[0].mxu0
    %1807 = vdwg.mxu0
    %v1809 = vsel %vm342, %v1706, 0
    %1811 = vmatprep.subr.mxu0 0.0
    %1812 = vmatpush1.msra.mxu0 %v245
    %1813 = vmatprep.subr.mxu0 0.0
    %1814 = vmatpush1.msra.mxu0 0.0
    %1815 = vmatprep.subr.mxu0 0.0
    %1816 = vmatpush1.msra.mxu0 0.0
    %1817 = vmatprep.subr.mxu0 0.0
    %1818 = vmatpush1.msra.mxu0 0.0
    %1819 = vmatprep.subr.mxu0 0.0
    %1820 = vmatpush1.msra.mxu0 0.0
    %1821 = vmatprep.subr.mxu0 0.0
    %1822 = vmatpush1.msra.mxu0 0.0
    %1823 = vmatprep.subr.mxu0 0.0
    %1824 = vmatpush1.msra.mxu0 0.0
    %1825 = vmatprep.subr.mxu0 0.0
    %1826 = vmatpush1.msra.mxu0 0.0
    %1827 = vmatprep.subr.mxu0 0.0
    %1828 = vmatpush1.msra.mxu0 0.0
    %1829 = vmatprep.subr.mxu0 0.0
    %1830 = vmatpush1.msra.mxu0 0.0
    %1831 = vmatprep.subr.mxu0 0.0
    %1832 = vmatpush1.msra.mxu0 0.0
    %1833 = vmatprep.subr.mxu0 0.0
    %1834 = vmatpush1.msra.mxu0 0.0
    %1835 = vmatprep.subr.mxu0 0.0
    %1836 = vmatpush1.msra.mxu0 0.0
    %1837 = vmatprep.subr.mxu0 0.0
    %1838 = vmatpush1.msra.mxu0 0.0
    %1839 = vmatprep.subr.mxu0 0.0
    %1840 = vmatpush1.msra.mxu0 0.0
    %1841 = vmatprep.subr.mxu0 0.0
    %1842 = vmatpush1.msra.mxu0 0.0
    %1843 = vmatprep.subr.mxu0 0.0
    %1844 = vmatpush1.msra.mxu0 0.0
    %1845 = vmatprep.subr.mxu0 0.0
    %1846 = vmatpush1.msra.mxu0 0.0
    %1847 = vmatprep.subr.mxu0 0.0
    %1848 = vmatpush1.msra.mxu0 0.0
    %1849 = vmatprep.subr.mxu0 0.0
    %1850 = vmatpush1.msra.mxu0 0.0
    %1851 = vmatprep.subr.mxu0 0.0
    %1852 = vmatpush1.msra.mxu0 0.0
    %1853 = vmatprep.subr.mxu0 0.0
    %1854 = vmatpush1.msra.mxu0 0.0
    %1855 = vmatprep.subr.mxu0 0.0
    %1856 = vmatpush1.msra.mxu0 0.0
    %1857 = vmatprep.subr.mxu0 0.0
    %1858 = vmatpush1.msra.mxu0 0.0
    %1859 = vmatprep.subr.mxu0 0.0
    %1860 = vmatpush1.msra.mxu0 0.0
    %1861 = vmatprep.subr.mxu0 0.0
    %1862 = vmatpush1.msra.mxu0 0.0
    %1863 = vmatprep.subr.mxu0 0.0
    %1864 = vmatpush1.msra.mxu0 0.0
    %1865 = vmatprep.subr.mxu0 0.0
    %1866 = vmatpush1.msra.mxu0 0.0
    %1867 = vmatprep.subr.mxu0 0.0
    %1868 = vmatpush1.msra.mxu0 0.0
    %1869 = vmatprep.subr.mxu0 0.0
    %1870 = vmatpush1.msra.mxu0 0.0
    %1871 = vmatprep.subr.mxu0 0.0
    %1872 = vmatpush1.msra.mxu0 0.0
    %1873 = vmatprep.subr.mxu0 0.0
    %1874 = vmatpush1.msra.mxu0 0.0
    %1875 = vmatprep.mubr.f32.mxu0 0.0
    %1876 = vmatmul.mubr.f32.gmra.mrb[0].mxu0 %v1809
    %v1877 = vpop.f32.mrb[0].mxu0
    %v1878 = vadd.f32 0.0, %v1877
    %v1879 = vpop.f32.mrb[0].mxu0
    %1880 = vdwg.mxu0
    %v1882 = vsel %vm342, %v1708, 0
    %1884 = vmatprep.subr.mxu0 0.0
    %1885 = vmatpush1.msra.mxu0 %v250
    %1886 = vmatprep.subr.mxu0 0.0
    %1887 = vmatpush1.msra.mxu0 0.0
    %1888 = vmatprep.subr.mxu0 0.0
    %1889 = vmatpush1.msra.mxu0 0.0
    %1890 = vmatprep.subr.mxu0 0.0
    %1891 = vmatpush1.msra.mxu0 0.0
    %1892 = vmatprep.subr.mxu0 0.0
    %1893 = vmatpush1.msra.mxu0 0.0
    %1894 = vmatprep.subr.mxu0 0.0
    %1895 = vmatpush1.msra.mxu0 0.0
    %1896 = vmatprep.subr.mxu0 0.0
    %1897 = vmatpush1.msra.mxu0 0.0
    %1898 = vmatprep.subr.mxu0 0.0
    %1899 = vmatpush1.msra.mxu0 0.0
    %1900 = vmatprep.subr.mxu0 0.0
    %1901 = vmatpush1.msra.mxu0 0.0
    %1902 = vmatprep.subr.mxu0 0.0
    %1903 = vmatpush1.msra.mxu0 0.0
    %1904 = vmatprep.subr.mxu0 0.0
    %1905 = vmatpush1.msra.mxu0 0.0
    %1906 = vmatprep.subr.mxu0 0.0
    %1907 = vmatpush1.msra.mxu0 0.0
    %1908 = vmatprep.subr.mxu0 0.0
    %1909 = vmatpush1.msra.mxu0 0.0
    %1910 = vmatprep.subr.mxu0 0.0
    %1911 = vmatpush1.msra.mxu0 0.0
    %1912 = vmatprep.subr.mxu0 0.0
    %1913 = vmatpush1.msra.mxu0 0.0
    %1914 = vmatprep.subr.mxu0 0.0
    %1915 = vmatpush1.msra.mxu0 0.0
    %1916 = vmatprep.subr.mxu0 0.0
    %1917 = vmatpush1.msra.mxu0 0.0
    %1918 = vmatprep.subr.mxu0 0.0
    %1919 = vmatpush1.msra.mxu0 0.0
    %1920 = vmatprep.subr.mxu0 0.0
    %1921 = vmatpush1.msra.mxu0 0.0
    %1922 = vmatprep.subr.mxu0 0.0
    %1923 = vmatpush1.msra.mxu0 0.0
    %1924 = vmatprep.subr.mxu0 0.0
    %1925 = vmatpush1.msra.mxu0 0.0
    %1926 = vmatprep.subr.mxu0 0.0
    %1927 = vmatpush1.msra.mxu0 0.0
    %1928 = vmatprep.subr.mxu0 0.0
    %1929 = vmatpush1.msra.mxu0 0.0
    %1930 = vmatprep.subr.mxu0 0.0
    %1931 = vmatpush1.msra.mxu0 0.0
    %1932 = vmatprep.subr.mxu0 0.0
    %1933 = vmatpush1.msra.mxu0 0.0
    %1934 = vmatprep.subr.mxu0 0.0
    %1935 = vmatpush1.msra.mxu0 0.0
    %1936 = vmatprep.subr.mxu0 0.0
    %1937 = vmatpush1.msra.mxu0 0.0
    %1938 = vmatprep.subr.mxu0 0.0
    %1939 = vmatpush1.msra.mxu0 0.0
    %1940 = vmatprep.subr.mxu0 0.0
    %1941 = vmatpush1.msra.mxu0 0.0
    %1942 = vmatprep.subr.mxu0 0.0
    %1943 = vmatpush1.msra.mxu0 0.0
    %1944 = vmatprep.subr.mxu0 0.0
    %1945 = vmatpush1.msra.mxu0 0.0
    %1946 = vmatprep.subr.mxu0 0.0
    %1947 = vmatpush1.msra.mxu0 0.0
    %1948 = vmatprep.mubr.f32.mxu0 0.0
    %1949 = vmatmul.mubr.f32.gmra.mrb[0].mxu0 %v1882
    %v1950 = vpop.f32.mrb[0].mxu0
    %v1951 = vadd.f32 0.0, %v1950
    %v1952 = vpop.f32.mrb[0].mxu0
    %1953 = vdwg.mxu0
    %v1955 = vsel %vm342, %v1710, 0
    %1957 = vmatprep.subr.mxu0 0.0
    %1958 = vmatpush1.msra.mxu0 %v255
    %1959 = vmatprep.subr.mxu0 0.0
    %1960 = vmatpush1.msra.mxu0 0.0
    %1961 = vmatprep.subr.mxu0 0.0
    %1962 = vmatpush1.msra.mxu0 0.0
    %1963 = vmatprep.subr.mxu0 0.0
    %1964 = vmatpush1.msra.mxu0 0.0
    %1965 = vmatprep.subr.mxu0 0.0
    %1966 = vmatpush1.msra.mxu0 0.0
    %1967 = vmatprep.subr.mxu0 0.0
    %1968 = vmatpush1.msra.mxu0 0.0
    %1969 = vmatprep.subr.mxu0 0.0
    %1970 = vmatpush1.msra.mxu0 0.0
    %1971 = vmatprep.subr.mxu0 0.0
    %1972 = vmatpush1.msra.mxu0 0.0
    %1973 = vmatprep.subr.mxu0 0.0
    %1974 = vmatpush1.msra.mxu0 0.0
    %1975 = vmatprep.subr.mxu0 0.0
    %1976 = vmatpush1.msra.mxu0 0.0
    %1977 = vmatprep.subr.mxu0 0.0
    %1978 = vmatpush1.msra.mxu0 0.0
    %1979 = vmatprep.subr.mxu0 0.0
    %1980 = vmatpush1.msra.mxu0 0.0
    %1981 = vmatprep.subr.mxu0 0.0
    %1982 = vmatpush1.msra.mxu0 0.0
    %1983 = vmatprep.subr.mxu0 0.0
    %1984 = vmatpush1.msra.mxu0 0.0
    %1985 = vmatprep.subr.mxu0 0.0
    %1986 = vmatpush1.msra.mxu0 0.0
    %1987 = vmatprep.subr.mxu0 0.0
    %1988 = vmatpush1.msra.mxu0 0.0
    %1989 = vmatprep.subr.mxu0 0.0
    %1990 = vmatpush1.msra.mxu0 0.0
    %1991 = vmatprep.subr.mxu0 0.0
    %1992 = vmatpush1.msra.mxu0 0.0
    %1993 = vmatprep.subr.mxu0 0.0
    %1994 = vmatpush1.msra.mxu0 0.0
    %1995 = vmatprep.subr.mxu0 0.0
    %1996 = vmatpush1.msra.mxu0 0.0
    %1997 = vmatprep.subr.mxu0 0.0
    %1998 = vmatpush1.msra.mxu0 0.0
    %1999 = vmatprep.subr.mxu0 0.0
    %2000 = vmatpush1.msra.mxu0 0.0
    %2001 = vmatprep.subr.mxu0 0.0
    %2002 = vmatpush1.msra.mxu0 0.0
    %2003 = vmatprep.subr.mxu0 0.0
    %2004 = vmatpush1.msra.mxu0 0.0
    %2005 = vmatprep.subr.mxu0 0.0
    %2006 = vmatpush1.msra.mxu0 0.0
    %2007 = vmatprep.subr.mxu0 0.0
    %2008 = vmatpush1.msra.mxu0 0.0
    %2009 = vmatprep.subr.mxu0 0.0
    %2010 = vmatpush1.msra.mxu0 0.0
    %2011 = vmatprep.subr.mxu0 0.0
    %2012 = vmatpush1.msra.mxu0 0.0
    %2013 = vmatprep.subr.mxu0 0.0
    %2014 = vmatpush1.msra.mxu0 0.0
    %2015 = vmatprep.subr.mxu0 0.0
    %2016 = vmatpush1.msra.mxu0 0.0
    %2017 = vmatprep.subr.mxu0 0.0
    %2018 = vmatpush1.msra.mxu0 0.0
    %2019 = vmatprep.subr.mxu0 0.0
    %2020 = vmatpush1.msra.mxu0 0.0
    %2021 = vmatprep.mubr.f32.mxu0 0.0
    %2022 = vmatmul.mubr.f32.gmra.mrb[0].mxu0 %v1955
    %v2023 = vpop.f32.mrb[0].mxu0
    %v2024 = vadd.f32 0.0, %v2023
    %v2025 = vpop.f32.mrb[0].mxu0
    %2026 = vdwg.mxu0
    %v2028 = vsel %vm342, %v1712, 0
    %2030 = vmatprep.subr.mxu0 0.0
    %2031 = vmatpush1.msra.mxu0 %v291
    %2032 = vmatprep.subr.mxu0 0.0
    %2033 = vmatpush1.msra.mxu0 0.0
    %2034 = vmatprep.subr.mxu0 0.0
    %2035 = vmatpush1.msra.mxu0 0.0
    %2036 = vmatprep.subr.mxu0 0.0
    %2037 = vmatpush1.msra.mxu0 0.0
    %2038 = vmatprep.subr.mxu0 0.0
    %2039 = vmatpush1.msra.mxu0 0.0
    %2040 = vmatprep.subr.mxu0 0.0
    %2041 = vmatpush1.msra.mxu0 0.0
    %2042 = vmatprep.subr.mxu0 0.0
    %2043 = vmatpush1.msra.mxu0 0.0
    %2044 = vmatprep.subr.mxu0 0.0
    %2045 = vmatpush1.msra.mxu0 0.0
    %2046 = vmatprep.subr.mxu0 0.0
    %2047 = vmatpush1.msra.mxu0 0.0
    %2048 = vmatprep.subr.mxu0 0.0
    %2049 = vmatpush1.msra.mxu0 0.0
    %2050 = vmatprep.subr.mxu0 0.0
    %2051 = vmatpush1.msra.mxu0 0.0
    %2052 = vmatprep.subr.mxu0 0.0
    %2053 = vmatpush1.msra.mxu0 0.0
    %2054 = vmatprep.subr.mxu0 0.0
    %2055 = vmatpush1.msra.mxu0 0.0
    %2056 = vmatprep.subr.mxu0 0.0
    %2057 = vmatpush1.msra.mxu0 0.0
    %2058 = vmatprep.subr.mxu0 0.0
    %2059 = vmatpush1.msra.mxu0 0.0
    %2060 = vmatprep.subr.mxu0 0.0
    %2061 = vmatpush1.msra.mxu0 0.0
    %2062 = vmatprep.subr.mxu0 0.0
    %2063 = vmatpush1.msra.mxu0 0.0
    %2064 = vmatprep.subr.mxu0 0.0
    %2065 = vmatpush1.msra.mxu0 0.0
    %2066 = vmatprep.subr.mxu0 0.0
    %2067 = vmatpush1.msra.mxu0 0.0
    %2068 = vmatprep.subr.mxu0 0.0
    %2069 = vmatpush1.msra.mxu0 0.0
    %2070 = vmatprep.subr.mxu0 0.0
    %2071 = vmatpush1.msra.mxu0 0.0
    %2072 = vmatprep.subr.mxu0 0.0
    %2073 = vmatpush1.msra.mxu0 0.0
    %2074 = vmatprep.subr.mxu0 0.0
    %2075 = vmatpush1.msra.mxu0 0.0
    %2076 = vmatprep.subr.mxu0 0.0
    %2077 = vmatpush1.msra.mxu0 0.0
    %2078 = vmatprep.subr.mxu0 0.0
    %2079 = vmatpush1.msra.mxu0 0.0
    %2080 = vmatprep.subr.mxu0 0.0
    %2081 = vmatpush1.msra.mxu0 0.0
    %2082 = vmatprep.subr.mxu0 0.0
    %2083 = vmatpush1.msra.mxu0 0.0
    %2084 = vmatprep.subr.mxu0 0.0
    %2085 = vmatpush1.msra.mxu0 0.0
    %2086 = vmatprep.subr.mxu0 0.0
    %2087 = vmatpush1.msra.mxu0 0.0
    %2088 = vmatprep.subr.mxu0 0.0
    %2089 = vmatpush1.msra.mxu0 0.0
    %2090 = vmatprep.subr.mxu0 0.0
    %2091 = vmatpush1.msra.mxu0 0.0
    %2092 = vmatprep.subr.mxu0 0.0
    %2093 = vmatpush1.msra.mxu0 0.0
    %2094 = vmatprep.mubr.f32.mxu0 0.0
    %2095 = vmatmul.mubr.f32.gmra.mrb[0].mxu0 %v2028
    %v2096 = vpop.f32.mrb[0].mxu0
    %v2097 = vadd.f32 0.0, %v2096
    %v2098 = vpop.f32.mrb[0].mxu0
    %2099 = vdwg.mxu0
    %v2101 = vsel %vm342, %v1714, 0
    %2103 = vmatprep.subr.mxu0 0.0
    %2104 = vmatpush1.msra.mxu0 %v293
    %2105 = vmatprep.subr.mxu0 0.0
    %2106 = vmatpush1.msra.mxu0 0.0
    %2107 = vmatprep.subr.mxu0 0.0
    %2108 = vmatpush1.msra.mxu0 0.0
    %2109 = vmatprep.subr.mxu0 0.0
    %2110 = vmatpush1.msra.mxu0 0.0
    %2111 = vmatprep.subr.mxu0 0.0
    %2112 = vmatpush1.msra.mxu0 0.0
    %2113 = vmatprep.subr.mxu0 0.0
    %2114 = vmatpush1.msra.mxu0 0.0
    %2115 = vmatprep.subr.mxu0 0.0
    %2116 = vmatpush1.msra.mxu0 0.0
    %2117 = vmatprep.subr.mxu0 0.0
    %2118 = vmatpush1.msra.mxu0 0.0
    %2119 = vmatprep.subr.mxu0 0.0
    %2120 = vmatpush1.msra.mxu0 0.0
    %2121 = vmatprep.subr.mxu0 0.0
    %2122 = vmatpush1.msra.mxu0 0.0
    %2123 = vmatprep.subr.mxu0 0.0
    %2124 = vmatpush1.msra.mxu0 0.0
    %2125 = vmatprep.subr.mxu0 0.0
    %2126 = vmatpush1.msra.mxu0 0.0
    %2127 = vmatprep.subr.mxu0 0.0
    %2128 = vmatpush1.msra.mxu0 0.0
    %2129 = vmatprep.subr.mxu0 0.0
    %2130 = vmatpush1.msra.mxu0 0.0
    %2131 = vmatprep.subr.mxu0 0.0
    %2132 = vmatpush1.msra.mxu0 0.0
    %2133 = vmatprep.subr.mxu0 0.0
    %2134 = vmatpush1.msra.mxu0 0.0
    %2135 = vmatprep.subr.mxu0 0.0
    %2136 = vmatpush1.msra.mxu0 0.0
    %2137 = vmatprep.subr.mxu0 0.0
    %2138 = vmatpush1.msra.mxu0 0.0
    %2139 = vmatprep.subr.mxu0 0.0
    %2140 = vmatpush1.msra.mxu0 0.0
    %2141 = vmatprep.subr.mxu0 0.0
    %2142 = vmatpush1.msra.mxu0 0.0
    %2143 = vmatprep.subr.mxu0 0.0
    %2144 = vmatpush1.msra.mxu0 0.0
    %2145 = vmatprep.subr.mxu0 0.0
    %2146 = vmatpush1.msra.mxu0 0.0
    %2147 = vmatprep.subr.mxu0 0.0
    %2148 = vmatpush1.msra.mxu0 0.0
    %2149 = vmatprep.subr.mxu0 0.0
    %2150 = vmatpush1.msra.mxu0 0.0
    %2151 = vmatprep.subr.mxu0 0.0
    %2152 = vmatpush1.msra.mxu0 0.0
    %2153 = vmatprep.subr.mxu0 0.0
    %2154 = vmatpush1.msra.mxu0 0.0
    %2155 = vmatprep.subr.mxu0 0.0
    %2156 = vmatpush1.msra.mxu0 0.0
    %2157 = vmatprep.subr.mxu0 0.0
    %2158 = vmatpush1.msra.mxu0 0.0
    %2159 = vmatprep.subr.mxu0 0.0
    %2160 = vmatpush1.msra.mxu0 0.0
    %2161 = vmatprep.subr.mxu0 0.0
    %2162 = vmatpush1.msra.mxu0 0.0
    %2163 = vmatprep.subr.mxu0 0.0
    %2164 = vmatpush1.msra.mxu0 0.0
    %2165 = vmatprep.subr.mxu0 0.0
    %2166 = vmatpush1.msra.mxu0 0.0
    %2167 = vmatprep.mubr.f32.mxu0 0.0
    %2168 = vmatmul.mubr.f32.gmra.mrb[0].mxu0 %v2101
    %v2169 = vpop.f32.mrb[0].mxu0
    %v2170 = vadd.f32 0.0, %v2169
    %v2171 = vpop.f32.mrb[0].mxu0
    %2172 = vdwg.mxu0
    %v2174 = vsel %vm342, %v1716, 0
    %2176 = vmatprep.subr.mxu0 0.0
    %2177 = vmatpush1.msra.mxu0 %v295
    %2178 = vmatprep.subr.mxu0 0.0
    %2179 = vmatpush1.msra.mxu0 0.0
    %2180 = vmatprep.subr.mxu0 0.0
    %2181 = vmatpush1.msra.mxu0 0.0
    %2182 = vmatprep.subr.mxu0 0.0
    %2183 = vmatpush1.msra.mxu0 0.0
    %2184 = vmatprep.subr.mxu0 0.0
    %2185 = vmatpush1.msra.mxu0 0.0
    %2186 = vmatprep.subr.mxu0 0.0
    %2187 = vmatpush1.msra.mxu0 0.0
    %2188 = vmatprep.subr.mxu0 0.0
    %2189 = vmatpush1.msra.mxu0 0.0
    %2190 = vmatprep.subr.mxu0 0.0
    %2191 = vmatpush1.msra.mxu0 0.0
    %2192 = vmatprep.subr.mxu0 0.0
    %2193 = vmatpush1.msra.mxu0 0.0
    %2194 = vmatprep.subr.mxu0 0.0
    %2195 = vmatpush1.msra.mxu0 0.0
    %2196 = vmatprep.subr.mxu0 0.0
    %2197 = vmatpush1.msra.mxu0 0.0
    %2198 = vmatprep.subr.mxu0 0.0
    %2199 = vmatpush1.msra.mxu0 0.0
    %2200 = vmatprep.subr.mxu0 0.0
    %2201 = vmatpush1.msra.mxu0 0.0
    %2202 = vmatprep.subr.mxu0 0.0
    %2203 = vmatpush1.msra.mxu0 0.0
    %2204 = vmatprep.subr.mxu0 0.0
    %2205 = vmatpush1.msra.mxu0 0.0
    %2206 = vmatprep.subr.mxu0 0.0
    %2207 = vmatpush1.msra.mxu0 0.0
    %2208 = vmatprep.subr.mxu0 0.0
    %2209 = vmatpush1.msra.mxu0 0.0
    %2210 = vmatprep.subr.mxu0 0.0
    %2211 = vmatpush1.msra.mxu0 0.0
    %2212 = vmatprep.subr.mxu0 0.0
    %2213 = vmatpush1.msra.mxu0 0.0
    %2214 = vmatprep.subr.mxu0 0.0
    %2215 = vmatpush1.msra.mxu0 0.0
    %2216 = vmatprep.subr.mxu0 0.0
    %2217 = vmatpush1.msra.mxu0 0.0
    %2218 = vmatprep.subr.mxu0 0.0
    %2219 = vmatpush1.msra.mxu0 0.0
    %2220 = vmatprep.subr.mxu0 0.0
    %2221 = vmatpush1.msra.mxu0 0.0
    %2222 = vmatprep.subr.mxu0 0.0
    %2223 = vmatpush1.msra.mxu0 0.0
    %2224 = vmatprep.subr.mxu0 0.0
    %2225 = vmatpush1.msra.mxu0 0.0
    %2226 = vmatprep.subr.mxu0 0.0
    %2227 = vmatpush1.msra.mxu0 0.0
    %2228 = vmatprep.subr.mxu0 0.0
    %2229 = vmatpush1.msra.mxu0 0.0
    %2230 = vmatprep.subr.mxu0 0.0
    %2231 = vmatpush1.msra.mxu0 0.0
    %2232 = vmatprep.subr.mxu0 0.0
    %2233 = vmatpush1.msra.mxu0 0.0
    %2234 = vmatprep.subr.mxu0 0.0
    %2235 = vmatpush1.msra.mxu0 0.0
    %2236 = vmatprep.subr.mxu0 0.0
    %2237 = vmatpush1.msra.mxu0 0.0
    %2238 = vmatprep.subr.mxu0 0.0
    %2239 = vmatpush1.msra.mxu0 0.0
    %2240 = vmatprep.mubr.f32.mxu0 0.0
    %2241 = vmatmul.mubr.f32.gmra.mrb[0].mxu0 %v2174
    %v2242 = vpop.f32.mrb[0].mxu0
    %v2243 = vadd.f32 0.0, %v2242
    %v2244 = vpop.f32.mrb[0].mxu0
    %2245 = vdwg.mxu0
    %v2247 = vsel %vm342, %v1718, 0
    %2249 = vmatprep.subr.mxu0 0.0
    %2250 = vmatpush1.msra.mxu0 %v297
    %2251 = vmatprep.subr.mxu0 0.0
    %2252 = vmatpush1.msra.mxu0 0.0
    %2253 = vmatprep.subr.mxu0 0.0
    %2254 = vmatpush1.msra.mxu0 0.0
    %2255 = vmatprep.subr.mxu0 0.0
    %2256 = vmatpush1.msra.mxu0 0.0
    %2257 = vmatprep.subr.mxu0 0.0
    %2258 = vmatpush1.msra.mxu0 0.0
    %2259 = vmatprep.subr.mxu0 0.0
    %2260 = vmatpush1.msra.mxu0 0.0
    %2261 = vmatprep.subr.mxu0 0.0
    %2262 = vmatpush1.msra.mxu0 0.0
    %2263 = vmatprep.subr.mxu0 0.0
    %2264 = vmatpush1.msra.mxu0 0.0
    %2265 = vmatprep.subr.mxu0 0.0
    %2266 = vmatpush1.msra.mxu0 0.0
    %2267 = vmatprep.subr.mxu0 0.0
    %2268 = vmatpush1.msra.mxu0 0.0
    %2269 = vmatprep.subr.mxu0 0.0
    %2270 = vmatpush1.msra.mxu0 0.0
    %2271 = vmatprep.subr.mxu0 0.0
    %2272 = vmatpush1.msra.mxu0 0.0
    %2273 = vmatprep.subr.mxu0 0.0
    %2274 = vmatpush1.msra.mxu0 0.0
    %2275 = vmatprep.subr.mxu0 0.0
    %2276 = vmatpush1.msra.mxu0 0.0
    %2277 = vmatprep.subr.mxu0 0.0
    %2278 = vmatpush1.msra.mxu0 0.0
    %2279 = vmatprep.subr.mxu0 0.0
    %2280 = vmatpush1.msra.mxu0 0.0
    %2281 = vmatprep.subr.mxu0 0.0
    %2282 = vmatpush1.msra.mxu0 0.0
    %2283 = vmatprep.subr.mxu0 0.0
    %2284 = vmatpush1.msra.mxu0 0.0
    %2285 = vmatprep.subr.mxu0 0.0
    %2286 = vmatpush1.msra.mxu0 0.0
    %2287 = vmatprep.subr.mxu0 0.0
    %2288 = vmatpush1.msra.mxu0 0.0
    %2289 = vmatprep.subr.mxu0 0.0
    %2290 = vmatpush1.msra.mxu0 0.0
    %2291 = vmatprep.subr.mxu0 0.0
    %2292 = vmatpush1.msra.mxu0 0.0
    %2293 = vmatprep.subr.mxu0 0.0
    %2294 = vmatpush1.msra.mxu0 0.0
    %2295 = vmatprep.subr.mxu0 0.0
    %2296 = vmatpush1.msra.mxu0 0.0
    %2297 = vmatprep.subr.mxu0 0.0
    %2298 = vmatpush1.msra.mxu0 0.0
    %2299 = vmatprep.subr.mxu0 0.0
    %2300 = vmatpush1.msra.mxu0 0.0
    %2301 = vmatprep.subr.mxu0 0.0
    %2302 = vmatpush1.msra.mxu0 0.0
    %2303 = vmatprep.subr.mxu0 0.0
    %2304 = vmatpush1.msra.mxu0 0.0
    %2305 = vmatprep.subr.mxu0 0.0
    %2306 = vmatpush1.msra.mxu0 0.0
    %2307 = vmatprep.subr.mxu0 0.0
    %2308 = vmatpush1.msra.mxu0 0.0
    %2309 = vmatprep.subr.mxu0 0.0
    %2310 = vmatpush1.msra.mxu0 0.0
    %2311 = vmatprep.subr.mxu0 0.0
    %2312 = vmatpush1.msra.mxu0 0.0
    %2313 = vmatprep.mubr.f32.mxu0 0.0
    %2314 = vmatmul.mubr.f32.gmra.mrb[0].mxu0 %v2247
    %v2315 = vpop.f32.mrb[0].mxu0
    %v2316 = vadd.f32 0.0, %v2315
    %v2317 = vpop.f32.mrb[0].mxu0
    %2318 = vdwg.mxu0
    %v2320 = vsel %vm342, %v1720, 0
    %2322 = vmatprep.subr.mxu0 0.0
    %2323 = vmatpush1.msra.mxu0 %v303
    %2324 = vmatprep.subr.mxu0 0.0
    %2325 = vmatpush1.msra.mxu0 0.0
    %2326 = vmatprep.subr.mxu0 0.0
    %2327 = vmatpush1.msra.mxu0 0.0
    %2328 = vmatprep.subr.mxu0 0.0
    %2329 = vmatpush1.msra.mxu0 0.0
    %2330 = vmatprep.subr.mxu0 0.0
    %2331 = vmatpush1.msra.mxu0 0.0
    %2332 = vmatprep.subr.mxu0 0.0
    %2333 = vmatpush1.msra.mxu0 0.0
    %2334 = vmatprep.subr.mxu0 0.0
    %2335 = vmatpush1.msra.mxu0 0.0
    %2336 = vmatprep.subr.mxu0 0.0
    %2337 = vmatpush1.msra.mxu0 0.0
    %2338 = vmatprep.subr.mxu0 0.0
    %2339 = vmatpush1.msra.mxu0 0.0
    %2340 = vmatprep.subr.mxu0 0.0
    %2341 = vmatpush1.msra.mxu0 0.0
    %2342 = vmatprep.subr.mxu0 0.0
    %2343 = vmatpush1.msra.mxu0 0.0
    %2344 = vmatprep.subr.mxu0 0.0
    %2345 = vmatpush1.msra.mxu0 0.0
    %2346 = vmatprep.subr.mxu0 0.0
    %2347 = vmatpush1.msra.mxu0 0.0
    %2348 = vmatprep.subr.mxu0 0.0
    %2349 = vmatpush1.msra.mxu0 0.0
    %2350 = vmatprep.subr.mxu0 0.0
    %2351 = vmatpush1.msra.mxu0 0.0
    %2352 = vmatprep.subr.mxu0 0.0
    %2353 = vmatpush1.msra.mxu0 0.0
    %2354 = vmatprep.subr.mxu0 0.0
    %2355 = vmatpush1.msra.mxu0 0.0
    %2356 = vmatprep.subr.mxu0 0.0
    %2357 = vmatpush1.msra.mxu0 0.0
    %2358 = vmatprep.subr.mxu0 0.0
    %2359 = vmatpush1.msra.mxu0 0.0
    %2360 = vmatprep.subr.mxu0 0.0
    %2361 = vmatpush1.msra.mxu0 0.0
    %2362 = vmatprep.subr.mxu0 0.0
    %2363 = vmatpush1.msra.mxu0 0.0
    %2364 = vmatprep.subr.mxu0 0.0
    %2365 = vmatpush1.msra.mxu0 0.0
    %2366 = vmatprep.subr.mxu0 0.0
    %2367 = vmatpush1.msra.mxu0 0.0
    %2368 = vmatprep.subr.mxu0 0.0
    %2369 = vmatpush1.msra.mxu0 0.0
    %2370 = vmatprep.subr.mxu0 0.0
    %2371 = vmatpush1.msra.mxu0 0.0
    %2372 = vmatprep.subr.mxu0 0.0
    %2373 = vmatpush1.msra.mxu0 0.0
    %2374 = vmatprep.subr.mxu0 0.0
    %2375 = vmatpush1.msra.mxu0 0.0
    %2376 = vmatprep.subr.mxu0 0.0
    %2377 = vmatpush1.msra.mxu0 0.0
    %2378 = vmatprep.subr.mxu0 0.0
    %2379 = vmatpush1.msra.mxu0 0.0
    %2380 = vmatprep.subr.mxu0 0.0
    %2381 = vmatpush1.msra.mxu0 0.0
    %2382 = vmatprep.subr.mxu0 0.0
    %2383 = vmatpush1.msra.mxu0 0.0
    %2384 = vmatprep.subr.mxu0 0.0
    %2385 = vmatpush1.msra.mxu0 0.0
    %2386 = vmatprep.mubr.f32.mxu0 0.0
    %2387 = vmatmul.mubr.f32.gmra.mrb[0].mxu0 %v2320
    %v2388 = vpop.f32.mrb[0].mxu0
    %v2389 = vadd.f32 0.0, %v2388
    %v2390 = vpop.f32.mrb[0].mxu0
    %2391 = vdwg.mxu0
    %v2393 = vsel %vm342, %v1722, 0
    %2395 = vmatprep.subr.mxu0 0.0
    %2396 = vmatpush1.msra.mxu0 %v305
    %2397 = vmatprep.subr.mxu0 0.0
    %2398 = vmatpush1.msra.mxu0 0.0
    %2399 = vmatprep.subr.mxu0 0.0
    %2400 = vmatpush1.msra.mxu0 0.0
    %2401 = vmatprep.subr.mxu0 0.0
    %2402 = vmatpush1.msra.mxu0 0.0
    %2403 = vmatprep.subr.mxu0 0.0
    %2404 = vmatpush1.msra.mxu0 0.0
    %2405 = vmatprep.subr.mxu0 0.0
    %2406 = vmatpush1.msra.mxu0 0.0
    %2407 = vmatprep.subr.mxu0 0.0
    %2408 = vmatpush1.msra.mxu0 0.0
    %2409 = vmatprep.subr.mxu0 0.0
    %2410 = vmatpush1.msra.mxu0 0.0
    %2411 = vmatprep.subr.mxu0 0.0
    %2412 = vmatpush1.msra.mxu0 0.0
    %2413 = vmatprep.subr.mxu0 0.0
    %2414 = vmatpush1.msra.mxu0 0.0
    %2415 = vmatprep.subr.mxu0 0.0
    %2416 = vmatpush1.msra.mxu0 0.0
    %2417 = vmatprep.subr.mxu0 0.0
    %2418 = vmatpush1.msra.mxu0 0.0
    %2419 = vmatprep.subr.mxu0 0.0
    %2420 = vmatpush1.msra.mxu0 0.0
    %2421 = vmatprep.subr.mxu0 0.0
    %2422 = vmatpush1.msra.mxu0 0.0
    %2423 = vmatprep.subr.mxu0 0.0
    %2424 = vmatpush1.msra.mxu0 0.0
    %2425 = vmatprep.subr.mxu0 0.0
    %2426 = vmatpush1.msra.mxu0 0.0
    %2427 = vmatprep.subr.mxu0 0.0
    %2428 = vmatpush1.msra.mxu0 0.0
    %2429 = vmatprep.subr.mxu0 0.0
    %2430 = vmatpush1.msra.mxu0 0.0
    %2431 = vmatprep.subr.mxu0 0.0
    %2432 = vmatpush1.msra.mxu0 0.0
    %2433 = vmatprep.subr.mxu0 0.0
    %2434 = vmatpush1.msra.mxu0 0.0
    %2435 = vmatprep.subr.mxu0 0.0
    %2436 = vmatpush1.msra.mxu0 0.0
    %2437 = vmatprep.subr.mxu0 0.0
    %2438 = vmatpush1.msra.mxu0 0.0
    %2439 = vmatprep.subr.mxu0 0.0
    %2440 = vmatpush1.msra.mxu0 0.0
    %2441 = vmatprep.subr.mxu0 0.0
    %2442 = vmatpush1.msra.mxu0 0.0
    %2443 = vmatprep.subr.mxu0 0.0
    %2444 = vmatpush1.msra.mxu0 0.0
    %2445 = vmatprep.subr.mxu0 0.0
    %2446 = vmatpush1.msra.mxu0 0.0
    %2447 = vmatprep.subr.mxu0 0.0
    %2448 = vmatpush1.msra.mxu0 0.0
    %2449 = vmatprep.subr.mxu0 0.0
    %2450 = vmatpush1.msra.mxu0 0.0
    %2451 = vmatprep.subr.mxu0 0.0
    %2452 = vmatpush1.msra.mxu0 0.0
    %2453 = vmatprep.subr.mxu0 0.0
    %2454 = vmatpush1.msra.mxu0 0.0
    %2455 = vmatprep.subr.mxu0 0.0
    %2456 = vmatpush1.msra.mxu0 0.0
    %2457 = vmatprep.subr.mxu0 0.0
    %2458 = vmatpush1.msra.mxu0 0.0
    %2459 = vmatprep.mubr.f32.mxu0 0.0
    %2460 = vmatmul.mubr.f32.gmra.mrb[0].mxu0 %v2393
    %v2461 = vpop.f32.mrb[0].mxu0
    %v2462 = vadd.f32 0.0, %v2461
    %v2463 = vpop.f32.mrb[0].mxu0
    %2464 = vdwg.mxu0
    %v2466 = vsel %vm342, %v1724, 0
    %2468 = vmatprep.subr.mxu0 0.0
    %2469 = vmatpush1.msra.mxu0 %v307
    %2470 = vmatprep.subr.mxu0 0.0
    %2471 = vmatpush1.msra.mxu0 0.0
    %2472 = vmatprep.subr.mxu0 0.0
    %2473 = vmatpush1.msra.mxu0 0.0
    %2474 = vmatprep.subr.mxu0 0.0
    %2475 = vmatpush1.msra.mxu0 0.0
    %2476 = vmatprep.subr.mxu0 0.0
    %2477 = vmatpush1.msra.mxu0 0.0
    %2478 = vmatprep.subr.mxu0 0.0
    %2479 = vmatpush1.msra.mxu0 0.0
    %2480 = vmatprep.subr.mxu0 0.0
    %2481 = vmatpush1.msra.mxu0 0.0
    %2482 = vmatprep.subr.mxu0 0.0
    %2483 = vmatpush1.msra.mxu0 0.0
    %2484 = vmatprep.subr.mxu0 0.0
    %2485 = vmatpush1.msra.mxu0 0.0
    %2486 = vmatprep.subr.mxu0 0.0
    %2487 = vmatpush1.msra.mxu0 0.0
    %2488 = vmatprep.subr.mxu0 0.0
    %2489 = vmatpush1.msra.mxu0 0.0
    %2490 = vmatprep.subr.mxu0 0.0
    %2491 = vmatpush1.msra.mxu0 0.0
    %2492 = vmatprep.subr.mxu0 0.0
    %2493 = vmatpush1.msra.mxu0 0.0
    %2494 = vmatprep.subr.mxu0 0.0
    %2495 = vmatpush1.msra.mxu0 0.0
    %2496 = vmatprep.subr.mxu0 0.0
    %2497 = vmatpush1.msra.mxu0 0.0
    %2498 = vmatprep.subr.mxu0 0.0
    %2499 = vmatpush1.msra.mxu0 0.0
    %2500 = vmatprep.subr.mxu0 0.0
    %2501 = vmatpush1.msra.mxu0 0.0
    %2502 = vmatprep.subr.mxu0 0.0
    %2503 = vmatpush1.msra.mxu0 0.0
    %2504 = vmatprep.subr.mxu0 0.0
    %2505 = vmatpush1.msra.mxu0 0.0
    %2506 = vmatprep.subr.mxu0 0.0
    %2507 = vmatpush1.msra.mxu0 0.0
    %2508 = vmatprep.subr.mxu0 0.0
    %2509 = vmatpush1.msra.mxu0 0.0
    %2510 = vmatprep.subr.mxu0 0.0
    %2511 = vmatpush1.msra.mxu0 0.0
    %2512 = vmatprep.subr.mxu0 0.0
    %2513 = vmatpush1.msra.mxu0 0.0
    %2514 = vmatprep.subr.mxu0 0.0
    %2515 = vmatpush1.msra.mxu0 0.0
    %2516 = vmatprep.subr.mxu0 0.0
    %2517 = vmatpush1.msra.mxu0 0.0
    %2518 = vmatprep.subr.mxu0 0.0
    %2519 = vmatpush1.msra.mxu0 0.0
    %2520 = vmatprep.subr.mxu0 0.0
    %2521 = vmatpush1.msra.mxu0 0.0
    %2522 = vmatprep.subr.mxu0 0.0
    %2523 = vmatpush1.msra.mxu0 0.0
    %2524 = vmatprep.subr.mxu0 0.0
    %2525 = vmatpush1.msra.mxu0 0.0
    %2526 = vmatprep.subr.mxu0 0.0
    %2527 = vmatpush1.msra.mxu0 0.0
    %2528 = vmatprep.subr.mxu0 0.0
    %2529 = vmatpush1.msra.mxu0 0.0
    %2530 = vmatprep.subr.mxu0 0.0
    %2531 = vmatpush1.msra.mxu0 0.0
    %2532 = vmatprep.mubr.f32.mxu0 0.0
    %2533 = vmatmul.mubr.f32.gmra.mrb[0].mxu0 %v2466
    %v2534 = vpop.f32.mrb[0].mxu0
    %v2535 = vadd.f32 0.0, %v2534
    %v2536 = vpop.f32.mrb[0].mxu0
    %2537 = vdwg.mxu0
    %v2539 = vsel %vm342, %v1726, 0
    %2541 = vmatprep.subr.mxu0 0.0
    %2542 = vmatpush1.msra.mxu0 %v309
    %2543 = vmatprep.subr.mxu0 0.0
    %2544 = vmatpush1.msra.mxu0 0.0
    %2545 = vmatprep.subr.mxu0 0.0
    %2546 = vmatpush1.msra.mxu0 0.0
    %2547 = vmatprep.subr.mxu0 0.0
    %2548 = vmatpush1.msra.mxu0 0.0
    %2549 = vmatprep.subr.mxu0 0.0
    %2550 = vmatpush1.msra.mxu0 0.0
    %2551 = vmatprep.subr.mxu0 0.0
    %2552 = vmatpush1.msra.mxu0 0.0
    %2553 = vmatprep.subr.mxu0 0.0
    %2554 = vmatpush1.msra.mxu0 0.0
    %2555 = vmatprep.subr.mxu0 0.0
    %2556 = vmatpush1.msra.mxu0 0.0
    %2557 = vmatprep.subr.mxu0 0.0
    %2558 = vmatpush1.msra.mxu0 0.0
    %2559 = vmatprep.subr.mxu0 0.0
    %2560 = vmatpush1.msra.mxu0 0.0
    %2561 = vmatprep.subr.mxu0 0.0
    %2562 = vmatpush1.msra.mxu0 0.0
    %2563 = vmatprep.subr.mxu0 0.0
    %2564 = vmatpush1.msra.mxu0 0.0
    %2565 = vmatprep.subr.mxu0 0.0
    %2566 = vmatpush1.msra.mxu0 0.0
    %2567 = vmatprep.subr.mxu0 0.0
    %2568 = vmatpush1.msra.mxu0 0.0
    %2569 = vmatprep.subr.mxu0 0.0
    %2570 = vmatpush1.msra.mxu0 0.0
    %2571 = vmatprep.subr.mxu0 0.0
    %2572 = vmatpush1.msra.mxu0 0.0
    %2573 = vmatprep.subr.mxu0 0.0
    %2574 = vmatpush1.msra.mxu0 0.0
    %2575 = vmatprep.subr.mxu0 0.0
    %2576 = vmatpush1.msra.mxu0 0.0
    %2577 = vmatprep.subr.mxu0 0.0
    %2578 = vmatpush1.msra.mxu0 0.0
    %2579 = vmatprep.subr.mxu0 0.0
    %2580 = vmatpush1.msra.mxu0 0.0
    %2581 = vmatprep.subr.mxu0 0.0
    %2582 = vmatpush1.msra.mxu0 0.0
    %2583 = vmatprep.subr.mxu0 0.0
    %2584 = vmatpush1.msra.mxu0 0.0
    %2585 = vmatprep.subr.mxu0 0.0
    %2586 = vmatpush1.msra.mxu0 0.0
    %2587 = vmatprep.subr.mxu0 0.0
    %2588 = vmatpush1.msra.mxu0 0.0
    %2589 = vmatprep.subr.mxu0 0.0
    %2590 = vmatpush1.msra.mxu0 0.0
    %2591 = vmatprep.subr.mxu0 0.0
    %2592 = vmatpush1.msra.mxu0 0.0
    %2593 = vmatprep.subr.mxu0 0.0
    %2594 = vmatpush1.msra.mxu0 0.0
    %2595 = vmatprep.subr.mxu0 0.0
    %2596 = vmatpush1.msra.mxu0 0.0
    %2597 = vmatprep.subr.mxu0 0.0
    %2598 = vmatpush1.msra.mxu0 0.0
    %2599 = vmatprep.subr.mxu0 0.0
    %2600 = vmatpush1.msra.mxu0 0.0
    %2601 = vmatprep.subr.mxu0 0.0
    %2602 = vmatpush1.msra.mxu0 0.0
    %2603 = vmatprep.subr.mxu0 0.0
    %2604 = vmatpush1.msra.mxu0 0.0
    %2605 = vmatprep.mubr.f32.mxu0 0.0
    %2606 = vmatmul.mubr.f32.gmra.mrb[0].mxu0 %v2539
    %v2607 = vpop.f32.mrb[0].mxu0
    %v2608 = vadd.f32 0.0, %v2607
    %v2609 = vpop.f32.mrb[0].mxu0
    %2610 = vdwg.mxu0
    %v2612 = vsel %vm342, %v1728, 0
    %2614 = vmatprep.subr.mxu0 0.0
    %2615 = vmatpush1.msra.mxu0 %v315
    %2616 = vmatprep.subr.mxu0 0.0
    %2617 = vmatpush1.msra.mxu0 0.0
    %2618 = vmatprep.subr.mxu0 0.0
    %2619 = vmatpush1.msra.mxu0 0.0
    %2620 = vmatprep.subr.mxu0 0.0
    %2621 = vmatpush1.msra.mxu0 0.0
    %2622 = vmatprep.subr.mxu0 0.0
    %2623 = vmatpush1.msra.mxu0 0.0
    %2624 = vmatprep.subr.mxu0 0.0
    %2625 = vmatpush1.msra.mxu0 0.0
    %2626 = vmatprep.subr.mxu0 0.0
    %2627 = vmatpush1.msra.mxu0 0.0
    %2628 = vmatprep.subr.mxu0 0.0
    %2629 = vmatpush1.msra.mxu0 0.0
    %2630 = vmatprep.subr.mxu0 0.0
    %2631 = vmatpush1.msra.mxu0 0.0
    %2632 = vmatprep.subr.mxu0 0.0
    %2633 = vmatpush1.msra.mxu0 0.0
    %2634 = vmatprep.subr.mxu0 0.0
    %2635 = vmatpush1.msra.mxu0 0.0
    %2636 = vmatprep.subr.mxu0 0.0
    %2637 = vmatpush1.msra.mxu0 0.0
    %2638 = vmatprep.subr.mxu0 0.0
    %2639 = vmatpush1.msra.mxu0 0.0
    %2640 = vmatprep.subr.mxu0 0.0
    %2641 = vmatpush1.msra.mxu0 0.0
    %2642 = vmatprep.subr.mxu0 0.0
    %2643 = vmatpush1.msra.mxu0 0.0
    %2644 = vmatprep.subr.mxu0 0.0
    %2645 = vmatpush1.msra.mxu0 0.0
    %2646 = vmatprep.subr.mxu0 0.0
    %2647 = vmatpush1.msra.mxu0 0.0
    %2648 = vmatprep.subr.mxu0 0.0
    %2649 = vmatpush1.msra.mxu0 0.0
    %2650 = vmatprep.subr.mxu0 0.0
    %2651 = vmatpush1.msra.mxu0 0.0
    %2652 = vmatprep.subr.mxu0 0.0
    %2653 = vmatpush1.msra.mxu0 0.0
    %2654 = vmatprep.subr.mxu0 0.0
    %2655 = vmatpush1.msra.mxu0 0.0
    %2656 = vmatprep.subr.mxu0 0.0
    %2657 = vmatpush1.msra.mxu0 0.0
    %2658 = vmatprep.subr.mxu0 0.0
    %2659 = vmatpush1.msra.mxu0 0.0
    %2660 = vmatprep.subr.mxu0 0.0
    %2661 = vmatpush1.msra.mxu0 0.0
    %2662 = vmatprep.subr.mxu0 0.0
    %2663 = vmatpush1.msra.mxu0 0.0
    %2664 = vmatprep.subr.mxu0 0.0
    %2665 = vmatpush1.msra.mxu0 0.0
    %2666 = vmatprep.subr.mxu0 0.0
    %2667 = vmatpush1.msra.mxu0 0.0
    %2668 = vmatprep.subr.mxu0 0.0
    %2669 = vmatpush1.msra.mxu0 0.0
    %2670 = vmatprep.subr.mxu0 0.0
    %2671 = vmatpush1.msra.mxu0 0.0
    %2672 = vmatprep.subr.mxu0 0.0
    %2673 = vmatpush1.msra.mxu0 0.0
    %2674 = vmatprep.subr.mxu0 0.0
    %2675 = vmatpush1.msra.mxu0 0.0
    %2676 = vmatprep.subr.mxu0 0.0
    %2677 = vmatpush1.msra.mxu0 0.0
    %2678 = vmatprep.mubr.f32.mxu0 0.0
    %2679 = vmatmul.mubr.f32.gmra.mrb[0].mxu0 %v2612
    %v2680 = vpop.f32.mrb[0].mxu0
    %v2681 = vadd.f32 0.0, %v2680
    %v2682 = vpop.f32.mrb[0].mxu0
    %2683 = vdwg.mxu0
    %v2685 = vsel %vm342, %v1730, 0
    %2687 = vmatprep.subr.mxu0 0.0
    %2688 = vmatpush1.msra.mxu0 %v317
    %2689 = vmatprep.subr.mxu0 0.0
    %2690 = vmatpush1.msra.mxu0 0.0
    %2691 = vmatprep.subr.mxu0 0.0
    %2692 = vmatpush1.msra.mxu0 0.0
    %2693 = vmatprep.subr.mxu0 0.0
    %2694 = vmatpush1.msra.mxu0 0.0
    %2695 = vmatprep.subr.mxu0 0.0
    %2696 = vmatpush1.msra.mxu0 0.0
    %2697 = vmatprep.subr.mxu0 0.0
    %2698 = vmatpush1.msra.mxu0 0.0
    %2699 = vmatprep.subr.mxu0 0.0
    %2700 = vmatpush1.msra.mxu0 0.0
    %2701 = vmatprep.subr.mxu0 0.0
    %2702 = vmatpush1.msra.mxu0 0.0
    %2703 = vmatprep.subr.mxu0 0.0
    %2704 = vmatpush1.msra.mxu0 0.0
    %2705 = vmatprep.subr.mxu0 0.0
    %2706 = vmatpush1.msra.mxu0 0.0
    %2707 = vmatprep.subr.mxu0 0.0
    %2708 = vmatpush1.msra.mxu0 0.0
    %2709 = vmatprep.subr.mxu0 0.0
    %2710 = vmatpush1.msra.mxu0 0.0
    %2711 = vmatprep.subr.mxu0 0.0
    %2712 = vmatpush1.msra.mxu0 0.0
    %2713 = vmatprep.subr.mxu0 0.0
    %2714 = vmatpush1.msra.mxu0 0.0
    %2715 = vmatprep.subr.mxu0 0.0
    %2716 = vmatpush1.msra.mxu0 0.0
    %2717 = vmatprep.subr.mxu0 0.0
    %2718 = vmatpush1.msra.mxu0 0.0
    %2719 = vmatprep.subr.mxu0 0.0
    %2720 = vmatpush1.msra.mxu0 0.0
    %2721 = vmatprep.subr.mxu0 0.0
    %2722 = vmatpush1.msra.mxu0 0.0
    %2723 = vmatprep.subr.mxu0 0.0
    %2724 = vmatpush1.msra.mxu0 0.0
    %2725 = vmatprep.subr.mxu0 0.0
    %2726 = vmatpush1.msra.mxu0 0.0
    %2727 = vmatprep.subr.mxu0 0.0
    %2728 = vmatpush1.msra.mxu0 0.0
    %2729 = vmatprep.subr.mxu0 0.0
    %2730 = vmatpush1.msra.mxu0 0.0
    %2731 = vmatprep.subr.mxu0 0.0
    %2732 = vmatpush1.msra.mxu0 0.0
    %2733 = vmatprep.subr.mxu0 0.0
    %2734 = vmatpush1.msra.mxu0 0.0
    %2735 = vmatprep.subr.mxu0 0.0
    %2736 = vmatpush1.msra.mxu0 0.0
    %2737 = vmatprep.subr.mxu0 0.0
    %2738 = vmatpush1.msra.mxu0 0.0
    %2739 = vmatprep.subr.mxu0 0.0
    %2740 = vmatpush1.msra.mxu0 0.0
    %2741 = vmatprep.subr.mxu0 0.0
    %2742 = vmatpush1.msra.mxu0 0.0
    %2743 = vmatprep.subr.mxu0 0.0
    %2744 = vmatpush1.msra.mxu0 0.0
    %2745 = vmatprep.subr.mxu0 0.0
    %2746 = vmatpush1.msra.mxu0 0.0
    %2747 = vmatprep.subr.mxu0 0.0
    %2748 = vmatpush1.msra.mxu0 0.0
    %2749 = vmatprep.subr.mxu0 0.0
    %2750 = vmatpush1.msra.mxu0 0.0
    %2751 = vmatprep.mubr.f32.mxu0 0.0
    %2752 = vmatmul.mubr.f32.gmra.mrb[0].mxu0 %v2685
    %v2753 = vpop.f32.mrb[0].mxu0
    %v2754 = vadd.f32 0.0, %v2753
    %v2755 = vpop.f32.mrb[0].mxu0
    %2756 = vdwg.mxu0
    %v2758 = vsel %vm342, %v1732, 0
    %2760 = vmatprep.subr.mxu0 0.0
    %2761 = vmatpush1.msra.mxu0 %v319
    %2762 = vmatprep.subr.mxu0 0.0
    %2763 = vmatpush1.msra.mxu0 0.0
    %2764 = vmatprep.subr.mxu0 0.0
    %2765 = vmatpush1.msra.mxu0 0.0
    %2766 = vmatprep.subr.mxu0 0.0
    %2767 = vmatpush1.msra.mxu0 0.0
    %2768 = vmatprep.subr.mxu0 0.0
    %2769 = vmatpush1.msra.mxu0 0.0
    %2770 = vmatprep.subr.mxu0 0.0
    %2771 = vmatpush1.msra.mxu0 0.0
    %2772 = vmatprep.subr.mxu0 0.0
    %2773 = vmatpush1.msra.mxu0 0.0
    %2774 = vmatprep.subr.mxu0 0.0
    %2775 = vmatpush1.msra.mxu0 0.0
    %2776 = vmatprep.subr.mxu0 0.0
    %2777 = vmatpush1.msra.mxu0 0.0
    %2778 = vmatprep.subr.mxu0 0.0
    %2779 = vmatpush1.msra.mxu0 0.0
    %2780 = vmatprep.subr.mxu0 0.0
    %2781 = vmatpush1.msra.mxu0 0.0
    %2782 = vmatprep.subr.mxu0 0.0
    %2783 = vmatpush1.msra.mxu0 0.0
    %2784 = vmatprep.subr.mxu0 0.0
    %2785 = vmatpush1.msra.mxu0 0.0
    %2786 = vmatprep.subr.mxu0 0.0
    %2787 = vmatpush1.msra.mxu0 0.0
    %2788 = vmatprep.subr.mxu0 0.0
    %2789 = vmatpush1.msra.mxu0 0.0
    %2790 = vmatprep.subr.mxu0 0.0
    %2791 = vmatpush1.msra.mxu0 0.0
    %2792 = vmatprep.subr.mxu0 0.0
    %2793 = vmatpush1.msra.mxu0 0.0
    %2794 = vmatprep.subr.mxu0 0.0
    %2795 = vmatpush1.msra.mxu0 0.0
    %2796 = vmatprep.subr.mxu0 0.0
    %2797 = vmatpush1.msra.mxu0 0.0
    %2798 = vmatprep.subr.mxu0 0.0
    %2799 = vmatpush1.msra.mxu0 0.0
    %2800 = vmatprep.subr.mxu0 0.0
    %2801 = vmatpush1.msra.mxu0 0.0
    %2802 = vmatprep.subr.mxu0 0.0
    %2803 = vmatpush1.msra.mxu0 0.0
    %2804 = vmatprep.subr.mxu0 0.0
    %2805 = vmatpush1.msra.mxu0 0.0
    %2806 = vmatprep.subr.mxu0 0.0
    %2807 = vmatpush1.msra.mxu0 0.0
    %2808 = vmatprep.subr.mxu0 0.0
    %2809 = vmatpush1.msra.mxu0 0.0
    %2810 = vmatprep.subr.mxu0 0.0
    %2811 = vmatpush1.msra.mxu0 0.0
    %2812 = vmatprep.subr.mxu0 0.0
    %2813 = vmatpush1.msra.mxu0 0.0
    %2814 = vmatprep.subr.mxu0 0.0
    %2815 = vmatpush1.msra.mxu0 0.0
    %2816 = vmatprep.subr.mxu0 0.0
    %2817 = vmatpush1.msra.mxu0 0.0
    %2818 = vmatprep.subr.mxu0 0.0
    %2819 = vmatpush1.msra.mxu0 0.0
    %2820 = vmatprep.subr.mxu0 0.0
    %2821 = vmatpush1.msra.mxu0 0.0
    %2822 = vmatprep.subr.mxu0 0.0
    %2823 = vmatpush1.msra.mxu0 0.0
    %2824 = vmatprep.mubr.f32.mxu0 0.0
    %2825 = vmatmul.mubr.f32.gmra.mrb[0].mxu0 %v2758
    %v2826 = vpop.f32.mrb[0].mxu0
    %v2827 = vadd.f32 0.0, %v2826
    %v2828 = vpop.f32.mrb[0].mxu0
    %2829 = vdwg.mxu0
    %v2831 = vsel %vm342, %v1734, 0
    %2833 = vmatprep.subr.mxu0 0.0
    %2834 = vmatpush1.msra.mxu0 %v321
    %2835 = vmatprep.subr.mxu0 0.0
    %2836 = vmatpush1.msra.mxu0 0.0
    %2837 = vmatprep.subr.mxu0 0.0
    %2838 = vmatpush1.msra.mxu0 0.0
    %2839 = vmatprep.subr.mxu0 0.0
    %2840 = vmatpush1.msra.mxu0 0.0
    %2841 = vmatprep.subr.mxu0 0.0
    %2842 = vmatpush1.msra.mxu0 0.0
    %2843 = vmatprep.subr.mxu0 0.0
    %2844 = vmatpush1.msra.mxu0 0.0
    %2845 = vmatprep.subr.mxu0 0.0
    %2846 = vmatpush1.msra.mxu0 0.0
    %2847 = vmatprep.subr.mxu0 0.0
    %2848 = vmatpush1.msra.mxu0 0.0
    %2849 = vmatprep.subr.mxu0 0.0
    %2850 = vmatpush1.msra.mxu0 0.0
    %2851 = vmatprep.subr.mxu0 0.0
    %2852 = vmatpush1.msra.mxu0 0.0
    %2853 = vmatprep.subr.mxu0 0.0
    %2854 = vmatpush1.msra.mxu0 0.0
    %2855 = vmatprep.subr.mxu0 0.0
    %2856 = vmatpush1.msra.mxu0 0.0
    %2857 = vmatprep.subr.mxu0 0.0
    %2858 = vmatpush1.msra.mxu0 0.0
    %2859 = vmatprep.subr.mxu0 0.0
    %2860 = vmatpush1.msra.mxu0 0.0
    %2861 = vmatprep.subr.mxu0 0.0
    %2862 = vmatpush1.msra.mxu0 0.0
    %2863 = vmatprep.subr.mxu0 0.0
    %2864 = vmatpush1.msra.mxu0 0.0
    %2865 = vmatprep.subr.mxu0 0.0
    %2866 = vmatpush1.msra.mxu0 0.0
    %2867 = vmatprep.subr.mxu0 0.0
    %2868 = vmatpush1.msra.mxu0 0.0
    %2869 = vmatprep.subr.mxu0 0.0
    %2870 = vmatpush1.msra.mxu0 0.0
    %2871 = vmatprep.subr.mxu0 0.0
    %2872 = vmatpush1.msra.mxu0 0.0
    %2873 = vmatprep.subr.mxu0 0.0
    %2874 = vmatpush1.msra.mxu0 0.0
    %2875 = vmatprep.subr.mxu0 0.0
    %2876 = vmatpush1.msra.mxu0 0.0
    %2877 = vmatprep.subr.mxu0 0.0
    %2878 = vmatpush1.msra.mxu0 0.0
    %2879 = vmatprep.subr.mxu0 0.0
    %2880 = vmatpush1.msra.mxu0 0.0
    %2881 = vmatprep.subr.mxu0 0.0
    %2882 = vmatpush1.msra.mxu0 0.0
    %2883 = vmatprep.subr.mxu0 0.0
    %2884 = vmatpush1.msra.mxu0 0.0
    %2885 = vmatprep.subr.mxu0 0.0
    %2886 = vmatpush1.msra.mxu0 0.0
    %2887 = vmatprep.subr.mxu0 0.0
    %2888 = vmatpush1.msra.mxu0 0.0
    %2889 = vmatprep.subr.mxu0 0.0
    %2890 = vmatpush1.msra.mxu0 0.0
    %2891 = vmatprep.subr.mxu0 0.0
    %2892 = vmatpush1.msra.mxu0 0.0
    %2893 = vmatprep.subr.mxu0 0.0
    %2894 = vmatpush1.msra.mxu0 0.0
    %2895 = vmatprep.subr.mxu0 0.0
    %2896 = vmatpush1.msra.mxu0 0.0
    %2897 = vmatprep.mubr.f32.mxu0 0.0
    %2898 = vmatmul.mubr.f32.gmra.mrb[0].mxu0 %v2831
    %v2899 = vpop.f32.mrb[0].mxu0
    %v2900 = vadd.f32 0.0, %v2899
    %v2901 = vpop.f32.mrb[0].mxu0
    %2902 = vdwg.mxu0
    %2907 = vrot.lane.b32.xlu0 %v2097, 8
    %v2908 = vpop.permute.xlu0 %2907
    %2909 = vrot.lane.b32.xlu0 %v2170, 8
    %v2910 = vpop.permute.xlu0 %2909
    %2911 = vrot.lane.b32.xlu0 %v2243, 8
    %v2912 = vpop.permute.xlu0 %2911
    %2913 = vrot.lane.b32.xlu0 %v2316, 8
    %v2914 = vpop.permute.xlu0 %2913
    %2923 = vrot.lane.b32.xlu0 %v2389, 16
    %v2924 = vpop.permute.xlu0 %2923
    %2925 = vrot.lane.b32.xlu0 %v2462, 16
    %v2926 = vpop.permute.xlu0 %2925
    %2927 = vrot.lane.b32.xlu0 %v2535, 16
    %v2928 = vpop.permute.xlu0 %2927
    %2929 = vrot.lane.b32.xlu0 %v2608, 16
    %v2930 = vpop.permute.xlu0 %2929
    %2939 = vrot.lane.b32.xlu0 %v2681, 24
    %v2940 = vpop.permute.xlu0 %2939
    %2941 = vrot.lane.b32.xlu0 %v2754, 24
    %v2942 = vpop.permute.xlu0 %2941
    %2943 = vrot.lane.b32.xlu0 %v2827, 24
    %v2944 = vpop.permute.xlu0 %2943
    %2945 = vrot.lane.b32.xlu0 %v2900, 24
    %v2946 = vpop.permute.xlu0 %2945
    %v2951 = vsel %vm342, %v1805, %v2908
    %v2952 = vsel %vm342, %v1878, %v2910
    %v2953 = vsel %vm342, %v1951, %v2912
    %v2954 = vsel %vm342, %v2024, %v2914
    %vm2955 = vcmask 130048
    %v2956 = vsel %vm2955, %v2951, %v2924
    %v2957 = vsel %vm2955, %v2952, %v2926
    %v2958 = vsel %vm2955, %v2953, %v2928
    %v2959 = vsel %vm2955, %v2954, %v2930
    %vm2960 = vcmask 195584
    %v2961 = vsel %vm2960, %v2956, %v2940
    %v2962 = vsel %vm2960, %v2957, %v2942
    %v2963 = vsel %vm2960, %v2958, %v2944
    %v2964 = vsel %vm2960, %v2959, %v2946
    %v2965 = vld [vmem:[%s7] sm:$0xff]
    %v2966 = vld [vmem:[%s7 + $0x8] sm:$0xff]
    %v2967 = vld [vmem:[%s7 + $0x10] sm:$0xff]
    %v2968 = vld [vmem:[%s7 + $0x18] sm:$0xff]
    %v2969 = vld [vmem:[%s8] sm:$0x1]
    %v2971 = vlaneseq
    %v2972 = vshrl.u32 %v2971, 7
    %v2973 = vsub.s32 0, %v2972
    %v2974 = vrot.slane %v2969, %v2973
    %v2977 = vsel %vm52, %v2961, 0
    %v2980 = vsel %vm52, %v2962, 0
    %v2983 = vsel %vm52, %v2963, 0
    %v2986 = vsel %vm52, %v2964, 0
    %2988 = vmatprep.subr.mxu0 0.0
    %2989 = vmatpush1.msra.mxu0 %v2965
    %2990 = vmatprep.subr.mxu0 0.0
    %2991 = vmatpush1.msra.mxu0 %v2966
    %2992 = vmatprep.subr.mxu0 0.0
    %2993 = vmatpush1.msra.mxu0 %v2967
    %2994 = vmatprep.subr.mxu0 0.0
    %2995 = vmatpush1.msra.mxu0 %v2968
    %2996 = vmatprep.subr.mxu0 0.0
    %2997 = vmatpush1.msra.mxu0 0.0
    %2998 = vmatprep.subr.mxu0 0.0
    %2999 = vmatpush1.msra.mxu0 0.0
    %3000 = vmatprep.subr.mxu0 0.0
    %3001 = vmatpush1.msra.mxu0 0.0
    %3002 = vmatprep.subr.mxu0 0.0
    %3003 = vmatpush1.msra.mxu0 0.0
    %3004 = vmatprep.subr.mxu0 0.0
    %3005 = vmatpush1.msra.mxu0 0.0
    %3006 = vmatprep.subr.mxu0 0.0
    %3007 = vmatpush1.msra.mxu0 0.0
    %3008 = vmatprep.subr.mxu0 0.0
    %3009 = vmatpush1.msra.mxu0 0.0
    %3010 = vmatprep.subr.mxu0 0.0
    %3011 = vmatpush1.msra.mxu0 0.0
    %3012 = vmatprep.subr.mxu0 0.0
    %3013 = vmatpush1.msra.mxu0 0.0
    %3014 = vmatprep.subr.mxu0 0.0
    %3015 = vmatpush1.msra.mxu0 0.0
    %3016 = vmatprep.subr.mxu0 0.0
    %3017 = vmatpush1.msra.mxu0 0.0
    %3018 = vmatprep.subr.mxu0 0.0
    %3019 = vmatpush1.msra.mxu0 0.0
    %3020 = vmatprep.subr.mxu0 0.0
    %3021 = vmatpush1.msra.mxu0 0.0
    %3022 = vmatprep.subr.mxu0 0.0
    %3023 = vmatpush1.msra.mxu0 0.0
    %3024 = vmatprep.subr.mxu0 0.0
    %3025 = vmatpush1.msra.mxu0 0.0
    %3026 = vmatprep.subr.mxu0 0.0
    %3027 = vmatpush1.msra.mxu0 0.0
    %3028 = vmatprep.subr.mxu0 0.0
    %3029 = vmatpush1.msra.mxu0 0.0
    %3030 = vmatprep.subr.mxu0 0.0
    %3031 = vmatpush1.msra.mxu0 0.0
    %3032 = vmatprep.subr.mxu0 0.0
    %3033 = vmatpush1.msra.mxu0 0.0
    %3034 = vmatprep.subr.mxu0 0.0
    %3035 = vmatpush1.msra.mxu0 0.0
    %3036 = vmatprep.subr.mxu0 0.0
    %3037 = vmatpush1.msra.mxu0 0.0
    %3038 = vmatprep.subr.mxu0 0.0
    %3039 = vmatpush1.msra.mxu0 0.0
    %3040 = vmatprep.subr.mxu0 0.0
    %3041 = vmatpush1.msra.mxu0 0.0
    %3042 = vmatprep.subr.mxu0 0.0
    %3043 = vmatpush1.msra.mxu0 0.0
    %3044 = vmatprep.subr.mxu0 0.0
    %3045 = vmatpush1.msra.mxu0 0.0
    %3046 = vmatprep.subr.mxu0 0.0
    %3047 = vmatpush1.msra.mxu0 0.0
    %3048 = vmatprep.subr.mxu0 0.0
    %3049 = vmatpush1.msra.mxu0 0.0
    %3050 = vmatprep.subr.mxu0 0.0
    %3051 = vmatpush1.msra.mxu0 0.0
    %3052 = vmatprep.mubr.f32.mxu0 0.0
    %3053 = vmatmul.mubr.f32.gmra.mrb[0].mxu0 %v2977
    %v3054 = vpop.f32.mrb[0].mxu0
    %v3055 = vadd.f32 %v2974, %v3054
    %v3056 = vpop.f32.mrb[0].mxu0
    %3057 = vmatprep.mubr.f32.mxu0 0.0
    %3058 = vmatmul.mubr.f32.gmra.mrb[0].mxu0 %v2980
    %v3059 = vpop.f32.mrb[0].mxu0
    %v3060 = vadd.f32 %v2974, %v3059
    %v3061 = vpop.f32.mrb[0].mxu0
    %3062 = vmatprep.mubr.f32.mxu0 0.0
    %3063 = vmatmul.mubr.f32.gmra.mrb[0].mxu0 %v2983
    %v3064 = vpop.f32.mrb[0].mxu0
    %v3065 = vadd.f32 %v2974, %v3064
    %v3066 = vpop.f32.mrb[0].mxu0
    %3067 = vmatprep.mubr.f32.mxu0 0.0
    %3068 = vmatmul.mubr.f32.gmra.mrb[0].mxu0 %v2986
    %v3069 = vpop.f32.mrb[0].mxu0
    %v3070 = vadd.f32 %v2974, %v3069
    %v3071 = vpop.f32.mrb[0].mxu0
    %3072 = vdwg.mxu0
    %3074 = vrot.lane.b32.xlu0 %v3060, 32
    %v3075 = vpop.permute.xlu0 %3074
    %3078 = vrot.lane.b32.xlu0 %v3065, 64
    %v3079 = vpop.permute.xlu0 %3078
    %3082 = vrot.lane.b32.xlu0 %v3070, 96
    %v3083 = vpop.permute.xlu0 %3082
    %v3085 = vsel %vm52, %v3055, %v3075
    %vm3086 = vcmask 523264
    %v3087 = vsel %vm3086, %v3085, %v3079
    %vm3088 = vcmask 785408
    %v3089 = vsel %vm3088, %v3087, %v3083
    %3090 = vst [vmem:[#allocation2] sm:$0xff] %v3089
    // Predicated region
    $region38: #{tpu_custom_call.1} parent=1 // pred_check
      _
    $region39: #{tpu_custom_call.1} parent=1 // pred_check_branch
      %3092 = sbr.rel (0) target = $region41
    $region40: #{tpu_custom_call.1} parent=1 // pred_region
      %s3094 = ssub.s32 128, 128
      %3095 = vsyncadd [#allocation3], %s3094
      %s3097 = sshll.u32 [#allocation2], 4
      %s3098 = int_to_ptr.vmem [resolvable:$true] %s3097
      %3100 = dma.vmem_to_hbm [thread:$0]  %s3098, 128, %s9, [#allocation3]
    $region41: #{tpu_custom_call.1} parent=1 // pred_fallthru
      _
    // Predicated region
    $region42: #{tpu_custom_call.1} parent=1 // pred_check
      _
    $region43: #{tpu_custom_call.1} parent=1 // pred_check_branch
      %3102 = sbr.rel (0) target = $region45
    $region44: #{tpu_custom_call.1} parent=1 // pred_region
      %3103 = dma.done [#allocation3], 128
    $region45: #{tpu_custom_call.1} parent=1 // pred_fallthru
      _
    %3104 = vsyncpa [#allocation3], 1

// kernel: tpu_custom_call.1
$region0: #{tpu_custom_call.1}
  #allocation0 [shape = 'u32[]', space=smem, size = 0x4, offset = 0x4, fixed_abs, tag = 'smem constant byte address 0x4 - core index']
  #allocation1 [shape = 'u32[144,128]{1,0:T(1,128)}', space=vmem, size = 0x12000, scoped, tag = 'internal scratch']
  %s0 = inlined_call_operand.vmem [shape: f32[16,8,8], index: 0, kind: input, shape index: {}]
  %s1 = inlined_call_operand.vmem [shape: f32[32,32], index: 1, kind: input, shape index: {}]
  %s2 = inlined_call_operand.vmem [shape: f32[32,32], index: 2, kind: input, shape index: {}]
  %s3 = inlined_call_operand.vmem [shape: f32[32,32], index: 3, kind: input, shape index: {}]
  %s4 = inlined_call_operand.vmem [shape: f32[1,32], index: 4, kind: input, shape index: {}]
  %s5 = inlined_call_operand.vmem [shape: f32[32,32], index: 5, kind: input, shape index: {}]
  %s6 = inlined_call_operand.vmem [shape: f32[1,32], index: 6, kind: input, shape index: {}]
  %s7 = inlined_call_operand.vmem [shape: f32[32,32], index: 7, kind: input, shape index: {}]
  %s8 = inlined_call_operand.vmem [shape: f32[1,32], index: 8, kind: input, shape index: {}]
  %s9 = inlined_call_operand.hbm [shape: f32[8,128], index: 9, kind: output, shape index: {}]
  %s10 = sld [smem:[#allocation0]]
  $region46: #{tpu_custom_call.1} parent=0
    _
  %s12 = ssub.s32 1, %s10
  %s13 = scalar_select 0, %s12, %s10
  $region1: #{tpu_custom_call.1} parent=0
    #allocation2 [shape = 'u8[4096]{0}', space=vmem, size = 0x1000, scoped, tag = 'output window, operand 0, single buffered']
    #allocation3 [shape = 's32[1]{0}', space=sflag, size = 0x4, scoped, tag = 'scoped memory for tpu_custom_call.1']
    %14 = vsyncpa [#allocation3], 0
    // Predicated region
    $region2: #{tpu_custom_call.1} parent=1 // pred_check
      _
    $region3: #{tpu_custom_call.1} parent=1 // pred_check_branch
      %16 = sbr.rel (0) target = $region5
    $region4: #{tpu_custom_call.1} parent=1 // pred_region
      _
    $region5: #{tpu_custom_call.1} parent=1 // pred_fallthru
      _
    // Predicated region
    $region6: #{tpu_custom_call.1} parent=1 // pred_check
      _
    $region7: #{tpu_custom_call.1} parent=1 // pred_check_branch
      %18 = sbr.rel (0) target = $region9
    $region8: #{tpu_custom_call.1} parent=1 // pred_region
      _
    $region9: #{tpu_custom_call.1} parent=1 // pred_fallthru
      _
    // Predicated region
    $region10: #{tpu_custom_call.1} parent=1 // pred_check
      _
    $region11: #{tpu_custom_call.1} parent=1 // pred_check_branch
      %20 = sbr.rel (0) target = $region13
    $region12: #{tpu_custom_call.1} parent=1 // pred_region
      _
    $region13: #{tpu_custom_call.1} parent=1 // pred_fallthru
      _
    // Predicated region
    $region14: #{tpu_custom_call.1} parent=1 // pred_check
      _
    $region15: #{tpu_custom_call.1} parent=1 // pred_check_branch
      %22 = sbr.rel (0) target = $region17
    $region16: #{tpu_custom_call.1} parent=1 // pred_region
      _
    $region17: #{tpu_custom_call.1} parent=1 // pred_fallthru
      _
    // Predicated region
    $region18: #{tpu_custom_call.1} parent=1 // pred_check
      _
    $region19: #{tpu_custom_call.1} parent=1 // pred_check_branch
      %24 = sbr.rel (0) target = $region21
    $region20: #{tpu_custom_call.1} parent=1 // pred_region
      _
    $region21: #{tpu_custom_call.1} parent=1 // pred_fallthru
      _
    // Predicated region
    $region22: #{tpu_custom_call.1} parent=1 // pred_check
      _
    $region23: #{tpu_custom_call.1} parent=1 // pred_check_branch
      %26 = sbr.rel (0) target = $region25
    $region24: #{tpu_custom_call.1} parent=1 // pred_region
      _
    $region25: #{tpu_custom_call.1} parent=1 // pred_fallthru
      _
    // Predicated region
    $region26: #{tpu_custom_call.1} parent=1 // pred_check
      _
    $region27: #{tpu_custom_call.1} parent=1 // pred_check_branch
      %28 = sbr.rel (0) target = $region29
    $region28: #{tpu_custom_call.1} parent=1 // pred_region
      _
    $region29: #{tpu_custom_call.1} parent=1 // pred_fallthru
      _
    // Predicated region
    $region30: #{tpu_custom_call.1} parent=1 // pred_check
      _
    $region31: #{tpu_custom_call.1} parent=1 // pred_check_branch
      %30 = sbr.rel (0) target = $region33
    $region32: #{tpu_custom_call.1} parent=1 // pred_region
      _
    $region33: #{tpu_custom_call.1} parent=1 // pred_fallthru
      _
    // Predicated region
    $region34: #{tpu_custom_call.1} parent=1 // pred_check
      _
    $region35: #{tpu_custom_call.1} parent=1 // pred_check_branch
      %32 = sbr.rel (0) target = $region37
    $region36: #{tpu_custom_call.1} parent=1 // pred_region
      _
    $region37: #{tpu_custom_call.1} parent=1 // pred_fallthru
      _
    %v33 = vld [vmem:[%s1] sm:$0xff]
    %v34 = vld [vmem:[%s1 + $0x8] sm:$0xff]
    %v35 = vld [vmem:[%s1 + $0x10] sm:$0xff]
    %v36 = vld [vmem:[%s1 + $0x18] sm:$0xff]
    %v37 = vld [vmem:[%s2] sm:$0xff]
    %v38 = vld [vmem:[%s2 + $0x8] sm:$0xff]
    %v39 = vld [vmem:[%s2 + $0x10] sm:$0xff]
    %v40 = vld [vmem:[%s2 + $0x18] sm:$0xff]
    %v41 = vld [vmem:[%s3] sm:$0xff]
    %v42 = vld [vmem:[%s3 + $0x8] sm:$0xff]
    %v43 = vld [vmem:[%s3 + $0x10] sm:$0xff]
    %v44 = vld [vmem:[%s3 + $0x18] sm:$0xff]
    %v45 = vld [vmem:[%s4] sm:$0x1]
    %v47 = vlaneseq
    %v48 = vshrl.u32 %v47, 7
    %v49 = vsub.s32 0, %v48
    %v50 = vrot.slane %v45, %v49
    %vm52 = vcmask 261120
    %v54 = vsel %vm52, %v33, 0
    %v57 = vsel %vm52, %v34, 0
    %v60 = vsel %vm52, %v35, 0
    %v63 = vsel %vm52, %v36, 0
    %65 = vmatprep.subr.mxu0 0.0
    %66 = vmatpush1.msra.mxu0 %v41
    %67 = vmatprep.subr.mxu0 0.0
    %68 = vmatpush1.msra.mxu0 %v42
    %69 = vmatprep.subr.mxu0 0.0
    %70 = vmatpush1.msra.mxu0 %v43
    %71 = vmatprep.subr.mxu0 0.0
    %72 = vmatpush1.msra.mxu0 %v44
    %73 = vmatprep.subr.mxu0 0.0
    %74 = vmatpush1.msra.mxu0 0.0
    %75 = vmatprep.subr.mxu0 0.0
    %76 = vmatpush1.msra.mxu0 0.0
    %77 = vmatprep.subr.mxu0 0.0
    %78 = vmatpush1.msra.mxu0 0.0
    %79 = vmatprep.subr.mxu0 0.0
    %80 = vmatpush1.msra.mxu0 0.0
    %81 = vmatprep.subr.mxu0 0.0
    %82 = vmatpush1.msra.mxu0 0.0
    %83 = vmatprep.subr.mxu0 0.0
    %84 = vmatpush1.msra.mxu0 0.0
    %85 = vmatprep.subr.mxu0 0.0
    %86 = vmatpush1.msra.mxu0 0.0
    %87 = vmatprep.subr.mxu0 0.0
    %88 = vmatpush1.msra.mxu0 0.0
    %89 = vmatprep.subr.mxu0 0.0
    %90 = vmatpush1.msra.mxu0 0.0
    %91 = vmatprep.subr.mxu0 0.0
    %92 = vmatpush1.msra.mxu0 0.0
    %93 = vmatprep.subr.mxu0 0.0
    %94 = vmatpush1.msra.mxu0 0.0
    %95 = vmatprep.subr.mxu0 0.0
    %96 = vmatpush1.msra.mxu0 0.0
    %97 = vmatprep.subr.mxu0 0.0
    %98 = vmatpush1.msra.mxu0 0.0
    %99 = vmatprep.subr.mxu0 0.0
    %100 = vmatpush1.msra.mxu0 0.0
    %101 = vmatprep.subr.mxu0 0.0
    %102 = vmatpush1.msra.mxu0 0.0
    %103 = vmatprep.subr.mxu0 0.0
    %104 = vmatpush1.msra.mxu0 0.0
    %105 = vmatprep.subr.mxu0 0.0
    %106 = vmatpush1.msra.mxu0 0.0
    %107 = vmatprep.subr.mxu0 0.0
    %108 = vmatpush1.msra.mxu0 0.0
    %109 = vmatprep.subr.mxu0 0.0
    %110 = vmatpush1.msra.mxu0 0.0
    %111 = vmatprep.subr.mxu0 0.0
    %112 = vmatpush1.msra.mxu0 0.0
    %113 = vmatprep.subr.mxu0 0.0
    %114 = vmatpush1.msra.mxu0 0.0
    %115 = vmatprep.subr.mxu0 0.0
    %116 = vmatpush1.msra.mxu0 0.0
    %117 = vmatprep.subr.mxu0 0.0
    %118 = vmatpush1.msra.mxu0 0.0
    %119 = vmatprep.subr.mxu0 0.0
    %120 = vmatpush1.msra.mxu0 0.0
    %121 = vmatprep.subr.mxu0 0.0
    %122 = vmatpush1.msra.mxu0 0.0
    %123 = vmatprep.subr.mxu0 0.0
    %124 = vmatpush1.msra.mxu0 0.0
    %125 = vmatprep.subr.mxu0 0.0
    %126 = vmatpush1.msra.mxu0 0.0
    %127 = vmatprep.subr.mxu0 0.0
    %128 = vmatpush1.msra.mxu0 0.0
    %129 = vmatprep.mubr.f32.mxu0 0.0
    %130 = vmatmul.mubr.f32.gmra.mrb[0].mxu0 %v54
    %v131 = vpop.f32.mrb[0].mxu0
    %v132 = vadd.f32 %v50, %v131
    %v133 = vpop.f32.mrb[0].mxu0
    %134 = vmatprep.mubr.f32.mxu0 0.0
    %135 = vmatmul.mubr.f32.gmra.mrb[0].mxu0 %v57
    %v136 = vpop.f32.mrb[0].mxu0
    %v137 = vadd.f32 %v50, %v136
    %v138 = vpop.f32.mrb[0].mxu0
    %139 = vmatprep.mubr.f32.mxu0 0.0
    %140 = vmatmul.mubr.f32.gmra.mrb[0].mxu0 %v60
    %v141 = vpop.f32.mrb[0].mxu0
    %v142 = vadd.f32 %v50, %v141
    %v143 = vpop.f32.mrb[0].mxu0
    %144 = vmatprep.mubr.f32.mxu0 0.0
    %145 = vmatmul.mubr.f32.gmra.mrb[0].mxu0 %v63
    %v146 = vpop.f32.mrb[0].mxu0
    %v147 = vadd.f32 %v50, %v146
    %v148 = vpop.f32.mrb[0].mxu0
    %149 = vdwg.mxu0
    %v150 = vld [vmem:[%s5] sm:$0xff]
    %v151 = vld [vmem:[%s5 + $0x8] sm:$0xff]
    %v152 = vld [vmem:[%s5 + $0x10] sm:$0xff]
    %v153 = vld [vmem:[%s5 + $0x18] sm:$0xff]
    %v154 = vld [vmem:[%s6] sm:$0x1]
    %v156 = vlaneseq
    %v157 = vshrl.u32 %v156, 7
    %v158 = vsub.s32 0, %v157
    %v159 = vrot.slane %v154, %v158
    %v162 = vsel %vm52, %v37, 0
    %v165 = vsel %vm52, %v38, 0
    %v168 = vsel %vm52, %v39, 0
    %v171 = vsel %vm52, %v40, 0
    %173 = vmatprep.subr.mxu0 0.0
    %174 = vmatpush1.msra.mxu0 %v150
    %175 = vmatprep.subr.mxu0 0.0
    %176 = vmatpush1.msra.mxu0 %v151
    %177 = vmatprep.subr.mxu0 0.0
    %178 = vmatpush1.msra.mxu0 %v152
    %179 = vmatprep.subr.mxu0 0.0
    %180 = vmatpush1.msra.mxu0 %v153
    %181 = vmatprep.subr.mxu0 0.0
    %182 = vmatpush1.msra.mxu0 0.0
    %183 = vmatprep.subr.mxu0 0.0
    %184 = vmatpush1.msra.mxu0 0.0
    %185 = vmatprep.subr.mxu0 0.0
    %186 = vmatpush1.msra.mxu0 0.0
    %187 = vmatprep.subr.mxu0 0.0
    %188 = vmatpush1.msra.mxu0 0.0
    %189 = vmatprep.subr.mxu0 0.0
    %190 = vmatpush1.msra.mxu0 0.0
    %191 = vmatprep.subr.mxu0 0.0
    %192 = vmatpush1.msra.mxu0 0.0
    %193 = vmatprep.subr.mxu0 0.0
    %194 = vmatpush1.msra.mxu0 0.0
    %195 = vmatprep.subr.mxu0 0.0
    %196 = vmatpush1.msra.mxu0 0.0
    %197 = vmatprep.subr.mxu0 0.0
    %198 = vmatpush1.msra.mxu0 0.0
    %199 = vmatprep.subr.mxu0 0.0
    %200 = vmatpush1.msra.mxu0 0.0
    %201 = vmatprep.subr.mxu0 0.0
    %202 = vmatpush1.msra.mxu0 0.0
    %203 = vmatprep.subr.mxu0 0.0
    %204 = vmatpush1.msra.mxu0 0.0
    %205 = vmatprep.subr.mxu0 0.0
    %206 = vmatpush1.msra.mxu0 0.0
    %207 = vmatprep.subr.mxu0 0.0
    %208 = vmatpush1.msra.mxu0 0.0
    %209 = vmatprep.subr.mxu0 0.0
    %210 = vmatpush1.msra.mxu0 0.0
    %211 = vmatprep.subr.mxu0 0.0
    %212 = vmatpush1.msra.mxu0 0.0
    %213 = vmatprep.subr.mxu0 0.0
    %214 = vmatpush1.msra.mxu0 0.0
    %215 = vmatprep.subr.mxu0 0.0
    %216 = vmatpush1.msra.mxu0 0.0
    %217 = vmatprep.subr.mxu0 0.0
    %218 = vmatpush1.msra.mxu0 0.0
    %219 = vmatprep.subr.mxu0 0.0
    %220 = vmatpush1.msra.mxu0 0.0
    %221 = vmatprep.subr.mxu0 0.0
    %222 = vmatpush1.msra.mxu0 0.0
    %223 = vmatprep.subr.mxu0 0.0
    %224 = vmatpush1.msra.mxu0 0.0
    %225 = vmatprep.subr.mxu0 0.0
    %226 = vmatpush1.msra.mxu0 0.0
    %227 = vmatprep.subr.mxu0 0.0
    %228 = vmatpush1.msra.mxu0 0.0
    %229 = vmatprep.subr.mxu0 0.0
    %230 = vmatpush1.msra.mxu0 0.0
    %231 = vmatprep.subr.mxu0 0.0
    %232 = vmatpush1.msra.mxu0 0.0
    %233 = vmatprep.subr.mxu0 0.0
    %234 = vmatpush1.msra.mxu0 0.0
    %235 = vmatprep.subr.mxu0 0.0
    %236 = vmatpush1.msra.mxu0 0.0
    %237 = vmatprep.mubr.f32.mxu0 0.0
    %238 = vmatmul.mubr.f32.gmra.mrb[0].mxu0 %v162
    %v239 = vpop.f32.mrb[0].mxu0
    %v240 = vadd.f32 %v159, %v239
    %v241 = vpop.f32.mrb[0].mxu0
    %242 = vmatprep.mubr.f32.mxu0 0.0
    %243 = vmatmul.mubr.f32.gmra.mrb[0].mxu0 %v165
    %v244 = vpop.f32.mrb[0].mxu0
    %v245 = vadd.f32 %v159, %v244
    %v246 = vpop.f32.mrb[0].mxu0
    %247 = vmatprep.mubr.f32.mxu0 0.0
    %248 = vmatmul.mubr.f32.gmra.mrb[0].mxu0 %v168
    %v249 = vpop.f32.mrb[0].mxu0
    %v250 = vadd.f32 %v159, %v249
    %v251 = vpop.f32.mrb[0].mxu0
    %252 = vmatprep.mubr.f32.mxu0 0.0
    %253 = vmatmul.mubr.f32.gmra.mrb[0].mxu0 %v171
    %v254 = vpop.f32.mrb[0].mxu0
    %v255 = vadd.f32 %v159, %v254
    %v256 = vpop.f32.mrb[0].mxu0
    %257 = vdwg.mxu0
    %262 = vrot.lane.b32.xlu0 %v132, 120
    %v263 = vpop.permute.xlu0 %262
    %264 = vrot.lane.b32.xlu0 %v137, 120
    %v265 = vpop.permute.xlu0 %264
    %266 = vrot.lane.b32.xlu0 %v142, 120
    %v267 = vpop.permute.xlu0 %266
    %268 = vrot.lane.b32.xlu0 %v147, 120
    %v269 = vpop.permute.xlu0 %268
    %270 = vrot.lane.b32.xlu0 %v132, 112
    %v271 = vpop.permute.xlu0 %270
    %272 = vrot.lane.b32.xlu0 %v137, 112
    %v273 = vpop.permute.xlu0 %272
    %274 = vrot.lane.b32.xlu0 %v142, 112
    %v275 = vpop.permute.xlu0 %274
    %276 = vrot.lane.b32.xlu0 %v147, 112
    %v277 = vpop.permute.xlu0 %276
    %278 = vrot.lane.b32.xlu0 %v132, 104
    %v279 = vpop.permute.xlu0 %278
    %280 = vrot.lane.b32.xlu0 %v137, 104
    %v281 = vpop.permute.xlu0 %280
    %282 = vrot.lane.b32.xlu0 %v142, 104
    %v283 = vpop.permute.xlu0 %282
    %284 = vrot.lane.b32.xlu0 %v147, 104
    %v285 = vpop.permute.xlu0 %284
    %290 = vrot.lane.b32.xlu0 %v240, 120
    %v291 = vpop.permute.xlu0 %290
    %292 = vrot.lane.b32.xlu0 %v245, 120
    %v293 = vpop.permute.xlu0 %292
    %294 = vrot.lane.b32.xlu0 %v250, 120
    %v295 = vpop.permute.xlu0 %294
    %296 = vrot.lane.b32.xlu0 %v255, 120
    %v297 = vpop.permute.xlu0 %296
    %302 = vrot.lane.b32.xlu0 %v240, 112
    %v303 = vpop.permute.xlu0 %302
    %304 = vrot.lane.b32.xlu0 %v245, 112
    %v305 = vpop.permute.xlu0 %304
    %306 = vrot.lane.b32.xlu0 %v250, 112
    %v307 = vpop.permute.xlu0 %306
    %308 = vrot.lane.b32.xlu0 %v255, 112
    %v309 = vpop.permute.xlu0 %308
    %314 = vrot.lane.b32.xlu0 %v240, 104
    %v315 = vpop.permute.xlu0 %314
    %316 = vrot.lane.b32.xlu0 %v245, 104
    %v317 = vpop.permute.xlu0 %316
    %318 = vrot.lane.b32.xlu0 %v250, 104
    %v319 = vpop.permute.xlu0 %318
    %320 = vrot.lane.b32.xlu0 %v255, 104
    %v321 = vpop.permute.xlu0 %320
    %v326 = vld [vmem:[%s0] sm:$0xff]
    %v327 = vld [vmem:[%s0 + $0x8] sm:$0xff]
    %v328 = vld [vmem:[%s0 + $0x10] sm:$0xff]
    %v329 = vld [vmem:[%s0 + $0x18] sm:$0xff]
    %v330 = vld [vmem:[%s0 + $0x20] sm:$0xff]
    %v331 = vld [vmem:[%s0 + $0x28] sm:$0xff]
    %v332 = vld [vmem:[%s0 + $0x30] sm:$0xff]
    %v333 = vld [vmem:[%s0 + $0x38] sm:$0xff]
    %v334 = vld [vmem:[%s0 + $0x40] sm:$0xff]
    %v335 = vld [vmem:[%s0 + $0x48] sm:$0xff]
    %v336 = vld [vmem:[%s0 + $0x50] sm:$0xff]
    %v337 = vld [vmem:[%s0 + $0x58] sm:$0xff]
    %v338 = vld [vmem:[%s0 + $0x60] sm:$0xff]
    %v339 = vld [vmem:[%s0 + $0x68] sm:$0xff]
    %v340 = vld [vmem:[%s0 + $0x70] sm:$0xff]
    %v341 = vld [vmem:[%s0 + $0x78] sm:$0xff]
    %vm342 = vcmask 64512
    %v344 = vsel %vm342, %v326, 0
    %v346 = vsel %vm342, %v132, 0
    %348 = vmatprep.subr.mxu0 0.0
    %349 = vmatpush1.xpose.msra.mxu0 %v346
    %350 = vmatprep.subr.mxu0 0.0
    %351 = vmatpush1.xpose.msra.mxu0 0.0
    %352 = vmatprep.subr.mxu0 0.0
    %353 = vmatpush1.xpose.msra.mxu0 0.0
    %354 = vmatprep.subr.mxu0 0.0
    %355 = vmatpush1.xpose.msra.mxu0 0.0
    %356 = vmatprep.subr.mxu0 0.0
    %357 = vmatpush1.xpose.msra.mxu0 0.0
    %358 = vmatprep.subr.mxu0 0.0
    %359 = vmatpush1.xpose.msra.mxu0 0.0
    %360 = vmatprep.subr.mxu0 0.0
    %361 = vmatpush1.xpose.msra.mxu0 0.0
    %362 = vmatprep.subr.mxu0 0.0
    %363 = vmatpush1.xpose.msra.mxu0 0.0
    %364 = vmatprep.subr.mxu0 0.0
    %365 = vmatpush1.xpose.msra.mxu0 0.0
    %366 = vmatprep.subr.mxu0 0.0
    %367 = vmatpush1.xpose.msra.mxu0 0.0
    %368 = vmatprep.subr.mxu0 0.0
    %369 = vmatpush1.xpose.msra.mxu0 0.0
    %370 = vmatprep.subr.mxu0 0.0
    %371 = vmatpush1.xpose.msra.mxu0 0.0
    %372 = vmatprep.subr.mxu0 0.0
    %373 = vmatpush1.xpose.msra.mxu0 0.0
    %374 = vmatprep.subr.mxu0 0.0
    %375 = vmatpush1.xpose.msra.mxu0 0.0
    %376 = vmatprep.subr.mxu0 0.0
    %377 = vmatpush1.xpose.msra.mxu0 0.0
    %378 = vmatprep.subr.mxu0 0.0
    %379 = vmatpush1.xpose.msra.mxu0 0.0
    %380 = vmatprep.subr.mxu0 0.0
    %381 = vmatpush1.xpose.msra.mxu0 0.0
    %382 = vmatprep.subr.mxu0 0.0
    %383 = vmatpush1.xpose.msra.mxu0 0.0
    %384 = vmatprep.subr.mxu0 0.0
    %385 = vmatpush1.xpose.msra.mxu0 0.0
    %386 = vmatprep.subr.mxu0 0.0
    %387 = vmatpush1.xpose.msra.mxu0 0.0
    %388 = vmatprep.subr.mxu0 0.0
    %389 = vmatpush1.xpose.msra.mxu0 0.0
    %390 = vmatprep.subr.mxu0 0.0
    %391 = vmatpush1.xpose.msra.mxu0 0.0
    %392 = vmatprep.subr.mxu0 0.0
    %393 = vmatpush1.xpose.msra.mxu0 0.0
    %394 = vmatprep.subr.mxu0 0.0
    %395 = vmatpush1.xpose.msra.mxu0 0.0
    %396 = vmatprep.subr.mxu0 0.0
    %397 = vmatpush1.xpose.msra.mxu0 0.0
    %398 = vmatprep.subr.mxu0 0.0
    %399 = vmatpush1.xpose.msra.mxu0 0.0
    %400 = vmatprep.subr.mxu0 0.0
    %401 = vmatpush1.xpose.msra.mxu0 0.0
    %402 = vmatprep.subr.mxu0 0.0
    %403 = vmatpush1.xpose.msra.mxu0 0.0
    %404 = vmatprep.subr.mxu0 0.0
    %405 = vmatpush1.xpose.msra.mxu0 0.0
    %406 = vmatprep.subr.mxu0 0.0
    %407 = vmatpush1.xpose.msra.mxu0 0.0
    %408 = vmatprep.subr.mxu0 0.0
    %409 = vmatpush1.xpose.msra.mxu0 0.0
    %410 = vmatprep.subr.mxu0 0.0
    %411 = vmatpush1.xpose.msra.mxu0 0.0
    %412 = vmatprep.mubr.f32.mxu0 0.0
    %413 = vmatmul.mubr.f32.gmra.mrb[0].mxu0 %v344
    %v414 = vpop.f32.mrb[0].mxu0
    %v415 = vadd.f32 0.0, %v414
    %v416 = vpop.f32.mrb[0].mxu0
    %417 = vdwg.mxu0
    %v419 = vsel %vm342, %v327, 0
    %v421 = vsel %vm342, %v137, 0
    %423 = vmatprep.subr.mxu0 0.0
    %424 = vmatpush1.xpose.msra.mxu0 %v421
    %425 = vmatprep.subr.mxu0 0.0
    %426 = vmatpush1.xpose.msra.mxu0 0.0
    %427 = vmatprep.subr.mxu0 0.0
    %428 = vmatpush1.xpose.msra.mxu0 0.0
    %429 = vmatprep.subr.mxu0 0.0
    %430 = vmatpush1.xpose.msra.mxu0 0.0
    %431 = vmatprep.subr.mxu0 0.0
    %432 = vmatpush1.xpose.msra.mxu0 0.0
    %433 = vmatprep.subr.mxu0 0.0
    %434 = vmatpush1.xpose.msra.mxu0 0.0
    %435 = vmatprep.subr.mxu0 0.0
    %436 = vmatpush1.xpose.msra.mxu0 0.0
    %437 = vmatprep.subr.mxu0 0.0
    %438 = vmatpush1.xpose.msra.mxu0 0.0
    %439 = vmatprep.subr.mxu0 0.0
    %440 = vmatpush1.xpose.msra.mxu0 0.0
    %441 = vmatprep.subr.mxu0 0.0
    %442 = vmatpush1.xpose.msra.mxu0 0.0
    %443 = vmatprep.subr.mxu0 0.0
    %444 = vmatpush1.xpose.msra.mxu0 0.0
    %445 = vmatprep.subr.mxu0 0.0
    %446 = vmatpush1.xpose.msra.mxu0 0.0
    %447 = vmatprep.subr.mxu0 0.0
    %448 = vmatpush1.xpose.msra.mxu0 0.0
    %449 = vmatprep.subr.mxu0 0.0
    %450 = vmatpush1.xpose.msra.mxu0 0.0
    %451 = vmatprep.subr.mxu0 0.0
    %452 = vmatpush1.xpose.msra.mxu0 0.0
    %453 = vmatprep.subr.mxu0 0.0
    %454 = vmatpush1.xpose.msra.mxu0 0.0
    %455 = vmatprep.subr.mxu0 0.0
    %456 = vmatpush1.xpose.msra.mxu0 0.0
    %457 = vmatprep.subr.mxu0 0.0
    %458 = vmatpush1.xpose.msra.mxu0 0.0
    %459 = vmatprep.subr.mxu0 0.0
    %460 = vmatpush1.xpose.msra.mxu0 0.0
    %461 = vmatprep.subr.mxu0 0.0
    %462 = vmatpush1.xpose.msra.mxu0 0.0
    %463 = vmatprep.subr.mxu0 0.0
    %464 = vmatpush1.xpose.msra.mxu0 0.0
    %465 = vmatprep.subr.mxu0 0.0
    %466 = vmatpush1.xpose.msra.mxu0 0.0
    %467 = vmatprep.subr.mxu0 0.0
    %468 = vmatpush1.xpose.msra.mxu0 0.0
    %469 = vmatprep.subr.mxu0 0.0
    %470 = vmatpush1.xpose.msra.mxu0 0.0
    %471 = vmatprep.subr.mxu0 0.0
    %472 = vmatpush1.xpose.msra.mxu0 0.0
    %473 = vmatprep.subr.mxu0 0.0
    %474 = vmatpush1.xpose.msra.mxu0 0.0
    %475 = vmatprep.subr.mxu0 0.0
    %476 = vmatpush1.xpose.msra.mxu0 0.0
    %477 = vmatprep.subr.mxu0 0.0
    %478 = vmatpush1.xpose.msra.mxu0 0.0
    %479 = vmatprep.subr.mxu0 0.0
    %480 = vmatpush1.xpose.msra.mxu0 0.0
    %481 = vmatprep.subr.mxu0 0.0
    %482 = vmatpush1.xpose.msra.mxu0 0.0
    %483 = vmatprep.subr.mxu0 0.0
    %484 = vmatpush1.xpose.msra.mxu0 0.0
    %485 = vmatprep.subr.mxu0 0.0
    %486 = vmatpush1.xpose.msra.mxu0 0.0
    %487 = vmatprep.mubr.f32.mxu0 0.0
    %488 = vmatmul.mubr.f32.gmra.mrb[0].mxu0 %v419
    %v489 = vpop.f32.mrb[0].mxu0
    %v490 = vadd.f32 0.0, %v489
    %v491 = vpop.f32.mrb[0].mxu0
    %492 = vdwg.mxu0
    %v494 = vsel %vm342, %v328, 0
    %v496 = vsel %vm342, %v142, 0
    %498 = vmatprep.subr.mxu0 0.0
    %499 = vmatpush1.xpose.msra.mxu0 %v496
    %500 = vmatprep.subr.mxu0 0.0
    %501 = vmatpush1.xpose.msra.mxu0 0.0
    %502 = vmatprep.subr.mxu0 0.0
    %503 = vmatpush1.xpose.msra.mxu0 0.0
    %504 = vmatprep.subr.mxu0 0.0
    %505 = vmatpush1.xpose.msra.mxu0 0.0
    %506 = vmatprep.subr.mxu0 0.0
    %507 = vmatpush1.xpose.msra.mxu0 0.0
    %508 = vmatprep.subr.mxu0 0.0
    %509 = vmatpush1.xpose.msra.mxu0 0.0
    %510 = vmatprep.subr.mxu0 0.0
    %511 = vmatpush1.xpose.msra.mxu0 0.0
    %512 = vmatprep.subr.mxu0 0.0
    %513 = vmatpush1.xpose.msra.mxu0 0.0
    %514 = vmatprep.subr.mxu0 0.0
    %515 = vmatpush1.xpose.msra.mxu0 0.0
    %516 = vmatprep.subr.mxu0 0.0
    %517 = vmatpush1.xpose.msra.mxu0 0.0
    %518 = vmatprep.subr.mxu0 0.0
    %519 = vmatpush1.xpose.msra.mxu0 0.0
    %520 = vmatprep.subr.mxu0 0.0
    %521 = vmatpush1.xpose.msra.mxu0 0.0
    %522 = vmatprep.subr.mxu0 0.0
    %523 = vmatpush1.xpose.msra.mxu0 0.0
    %524 = vmatprep.subr.mxu0 0.0
    %525 = vmatpush1.xpose.msra.mxu0 0.0
    %526 = vmatprep.subr.mxu0 0.0
    %527 = vmatpush1.xpose.msra.mxu0 0.0
    %528 = vmatprep.subr.mxu0 0.0
    %529 = vmatpush1.xpose.msra.mxu0 0.0
    %530 = vmatprep.subr.mxu0 0.0
    %531 = vmatpush1.xpose.msra.mxu0 0.0
    %532 = vmatprep.subr.mxu0 0.0
    %533 = vmatpush1.xpose.msra.mxu0 0.0
    %534 = vmatprep.subr.mxu0 0.0
    %535 = vmatpush1.xpose.msra.mxu0 0.0
    %536 = vmatprep.subr.mxu0 0.0
    %537 = vmatpush1.xpose.msra.mxu0 0.0
    %538 = vmatprep.subr.mxu0 0.0
    %539 = vmatpush1.xpose.msra.mxu0 0.0
    %540 = vmatprep.subr.mxu0 0.0
    %541 = vmatpush1.xpose.msra.mxu0 0.0
    %542 = vmatprep.subr.mxu0 0.0
    %543 = vmatpush1.xpose.msra.mxu0 0.0
    %544 = vmatprep.subr.mxu0 0.0
    %545 = vmatpush1.xpose.msra.mxu0 0.0
    %546 = vmatprep.subr.mxu0 0.0
    %547 = vmatpush1.xpose.msra.mxu0 0.0
    %548 = vmatprep.subr.mxu0 0.0
    %549 = vmatpush1.xpose.msra.mxu0 0.0
    %550 = vmatprep.subr.mxu0 0.0
    %551 = vmatpush1.xpose.msra.mxu0 0.0
    %552 = vmatprep.subr.mxu0 0.0
    %553 = vmatpush1.xpose.msra.mxu0 0.0
    %554 = vmatprep.subr.mxu0 0.0
    %555 = vmatpush1.xpose.msra.mxu0 0.0
    %556 = vmatprep.subr.mxu0 0.0
    %557 = vmatpush1.xpose.msra.mxu0 0.0
    %558 = vmatprep.subr.mxu0 0.0
    %559 = vmatpush1.xpose.msra.mxu0 0.0
    %560 = vmatprep.subr.mxu0 0.0
    %561 = vmatpush1.xpose.msra.mxu0 0.0
    %562 = vmatprep.mubr.f32.mxu0 0.0
    %563 = vmatmul.mubr.f32.gmra.mrb[0].mxu0 %v494
    %v564 = vpop.f32.mrb[0].mxu0
    %v565 = vadd.f32 0.0, %v564
    %v566 = vpop.f32.mrb[0].mxu0
    %567 = vdwg.mxu0
    %v569 = vsel %vm342, %v329, 0
    %v571 = vsel %vm342, %v147, 0
    %573 = vmatprep.subr.mxu0 0.0
    %574 = vmatpush1.xpose.msra.mxu0 %v571
    %575 = vmatprep.subr.mxu0 0.0
    %576 = vmatpush1.xpose.msra.mxu0 0.0
    %577 = vmatprep.subr.mxu0 0.0
    %578 = vmatpush1.xpose.msra.mxu0 0.0
    %579 = vmatprep.subr.mxu0 0.0
    %580 = vmatpush1.xpose.msra.mxu0 0.0
    %581 = vmatprep.subr.mxu0 0.0
    %582 = vmatpush1.xpose.msra.mxu0 0.0
    %583 = vmatprep.subr.mxu0 0.0
    %584 = vmatpush1.xpose.msra.mxu0 0.0
    %585 = vmatprep.subr.mxu0 0.0
    %586 = vmatpush1.xpose.msra.mxu0 0.0
    %587 = vmatprep.subr.mxu0 0.0
    %588 = vmatpush1.xpose.msra.mxu0 0.0
    %589 = vmatprep.subr.mxu0 0.0
    %590 = vmatpush1.xpose.msra.mxu0 0.0
    %591 = vmatprep.subr.mxu0 0.0
    %592 = vmatpush1.xpose.msra.mxu0 0.0
    %593 = vmatprep.subr.mxu0 0.0
    %594 = vmatpush1.xpose.msra.mxu0 0.0
    %595 = vmatprep.subr.mxu0 0.0
    %596 = vmatpush1.xpose.msra.mxu0 0.0
    %597 = vmatprep.subr.mxu0 0.0
    %598 = vmatpush1.xpose.msra.mxu0 0.0
    %599 = vmatprep.subr.mxu0 0.0
    %600 = vmatpush1.xpose.msra.mxu0 0.0
    %601 = vmatprep.subr.mxu0 0.0
    %602 = vmatpush1.xpose.msra.mxu0 0.0
    %603 = vmatprep.subr.mxu0 0.0
    %604 = vmatpush1.xpose.msra.mxu0 0.0
    %605 = vmatprep.subr.mxu0 0.0
    %606 = vmatpush1.xpose.msra.mxu0 0.0
    %607 = vmatprep.subr.mxu0 0.0
    %608 = vmatpush1.xpose.msra.mxu0 0.0
    %609 = vmatprep.subr.mxu0 0.0
    %610 = vmatpush1.xpose.msra.mxu0 0.0
    %611 = vmatprep.subr.mxu0 0.0
    %612 = vmatpush1.xpose.msra.mxu0 0.0
    %613 = vmatprep.subr.mxu0 0.0
    %614 = vmatpush1.xpose.msra.mxu0 0.0
    %615 = vmatprep.subr.mxu0 0.0
    %616 = vmatpush1.xpose.msra.mxu0 0.0
    %617 = vmatprep.subr.mxu0 0.0
    %618 = vmatpush1.xpose.msra.mxu0 0.0
    %619 = vmatprep.subr.mxu0 0.0
    %620 = vmatpush1.xpose.msra.mxu0 0.0
    %621 = vmatprep.subr.mxu0 0.0
    %622 = vmatpush1.xpose.msra.mxu0 0.0
    %623 = vmatprep.subr.mxu0 0.0
    %624 = vmatpush1.xpose.msra.mxu0 0.0
    %625 = vmatprep.subr.mxu0 0.0
    %626 = vmatpush1.xpose.msra.mxu0 0.0
    %627 = vmatprep.subr.mxu0 0.0
    %628 = vmatpush1.xpose.msra.mxu0 0.0
    %629 = vmatprep.subr.mxu0 0.0
    %630 = vmatpush1.xpose.msra.mxu0 0.0
    %631 = vmatprep.subr.mxu0 0.0
    %632 = vmatpush1.xpose.msra.mxu0 0.0
    %633 = vmatprep.subr.mxu0 0.0
    %634 = vmatpush1.xpose.msra.mxu0 0.0
    %635 = vmatprep.subr.mxu0 0.0
    %636 = vmatpush1.xpose.msra.mxu0 0.0
    %637 = vmatprep.mubr.f32.mxu0 0.0
    %638 = vmatmul.mubr.f32.gmra.mrb[0].mxu0 %v569
    %v639 = vpop.f32.mrb[0].mxu0
    %v640 = vadd.f32 0.0, %v639
    %v641 = vpop.f32.mrb[0].mxu0
    %642 = vdwg.mxu0
    %v644 = vsel %vm342, %v330, 0
    %v646 = vsel %vm342, %v263, 0
    %648 = vmatprep.subr.mxu0 0.0
    %649 = vmatpush1.xpose.msra.mxu0 %v646
    %650 = vmatprep.subr.mxu0 0.0
    %651 = vmatpush1.xpose.msra.mxu0 0.0
    %652 = vmatprep.subr.mxu0 0.0
    %653 = vmatpush1.xpose.msra.mxu0 0.0
    %654 = vmatprep.subr.mxu0 0.0
    %655 = vmatpush1.xpose.msra.mxu0 0.0
    %656 = vmatprep.subr.mxu0 0.0
    %657 = vmatpush1.xpose.msra.mxu0 0.0
    %658 = vmatprep.subr.mxu0 0.0
    %659 = vmatpush1.xpose.msra.mxu0 0.0
    %660 = vmatprep.subr.mxu0 0.0
    %661 = vmatpush1.xpose.msra.mxu0 0.0
    %662 = vmatprep.subr.mxu0 0.0
    %663 = vmatpush1.xpose.msra.mxu0 0.0
    %664 = vmatprep.subr.mxu0 0.0
    %665 = vmatpush1.xpose.msra.mxu0 0.0
    %666 = vmatprep.subr.mxu0 0.0
    %667 = vmatpush1.xpose.msra.mxu0 0.0
    %668 = vmatprep.subr.mxu0 0.0
    %669 = vmatpush1.xpose.msra.mxu0 0.0
    %670 = vmatprep.subr.mxu0 0.0
    %671 = vmatpush1.xpose.msra.mxu0 0.0
    %672 = vmatprep.subr.mxu0 0.0
    %673 = vmatpush1.xpose.msra.mxu0 0.0
    %674 = vmatprep.subr.mxu0 0.0
    %675 = vmatpush1.xpose.msra.mxu0 0.0
    %676 = vmatprep.subr.mxu0 0.0
    %677 = vmatpush1.xpose.msra.mxu0 0.0
    %678 = vmatprep.subr.mxu0 0.0
    %679 = vmatpush1.xpose.msra.mxu0 0.0
    %680 = vmatprep.subr.mxu0 0.0
    %681 = vmatpush1.xpose.msra.mxu0 0.0
    %682 = vmatprep.subr.mxu0 0.0
    %683 = vmatpush1.xpose.msra.mxu0 0.0
    %684 = vmatprep.subr.mxu0 0.0
    %685 = vmatpush1.xpose.msra.mxu0 0.0
    %686 = vmatprep.subr.mxu0 0.0
    %687 = vmatpush1.xpose.msra.mxu0 0.0
    %688 = vmatprep.subr.mxu0 0.0
    %689 = vmatpush1.xpose.msra.mxu0 0.0
    %690 = vmatprep.subr.mxu0 0.0
    %691 = vmatpush1.xpose.msra.mxu0 0.0
    %692 = vmatprep.subr.mxu0 0.0
    %693 = vmatpush1.xpose.msra.mxu0 0.0
    %694 = vmatprep.subr.mxu0 0.0
    %695 = vmatpush1.xpose.msra.mxu0 0.0
    %696 = vmatprep.subr.mxu0 0.0
    %697 = vmatpush1.xpose.msra.mxu0 0.0
    %698 = vmatprep.subr.mxu0 0.0
    %699 = vmatpush1.xpose.msra.mxu0 0.0
    %700 = vmatprep.subr.mxu0 0.0
    %701 = vmatpush1.xpose.msra.mxu0 0.0
    %702 = vmatprep.subr.mxu0 0.0
    %703 = vmatpush1.xpose.msra.mxu0 0.0
    %704 = vmatprep.subr.mxu0 0.0
    %705 = vmatpush1.xpose.msra.mxu0 0.0
    %706 = vmatprep.subr.mxu0 0.0
    %707 = vmatpush1.xpose.msra.mxu0 0.0
    %708 = vmatprep.subr.mxu0 0.0
    %709 = vmatpush1.xpose.msra.mxu0 0.0
    %710 = vmatprep.subr.mxu0 0.0
    %711 = vmatpush1.xpose.msra.mxu0 0.0
    %712 = vmatprep.mubr.f32.mxu0 0.0
    %713 = vmatmul.mubr.f32.gmra.mrb[0].mxu0 %v644
    %v714 = vpop.f32.mrb[0].mxu0
    %v715 = vadd.f32 0.0, %v714
    %v716 = vpop.f32.mrb[0].mxu0
    %717 = vdwg.mxu0
    %v719 = vsel %vm342, %v331, 0
    %v721 = vsel %vm342, %v265, 0
    %723 = vmatprep.subr.mxu0 0.0
    %724 = vmatpush1.xpose.msra.mxu0 %v721
    %725 = vmatprep.subr.mxu0 0.0
    %726 = vmatpush1.xpose.msra.mxu0 0.0
    %727 = vmatprep.subr.mxu0 0.0
    %728 = vmatpush1.xpose.msra.mxu0 0.0
    %729 = vmatprep.subr.mxu0 0.0
    %730 = vmatpush1.xpose.msra.mxu0 0.0
    %731 = vmatprep.subr.mxu0 0.0
    %732 = vmatpush1.xpose.msra.mxu0 0.0
    %733 = vmatprep.subr.mxu0 0.0
    %734 = vmatpush1.xpose.msra.mxu0 0.0
    %735 = vmatprep.subr.mxu0 0.0
    %736 = vmatpush1.xpose.msra.mxu0 0.0
    %737 = vmatprep.subr.mxu0 0.0
    %738 = vmatpush1.xpose.msra.mxu0 0.0
    %739 = vmatprep.subr.mxu0 0.0
    %740 = vmatpush1.xpose.msra.mxu0 0.0
    %741 = vmatprep.subr.mxu0 0.0
    %742 = vmatpush1.xpose.msra.mxu0 0.0
    %743 = vmatprep.subr.mxu0 0.0
    %744 = vmatpush1.xpose.msra.mxu0 0.0
    %745 = vmatprep.subr.mxu0 0.0
    %746 = vmatpush1.xpose.msra.mxu0 0.0
    %747 = vmatprep.subr.mxu0 0.0
    %748 = vmatpush1.xpose.msra.mxu0 0.0
    %749 = vmatprep.subr.mxu0 0.0
    %750 = vmatpush1.xpose.msra.mxu0 0.0
    %751 = vmatprep.subr.mxu0 0.0
    %752 = vmatpush1.xpose.msra.mxu0 0.0
    %753 = vmatprep.subr.mxu0 0.0
    %754 = vmatpush1.xpose.msra.mxu0 0.0
    %755 = vmatprep.subr.mxu0 0.0
    %756 = vmatpush1.xpose.msra.mxu0 0.0
    %757 = vmatprep.subr.mxu0 0.0
    %758 = vmatpush1.xpose.msra.mxu0 0.0
    %759 = vmatprep.subr.mxu0 0.0
    %760 = vmatpush1.xpose.msra.mxu0 0.0
    %761 = vmatprep.subr.mxu0 0.0
    %762 = vmatpush1.xpose.msra.mxu0 0.0
    %763 = vmatprep.subr.mxu0 0.0
    %764 = vmatpush1.xpose.msra.mxu0 0.0
    %765 = vmatprep.subr.mxu0 0.0
    %766 = vmatpush1.xpose.msra.mxu0 0.0
    %767 = vmatprep.subr.mxu0 0.0
    %768 = vmatpush1.xpose.msra.mxu0 0.0
    %769 = vmatprep.subr.mxu0 0.0
    %770 = vmatpush1.xpose.msra.mxu0 0.0
    %771 = vmatprep.subr.mxu0 0.0
    %772 = vmatpush1.xpose.msra.mxu0 0.0
    %773 = vmatprep.subr.mxu0 0.0
    %774 = vmatpush1.xpose.msra.mxu0 0.0
    %775 = vmatprep.subr.mxu0 0.0
    %776 = vmatpush1.xpose.msra.mxu0 0.0
    %777 = vmatprep.subr.mxu0 0.0
    %778 = vmatpush1.xpose.msra.mxu0 0.0
    %779 = vmatprep.subr.mxu0 0.0
    %780 = vmatpush1.xpose.msra.mxu0 0.0
    %781 = vmatprep.subr.mxu0 0.0
    %782 = vmatpush1.xpose.msra.mxu0 0.0
    %783 = vmatprep.subr.mxu0 0.0
    %784 = vmatpush1.xpose.msra.mxu0 0.0
    %785 = vmatprep.subr.mxu0 0.0
    %786 = vmatpush1.xpose.msra.mxu0 0.0
    %787 = vmatprep.mubr.f32.mxu0 0.0
    %788 = vmatmul.mubr.f32.gmra.mrb[0].mxu0 %v719
    %v789 = vpop.f32.mrb[0].mxu0
    %v790 = vadd.f32 0.0, %v789
    %v791 = vpop.f32.mrb[0].mxu0
    %792 = vdwg.mxu0
    %v794 = vsel %vm342, %v332, 0
    %v796 = vsel %vm342, %v267, 0
    %798 = vmatprep.subr.mxu0 0.0
    %799 = vmatpush1.xpose.msra.mxu0 %v796
    %800 = vmatprep.subr.mxu0 0.0
    %801 = vmatpush1.xpose.msra.mxu0 0.0
    %802 = vmatprep.subr.mxu0 0.0
    %803 = vmatpush1.xpose.msra.mxu0 0.0
    %804 = vmatprep.subr.mxu0 0.0
    %805 = vmatpush1.xpose.msra.mxu0 0.0
    %806 = vmatprep.subr.mxu0 0.0
    %807 = vmatpush1.xpose.msra.mxu0 0.0
    %808 = vmatprep.subr.mxu0 0.0
    %809 = vmatpush1.xpose.msra.mxu0 0.0
    %810 = vmatprep.subr.mxu0 0.0
    %811 = vmatpush1.xpose.msra.mxu0 0.0
    %812 = vmatprep.subr.mxu0 0.0
    %813 = vmatpush1.xpose.msra.mxu0 0.0
    %814 = vmatprep.subr.mxu0 0.0
    %815 = vmatpush1.xpose.msra.mxu0 0.0
    %816 = vmatprep.subr.mxu0 0.0
    %817 = vmatpush1.xpose.msra.mxu0 0.0
    %818 = vmatprep.subr.mxu0 0.0
    %819 = vmatpush1.xpose.msra.mxu0 0.0
    %820 = vmatprep.subr.mxu0 0.0
    %821 = vmatpush1.xpose.msra.mxu0 0.0
    %822 = vmatprep.subr.mxu0 0.0
    %823 = vmatpush1.xpose.msra.mxu0 0.0
    %824 = vmatprep.subr.mxu0 0.0
    %825 = vmatpush1.xpose.msra.mxu0 0.0
    %826 = vmatprep.subr.mxu0 0.0
    %827 = vmatpush1.xpose.msra.mxu0 0.0
    %828 = vmatprep.subr.mxu0 0.0
    %829 = vmatpush1.xpose.msra.mxu0 0.0
    %830 = vmatprep.subr.mxu0 0.0
    %831 = vmatpush1.xpose.msra.mxu0 0.0
    %832 = vmatprep.subr.mxu0 0.0
    %833 = vmatpush1.xpose.msra.mxu0 0.0
    %834 = vmatprep.subr.mxu0 0.0
    %835 = vmatpush1.xpose.msra.mxu0 0.0
    %836 = vmatprep.subr.mxu0 0.0
    %837 = vmatpush1.xpose.msra.mxu0 0.0
    %838 = vmatprep.subr.mxu0 0.0
    %839 = vmatpush1.xpose.msra.mxu0 0.0
    %840 = vmatprep.subr.mxu0 0.0
    %841 = vmatpush1.xpose.msra.mxu0 0.0
    %842 = vmatprep.subr.mxu0 0.0
    %843 = vmatpush1.xpose.msra.mxu0 0.0
    %844 = vmatprep.subr.mxu0 0.0
    %845 = vmatpush1.xpose.msra.mxu0 0.0
    %846 = vmatprep.subr.mxu0 0.0
    %847 = vmatpush1.xpose.msra.mxu0 0.0
    %848 = vmatprep.subr.mxu0 0.0
    %849 = vmatpush1.xpose.msra.mxu0 0.0
    %850 = vmatprep.subr.mxu0 0.0
    %851 = vmatpush1.xpose.msra.mxu0 0.0
    %852 = vmatprep.subr.mxu0 0.0
    %853 = vmatpush1.xpose.msra.mxu0 0.0
    %854 = vmatprep.subr.mxu0 0.0
    %855 = vmatpush1.xpose.msra.mxu0 0.0
    %856 = vmatprep.subr.mxu0 0.0
    %857 = vmatpush1.xpose.msra.mxu0 0.0
    %858 = vmatprep.subr.mxu0 0.0
    %859 = vmatpush1.xpose.msra.mxu0 0.0
    %860 = vmatprep.subr.mxu0 0.0
    %861 = vmatpush1.xpose.msra.mxu0 0.0
    %862 = vmatprep.mubr.f32.mxu0 0.0
    %863 = vmatmul.mubr.f32.gmra.mrb[0].mxu0 %v794
    %v864 = vpop.f32.mrb[0].mxu0
    %v865 = vadd.f32 0.0, %v864
    %v866 = vpop.f32.mrb[0].mxu0
    %867 = vdwg.mxu0
    %v869 = vsel %vm342, %v333, 0
    %v871 = vsel %vm342, %v269, 0
    %873 = vmatprep.subr.mxu0 0.0
    %874 = vmatpush1.xpose.msra.mxu0 %v871
    %875 = vmatprep.subr.mxu0 0.0
    %876 = vmatpush1.xpose.msra.mxu0 0.0
    %877 = vmatprep.subr.mxu0 0.0
    %878 = vmatpush1.xpose.msra.mxu0 0.0
    %879 = vmatprep.subr.mxu0 0.0
    %880 = vmatpush1.xpose.msra.mxu0 0.0
    %881 = vmatprep.subr.mxu0 0.0
    %882 = vmatpush1.xpose.msra.mxu0 0.0
    %883 = vmatprep.subr.mxu0 0.0
    %884 = vmatpush1.xpose.msra.mxu0 0.0
    %885 = vmatprep.subr.mxu0 0.0
    %886 = vmatpush1.xpose.msra.mxu0 0.0
    %887 = vmatprep.subr.mxu0 0.0
    %888 = vmatpush1.xpose.msra.mxu0 0.0
    %889 = vmatprep.subr.mxu0 0.0
    %890 = vmatpush1.xpose.msra.mxu0 0.0
    %891 = vmatprep.subr.mxu0 0.0
    %892 = vmatpush1.xpose.msra.mxu0 0.0
    %893 = vmatprep.subr.mxu0 0.0
    %894 = vmatpush1.xpose.msra.mxu0 0.0
    %895 = vmatprep.subr.mxu0 0.0
    %896 = vmatpush1.xpose.msra.mxu0 0.0
    %897 = vmatprep.subr.mxu0 0.0
    %898 = vmatpush1.xpose.msra.mxu0 0.0
    %899 = vmatprep.subr.mxu0 0.0
    %900 = vmatpush1.xpose.msra.mxu0 0.0
    %901 = vmatprep.subr.mxu0 0.0
    %902 = vmatpush1.xpose.msra.mxu0 0.0
    %903 = vmatprep.subr.mxu0 0.0
    %904 = vmatpush1.xpose.msra.mxu0 0.0
    %905 = vmatprep.subr.mxu0 0.0
    %906 = vmatpush1.xpose.msra.mxu0 0.0
    %907 = vmatprep.subr.mxu0 0.0
    %908 = vmatpush1.xpose.msra.mxu0 0.0
    %909 = vmatprep.subr.mxu0 0.0
    %910 = vmatpush1.xpose.msra.mxu0 0.0
    %911 = vmatprep.subr.mxu0 0.0
    %912 = vmatpush1.xpose.msra.mxu0 0.0
    %913 = vmatprep.subr.mxu0 0.0
    %914 = vmatpush1.xpose.msra.mxu0 0.0
    %915 = vmatprep.subr.mxu0 0.0
    %916 = vmatpush1.xpose.msra.mxu0 0.0
    %917 = vmatprep.subr.mxu0 0.0
    %918 = vmatpush1.xpose.msra.mxu0 0.0
    %919 = vmatprep.subr.mxu0 0.0
    %920 = vmatpush1.xpose.msra.mxu0 0.0
    %921 = vmatprep.subr.mxu0 0.0
    %922 = vmatpush1.xpose.msra.mxu0 0.0
    %923 = vmatprep.subr.mxu0 0.0
    %924 = vmatpush1.xpose.msra.mxu0 0.0
    %925 = vmatprep.subr.mxu0 0.0
    %926 = vmatpush1.xpose.msra.mxu0 0.0
    %927 = vmatprep.subr.mxu0 0.0
    %928 = vmatpush1.xpose.msra.mxu0 0.0
    %929 = vmatprep.subr.mxu0 0.0
    %930 = vmatpush1.xpose.msra.mxu0 0.0
    %931 = vmatprep.subr.mxu0 0.0
    %932 = vmatpush1.xpose.msra.mxu0 0.0
    %933 = vmatprep.subr.mxu0 0.0
    %934 = vmatpush1.xpose.msra.mxu0 0.0
    %935 = vmatprep.subr.mxu0 0.0
    %936 = vmatpush1.xpose.msra.mxu0 0.0
    %937 = vmatprep.mubr.f32.mxu0 0.0
    %938 = vmatmul.mubr.f32.gmra.mrb[0].mxu0 %v869
    %v939 = vpop.f32.mrb[0].mxu0
    %v940 = vadd.f32 0.0, %v939
    %v941 = vpop.f32.mrb[0].mxu0
    %942 = vdwg.mxu0
    %v944 = vsel %vm342, %v334, 0
    %v946 = vsel %vm342, %v271, 0
    %948 = vmatprep.subr.mxu0 0.0
    %949 = vmatpush1.xpose.msra.mxu0 %v946
    %950 = vmatprep.subr.mxu0 0.0
    %951 = vmatpush1.xpose.msra.mxu0 0.0
    %952 = vmatprep.subr.mxu0 0.0
    %953 = vmatpush1.xpose.msra.mxu0 0.0
    %954 = vmatprep.subr.mxu0 0.0
    %955 = vmatpush1.xpose.msra.mxu0 0.0
    %956 = vmatprep.subr.mxu0 0.0
    %957 = vmatpush1.xpose.msra.mxu0 0.0
    %958 = vmatprep.subr.mxu0 0.0
    %959 = vmatpush1.xpose.msra.mxu0 0.0
    %960 = vmatprep.subr.mxu0 0.0
    %961 = vmatpush1.xpose.msra.mxu0 0.0
    %962 = vmatprep.subr.mxu0 0.0
    %963 = vmatpush1.xpose.msra.mxu0 0.0
    %964 = vmatprep.subr.mxu0 0.0
    %965 = vmatpush1.xpose.msra.mxu0 0.0
    %966 = vmatprep.subr.mxu0 0.0
    %967 = vmatpush1.xpose.msra.mxu0 0.0
    %968 = vmatprep.subr.mxu0 0.0
    %969 = vmatpush1.xpose.msra.mxu0 0.0
    %970 = vmatprep.subr.mxu0 0.0
    %971 = vmatpush1.xpose.msra.mxu0 0.0
    %972 = vmatprep.subr.mxu0 0.0
    %973 = vmatpush1.xpose.msra.mxu0 0.0
    %974 = vmatprep.subr.mxu0 0.0
    %975 = vmatpush1.xpose.msra.mxu0 0.0
    %976 = vmatprep.subr.mxu0 0.0
    %977 = vmatpush1.xpose.msra.mxu0 0.0
    %978 = vmatprep.subr.mxu0 0.0
    %979 = vmatpush1.xpose.msra.mxu0 0.0
    %980 = vmatprep.subr.mxu0 0.0
    %981 = vmatpush1.xpose.msra.mxu0 0.0
    %982 = vmatprep.subr.mxu0 0.0
    %983 = vmatpush1.xpose.msra.mxu0 0.0
    %984 = vmatprep.subr.mxu0 0.0
    %985 = vmatpush1.xpose.msra.mxu0 0.0
    %986 = vmatprep.subr.mxu0 0.0
    %987 = vmatpush1.xpose.msra.mxu0 0.0
    %988 = vmatprep.subr.mxu0 0.0
    %989 = vmatpush1.xpose.msra.mxu0 0.0
    %990 = vmatprep.subr.mxu0 0.0
    %991 = vmatpush1.xpose.msra.mxu0 0.0
    %992 = vmatprep.subr.mxu0 0.0
    %993 = vmatpush1.xpose.msra.mxu0 0.0
    %994 = vmatprep.subr.mxu0 0.0
    %995 = vmatpush1.xpose.msra.mxu0 0.0
    %996 = vmatprep.subr.mxu0 0.0
    %997 = vmatpush1.xpose.msra.mxu0 0.0
    %998 = vmatprep.subr.mxu0 0.0
    %999 = vmatpush1.xpose.msra.mxu0 0.0
    %1000 = vmatprep.subr.mxu0 0.0
    %1001 = vmatpush1.xpose.msra.mxu0 0.0
    %1002 = vmatprep.subr.mxu0 0.0
    %1003 = vmatpush1.xpose.msra.mxu0 0.0
    %1004 = vmatprep.subr.mxu0 0.0
    %1005 = vmatpush1.xpose.msra.mxu0 0.0
    %1006 = vmatprep.subr.mxu0 0.0
    %1007 = vmatpush1.xpose.msra.mxu0 0.0
    %1008 = vmatprep.subr.mxu0 0.0
    %1009 = vmatpush1.xpose.msra.mxu0 0.0
    %1010 = vmatprep.subr.mxu0 0.0
    %1011 = vmatpush1.xpose.msra.mxu0 0.0
    %1012 = vmatprep.mubr.f32.mxu0 0.0
    %1013 = vmatmul.mubr.f32.gmra.mrb[0].mxu0 %v944
    %v1014 = vpop.f32.mrb[0].mxu0
    %v1015 = vadd.f32 0.0, %v1014
    %v1016 = vpop.f32.mrb[0].mxu0
    %1017 = vdwg.mxu0
    %v1019 = vsel %vm342, %v335, 0
    %v1021 = vsel %vm342, %v273, 0
    %1023 = vmatprep.subr.mxu0 0.0
    %1024 = vmatpush1.xpose.msra.mxu0 %v1021
    %1025 = vmatprep.subr.mxu0 0.0
    %1026 = vmatpush1.xpose.msra.mxu0 0.0
    %1027 = vmatprep.subr.mxu0 0.0
    %1028 = vmatpush1.xpose.msra.mxu0 0.0
    %1029 = vmatprep.subr.mxu0 0.0
    %1030 = vmatpush1.xpose.msra.mxu0 0.0
    %1031 = vmatprep.subr.mxu0 0.0
    %1032 = vmatpush1.xpose.msra.mxu0 0.0
    %1033 = vmatprep.subr.mxu0 0.0
    %1034 = vmatpush1.xpose.msra.mxu0 0.0
    %1035 = vmatprep.subr.mxu0 0.0
    %1036 = vmatpush1.xpose.msra.mxu0 0.0
    %1037 = vmatprep.subr.mxu0 0.0
    %1038 = vmatpush1.xpose.msra.mxu0 0.0
    %1039 = vmatprep.subr.mxu0 0.0
    %1040 = vmatpush1.xpose.msra.mxu0 0.0
    %1041 = vmatprep.subr.mxu0 0.0
    %1042 = vmatpush1.xpose.msra.mxu0 0.0
    %1043 = vmatprep.subr.mxu0 0.0
    %1044 = vmatpush1.xpose.msra.mxu0 0.0
    %1045 = vmatprep.subr.mxu0 0.0
    %1046 = vmatpush1.xpose.msra.mxu0 0.0
    %1047 = vmatprep.subr.mxu0 0.0
    %1048 = vmatpush1.xpose.msra.mxu0 0.0
    %1049 = vmatprep.subr.mxu0 0.0
    %1050 = vmatpush1.xpose.msra.mxu0 0.0
    %1051 = vmatprep.subr.mxu0 0.0
    %1052 = vmatpush1.xpose.msra.mxu0 0.0
    %1053 = vmatprep.subr.mxu0 0.0
    %1054 = vmatpush1.xpose.msra.mxu0 0.0
    %1055 = vmatprep.subr.mxu0 0.0
    %1056 = vmatpush1.xpose.msra.mxu0 0.0
    %1057 = vmatprep.subr.mxu0 0.0
    %1058 = vmatpush1.xpose.msra.mxu0 0.0
    %1059 = vmatprep.subr.mxu0 0.0
    %1060 = vmatpush1.xpose.msra.mxu0 0.0
    %1061 = vmatprep.subr.mxu0 0.0
    %1062 = vmatpush1.xpose.msra.mxu0 0.0
    %1063 = vmatprep.subr.mxu0 0.0
    %1064 = vmatpush1.xpose.msra.mxu0 0.0
    %1065 = vmatprep.subr.mxu0 0.0
    %1066 = vmatpush1.xpose.msra.mxu0 0.0
    %1067 = vmatprep.subr.mxu0 0.0
    %1068 = vmatpush1.xpose.msra.mxu0 0.0
    %1069 = vmatprep.subr.mxu0 0.0
    %1070 = vmatpush1.xpose.msra.mxu0 0.0
    %1071 = vmatprep.subr.mxu0 0.0
    %1072 = vmatpush1.xpose.msra.mxu0 0.0
    %1073 = vmatprep.subr.mxu0 0.0
    %1074 = vmatpush1.xpose.msra.mxu0 0.0
    %1075 = vmatprep.subr.mxu0 0.0
    %1076 = vmatpush1.xpose.msra.mxu0 0.0
    %1077 = vmatprep.subr.mxu0 0.0
    %1078 = vmatpush1.xpose.msra.mxu0 0.0
    %1079 = vmatprep.subr.mxu0 0.0
    %1080 = vmatpush1.xpose.msra.mxu0 0.0
    %1081 = vmatprep.subr.mxu0 0.0
    %1082 = vmatpush1.xpose.msra.mxu0 0.0
    %1083 = vmatprep.subr.mxu0 0.0
    %1084 = vmatpush1.xpose.msra.mxu0 0.0
    %1085 = vmatprep.subr.mxu0 0.0
    %1086 = vmatpush1.xpose.msra.mxu0 0.0
    %1087 = vmatprep.mubr.f32.mxu0 0.0
    %1088 = vmatmul.mubr.f32.gmra.mrb[0].mxu0 %v1019
    %v1089 = vpop.f32.mrb[0].mxu0
    %v1090 = vadd.f32 0.0, %v1089
    %v1091 = vpop.f32.mrb[0].mxu0
    %1092 = vdwg.mxu0
    %v1094 = vsel %vm342, %v336, 0
    %v1096 = vsel %vm342, %v275, 0
    %1098 = vmatprep.subr.mxu0 0.0
    %1099 = vmatpush1.xpose.msra.mxu0 %v1096
    %1100 = vmatprep.subr.mxu0 0.0
    %1101 = vmatpush1.xpose.msra.mxu0 0.0
    %1102 = vmatprep.subr.mxu0 0.0
    %1103 = vmatpush1.xpose.msra.mxu0 0.0
    %1104 = vmatprep.subr.mxu0 0.0
    %1105 = vmatpush1.xpose.msra.mxu0 0.0
    %1106 = vmatprep.subr.mxu0 0.0
    %1107 = vmatpush1.xpose.msra.mxu0 0.0
    %1108 = vmatprep.subr.mxu0 0.0
    %1109 = vmatpush1.xpose.msra.mxu0 0.0
    %1110 = vmatprep.subr.mxu0 0.0
    %1111 = vmatpush1.xpose.msra.mxu0 0.0
    %1112 = vmatprep.subr.mxu0 0.0
    %1113 = vmatpush1.xpose.msra.mxu0 0.0
    %1114 = vmatprep.subr.mxu0 0.0
    %1115 = vmatpush1.xpose.msra.mxu0 0.0
    %1116 = vmatprep.subr.mxu0 0.0
    %1117 = vmatpush1.xpose.msra.mxu0 0.0
    %1118 = vmatprep.subr.mxu0 0.0
    %1119 = vmatpush1.xpose.msra.mxu0 0.0
    %1120 = vmatprep.subr.mxu0 0.0
    %1121 = vmatpush1.xpose.msra.mxu0 0.0
    %1122 = vmatprep.subr.mxu0 0.0
    %1123 = vmatpush1.xpose.msra.mxu0 0.0
    %1124 = vmatprep.subr.mxu0 0.0
    %1125 = vmatpush1.xpose.msra.mxu0 0.0
    %1126 = vmatprep.subr.mxu0 0.0
    %1127 = vmatpush1.xpose.msra.mxu0 0.0
    %1128 = vmatprep.subr.mxu0 0.0
    %1129 = vmatpush1.xpose.msra.mxu0 0.0
    %1130 = vmatprep.subr.mxu0 0.0
    %1131 = vmatpush1.xpose.msra.mxu0 0.0
    %1132 = vmatprep.subr.mxu0 0.0
    %1133 = vmatpush1.xpose.msra.mxu0 0.0
    %1134 = vmatprep.subr.mxu0 0.0
    %1135 = vmatpush1.xpose.msra.mxu0 0.0
    %1136 = vmatprep.subr.mxu0 0.0
    %1137 = vmatpush1.xpose.msra.mxu0 0.0
    %1138 = vmatprep.subr.mxu0 0.0
    %1139 = vmatpush1.xpose.msra.mxu0 0.0
    %1140 = vmatprep.subr.mxu0 0.0
    %1141 = vmatpush1.xpose.msra.mxu0 0.0
    %1142 = vmatprep.subr.mxu0 0.0
    %1143 = vmatpush1.xpose.msra.mxu0 0.0
    %1144 = vmatprep.subr.mxu0 0.0
    %1145 = vmatpush1.xpose.msra.mxu0 0.0
    %1146 = vmatprep.subr.mxu0 0.0
    %1147 = vmatpush1.xpose.msra.mxu0 0.0
    %1148 = vmatprep.subr.mxu0 0.0
    %1149 = vmatpush1.xpose.msra.mxu0 0.0
    %1150 = vmatprep.subr.mxu0 0.0
    %1151 = vmatpush1.xpose.msra.mxu0 0.0
    %1152 = vmatprep.subr.mxu0 0.0
    %1153 = vmatpush1.xpose.msra.mxu0 0.0
    %1154 = vmatprep.subr.mxu0 0.0
    %1155 = vmatpush1.xpose.msra.mxu0 0.0
    %1156 = vmatprep.subr.mxu0 0.0
    %1157 = vmatpush1.xpose.msra.mxu0 0.0
    %1158 = vmatprep.subr.mxu0 0.0
    %1159 = vmatpush1.xpose.msra.mxu0 0.0
    %1160 = vmatprep.subr.mxu0 0.0
    %1161 = vmatpush1.xpose.msra.mxu0 0.0
    %1162 = vmatprep.mubr.f32.mxu0 0.0
    %1163 = vmatmul.mubr.f32.gmra.mrb[0].mxu0 %v1094
    %v1164 = vpop.f32.mrb[0].mxu0
    %v1165 = vadd.f32 0.0, %v1164
    %v1166 = vpop.f32.mrb[0].mxu0
    %1167 = vdwg.mxu0
    %v1169 = vsel %vm342, %v337, 0
    %v1171 = vsel %vm342, %v277, 0
    %1173 = vmatprep.subr.mxu0 0.0
    %1174 = vmatpush1.xpose.msra.mxu0 %v1171
    %1175 = vmatprep.subr.mxu0 0.0
    %1176 = vmatpush1.xpose.msra.mxu0 0.0
    %1177 = vmatprep.subr.mxu0 0.0
    %1178 = vmatpush1.xpose.msra.mxu0 0.0
    %1179 = vmatprep.subr.mxu0 0.0
    %1180 = vmatpush1.xpose.msra.mxu0 0.0
    %1181 = vmatprep.subr.mxu0 0.0
    %1182 = vmatpush1.xpose.msra.mxu0 0.0
    %1183 = vmatprep.subr.mxu0 0.0
    %1184 = vmatpush1.xpose.msra.mxu0 0.0
    %1185 = vmatprep.subr.mxu0 0.0
    %1186 = vmatpush1.xpose.msra.mxu0 0.0
    %1187 = vmatprep.subr.mxu0 0.0
    %1188 = vmatpush1.xpose.msra.mxu0 0.0
    %1189 = vmatprep.subr.mxu0 0.0
    %1190 = vmatpush1.xpose.msra.mxu0 0.0
    %1191 = vmatprep.subr.mxu0 0.0
    %1192 = vmatpush1.xpose.msra.mxu0 0.0
    %1193 = vmatprep.subr.mxu0 0.0
    %1194 = vmatpush1.xpose.msra.mxu0 0.0
    %1195 = vmatprep.subr.mxu0 0.0
    %1196 = vmatpush1.xpose.msra.mxu0 0.0
    %1197 = vmatprep.subr.mxu0 0.0
    %1198 = vmatpush1.xpose.msra.mxu0 0.0
    %1199 = vmatprep.subr.mxu0 0.0
    %1200 = vmatpush1.xpose.msra.mxu0 0.0
    %1201 = vmatprep.subr.mxu0 0.0
    %1202 = vmatpush1.xpose.msra.mxu0 0.0
    %1203 = vmatprep.subr.mxu0 0.0
    %1204 = vmatpush1.xpose.msra.mxu0 0.0
    %1205 = vmatprep.subr.mxu0 0.0
    %1206 = vmatpush1.xpose.msra.mxu0 0.0
    %1207 = vmatprep.subr.mxu0 0.0
    %1208 = vmatpush1.xpose.msra.mxu0 0.0
    %1209 = vmatprep.subr.mxu0 0.0
    %1210 = vmatpush1.xpose.msra.mxu0 0.0
    %1211 = vmatprep.subr.mxu0 0.0
    %1212 = vmatpush1.xpose.msra.mxu0 0.0
    %1213 = vmatprep.subr.mxu0 0.0
    %1214 = vmatpush1.xpose.msra.mxu0 0.0
    %1215 = vmatprep.subr.mxu0 0.0
    %1216 = vmatpush1.xpose.msra.mxu0 0.0
    %1217 = vmatprep.subr.mxu0 0.0
    %1218 = vmatpush1.xpose.msra.mxu0 0.0
    %1219 = vmatprep.subr.mxu0 0.0
    %1220 = vmatpush1.xpose.msra.mxu0 0.0
    %1221 = vmatprep.subr.mxu0 0.0
    %1222 = vmatpush1.xpose.msra.mxu0 0.0
    %1223 = vmatprep.subr.mxu0 0.0
    %1224 = vmatpush1.xpose.msra.mxu0 0.0
    %1225 = vmatprep.subr.mxu0 0.0
    %1226 = vmatpush1.xpose.msra.mxu0 0.0
    %1227 = vmatprep.subr.mxu0 0.0
    %1228 = vmatpush1.xpose.msra.mxu0 0.0
    %1229 = vmatprep.subr.mxu0 0.0
    %1230 = vmatpush1.xpose.msra.mxu0 0.0
    %1231 = vmatprep.subr.mxu0 0.0
    %1232 = vmatpush1.xpose.msra.mxu0 0.0
    %1233 = vmatprep.subr.mxu0 0.0
    %1234 = vmatpush1.xpose.msra.mxu0 0.0
    %1235 = vmatprep.subr.mxu0 0.0
    %1236 = vmatpush1.xpose.msra.mxu0 0.0
    %1237 = vmatprep.mubr.f32.mxu0 0.0
    %1238 = vmatmul.mubr.f32.gmra.mrb[0].mxu0 %v1169
    %v1239 = vpop.f32.mrb[0].mxu0
    %v1240 = vadd.f32 0.0, %v1239
    %v1241 = vpop.f32.mrb[0].mxu0
    %1242 = vdwg.mxu0
    %v1244 = vsel %vm342, %v338, 0
    %v1246 = vsel %vm342, %v279, 0
    %1248 = vmatprep.subr.mxu0 0.0
    %1249 = vmatpush1.xpose.msra.mxu0 %v1246
    %1250 = vmatprep.subr.mxu0 0.0
    %1251 = vmatpush1.xpose.msra.mxu0 0.0
    %1252 = vmatprep.subr.mxu0 0.0
    %1253 = vmatpush1.xpose.msra.mxu0 0.0
    %1254 = vmatprep.subr.mxu0 0.0
    %1255 = vmatpush1.xpose.msra.mxu0 0.0
    %1256 = vmatprep.subr.mxu0 0.0
    %1257 = vmatpush1.xpose.msra.mxu0 0.0
    %1258 = vmatprep.subr.mxu0 0.0
    %1259 = vmatpush1.xpose.msra.mxu0 0.0
    %1260 = vmatprep.subr.mxu0 0.0
    %1261 = vmatpush1.xpose.msra.mxu0 0.0
    %1262 = vmatprep.subr.mxu0 0.0
    %1263 = vmatpush1.xpose.msra.mxu0 0.0
    %1264 = vmatprep.subr.mxu0 0.0
    %1265 = vmatpush1.xpose.msra.mxu0 0.0
    %1266 = vmatprep.subr.mxu0 0.0
    %1267 = vmatpush1.xpose.msra.mxu0 0.0
    %1268 = vmatprep.subr.mxu0 0.0
    %1269 = vmatpush1.xpose.msra.mxu0 0.0
    %1270 = vmatprep.subr.mxu0 0.0
    %1271 = vmatpush1.xpose.msra.mxu0 0.0
    %1272 = vmatprep.subr.mxu0 0.0
    %1273 = vmatpush1.xpose.msra.mxu0 0.0
    %1274 = vmatprep.subr.mxu0 0.0
    %1275 = vmatpush1.xpose.msra.mxu0 0.0
    %1276 = vmatprep.subr.mxu0 0.0
    %1277 = vmatpush1.xpose.msra.mxu0 0.0
    %1278 = vmatprep.subr.mxu0 0.0
    %1279 = vmatpush1.xpose.msra.mxu0 0.0
    %1280 = vmatprep.subr.mxu0 0.0
    %1281 = vmatpush1.xpose.msra.mxu0 0.0
    %1282 = vmatprep.subr.mxu0 0.0
    %1283 = vmatpush1.xpose.msra.mxu0 0.0
    %1284 = vmatprep.subr.mxu0 0.0
    %1285 = vmatpush1.xpose.msra.mxu0 0.0
    %1286 = vmatprep.subr.mxu0 0.0
    %1287 = vmatpush1.xpose.msra.mxu0 0.0
    %1288 = vmatprep.subr.mxu0 0.0
    %1289 = vmatpush1.xpose.msra.mxu0 0.0
    %1290 = vmatprep.subr.mxu0 0.0
    %1291 = vmatpush1.xpose.msra.mxu0 0.0
    %1292 = vmatprep.subr.mxu0 0.0
    %1293 = vmatpush1.xpose.msra.mxu0 0.0
    %1294 = vmatprep.subr.mxu0 0.0
    %1295 = vmatpush1.xpose.msra.mxu0 0.0
    %1296 = vmatprep.subr.mxu0 0.0
    %1297 = vmatpush1.xpose.msra.mxu0 0.0
    %1298 = vmatprep.subr.mxu0 0.0
    %1299 = vmatpush1.xpose.msra.mxu0 0.0
    %1300 = vmatprep.subr.mxu0 0.0
    %1301 = vmatpush1.xpose.msra.mxu0 0.0
    %1302 = vmatprep.subr.mxu0 0.0
    %1303 = vmatpush1.xpose.msra.mxu0 0.0
    %1304 = vmatprep.subr.mxu0 0.0
    %1305 = vmatpush1.xpose.msra.mxu0 0.0
    %1306 = vmatprep.subr.mxu0 0.0
    %1307 = vmatpush1.xpose.msra.mxu0 0.0
    %1308 = vmatprep.subr.mxu0 0.0
    %1309 = vmatpush1.xpose.msra.mxu0 0.0
    %1310 = vmatprep.subr.mxu0 0.0
    %1311 = vmatpush1.xpose.msra.mxu0 0.0
    %1312 = vmatprep.mubr.f32.mxu0 0.0
    %1313 = vmatmul.mubr.f32.gmra.mrb[0].mxu0 %v1244
    %v1314 = vpop.f32.mrb[0].mxu0
    %v1315 = vadd.f32 0.0, %v1314
    %v1316 = vpop.f32.mrb[0].mxu0
    %1317 = vdwg.mxu0
    %v1319 = vsel %vm342, %v339, 0
    %v1321 = vsel %vm342, %v281, 0
    %1323 = vmatprep.subr.mxu0 0.0
    %1324 = vmatpush1.xpose.msra.mxu0 %v1321
    %1325 = vmatprep.subr.mxu0 0.0
    %1326 = vmatpush1.xpose.msra.mxu0 0.0
    %1327 = vmatprep.subr.mxu0 0.0
    %1328 = vmatpush1.xpose.msra.mxu0 0.0
    %1329 = vmatprep.subr.mxu0 0.0
    %1330 = vmatpush1.xpose.msra.mxu0 0.0
    %1331 = vmatprep.subr.mxu0 0.0
    %1332 = vmatpush1.xpose.msra.mxu0 0.0
    %1333 = vmatprep.subr.mxu0 0.0
    %1334 = vmatpush1.xpose.msra.mxu0 0.0
    %1335 = vmatprep.subr.mxu0 0.0
    %1336 = vmatpush1.xpose.msra.mxu0 0.0
    %1337 = vmatprep.subr.mxu0 0.0
    %1338 = vmatpush1.xpose.msra.mxu0 0.0
    %1339 = vmatprep.subr.mxu0 0.0
    %1340 = vmatpush1.xpose.msra.mxu0 0.0
    %1341 = vmatprep.subr.mxu0 0.0
    %1342 = vmatpush1.xpose.msra.mxu0 0.0
    %1343 = vmatprep.subr.mxu0 0.0
    %1344 = vmatpush1.xpose.msra.mxu0 0.0
    %1345 = vmatprep.subr.mxu0 0.0
    %1346 = vmatpush1.xpose.msra.mxu0 0.0
    %1347 = vmatprep.subr.mxu0 0.0
    %1348 = vmatpush1.xpose.msra.mxu0 0.0
    %1349 = vmatprep.subr.mxu0 0.0
    %1350 = vmatpush1.xpose.msra.mxu0 0.0
    %1351 = vmatprep.subr.mxu0 0.0
    %1352 = vmatpush1.xpose.msra.mxu0 0.0
    %1353 = vmatprep.subr.mxu0 0.0
    %1354 = vmatpush1.xpose.msra.mxu0 0.0
    %1355 = vmatprep.subr.mxu0 0.0
    %1356 = vmatpush1.xpose.msra.mxu0 0.0
    %1357 = vmatprep.subr.mxu0 0.0
    %1358 = vmatpush1.xpose.msra.mxu0 0.0
    %1359 = vmatprep.subr.mxu0 0.0
    %1360 = vmatpush1.xpose.msra.mxu0 0.0
    %1361 = vmatprep.subr.mxu0 0.0
    %1362 = vmatpush1.xpose.msra.mxu0 0.0
    %1363 = vmatprep.subr.mxu0 0.0
    %1364 = vmatpush1.xpose.msra.mxu0 0.0
    %1365 = vmatprep.subr.mxu0 0.0
    %1366 = vmatpush1.xpose.msra.mxu0 0.0
    %1367 = vmatprep.subr.mxu0 0.0
    %1368 = vmatpush1.xpose.msra.mxu0 0.0
    %1369 = vmatprep.subr.mxu0 0.0
    %1370 = vmatpush1.xpose.msra.mxu0 0.0
    %1371 = vmatprep.subr.mxu0 0.0
    %1372 = vmatpush1.xpose.msra.mxu0 0.0
    %1373 = vmatprep.subr.mxu0 0.0
    %1374 = vmatpush1.xpose.msra.mxu0 0.0
    %1375 = vmatprep.subr.mxu0 0.0
    %1376 = vmatpush1.xpose.msra.mxu0 0.0
    %1377 = vmatprep.subr.mxu0 0.0
    %1378 = vmatpush1.xpose.msra.mxu0 0.0
    %1379 = vmatprep.subr.mxu0 0.0
    %1380 = vmatpush1.xpose.msra.mxu0 0.0
    %1381 = vmatprep.subr.mxu0 0.0
    %1382 = vmatpush1.xpose.msra.mxu0 0.0
    %1383 = vmatprep.subr.mxu0 0.0
    %1384 = vmatpush1.xpose.msra.mxu0 0.0
    %1385 = vmatprep.subr.mxu0 0.0
    %1386 = vmatpush1.xpose.msra.mxu0 0.0
    %1387 = vmatprep.mubr.f32.mxu0 0.0
    %1388 = vmatmul.mubr.f32.gmra.mrb[0].mxu0 %v1319
    %v1389 = vpop.f32.mrb[0].mxu0
    %v1390 = vadd.f32 0.0, %v1389
    %v1391 = vpop.f32.mrb[0].mxu0
    %1392 = vdwg.mxu0
    %v1394 = vsel %vm342, %v340, 0
    %v1396 = vsel %vm342, %v283, 0
    %1398 = vmatprep.subr.mxu0 0.0
    %1399 = vmatpush1.xpose.msra.mxu0 %v1396
    %1400 = vmatprep.subr.mxu0 0.0
    %1401 = vmatpush1.xpose.msra.mxu0 0.0
    %1402 = vmatprep.subr.mxu0 0.0
    %1403 = vmatpush1.xpose.msra.mxu0 0.0
    %1404 = vmatprep.subr.mxu0 0.0
    %1405 = vmatpush1.xpose.msra.mxu0 0.0
    %1406 = vmatprep.subr.mxu0 0.0
    %1407 = vmatpush1.xpose.msra.mxu0 0.0
    %1408 = vmatprep.subr.mxu0 0.0
    %1409 = vmatpush1.xpose.msra.mxu0 0.0
    %1410 = vmatprep.subr.mxu0 0.0
    %1411 = vmatpush1.xpose.msra.mxu0 0.0
    %1412 = vmatprep.subr.mxu0 0.0
    %1413 = vmatpush1.xpose.msra.mxu0 0.0
    %1414 = vmatprep.subr.mxu0 0.0
    %1415 = vmatpush1.xpose.msra.mxu0 0.0
    %1416 = vmatprep.subr.mxu0 0.0
    %1417 = vmatpush1.xpose.msra.mxu0 0.0
    %1418 = vmatprep.subr.mxu0 0.0
    %1419 = vmatpush1.xpose.msra.mxu0 0.0
    %1420 = vmatprep.subr.mxu0 0.0
    %1421 = vmatpush1.xpose.msra.mxu0 0.0
    %1422 = vmatprep.subr.mxu0 0.0
    %1423 = vmatpush1.xpose.msra.mxu0 0.0
    %1424 = vmatprep.subr.mxu0 0.0
    %1425 = vmatpush1.xpose.msra.mxu0 0.0
    %1426 = vmatprep.subr.mxu0 0.0
    %1427 = vmatpush1.xpose.msra.mxu0 0.0
    %1428 = vmatprep.subr.mxu0 0.0
    %1429 = vmatpush1.xpose.msra.mxu0 0.0
    %1430 = vmatprep.subr.mxu0 0.0
    %1431 = vmatpush1.xpose.msra.mxu0 0.0
    %1432 = vmatprep.subr.mxu0 0.0
    %1433 = vmatpush1.xpose.msra.mxu0 0.0
    %1434 = vmatprep.subr.mxu0 0.0
    %1435 = vmatpush1.xpose.msra.mxu0 0.0
    %1436 = vmatprep.subr.mxu0 0.0
    %1437 = vmatpush1.xpose.msra.mxu0 0.0
    %1438 = vmatprep.subr.mxu0 0.0
    %1439 = vmatpush1.xpose.msra.mxu0 0.0
    %1440 = vmatprep.subr.mxu0 0.0
    %1441 = vmatpush1.xpose.msra.mxu0 0.0
    %1442 = vmatprep.subr.mxu0 0.0
    %1443 = vmatpush1.xpose.msra.mxu0 0.0
    %1444 = vmatprep.subr.mxu0 0.0
    %1445 = vmatpush1.xpose.msra.mxu0 0.0
    %1446 = vmatprep.subr.mxu0 0.0
    %1447 = vmatpush1.xpose.msra.mxu0 0.0
    %1448 = vmatprep.subr.mxu0 0.0
    %1449 = vmatpush1.xpose.msra.mxu0 0.0
    %1450 = vmatprep.subr.mxu0 0.0
    %1451 = vmatpush1.xpose.msra.mxu0 0.0
    %1452 = vmatprep.subr.mxu0 0.0
    %1453 = vmatpush1.xpose.msra.mxu0 0.0
    %1454 = vmatprep.subr.mxu0 0.0
    %1455 = vmatpush1.xpose.msra.mxu0 0.0
    %1456 = vmatprep.subr.mxu0 0.0
    %1457 = vmatpush1.xpose.msra.mxu0 0.0
    %1458 = vmatprep.subr.mxu0 0.0
    %1459 = vmatpush1.xpose.msra.mxu0 0.0
    %1460 = vmatprep.subr.mxu0 0.0
    %1461 = vmatpush1.xpose.msra.mxu0 0.0
    %1462 = vmatprep.mubr.f32.mxu0 0.0
    %1463 = vmatmul.mubr.f32.gmra.mrb[0].mxu0 %v1394
    %v1464 = vpop.f32.mrb[0].mxu0
    %v1465 = vadd.f32 0.0, %v1464
    %v1466 = vpop.f32.mrb[0].mxu0
    %1467 = vdwg.mxu0
    %v1469 = vsel %vm342, %v341, 0
    %v1471 = vsel %vm342, %v285, 0
    %1473 = vmatprep.subr.mxu0 0.0
    %1474 = vmatpush1.xpose.msra.mxu0 %v1471
    %1475 = vmatprep.subr.mxu0 0.0
    %1476 = vmatpush1.xpose.msra.mxu0 0.0
    %1477 = vmatprep.subr.mxu0 0.0
    %1478 = vmatpush1.xpose.msra.mxu0 0.0
    %1479 = vmatprep.subr.mxu0 0.0
    %1480 = vmatpush1.xpose.msra.mxu0 0.0
    %1481 = vmatprep.subr.mxu0 0.0
    %1482 = vmatpush1.xpose.msra.mxu0 0.0
    %1483 = vmatprep.subr.mxu0 0.0
    %1484 = vmatpush1.xpose.msra.mxu0 0.0
    %1485 = vmatprep.subr.mxu0 0.0
    %1486 = vmatpush1.xpose.msra.mxu0 0.0
    %1487 = vmatprep.subr.mxu0 0.0
    %1488 = vmatpush1.xpose.msra.mxu0 0.0
    %1489 = vmatprep.subr.mxu0 0.0
    %1490 = vmatpush1.xpose.msra.mxu0 0.0
    %1491 = vmatprep.subr.mxu0 0.0
    %1492 = vmatpush1.xpose.msra.mxu0 0.0
    %1493 = vmatprep.subr.mxu0 0.0
    %1494 = vmatpush1.xpose.msra.mxu0 0.0
    %1495 = vmatprep.subr.mxu0 0.0
    %1496 = vmatpush1.xpose.msra.mxu0 0.0
    %1497 = vmatprep.subr.mxu0 0.0
    %1498 = vmatpush1.xpose.msra.mxu0 0.0
    %1499 = vmatprep.subr.mxu0 0.0
    %1500 = vmatpush1.xpose.msra.mxu0 0.0
    %1501 = vmatprep.subr.mxu0 0.0
    %1502 = vmatpush1.xpose.msra.mxu0 0.0
    %1503 = vmatprep.subr.mxu0 0.0
    %1504 = vmatpush1.xpose.msra.mxu0 0.0
    %1505 = vmatprep.subr.mxu0 0.0
    %1506 = vmatpush1.xpose.msra.mxu0 0.0
    %1507 = vmatprep.subr.mxu0 0.0
    %1508 = vmatpush1.xpose.msra.mxu0 0.0
    %1509 = vmatprep.subr.mxu0 0.0
    %1510 = vmatpush1.xpose.msra.mxu0 0.0
    %1511 = vmatprep.subr.mxu0 0.0
    %1512 = vmatpush1.xpose.msra.mxu0 0.0
    %1513 = vmatprep.subr.mxu0 0.0
    %1514 = vmatpush1.xpose.msra.mxu0 0.0
    %1515 = vmatprep.subr.mxu0 0.0
    %1516 = vmatpush1.xpose.msra.mxu0 0.0
    %1517 = vmatprep.subr.mxu0 0.0
    %1518 = vmatpush1.xpose.msra.mxu0 0.0
    %1519 = vmatprep.subr.mxu0 0.0
    %1520 = vmatpush1.xpose.msra.mxu0 0.0
    %1521 = vmatprep.subr.mxu0 0.0
    %1522 = vmatpush1.xpose.msra.mxu0 0.0
    %1523 = vmatprep.subr.mxu0 0.0
    %1524 = vmatpush1.xpose.msra.mxu0 0.0
    %1525 = vmatprep.subr.mxu0 0.0
    %1526 = vmatpush1.xpose.msra.mxu0 0.0
    %1527 = vmatprep.subr.mxu0 0.0
    %1528 = vmatpush1.xpose.msra.mxu0 0.0
    %1529 = vmatprep.subr.mxu0 0.0
    %1530 = vmatpush1.xpose.msra.mxu0 0.0
    %1531 = vmatprep.subr.mxu0 0.0
    %1532 = vmatpush1.xpose.msra.mxu0 0.0
    %1533 = vmatprep.subr.mxu0 0.0
    %1534 = vmatpush1.xpose.msra.mxu0 0.0
    %1535 = vmatprep.subr.mxu0 0.0
    %1536 = vmatpush1.xpose.msra.mxu0 0.0
    %1537 = vmatprep.mubr.f32.mxu0 0.0
    %1538 = vmatmul.mubr.f32.gmra.mrb[0].mxu0 %v1469
    %v1539 = vpop.f32.mrb[0].mxu0
    %v1540 = vadd.f32 0.0, %v1539
    %v1541 = vpop.f32.mrb[0].mxu0
    %1542 = vdwg.mxu0
    %v1543 = vmul.f32 %v415, 0.35355338
    %v1544 = vmul.f32 %v490, 0.35355338
    %v1545 = vmul.f32 %v565, 0.35355338
    %v1546 = vmul.f32 %v640, 0.35355338
    %v1547 = vmul.f32 %v715, 0.35355338
    %v1548 = vmul.f32 %v790, 0.35355338
    %v1549 = vmul.f32 %v865, 0.35355338
    %v1550 = vmul.f32 %v940, 0.35355338
    %v1551 = vmul.f32 %v1015, 0.35355338
    %v1552 = vmul.f32 %v1090, 0.35355338
    %v1553 = vmul.f32 %v1165, 0.35355338
    %v1554 = vmul.f32 %v1240, 0.35355338
    %v1555 = vmul.f32 %v1315, 0.35355338
    %v1556 = vmul.f32 %v1390, 0.35355338
    %v1557 = vmul.f32 %v1465, 0.35355338
    %v1558 = vmul.f32 %v1540, 0.35355338
    %v1559 = vsel %vm342, %v1543, -inf
    %1560 = vmax.xlane.f32.xlu0 %v1559
    %v1561 = vpop.xlane.xlu0 %1560
    %v1562 = vsel %vm342, %v1544, -inf
    %1563 = vmax.xlane.f32.xlu0 %v1562
    %v1564 = vpop.xlane.xlu0 %1563
    %v1565 = vsel %vm342, %v1545, -inf
    %1566 = vmax.xlane.f32.xlu0 %v1565
    %v1567 = vpop.xlane.xlu0 %1566
    %v1568 = vsel %vm342, %v1546, -inf
    %1569 = vmax.xlane.f32.xlu0 %v1568
    %v1570 = vpop.xlane.xlu0 %1569
    %v1571 = vsel %vm342, %v1547, -inf
    %1572 = vmax.xlane.f32.xlu0 %v1571
    %v1573 = vpop.xlane.xlu0 %1572
    %v1574 = vsel %vm342, %v1548, -inf
    %1575 = vmax.xlane.f32.xlu0 %v1574
    %v1576 = vpop.xlane.xlu0 %1575
    %v1577 = vsel %vm342, %v1549, -inf
    %1578 = vmax.xlane.f32.xlu0 %v1577
    %v1579 = vpop.xlane.xlu0 %1578
    %v1580 = vsel %vm342, %v1550, -inf
    %1581 = vmax.xlane.f32.xlu0 %v1580
    %v1582 = vpop.xlane.xlu0 %1581
    %v1583 = vsel %vm342, %v1551, -inf
    %1584 = vmax.xlane.f32.xlu0 %v1583
    %v1585 = vpop.xlane.xlu0 %1584
    %v1586 = vsel %vm342, %v1552, -inf
    %1587 = vmax.xlane.f32.xlu0 %v1586
    %v1588 = vpop.xlane.xlu0 %1587
    %v1589 = vsel %vm342, %v1553, -inf
    %1590 = vmax.xlane.f32.xlu0 %v1589
    %v1591 = vpop.xlane.xlu0 %1590
    %v1592 = vsel %vm342, %v1554, -inf
    %1593 = vmax.xlane.f32.xlu0 %v1592
    %v1594 = vpop.xlane.xlu0 %1593
    %v1595 = vsel %vm342, %v1555, -inf
    %1596 = vmax.xlane.f32.xlu0 %v1595
    %v1597 = vpop.xlane.xlu0 %1596
    %v1598 = vsel %vm342, %v1556, -inf
    %1599 = vmax.xlane.f32.xlu0 %v1598
    %v1600 = vpop.xlane.xlu0 %1599
    %v1601 = vsel %vm342, %v1557, -inf
    %1602 = vmax.xlane.f32.xlu0 %v1601
    %v1603 = vpop.xlane.xlu0 %1602
    %v1604 = vsel %vm342, %v1558, -inf
    %1605 = vmax.xlane.f32.xlu0 %v1604
    %v1606 = vpop.xlane.xlu0 %1605
    %v1607 = vsub.f32 %v1543, %v1561
    %v1608 = vsub.f32 %v1544, %v1564
    %v1609 = vsub.f32 %v1545, %v1567
    %v1610 = vsub.f32 %v1546, %v1570
    %v1611 = vsub.f32 %v1547, %v1573
    %v1612 = vsub.f32 %v1548, %v1576
    %v1613 = vsub.f32 %v1549, %v1579
    %v1614 = vsub.f32 %v1550, %v1582
    %v1615 = vsub.f32 %v1551, %v1585
    %v1616 = vsub.f32 %v1552, %v1588
    %v1617 = vsub.f32 %v1553, %v1591
    %v1618 = vsub.f32 %v1554, %v1594
    %v1619 = vsub.f32 %v1555, %v1597
    %v1620 = vsub.f32 %v1556, %v1600
    %v1621 = vsub.f32 %v1557, %v1603
    %v1622 = vsub.f32 %v1558, %v1606
    %v1623 = vmul.f32 %v1607, 1.442695
    %v1624 = vpow.pop %v1623
    %v1625 = vmul.f32 %v1608, 1.442695
    %v1626 = vpow.pop %v1625
    %v1627 = vmul.f32 %v1609, 1.442695
    %v1628 = vpow.pop %v1627
    %v1629 = vmul.f32 %v1610, 1.442695
    %v1630 = vpow.pop %v1629
    %v1631 = vmul.f32 %v1611, 1.442695
    %v1632 = vpow.pop %v1631
    %v1633 = vmul.f32 %v1612, 1.442695
    %v1634 = vpow.pop %v1633
    %v1635 = vmul.f32 %v1613, 1.442695
    %v1636 = vpow.pop %v1635
    %v1637 = vmul.f32 %v1614, 1.442695
    %v1638 = vpow.pop %v1637
    %v1639 = vmul.f32 %v1615, 1.442695
    %v1640 = vpow.pop %v1639
    %v1641 = vmul.f32 %v1616, 1.442695
    %v1642 = vpow.pop %v1641
    %v1643 = vmul.f32 %v1617, 1.442695
    %v1644 = vpow.pop %v1643
    %v1645 = vmul.f32 %v1618, 1.442695
    %v1646 = vpow.pop %v1645
    %v1647 = vmul.f32 %v1619, 1.442695
    %v1648 = vpow.pop %v1647
    %v1649 = vmul.f32 %v1620, 1.442695
    %v1650 = vpow.pop %v1649
    %v1651 = vmul.f32 %v1621, 1.442695
    %v1652 = vpow.pop %v1651
    %v1653 = vmul.f32 %v1622, 1.442695
    %v1654 = vpow.pop %v1653
    %v1655 = vsel %vm342, %v1624, 0.0
    %1656 = vadd.xlane.f32.xlu0 %v1655
    %v1657 = vpop.xlane.xlu0 %1656
    %v1658 = vsel %vm342, %v1626, 0.0
    %1659 = vadd.xlane.f32.xlu0 %v1658
    %v1660 = vpop.xlane.xlu0 %1659
    %v1661 = vsel %vm342, %v1628, 0.0
    %1662 = vadd.xlane.f32.xlu0 %v1661
    %v1663 = vpop.xlane.xlu0 %1662
    %v1664 = vsel %vm342, %v1630, 0.0
    %1665 = vadd.xlane.f32.xlu0 %v1664
    %v1666 = vpop.xlane.xlu0 %1665
    %v1667 = vsel %vm342, %v1632, 0.0
    %1668 = vadd.xlane.f32.xlu0 %v1667
    %v1669 = vpop.xlane.xlu0 %1668
    %v1670 = vsel %vm342, %v1634, 0.0
    %1671 = vadd.xlane.f32.xlu0 %v1670
    %v1672 = vpop.xlane.xlu0 %1671
    %v1673 = vsel %vm342, %v1636, 0.0
    %1674 = vadd.xlane.f32.xlu0 %v1673
    %v1675 = vpop.xlane.xlu0 %1674
    %v1676 = vsel %vm342, %v1638, 0.0
    %1677 = vadd.xlane.f32.xlu0 %v1676
    %v1678 = vpop.xlane.xlu0 %1677
    %v1679 = vsel %vm342, %v1640, 0.0
    %1680 = vadd.xlane.f32.xlu0 %v1679
    %v1681 = vpop.xlane.xlu0 %1680
    %v1682 = vsel %vm342, %v1642, 0.0
    %1683 = vadd.xlane.f32.xlu0 %v1682
    %v1684 = vpop.xlane.xlu0 %1683
    %v1685 = vsel %vm342, %v1644, 0.0
    %1686 = vadd.xlane.f32.xlu0 %v1685
    %v1687 = vpop.xlane.xlu0 %1686
    %v1688 = vsel %vm342, %v1646, 0.0
    %1689 = vadd.xlane.f32.xlu0 %v1688
    %v1690 = vpop.xlane.xlu0 %1689
    %v1691 = vsel %vm342, %v1648, 0.0
    %1692 = vadd.xlane.f32.xlu0 %v1691
    %v1693 = vpop.xlane.xlu0 %1692
    %v1694 = vsel %vm342, %v1650, 0.0
    %1695 = vadd.xlane.f32.xlu0 %v1694
    %v1696 = vpop.xlane.xlu0 %1695
    %v1697 = vsel %vm342, %v1652, 0.0
    %1698 = vadd.xlane.f32.xlu0 %v1697
    %v1699 = vpop.xlane.xlu0 %1698
    %v1700 = vsel %vm342, %v1654, 0.0
    %1701 = vadd.xlane.f32.xlu0 %v1700
    %v1702 = vpop.xlane.xlu0 %1701
    %v1703 = vrcp.pop %v1657
    %v1704 = vmul.f32 %v1624, %v1703
    %v1705 = vrcp.pop %v1660
    %v1706 = vmul.f32 %v1626, %v1705
    %v1707 = vrcp.pop %v1663
    %v1708 = vmul.f32 %v1628, %v1707
    %v1709 = vrcp.pop %v1666
    %v1710 = vmul.f32 %v1630, %v1709
    %v1711 = vrcp.pop %v1669
    %v1712 = vmul.f32 %v1632, %v1711
    %v1713 = vrcp.pop %v1672
    %v1714 = vmul.f32 %v1634, %v1713
    %v1715 = vrcp.pop %v1675
    %v1716 = vmul.f32 %v1636, %v1715
    %v1717 = vrcp.pop %v1678
    %v1718 = vmul.f32 %v1638, %v1717
    %v1719 = vrcp.pop %v1681
    %v1720 = vmul.f32 %v1640, %v1719
    %v1721 = vrcp.pop %v1684
    %v1722 = vmul.f32 %v1642, %v1721
    %v1723 = vrcp.pop %v1687
    %v1724 = vmul.f32 %v1644, %v1723
    %v1725 = vrcp.pop %v1690
    %v1726 = vmul.f32 %v1646, %v1725
    %v1727 = vrcp.pop %v1693
    %v1728 = vmul.f32 %v1648, %v1727
    %v1729 = vrcp.pop %v1696
    %v1730 = vmul.f32 %v1650, %v1729
    %v1731 = vrcp.pop %v1699
    %v1732 = vmul.f32 %v1652, %v1731
    %v1733 = vrcp.pop %v1702
    %v1734 = vmul.f32 %v1654, %v1733
    %v1736 = vsel %vm342, %v1704, 0
    %1738 = vmatprep.subr.mxu0 0.0
    %1739 = vmatpush1.msra.mxu0 %v240
    %1740 = vmatprep.subr.mxu0 0.0
    %1741 = vmatpush1.msra.mxu0 0.0
    %1742 = vmatprep.subr.mxu0 0.0
    %1743 = vmatpush1.msra.mxu0 0.0
    %1744 = vmatprep.subr.mxu0 0.0
    %1745 = vmatpush1.msra.mxu0 0.0
    %1746 = vmatprep.subr.mxu0 0.0
    %1747 = vmatpush1.msra.mxu0 0.0
    %1748 = vmatprep.subr.mxu0 0.0
    %1749 = vmatpush1.msra.mxu0 0.0
    %1750 = vmatprep.subr.mxu0 0.0
    %1751 = vmatpush1.msra.mxu0 0.0
    %1752 = vmatprep.subr.mxu0 0.0
    %1753 = vmatpush1.msra.mxu0 0.0
    %1754 = vmatprep.subr.mxu0 0.0
    %1755 = vmatpush1.msra.mxu0 0.0
    %1756 = vmatprep.subr.mxu0 0.0
    %1757 = vmatpush1.msra.mxu0 0.0
    %1758 = vmatprep.subr.mxu0 0.0
    %1759 = vmatpush1.msra.mxu0 0.0
    %1760 = vmatprep.subr.mxu0 0.0
    %1761 = vmatpush1.msra.mxu0 0.0
    %1762 = vmatprep.subr.mxu0 0.0
    %1763 = vmatpush1.msra.mxu0 0.0
    %1764 = vmatprep.subr.mxu0 0.0
    %1765 = vmatpush1.msra.mxu0 0.0
    %1766 = vmatprep.subr.mxu0 0.0
    %1767 = vmatpush1.msra.mxu0 0.0
    %1768 = vmatprep.subr.mxu0 0.0
    %1769 = vmatpush1.msra.mxu0 0.0
    %1770 = vmatprep.subr.mxu0 0.0
    %1771 = vmatpush1.msra.mxu0 0.0
    %1772 = vmatprep.subr.mxu0 0.0
    %1773 = vmatpush1.msra.mxu0 0.0
    %1774 = vmatprep.subr.mxu0 0.0
    %1775 = vmatpush1.msra.mxu0 0.0
    %1776 = vmatprep.subr.mxu0 0.0
    %1777 = vmatpush1.msra.mxu0 0.0
    %1778 = vmatprep.subr.mxu0 0.0
    %1779 = vmatpush1.msra.mxu0 0.0
    %1780 = vmatprep.subr.mxu0 0.0
    %1781 = vmatpush1.msra.mxu0 0.0
    %1782 = vmatprep.subr.mxu0 0.0
    %1783 = vmatpush1.msra.mxu0 0.0
    %1784 = vmatprep.subr.mxu0 0.0
    %1785 = vmatpush1.msra.mxu0 0.0
    %1786 = vmatprep.subr.mxu0 0.0
    %1787 = vmatpush1.msra.mxu0 0.0
    %1788 = vmatprep.subr.mxu0 0.0
    %1789 = vmatpush1.msra.mxu0 0.0
    %1790 = vmatprep.subr.mxu0 0.0
    %1791 = vmatpush1.msra.mxu0 0.0
    %1792 = vmatprep.subr.mxu0 0.0
    %1793 = vmatpush1.msra.mxu0 0.0
    %1794 = vmatprep.subr.mxu0 0.0
    %1795 = vmatpush1.msra.mxu0 0.0
    %1796 = vmatprep.subr.mxu0 0.0
    %1797 = vmatpush1.msra.mxu0 0.0
    %1798 = vmatprep.subr.mxu0 0.0
    %1799 = vmatpush1.msra.mxu0 0.0
    %1800 = vmatprep.subr.mxu0 0.0
    %1801 = vmatpush1.msra.mxu0 0.0
    %1802 = vmatprep.mubr.f32.mxu0 0.0
    %1803 = vmatmul.mubr.f32.gmra.mrb[0].mxu0 %v1736
    %v1804 = vpop.f32.mrb[0].mxu0
    %v1805 = vadd.f32 0.0, %v1804
    %v1806 = vpop.f32.mrb[0].mxu0
    %1807 = vdwg.mxu0
    %v1809 = vsel %vm342, %v1706, 0
    %1811 = vmatprep.subr.mxu0 0.0
    %1812 = vmatpush1.msra.mxu0 %v245
    %1813 = vmatprep.subr.mxu0 0.0
    %1814 = vmatpush1.msra.mxu0 0.0
    %1815 = vmatprep.subr.mxu0 0.0
    %1816 = vmatpush1.msra.mxu0 0.0
    %1817 = vmatprep.subr.mxu0 0.0
    %1818 = vmatpush1.msra.mxu0 0.0
    %1819 = vmatprep.subr.mxu0 0.0
    %1820 = vmatpush1.msra.mxu0 0.0
    %1821 = vmatprep.subr.mxu0 0.0
    %1822 = vmatpush1.msra.mxu0 0.0
    %1823 = vmatprep.subr.mxu0 0.0
    %1824 = vmatpush1.msra.mxu0 0.0
    %1825 = vmatprep.subr.mxu0 0.0
    %1826 = vmatpush1.msra.mxu0 0.0
    %1827 = vmatprep.subr.mxu0 0.0
    %1828 = vmatpush1.msra.mxu0 0.0
    %1829 = vmatprep.subr.mxu0 0.0
    %1830 = vmatpush1.msra.mxu0 0.0
    %1831 = vmatprep.subr.mxu0 0.0
    %1832 = vmatpush1.msra.mxu0 0.0
    %1833 = vmatprep.subr.mxu0 0.0
    %1834 = vmatpush1.msra.mxu0 0.0
    %1835 = vmatprep.subr.mxu0 0.0
    %1836 = vmatpush1.msra.mxu0 0.0
    %1837 = vmatprep.subr.mxu0 0.0
    %1838 = vmatpush1.msra.mxu0 0.0
    %1839 = vmatprep.subr.mxu0 0.0
    %1840 = vmatpush1.msra.mxu0 0.0
    %1841 = vmatprep.subr.mxu0 0.0
    %1842 = vmatpush1.msra.mxu0 0.0
    %1843 = vmatprep.subr.mxu0 0.0
    %1844 = vmatpush1.msra.mxu0 0.0
    %1845 = vmatprep.subr.mxu0 0.0
    %1846 = vmatpush1.msra.mxu0 0.0
    %1847 = vmatprep.subr.mxu0 0.0
    %1848 = vmatpush1.msra.mxu0 0.0
    %1849 = vmatprep.subr.mxu0 0.0
    %1850 = vmatpush1.msra.mxu0 0.0
    %1851 = vmatprep.subr.mxu0 0.0
    %1852 = vmatpush1.msra.mxu0 0.0
    %1853 = vmatprep.subr.mxu0 0.0
    %1854 = vmatpush1.msra.mxu0 0.0
    %1855 = vmatprep.subr.mxu0 0.0
    %1856 = vmatpush1.msra.mxu0 0.0
    %1857 = vmatprep.subr.mxu0 0.0
    %1858 = vmatpush1.msra.mxu0 0.0
    %1859 = vmatprep.subr.mxu0 0.0
    %1860 = vmatpush1.msra.mxu0 0.0
    %1861 = vmatprep.subr.mxu0 0.0
    %1862 = vmatpush1.msra.mxu0 0.0
    %1863 = vmatprep.subr.mxu0 0.0
    %1864 = vmatpush1.msra.mxu0 0.0
    %1865 = vmatprep.subr.mxu0 0.0
    %1866 = vmatpush1.msra.mxu0 0.0
    %1867 = vmatprep.subr.mxu0 0.0
    %1868 = vmatpush1.msra.mxu0 0.0
    %1869 = vmatprep.subr.mxu0 0.0
    %1870 = vmatpush1.msra.mxu0 0.0
    %1871 = vmatprep.subr.mxu0 0.0
    %1872 = vmatpush1.msra.mxu0 0.0
    %1873 = vmatprep.subr.mxu0 0.0
    %1874 = vmatpush1.msra.mxu0 0.0
    %1875 = vmatprep.mubr.f32.mxu0 0.0
    %1876 = vmatmul.mubr.f32.gmra.mrb[0].mxu0 %v1809
    %v1877 = vpop.f32.mrb[0].mxu0
    %v1878 = vadd.f32 0.0, %v1877
    %v1879 = vpop.f32.mrb[0].mxu0
    %1880 = vdwg.mxu0
    %v1882 = vsel %vm342, %v1708, 0
    %1884 = vmatprep.subr.mxu0 0.0
    %1885 = vmatpush1.msra.mxu0 %v250
    %1886 = vmatprep.subr.mxu0 0.0
    %1887 = vmatpush1.msra.mxu0 0.0
    %1888 = vmatprep.subr.mxu0 0.0
    %1889 = vmatpush1.msra.mxu0 0.0
    %1890 = vmatprep.subr.mxu0 0.0
    %1891 = vmatpush1.msra.mxu0 0.0
    %1892 = vmatprep.subr.mxu0 0.0
    %1893 = vmatpush1.msra.mxu0 0.0
    %1894 = vmatprep.subr.mxu0 0.0
    %1895 = vmatpush1.msra.mxu0 0.0
    %1896 = vmatprep.subr.mxu0 0.0
    %1897 = vmatpush1.msra.mxu0 0.0
    %1898 = vmatprep.subr.mxu0 0.0
    %1899 = vmatpush1.msra.mxu0 0.0
    %1900 = vmatprep.subr.mxu0 0.0
    %1901 = vmatpush1.msra.mxu0 0.0
    %1902 = vmatprep.subr.mxu0 0.0
    %1903 = vmatpush1.msra.mxu0 0.0
    %1904 = vmatprep.subr.mxu0 0.0
    %1905 = vmatpush1.msra.mxu0 0.0
    %1906 = vmatprep.subr.mxu0 0.0
    %1907 = vmatpush1.msra.mxu0 0.0
    %1908 = vmatprep.subr.mxu0 0.0
    %1909 = vmatpush1.msra.mxu0 0.0
    %1910 = vmatprep.subr.mxu0 0.0
    %1911 = vmatpush1.msra.mxu0 0.0
    %1912 = vmatprep.subr.mxu0 0.0
    %1913 = vmatpush1.msra.mxu0 0.0
    %1914 = vmatprep.subr.mxu0 0.0
    %1915 = vmatpush1.msra.mxu0 0.0
    %1916 = vmatprep.subr.mxu0 0.0
    %1917 = vmatpush1.msra.mxu0 0.0
    %1918 = vmatprep.subr.mxu0 0.0
    %1919 = vmatpush1.msra.mxu0 0.0
    %1920 = vmatprep.subr.mxu0 0.0
    %1921 = vmatpush1.msra.mxu0 0.0
    %1922 = vmatprep.subr.mxu0 0.0
    %1923 = vmatpush1.msra.mxu0 0.0
    %1924 = vmatprep.subr.mxu0 0.0
    %1925 = vmatpush1.msra.mxu0 0.0
    %1926 = vmatprep.subr.mxu0 0.0
    %1927 = vmatpush1.msra.mxu0 0.0
    %1928 = vmatprep.subr.mxu0 0.0
    %1929 = vmatpush1.msra.mxu0 0.0
    %1930 = vmatprep.subr.mxu0 0.0
    %1931 = vmatpush1.msra.mxu0 0.0
    %1932 = vmatprep.subr.mxu0 0.0
    %1933 = vmatpush1.msra.mxu0 0.0
    %1934 = vmatprep.subr.mxu0 0.0
    %1935 = vmatpush1.msra.mxu0 0.0
    %1936 = vmatprep.subr.mxu0 0.0
    %1937 = vmatpush1.msra.mxu0 0.0
    %1938 = vmatprep.subr.mxu0 0.0
    %1939 = vmatpush1.msra.mxu0 0.0
    %1940 = vmatprep.subr.mxu0 0.0
    %1941 = vmatpush1.msra.mxu0 0.0
    %1942 = vmatprep.subr.mxu0 0.0
    %1943 = vmatpush1.msra.mxu0 0.0
    %1944 = vmatprep.subr.mxu0 0.0
    %1945 = vmatpush1.msra.mxu0 0.0
    %1946 = vmatprep.subr.mxu0 0.0
    %1947 = vmatpush1.msra.mxu0 0.0
    %1948 = vmatprep.mubr.f32.mxu0 0.0
    %1949 = vmatmul.mubr.f32.gmra.mrb[0].mxu0 %v1882
    %v1950 = vpop.f32.mrb[0].mxu0
    %v1951 = vadd.f32 0.0, %v1950
    %v1952 = vpop.f32.mrb[0].mxu0
    %1953 = vdwg.mxu0
    %v1955 = vsel %vm342, %v1710, 0
    %1957 = vmatprep.subr.mxu0 0.0
    %1958 = vmatpush1.msra.mxu0 %v255
    %1959 = vmatprep.subr.mxu0 0.0
    %1960 = vmatpush1.msra.mxu0 0.0
    %1961 = vmatprep.subr.mxu0 0.0
    %1962 = vmatpush1.msra.mxu0 0.0
    %1963 = vmatprep.subr.mxu0 0.0
    %1964 = vmatpush1.msra.mxu0 0.0
    %1965 = vmatprep.subr.mxu0 0.0
    %1966 = vmatpush1.msra.mxu0 0.0
    %1967 = vmatprep.subr.mxu0 0.0
    %1968 = vmatpush1.msra.mxu0 0.0
    %1969 = vmatprep.subr.mxu0 0.0
    %1970 = vmatpush1.msra.mxu0 0.0
    %1971 = vmatprep.subr.mxu0 0.0
    %1972 = vmatpush1.msra.mxu0 0.0
    %1973 = vmatprep.subr.mxu0 0.0
    %1974 = vmatpush1.msra.mxu0 0.0
    %1975 = vmatprep.subr.mxu0 0.0
    %1976 = vmatpush1.msra.mxu0 0.0
    %1977 = vmatprep.subr.mxu0 0.0
    %1978 = vmatpush1.msra.mxu0 0.0
    %1979 = vmatprep.subr.mxu0 0.0
    %1980 = vmatpush1.msra.mxu0 0.0
    %1981 = vmatprep.subr.mxu0 0.0
    %1982 = vmatpush1.msra.mxu0 0.0
    %1983 = vmatprep.subr.mxu0 0.0
    %1984 = vmatpush1.msra.mxu0 0.0
    %1985 = vmatprep.subr.mxu0 0.0
    %1986 = vmatpush1.msra.mxu0 0.0
    %1987 = vmatprep.subr.mxu0 0.0
    %1988 = vmatpush1.msra.mxu0 0.0
    %1989 = vmatprep.subr.mxu0 0.0
    %1990 = vmatpush1.msra.mxu0 0.0
    %1991 = vmatprep.subr.mxu0 0.0
    %1992 = vmatpush1.msra.mxu0 0.0
    %1993 = vmatprep.subr.mxu0 0.0
    %1994 = vmatpush1.msra.mxu0 0.0
    %1995 = vmatprep.subr.mxu0 0.0
    %1996 = vmatpush1.msra.mxu0 0.0
    %1997 = vmatprep.subr.mxu0 0.0
    %1998 = vmatpush1.msra.mxu0 0.0
    %1999 = vmatprep.subr.mxu0 0.0
    %2000 = vmatpush1.msra.mxu0 0.0
    %2001 = vmatprep.subr.mxu0 0.0
    %2002 = vmatpush1.msra.mxu0 0.0
    %2003 = vmatprep.subr.mxu0 0.0
    %2004 = vmatpush1.msra.mxu0 0.0
    %2005 = vmatprep.subr.mxu0 0.0
    %2006 = vmatpush1.msra.mxu0 0.0
    %2007 = vmatprep.subr.mxu0 0.0
    %2008 = vmatpush1.msra.mxu0 0.0
    %2009 = vmatprep.subr.mxu0 0.0
    %2010 = vmatpush1.msra.mxu0 0.0
    %2011 = vmatprep.subr.mxu0 0.0
    %2012 = vmatpush1.msra.mxu0 0.0
    %2013 = vmatprep.subr.mxu0 0.0
    %2014 = vmatpush1.msra.mxu0 0.0
    %2015 = vmatprep.subr.mxu0 0.0
    %2016 = vmatpush1.msra.mxu0 0.0
    %2017 = vmatprep.subr.mxu0 0.0
    %2018 = vmatpush1.msra.mxu0 0.0
    %2019 = vmatprep.subr.mxu0 0.0
    %2020 = vmatpush1.msra.mxu0 0.0
    %2021 = vmatprep.mubr.f32.mxu0 0.0
    %2022 = vmatmul.mubr.f32.gmra.mrb[0].mxu0 %v1955
    %v2023 = vpop.f32.mrb[0].mxu0
    %v2024 = vadd.f32 0.0, %v2023
    %v2025 = vpop.f32.mrb[0].mxu0
    %2026 = vdwg.mxu0
    %v2028 = vsel %vm342, %v1712, 0
    %2030 = vmatprep.subr.mxu0 0.0
    %2031 = vmatpush1.msra.mxu0 %v291
    %2032 = vmatprep.subr.mxu0 0.0
    %2033 = vmatpush1.msra.mxu0 0.0
    %2034 = vmatprep.subr.mxu0 0.0
    %2035 = vmatpush1.msra.mxu0 0.0
    %2036 = vmatprep.subr.mxu0 0.0
    %2037 = vmatpush1.msra.mxu0 0.0
    %2038 = vmatprep.subr.mxu0 0.0
    %2039 = vmatpush1.msra.mxu0 0.0
    %2040 = vmatprep.subr.mxu0 0.0
    %2041 = vmatpush1.msra.mxu0 0.0
    %2042 = vmatprep.subr.mxu0 0.0
    %2043 = vmatpush1.msra.mxu0 0.0
    %2044 = vmatprep.subr.mxu0 0.0
    %2045 = vmatpush1.msra.mxu0 0.0
    %2046 = vmatprep.subr.mxu0 0.0
    %2047 = vmatpush1.msra.mxu0 0.0
    %2048 = vmatprep.subr.mxu0 0.0
    %2049 = vmatpush1.msra.mxu0 0.0
    %2050 = vmatprep.subr.mxu0 0.0
    %2051 = vmatpush1.msra.mxu0 0.0
    %2052 = vmatprep.subr.mxu0 0.0
    %2053 = vmatpush1.msra.mxu0 0.0
    %2054 = vmatprep.subr.mxu0 0.0
    %2055 = vmatpush1.msra.mxu0 0.0
    %2056 = vmatprep.subr.mxu0 0.0
    %2057 = vmatpush1.msra.mxu0 0.0
    %2058 = vmatprep.subr.mxu0 0.0
    %2059 = vmatpush1.msra.mxu0 0.0
    %2060 = vmatprep.subr.mxu0 0.0
    %2061 = vmatpush1.msra.mxu0 0.0
    %2062 = vmatprep.subr.mxu0 0.0
    %2063 = vmatpush1.msra.mxu0 0.0
    %2064 = vmatprep.subr.mxu0 0.0
    %2065 = vmatpush1.msra.mxu0 0.0
    %2066 = vmatprep.subr.mxu0 0.0
    %2067 = vmatpush1.msra.mxu0 0.0
    %2068 = vmatprep.subr.mxu0 0.0
    %2069 = vmatpush1.msra.mxu0 0.0
    %2070 = vmatprep.subr.mxu0 0.0
    %2071 = vmatpush1.msra.mxu0 0.0
    %2072 = vmatprep.subr.mxu0 0.0
    %2073 = vmatpush1.msra.mxu0 0.0
    %2074 = vmatprep.subr.mxu0 0.0
    %2075 = vmatpush1.msra.mxu0 0.0
    %2076 = vmatprep.subr.mxu0 0.0
    %2077 = vmatpush1.msra.mxu0 0.0
    %2078 = vmatprep.subr.mxu0 0.0
    %2079 = vmatpush1.msra.mxu0 0.0
    %2080 = vmatprep.subr.mxu0 0.0
    %2081 = vmatpush1.msra.mxu0 0.0
    %2082 = vmatprep.subr.mxu0 0.0
    %2083 = vmatpush1.msra.mxu0 0.0
    %2084 = vmatprep.subr.mxu0 0.0
    %2085 = vmatpush1.msra.mxu0 0.0
    %2086 = vmatprep.subr.mxu0 0.0
    %2087 = vmatpush1.msra.mxu0 0.0
    %2088 = vmatprep.subr.mxu0 0.0
    %2089 = vmatpush1.msra.mxu0 0.0
    %2090 = vmatprep.subr.mxu0 0.0
    %2091 = vmatpush1.msra.mxu0 0.0
    %2092 = vmatprep.subr.mxu0 0.0
    %2093 = vmatpush1.msra.mxu0 0.0
    %2094 = vmatprep.mubr.f32.mxu0 0.0
    %2095 = vmatmul.mubr.f32.gmra.mrb[0].mxu0 %v2028
    %v2096 = vpop.f32.mrb[0].mxu0
    %v2097 = vadd.f32 0.0, %v2096
    %v2098 = vpop.f32.mrb[0].mxu0
    %2099 = vdwg.mxu0
    %v2101 = vsel %vm342, %v1714, 0
    %2103 = vmatprep.subr.mxu0 0.0
    %2104 = vmatpush1.msra.mxu0 %v293
    %2105 = vmatprep.subr.mxu0 0.0
    %2106 = vmatpush1.msra.mxu0 0.0
    %2107 = vmatprep.subr.mxu0 0.0
    %2108 = vmatpush1.msra.mxu0 0.0
    %2109 = vmatprep.subr.mxu0 0.0
    %2110 = vmatpush1.msra.mxu0 0.0
    %2111 = vmatprep.subr.mxu0 0.0
    %2112 = vmatpush1.msra.mxu0 0.0
    %2113 = vmatprep.subr.mxu0 0.0
    %2114 = vmatpush1.msra.mxu0 0.0
    %2115 = vmatprep.subr.mxu0 0.0
    %2116 = vmatpush1.msra.mxu0 0.0
    %2117 = vmatprep.subr.mxu0 0.0
    %2118 = vmatpush1.msra.mxu0 0.0
    %2119 = vmatprep.subr.mxu0 0.0
    %2120 = vmatpush1.msra.mxu0 0.0
    %2121 = vmatprep.subr.mxu0 0.0
    %2122 = vmatpush1.msra.mxu0 0.0
    %2123 = vmatprep.subr.mxu0 0.0
    %2124 = vmatpush1.msra.mxu0 0.0
    %2125 = vmatprep.subr.mxu0 0.0
    %2126 = vmatpush1.msra.mxu0 0.0
    %2127 = vmatprep.subr.mxu0 0.0
    %2128 = vmatpush1.msra.mxu0 0.0
    %2129 = vmatprep.subr.mxu0 0.0
    %2130 = vmatpush1.msra.mxu0 0.0
    %2131 = vmatprep.subr.mxu0 0.0
    %2132 = vmatpush1.msra.mxu0 0.0
    %2133 = vmatprep.subr.mxu0 0.0
    %2134 = vmatpush1.msra.mxu0 0.0
    %2135 = vmatprep.subr.mxu0 0.0
    %2136 = vmatpush1.msra.mxu0 0.0
    %2137 = vmatprep.subr.mxu0 0.0
    %2138 = vmatpush1.msra.mxu0 0.0
    %2139 = vmatprep.subr.mxu0 0.0
    %2140 = vmatpush1.msra.mxu0 0.0
    %2141 = vmatprep.subr.mxu0 0.0
    %2142 = vmatpush1.msra.mxu0 0.0
    %2143 = vmatprep.subr.mxu0 0.0
    %2144 = vmatpush1.msra.mxu0 0.0
    %2145 = vmatprep.subr.mxu0 0.0
    %2146 = vmatpush1.msra.mxu0 0.0
    %2147 = vmatprep.subr.mxu0 0.0
    %2148 = vmatpush1.msra.mxu0 0.0
    %2149 = vmatprep.subr.mxu0 0.0
    %2150 = vmatpush1.msra.mxu0 0.0
    %2151 = vmatprep.subr.mxu0 0.0
    %2152 = vmatpush1.msra.mxu0 0.0
    %2153 = vmatprep.subr.mxu0 0.0
    %2154 = vmatpush1.msra.mxu0 0.0
    %2155 = vmatprep.subr.mxu0 0.0
    %2156 = vmatpush1.msra.mxu0 0.0
    %2157 = vmatprep.subr.mxu0 0.0
    %2158 = vmatpush1.msra.mxu0 0.0
    %2159 = vmatprep.subr.mxu0 0.0
    %2160 = vmatpush1.msra.mxu0 0.0
    %2161 = vmatprep.subr.mxu0 0.0
    %2162 = vmatpush1.msra.mxu0 0.0
    %2163 = vmatprep.subr.mxu0 0.0
    %2164 = vmatpush1.msra.mxu0 0.0
    %2165 = vmatprep.subr.mxu0 0.0
    %2166 = vmatpush1.msra.mxu0 0.0
    %2167 = vmatprep.mubr.f32.mxu0 0.0
    %2168 = vmatmul.mubr.f32.gmra.mrb[0].mxu0 %v2101
    %v2169 = vpop.f32.mrb[0].mxu0
    %v2170 = vadd.f32 0.0, %v2169
    %v2171 = vpop.f32.mrb[0].mxu0
    %2172 = vdwg.mxu0
    %v2174 = vsel %vm342, %v1716, 0
    %2176 = vmatprep.subr.mxu0 0.0
    %2177 = vmatpush1.msra.mxu0 %v295
    %2178 = vmatprep.subr.mxu0 0.0
    %2179 = vmatpush1.msra.mxu0 0.0
    %2180 = vmatprep.subr.mxu0 0.0
    %2181 = vmatpush1.msra.mxu0 0.0
    %2182 = vmatprep.subr.mxu0 0.0
    %2183 = vmatpush1.msra.mxu0 0.0
    %2184 = vmatprep.subr.mxu0 0.0
    %2185 = vmatpush1.msra.mxu0 0.0
    %2186 = vmatprep.subr.mxu0 0.0
    %2187 = vmatpush1.msra.mxu0 0.0
    %2188 = vmatprep.subr.mxu0 0.0
    %2189 = vmatpush1.msra.mxu0 0.0
    %2190 = vmatprep.subr.mxu0 0.0
    %2191 = vmatpush1.msra.mxu0 0.0
    %2192 = vmatprep.subr.mxu0 0.0
    %2193 = vmatpush1.msra.mxu0 0.0
    %2194 = vmatprep.subr.mxu0 0.0
    %2195 = vmatpush1.msra.mxu0 0.0
    %2196 = vmatprep.subr.mxu0 0.0
    %2197 = vmatpush1.msra.mxu0 0.0
    %2198 = vmatprep.subr.mxu0 0.0
    %2199 = vmatpush1.msra.mxu0 0.0
    %2200 = vmatprep.subr.mxu0 0.0
    %2201 = vmatpush1.msra.mxu0 0.0
    %2202 = vmatprep.subr.mxu0 0.0
    %2203 = vmatpush1.msra.mxu0 0.0
    %2204 = vmatprep.subr.mxu0 0.0
    %2205 = vmatpush1.msra.mxu0 0.0
    %2206 = vmatprep.subr.mxu0 0.0
    %2207 = vmatpush1.msra.mxu0 0.0
    %2208 = vmatprep.subr.mxu0 0.0
    %2209 = vmatpush1.msra.mxu0 0.0
    %2210 = vmatprep.subr.mxu0 0.0
    %2211 = vmatpush1.msra.mxu0 0.0
    %2212 = vmatprep.subr.mxu0 0.0
    %2213 = vmatpush1.msra.mxu0 0.0
    %2214 = vmatprep.subr.mxu0 0.0
    %2215 = vmatpush1.msra.mxu0 0.0
    %2216 = vmatprep.subr.mxu0 0.0
    %2217 = vmatpush1.msra.mxu0 0.0
    %2218 = vmatprep.subr.mxu0 0.0
    %2219 = vmatpush1.msra.mxu0 0.0
    %2220 = vmatprep.subr.mxu0 0.0
    %2221 = vmatpush1.msra.mxu0 0.0
    %2222 = vmatprep.subr.mxu0 0.0
    %2223 = vmatpush1.msra.mxu0 0.0
    %2224 = vmatprep.subr.mxu0 0.0
    %2225 = vmatpush1.msra.mxu0 0.0
    %2226 = vmatprep.subr.mxu0 0.0
    %2227 = vmatpush1.msra.mxu0 0.0
    %2228 = vmatprep.subr.mxu0 0.0
    %2229 = vmatpush1.msra.mxu0 0.0
    %2230 = vmatprep.subr.mxu0 0.0
    %2231 = vmatpush1.msra.mxu0 0.0
    %2232 = vmatprep.subr.mxu0 0.0
    %2233 = vmatpush1.msra.mxu0 0.0
    %2234 = vmatprep.subr.mxu0 0.0
    %2235 = vmatpush1.msra.mxu0 0.0
    %2236 = vmatprep.subr.mxu0 0.0
    %2237 = vmatpush1.msra.mxu0 0.0
    %2238 = vmatprep.subr.mxu0 0.0
    %2239 = vmatpush1.msra.mxu0 0.0
    %2240 = vmatprep.mubr.f32.mxu0 0.0
    %2241 = vmatmul.mubr.f32.gmra.mrb[0].mxu0 %v2174
    %v2242 = vpop.f32.mrb[0].mxu0
    %v2243 = vadd.f32 0.0, %v2242
    %v2244 = vpop.f32.mrb[0].mxu0
    %2245 = vdwg.mxu0
    %v2247 = vsel %vm342, %v1718, 0
    %2249 = vmatprep.subr.mxu0 0.0
    %2250 = vmatpush1.msra.mxu0 %v297
    %2251 = vmatprep.subr.mxu0 0.0
    %2252 = vmatpush1.msra.mxu0 0.0
    %2253 = vmatprep.subr.mxu0 0.0
    %2254 = vmatpush1.msra.mxu0 0.0
    %2255 = vmatprep.subr.mxu0 0.0
    %2256 = vmatpush1.msra.mxu0 0.0
    %2257 = vmatprep.subr.mxu0 0.0
    %2258 = vmatpush1.msra.mxu0 0.0
    %2259 = vmatprep.subr.mxu0 0.0
    %2260 = vmatpush1.msra.mxu0 0.0
    %2261 = vmatprep.subr.mxu0 0.0
    %2262 = vmatpush1.msra.mxu0 0.0
    %2263 = vmatprep.subr.mxu0 0.0
    %2264 = vmatpush1.msra.mxu0 0.0
    %2265 = vmatprep.subr.mxu0 0.0
    %2266 = vmatpush1.msra.mxu0 0.0
    %2267 = vmatprep.subr.mxu0 0.0
    %2268 = vmatpush1.msra.mxu0 0.0
    %2269 = vmatprep.subr.mxu0 0.0
    %2270 = vmatpush1.msra.mxu0 0.0
    %2271 = vmatprep.subr.mxu0 0.0
    %2272 = vmatpush1.msra.mxu0 0.0
    %2273 = vmatprep.subr.mxu0 0.0
    %2274 = vmatpush1.msra.mxu0 0.0
    %2275 = vmatprep.subr.mxu0 0.0
    %2276 = vmatpush1.msra.mxu0 0.0
    %2277 = vmatprep.subr.mxu0 0.0
    %2278 = vmatpush1.msra.mxu0 0.0
    %2279 = vmatprep.subr.mxu0 0.0
    %2280 = vmatpush1.msra.mxu0 0.0
    %2281 = vmatprep.subr.mxu0 0.0
    %2282 = vmatpush1.msra.mxu0 0.0
    %2283 = vmatprep.subr.mxu0 0.0
    %2284 = vmatpush1.msra.mxu0 0.0
    %2285 = vmatprep.subr.mxu0 0.0
    %2286 = vmatpush1.msra.mxu0 0.0
    %2287 = vmatprep.subr.mxu0 0.0
    %2288 = vmatpush1.msra.mxu0 0.0
    %2289 = vmatprep.subr.mxu0 0.0
    %2290 = vmatpush1.msra.mxu0 0.0
    %2291 = vmatprep.subr.mxu0 0.0
    %2292 = vmatpush1.msra.mxu0 0.0
    %2293 = vmatprep.subr.mxu0 0.0
    %2294 = vmatpush1.msra.mxu0 0.0
    %2295 = vmatprep.subr.mxu0 0.0
    %2296 = vmatpush1.msra.mxu0 0.0
    %2297 = vmatprep.subr.mxu0 0.0
    %2298 = vmatpush1.msra.mxu0 0.0
    %2299 = vmatprep.subr.mxu0 0.0
    %2300 = vmatpush1.msra.mxu0 0.0
    %2301 = vmatprep.subr.mxu0 0.0
    %2302 = vmatpush1.msra.mxu0 0.0
    %2303 = vmatprep.subr.mxu0 0.0
    %2304 = vmatpush1.msra.mxu0 0.0
    %2305 = vmatprep.subr.mxu0 0.0
    %2306 = vmatpush1.msra.mxu0 0.0
    %2307 = vmatprep.subr.mxu0 0.0
    %2308 = vmatpush1.msra.mxu0 0.0
    %2309 = vmatprep.subr.mxu0 0.0
    %2310 = vmatpush1.msra.mxu0 0.0
    %2311 = vmatprep.subr.mxu0 0.0
    %2312 = vmatpush1.msra.mxu0 0.0
    %2313 = vmatprep.mubr.f32.mxu0 0.0
    %2314 = vmatmul.mubr.f32.gmra.mrb[0].mxu0 %v2247
    %v2315 = vpop.f32.mrb[0].mxu0
    %v2316 = vadd.f32 0.0, %v2315
    %v2317 = vpop.f32.mrb[0].mxu0
    %2318 = vdwg.mxu0
    %v2320 = vsel %vm342, %v1720, 0
    %2322 = vmatprep.subr.mxu0 0.0
    %2323 = vmatpush1.msra.mxu0 %v303
    %2324 = vmatprep.subr.mxu0 0.0
    %2325 = vmatpush1.msra.mxu0 0.0
    %2326 = vmatprep.subr.mxu0 0.0
    %2327 = vmatpush1.msra.mxu0 0.0
    %2328 = vmatprep.subr.mxu0 0.0
    %2329 = vmatpush1.msra.mxu0 0.0
    %2330 = vmatprep.subr.mxu0 0.0
    %2331 = vmatpush1.msra.mxu0 0.0
    %2332 = vmatprep.subr.mxu0 0.0
    %2333 = vmatpush1.msra.mxu0 0.0
    %2334 = vmatprep.subr.mxu0 0.0
    %2335 = vmatpush1.msra.mxu0 0.0
    %2336 = vmatprep.subr.mxu0 0.0
    %2337 = vmatpush1.msra.mxu0 0.0
    %2338 = vmatprep.subr.mxu0 0.0
    %2339 = vmatpush1.msra.mxu0 0.0
    %2340 = vmatprep.subr.mxu0 0.0
    %2341 = vmatpush1.msra.mxu0 0.0
    %2342 = vmatprep.subr.mxu0 0.0
    %2343 = vmatpush1.msra.mxu0 0.0
    %2344 = vmatprep.subr.mxu0 0.0
    %2345 = vmatpush1.msra.mxu0 0.0
    %2346 = vmatprep.subr.mxu0 0.0
    %2347 = vmatpush1.msra.mxu0 0.0
    %2348 = vmatprep.subr.mxu0 0.0
    %2349 = vmatpush1.msra.mxu0 0.0
    %2350 = vmatprep.subr.mxu0 0.0
    %2351 = vmatpush1.msra.mxu0 0.0
    %2352 = vmatprep.subr.mxu0 0.0
    %2353 = vmatpush1.msra.mxu0 0.0
    %2354 = vmatprep.subr.mxu0 0.0
    %2355 = vmatpush1.msra.mxu0 0.0
    %2356 = vmatprep.subr.mxu0 0.0
    %2357 = vmatpush1.msra.mxu0 0.0
    %2358 = vmatprep.subr.mxu0 0.0
    %2359 = vmatpush1.msra.mxu0 0.0
    %2360 = vmatprep.subr.mxu0 0.0
    %2361 = vmatpush1.msra.mxu0 0.0
    %2362 = vmatprep.subr.mxu0 0.0
    %2363 = vmatpush1.msra.mxu0 0.0
    %2364 = vmatprep.subr.mxu0 0.0
    %2365 = vmatpush1.msra.mxu0 0.0
    %2366 = vmatprep.subr.mxu0 0.0
    %2367 = vmatpush1.msra.mxu0 0.0
    %2368 = vmatprep.subr.mxu0 0.0
    %2369 = vmatpush1.msra.mxu0 0.0
    %2370 = vmatprep.subr.mxu0 0.0
    %2371 = vmatpush1.msra.mxu0 0.0
    %2372 = vmatprep.subr.mxu0 0.0
    %2373 = vmatpush1.msra.mxu0 0.0
    %2374 = vmatprep.subr.mxu0 0.0
    %2375 = vmatpush1.msra.mxu0 0.0
    %2376 = vmatprep.subr.mxu0 0.0
    %2377 = vmatpush1.msra.mxu0 0.0
    %2378 = vmatprep.subr.mxu0 0.0
    %2379 = vmatpush1.msra.mxu0 0.0
    %2380 = vmatprep.subr.mxu0 0.0
    %2381 = vmatpush1.msra.mxu0 0.0
    %2382 = vmatprep.subr.mxu0 0.0
    %2383 = vmatpush1.msra.mxu0 0.0
    %2384 = vmatprep.subr.mxu0 0.0
    %2385 = vmatpush1.msra.mxu0 0.0
    %2386 = vmatprep.mubr.f32.mxu0 0.0
    %2387 = vmatmul.mubr.f32.gmra.mrb[0].mxu0 %v2320
    %v2388 = vpop.f32.mrb[0].mxu0
    %v2389 = vadd.f32 0.0, %v2388
    %v2390 = vpop.f32.mrb[0].mxu0
    %2391 = vdwg.mxu0
    %v2393 = vsel %vm342, %v1722, 0
    %2395 = vmatprep.subr.mxu0 0.0
    %2396 = vmatpush1.msra.mxu0 %v305
    %2397 = vmatprep.subr.mxu0 0.0
    %2398 = vmatpush1.msra.mxu0 0.0
    %2399 = vmatprep.subr.mxu0 0.0
    %2400 = vmatpush1.msra.mxu0 0.0
    %2401 = vmatprep.subr.mxu0 0.0
    %2402 = vmatpush1.msra.mxu0 0.0
    %2403 = vmatprep.subr.mxu0 0.0
    %2404 = vmatpush1.msra.mxu0 0.0
    %2405 = vmatprep.subr.mxu0 0.0
    %2406 = vmatpush1.msra.mxu0 0.0
    %2407 = vmatprep.subr.mxu0 0.0
    %2408 = vmatpush1.msra.mxu0 0.0
    %2409 = vmatprep.subr.mxu0 0.0
    %2410 = vmatpush1.msra.mxu0 0.0
    %2411 = vmatprep.subr.mxu0 0.0
    %2412 = vmatpush1.msra.mxu0 0.0
    %2413 = vmatprep.subr.mxu0 0.0
    %2414 = vmatpush1.msra.mxu0 0.0
    %2415 = vmatprep.subr.mxu0 0.0
    %2416 = vmatpush1.msra.mxu0 0.0
    %2417 = vmatprep.subr.mxu0 0.0
    %2418 = vmatpush1.msra.mxu0 0.0
    %2419 = vmatprep.subr.mxu0 0.0
    %2420 = vmatpush1.msra.mxu0 0.0
    %2421 = vmatprep.subr.mxu0 0.0
    %2422 = vmatpush1.msra.mxu0 0.0
    %2423 = vmatprep.subr.mxu0 0.0
    %2424 = vmatpush1.msra.mxu0 0.0
    %2425 = vmatprep.subr.mxu0 0.0
    %2426 = vmatpush1.msra.mxu0 0.0
    %2427 = vmatprep.subr.mxu0 0.0
    %2428 = vmatpush1.msra.mxu0 0.0
    %2429 = vmatprep.subr.mxu0 0.0
    %2430 = vmatpush1.msra.mxu0 0.0
    %2431 = vmatprep.subr.mxu0 0.0
    %2432 = vmatpush1.msra.mxu0 0.0
    %2433 = vmatprep.subr.mxu0 0.0
    %2434 = vmatpush1.msra.mxu0 0.0
    %2435 = vmatprep.subr.mxu0 0.0
    %2436 = vmatpush1.msra.mxu0 0.0
    %2437 = vmatprep.subr.mxu0 0.0
    %2438 = vmatpush1.msra.mxu0 0.0
    %2439 = vmatprep.subr.mxu0 0.0
    %2440 = vmatpush1.msra.mxu0 0.0
    %2441 = vmatprep.subr.mxu0 0.0
    %2442 = vmatpush1.msra.mxu0 0.0
    %2443 = vmatprep.subr.mxu0 0.0
    %2444 = vmatpush1.msra.mxu0 0.0
    %2445 = vmatprep.subr.mxu0 0.0
    %2446 = vmatpush1.msra.mxu0 0.0
    %2447 = vmatprep.subr.mxu0 0.0
    %2448 = vmatpush1.msra.mxu0 0.0
    %2449 = vmatprep.subr.mxu0 0.0
    %2450 = vmatpush1.msra.mxu0 0.0
    %2451 = vmatprep.subr.mxu0 0.0
    %2452 = vmatpush1.msra.mxu0 0.0
    %2453 = vmatprep.subr.mxu0 0.0
    %2454 = vmatpush1.msra.mxu0 0.0
    %2455 = vmatprep.subr.mxu0 0.0
    %2456 = vmatpush1.msra.mxu0 0.0
    %2457 = vmatprep.subr.mxu0 0.0
    %2458 = vmatpush1.msra.mxu0 0.0
    %2459 = vmatprep.mubr.f32.mxu0 0.0
    %2460 = vmatmul.mubr.f32.gmra.mrb[0].mxu0 %v2393
    %v2461 = vpop.f32.mrb[0].mxu0
    %v2462 = vadd.f32 0.0, %v2461
    %v2463 = vpop.f32.mrb[0].mxu0
    %2464 = vdwg.mxu0
    %v2466 = vsel %vm342, %v1724, 0
    %2468 = vmatprep.subr.mxu0 0.0
    %2469 = vmatpush1.msra.mxu0 %v307
    %2470 = vmatprep.subr.mxu0 0.0
    %2471 = vmatpush1.msra.mxu0 0.0
    %2472 = vmatprep.subr.mxu0 0.0
    %2473 = vmatpush1.msra.mxu0 0.0
    %2474 = vmatprep.subr.mxu0 0.0
    %2475 = vmatpush1.msra.mxu0 0.0
    %2476 = vmatprep.subr.mxu0 0.0
    %2477 = vmatpush1.msra.mxu0 0.0
    %2478 = vmatprep.subr.mxu0 0.0
    %2479 = vmatpush1.msra.mxu0 0.0
    %2480 = vmatprep.subr.mxu0 0.0
    %2481 = vmatpush1.msra.mxu0 0.0
    %2482 = vmatprep.subr.mxu0 0.0
    %2483 = vmatpush1.msra.mxu0 0.0
    %2484 = vmatprep.subr.mxu0 0.0
    %2485 = vmatpush1.msra.mxu0 0.0
    %2486 = vmatprep.subr.mxu0 0.0
    %2487 = vmatpush1.msra.mxu0 0.0
    %2488 = vmatprep.subr.mxu0 0.0
    %2489 = vmatpush1.msra.mxu0 0.0
    %2490 = vmatprep.subr.mxu0 0.0
    %2491 = vmatpush1.msra.mxu0 0.0
    %2492 = vmatprep.subr.mxu0 0.0
    %2493 = vmatpush1.msra.mxu0 0.0
    %2494 = vmatprep.subr.mxu0 0.0
    %2495 = vmatpush1.msra.mxu0 0.0
    %2496 = vmatprep.subr.mxu0 0.0
    %2497 = vmatpush1.msra.mxu0 0.0
    %2498 = vmatprep.subr.mxu0 0.0
    %2499 = vmatpush1.msra.mxu0 0.0
    %2500 = vmatprep.subr.mxu0 0.0
    %2501 = vmatpush1.msra.mxu0 0.0
    %2502 = vmatprep.subr.mxu0 0.0
    %2503 = vmatpush1.msra.mxu0 0.0
    %2504 = vmatprep.subr.mxu0 0.0
    %2505 = vmatpush1.msra.mxu0 0.0
    %2506 = vmatprep.subr.mxu0 0.0
    %2507 = vmatpush1.msra.mxu0 0.0
    %2508 = vmatprep.subr.mxu0 0.0
    %2509 = vmatpush1.msra.mxu0 0.0
    %2510 = vmatprep.subr.mxu0 0.0
    %2511 = vmatpush1.msra.mxu0 0.0
    %2512 = vmatprep.subr.mxu0 0.0
    %2513 = vmatpush1.msra.mxu0 0.0
    %2514 = vmatprep.subr.mxu0 0.0
    %2515 = vmatpush1.msra.mxu0 0.0
    %2516 = vmatprep.subr.mxu0 0.0
    %2517 = vmatpush1.msra.mxu0 0.0
    %2518 = vmatprep.subr.mxu0 0.0
    %2519 = vmatpush1.msra.mxu0 0.0
    %2520 = vmatprep.subr.mxu0 0.0
    %2521 = vmatpush1.msra.mxu0 0.0
    %2522 = vmatprep.subr.mxu0 0.0
    %2523 = vmatpush1.msra.mxu0 0.0
    %2524 = vmatprep.subr.mxu0 0.0
    %2525 = vmatpush1.msra.mxu0 0.0
    %2526 = vmatprep.subr.mxu0 0.0
    %2527 = vmatpush1.msra.mxu0 0.0
    %2528 = vmatprep.subr.mxu0 0.0
    %2529 = vmatpush1.msra.mxu0 0.0
    %2530 = vmatprep.subr.mxu0 0.0
    %2531 = vmatpush1.msra.mxu0 0.0
    %2532 = vmatprep.mubr.f32.mxu0 0.0
    %2533 = vmatmul.mubr.f32.gmra.mrb[0].mxu0 %v2466
    %v2534 = vpop.f32.mrb[0].mxu0
    %v2535 = vadd.f32 0.0, %v2534
    %v2536 = vpop.f32.mrb[0].mxu0
    %2537 = vdwg.mxu0
    %v2539 = vsel %vm342, %v1726, 0
    %2541 = vmatprep.subr.mxu0 0.0
    %2542 = vmatpush1.msra.mxu0 %v309
    %2543 = vmatprep.subr.mxu0 0.0
    %2544 = vmatpush1.msra.mxu0 0.0
    %2545 = vmatprep.subr.mxu0 0.0
    %2546 = vmatpush1.msra.mxu0 0.0
    %2547 = vmatprep.subr.mxu0 0.0
    %2548 = vmatpush1.msra.mxu0 0.0
    %2549 = vmatprep.subr.mxu0 0.0
    %2550 = vmatpush1.msra.mxu0 0.0
    %2551 = vmatprep.subr.mxu0 0.0
    %2552 = vmatpush1.msra.mxu0 0.0
    %2553 = vmatprep.subr.mxu0 0.0
    %2554 = vmatpush1.msra.mxu0 0.0
    %2555 = vmatprep.subr.mxu0 0.0
    %2556 = vmatpush1.msra.mxu0 0.0
    %2557 = vmatprep.subr.mxu0 0.0
    %2558 = vmatpush1.msra.mxu0 0.0
    %2559 = vmatprep.subr.mxu0 0.0
    %2560 = vmatpush1.msra.mxu0 0.0
    %2561 = vmatprep.subr.mxu0 0.0
    %2562 = vmatpush1.msra.mxu0 0.0
    %2563 = vmatprep.subr.mxu0 0.0
    %2564 = vmatpush1.msra.mxu0 0.0
    %2565 = vmatprep.subr.mxu0 0.0
    %2566 = vmatpush1.msra.mxu0 0.0
    %2567 = vmatprep.subr.mxu0 0.0
    %2568 = vmatpush1.msra.mxu0 0.0
    %2569 = vmatprep.subr.mxu0 0.0
    %2570 = vmatpush1.msra.mxu0 0.0
    %2571 = vmatprep.subr.mxu0 0.0
    %2572 = vmatpush1.msra.mxu0 0.0
    %2573 = vmatprep.subr.mxu0 0.0
    %2574 = vmatpush1.msra.mxu0 0.0
    %2575 = vmatprep.subr.mxu0 0.0
    %2576 = vmatpush1.msra.mxu0 0.0
    %2577 = vmatprep.subr.mxu0 0.0
    %2578 = vmatpush1.msra.mxu0 0.0
    %2579 = vmatprep.subr.mxu0 0.0
    %2580 = vmatpush1.msra.mxu0 0.0
    %2581 = vmatprep.subr.mxu0 0.0
    %2582 = vmatpush1.msra.mxu0 0.0
    %2583 = vmatprep.subr.mxu0 0.0
    %2584 = vmatpush1.msra.mxu0 0.0
    %2585 = vmatprep.subr.mxu0 0.0
    %2586 = vmatpush1.msra.mxu0 0.0
    %2587 = vmatprep.subr.mxu0 0.0
    %2588 = vmatpush1.msra.mxu0 0.0
    %2589 = vmatprep.subr.mxu0 0.0
    %2590 = vmatpush1.msra.mxu0 0.0
    %2591 = vmatprep.subr.mxu0 0.0
    %2592 = vmatpush1.msra.mxu0 0.0
    %2593 = vmatprep.subr.mxu0 0.0
    %2594 = vmatpush1.msra.mxu0 0.0
    %2595 = vmatprep.subr.mxu0 0.0
    %2596 = vmatpush1.msra.mxu0 0.0
    %2597 = vmatprep.subr.mxu0 0.0
    %2598 = vmatpush1.msra.mxu0 0.0
    %2599 = vmatprep.subr.mxu0 0.0
    %2600 = vmatpush1.msra.mxu0 0.0
    %2601 = vmatprep.subr.mxu0 0.0
    %2602 = vmatpush1.msra.mxu0 0.0
    %2603 = vmatprep.subr.mxu0 0.0
    %2604 = vmatpush1.msra.mxu0 0.0
    %2605 = vmatprep.mubr.f32.mxu0 0.0
    %2606 = vmatmul.mubr.f32.gmra.mrb[0].mxu0 %v2539
    %v2607 = vpop.f32.mrb[0].mxu0
    %v2608 = vadd.f32 0.0, %v2607
    %v2609 = vpop.f32.mrb[0].mxu0
    %2610 = vdwg.mxu0
    %v2612 = vsel %vm342, %v1728, 0
    %2614 = vmatprep.subr.mxu0 0.0
    %2615 = vmatpush1.msra.mxu0 %v315
    %2616 = vmatprep.subr.mxu0 0.0
    %2617 = vmatpush1.msra.mxu0 0.0
    %2618 = vmatprep.subr.mxu0 0.0
    %2619 = vmatpush1.msra.mxu0 0.0
    %2620 = vmatprep.subr.mxu0 0.0
    %2621 = vmatpush1.msra.mxu0 0.0
    %2622 = vmatprep.subr.mxu0 0.0
    %2623 = vmatpush1.msra.mxu0 0.0
    %2624 = vmatprep.subr.mxu0 0.0
    %2625 = vmatpush1.msra.mxu0 0.0
    %2626 = vmatprep.subr.mxu0 0.0
    %2627 = vmatpush1.msra.mxu0 0.0
    %2628 = vmatprep.subr.mxu0 0.0
    %2629 = vmatpush1.msra.mxu0 0.0
    %2630 = vmatprep.subr.mxu0 0.0
    %2631 = vmatpush1.msra.mxu0 0.0
    %2632 = vmatprep.subr.mxu0 0.0
    %2633 = vmatpush1.msra.mxu0 0.0
    %2634 = vmatprep.subr.mxu0 0.0
    %2635 = vmatpush1.msra.mxu0 0.0
    %2636 = vmatprep.subr.mxu0 0.0
    %2637 = vmatpush1.msra.mxu0 0.0
    %2638 = vmatprep.subr.mxu0 0.0
    %2639 = vmatpush1.msra.mxu0 0.0
    %2640 = vmatprep.subr.mxu0 0.0
    %2641 = vmatpush1.msra.mxu0 0.0
    %2642 = vmatprep.subr.mxu0 0.0
    %2643 = vmatpush1.msra.mxu0 0.0
    %2644 = vmatprep.subr.mxu0 0.0
    %2645 = vmatpush1.msra.mxu0 0.0
    %2646 = vmatprep.subr.mxu0 0.0
    %2647 = vmatpush1.msra.mxu0 0.0
    %2648 = vmatprep.subr.mxu0 0.0
    %2649 = vmatpush1.msra.mxu0 0.0
    %2650 = vmatprep.subr.mxu0 0.0
    %2651 = vmatpush1.msra.mxu0 0.0
    %2652 = vmatprep.subr.mxu0 0.0
    %2653 = vmatpush1.msra.mxu0 0.0
    %2654 = vmatprep.subr.mxu0 0.0
    %2655 = vmatpush1.msra.mxu0 0.0
    %2656 = vmatprep.subr.mxu0 0.0
    %2657 = vmatpush1.msra.mxu0 0.0
    %2658 = vmatprep.subr.mxu0 0.0
    %2659 = vmatpush1.msra.mxu0 0.0
    %2660 = vmatprep.subr.mxu0 0.0
    %2661 = vmatpush1.msra.mxu0 0.0
    %2662 = vmatprep.subr.mxu0 0.0
    %2663 = vmatpush1.msra.mxu0 0.0
    %2664 = vmatprep.subr.mxu0 0.0
    %2665 = vmatpush1.msra.mxu0 0.0
    %2666 = vmatprep.subr.mxu0 0.0
    %2667 = vmatpush1.msra.mxu0 0.0
    %2668 = vmatprep.subr.mxu0 0.0
    %2669 = vmatpush1.msra.mxu0 0.0
    %2670 = vmatprep.subr.mxu0 0.0
    %2671 = vmatpush1.msra.mxu0 0.0
    %2672 = vmatprep.subr.mxu0 0.0
    %2673 = vmatpush1.msra.mxu0 0.0
    %2674 = vmatprep.subr.mxu0 0.0
    %2675 = vmatpush1.msra.mxu0 0.0
    %2676 = vmatprep.subr.mxu0 0.0
    %2677 = vmatpush1.msra.mxu0 0.0
    %2678 = vmatprep.mubr.f32.mxu0 0.0
    %2679 = vmatmul.mubr.f32.gmra.mrb[0].mxu0 %v2612
    %v2680 = vpop.f32.mrb[0].mxu0
    %v2681 = vadd.f32 0.0, %v2680
    %v2682 = vpop.f32.mrb[0].mxu0
    %2683 = vdwg.mxu0
    %v2685 = vsel %vm342, %v1730, 0
    %2687 = vmatprep.subr.mxu0 0.0
    %2688 = vmatpush1.msra.mxu0 %v317
    %2689 = vmatprep.subr.mxu0 0.0
    %2690 = vmatpush1.msra.mxu0 0.0
    %2691 = vmatprep.subr.mxu0 0.0
    %2692 = vmatpush1.msra.mxu0 0.0
    %2693 = vmatprep.subr.mxu0 0.0
    %2694 = vmatpush1.msra.mxu0 0.0
    %2695 = vmatprep.subr.mxu0 0.0
    %2696 = vmatpush1.msra.mxu0 0.0
    %2697 = vmatprep.subr.mxu0 0.0
    %2698 = vmatpush1.msra.mxu0 0.0
    %2699 = vmatprep.subr.mxu0 0.0
    %2700 = vmatpush1.msra.mxu0 0.0
    %2701 = vmatprep.subr.mxu0 0.0
    %2702 = vmatpush1.msra.mxu0 0.0
    %2703 = vmatprep.subr.mxu0 0.0
    %2704 = vmatpush1.msra.mxu0 0.0
    %2705 = vmatprep.subr.mxu0 0.0
    %2706 = vmatpush1.msra.mxu0 0.0
    %2707 = vmatprep.subr.mxu0 0.0
    %2708 = vmatpush1.msra.mxu0 0.0
    %2709 = vmatprep.subr.mxu0 0.0
    %2710 = vmatpush1.msra.mxu0 0.0
    %2711 = vmatprep.subr.mxu0 0.0
    %2712 = vmatpush1.msra.mxu0 0.0
    %2713 = vmatprep.subr.mxu0 0.0
    %2714 = vmatpush1.msra.mxu0 0.0
    %2715 = vmatprep.subr.mxu0 0.0
    %2716 = vmatpush1.msra.mxu0 0.0
    %2717 = vmatprep.subr.mxu0 0.0
    %2718 = vmatpush1.msra.mxu0 0.0
    %2719 = vmatprep.subr.mxu0 0.0
    %2720 = vmatpush1.msra.mxu0 0.0
    %2721 = vmatprep.subr.mxu0 0.0
    %2722 = vmatpush1.msra.mxu0 0.0
    %2723 = vmatprep.subr.mxu0 0.0
    %2724 = vmatpush1.msra.mxu0 0.0
    %2725 = vmatprep.subr.mxu0 0.0
    %2726 = vmatpush1.msra.mxu0 0.0
    %2727 = vmatprep.subr.mxu0 0.0
    %2728 = vmatpush1.msra.mxu0 0.0
    %2729 = vmatprep.subr.mxu0 0.0
    %2730 = vmatpush1.msra.mxu0 0.0
    %2731 = vmatprep.subr.mxu0 0.0
    %2732 = vmatpush1.msra.mxu0 0.0
    %2733 = vmatprep.subr.mxu0 0.0
    %2734 = vmatpush1.msra.mxu0 0.0
    %2735 = vmatprep.subr.mxu0 0.0
    %2736 = vmatpush1.msra.mxu0 0.0
    %2737 = vmatprep.subr.mxu0 0.0
    %2738 = vmatpush1.msra.mxu0 0.0
    %2739 = vmatprep.subr.mxu0 0.0
    %2740 = vmatpush1.msra.mxu0 0.0
    %2741 = vmatprep.subr.mxu0 0.0
    %2742 = vmatpush1.msra.mxu0 0.0
    %2743 = vmatprep.subr.mxu0 0.0
    %2744 = vmatpush1.msra.mxu0 0.0
    %2745 = vmatprep.subr.mxu0 0.0
    %2746 = vmatpush1.msra.mxu0 0.0
    %2747 = vmatprep.subr.mxu0 0.0
    %2748 = vmatpush1.msra.mxu0 0.0
    %2749 = vmatprep.subr.mxu0 0.0
    %2750 = vmatpush1.msra.mxu0 0.0
    %2751 = vmatprep.mubr.f32.mxu0 0.0
    %2752 = vmatmul.mubr.f32.gmra.mrb[0].mxu0 %v2685
    %v2753 = vpop.f32.mrb[0].mxu0
    %v2754 = vadd.f32 0.0, %v2753
    %v2755 = vpop.f32.mrb[0].mxu0
    %2756 = vdwg.mxu0
    %v2758 = vsel %vm342, %v1732, 0
    %2760 = vmatprep.subr.mxu0 0.0
    %2761 = vmatpush1.msra.mxu0 %v319
    %2762 = vmatprep.subr.mxu0 0.0
    %2763 = vmatpush1.msra.mxu0 0.0
    %2764 = vmatprep.subr.mxu0 0.0
    %2765 = vmatpush1.msra.mxu0 0.0
    %2766 = vmatprep.subr.mxu0 0.0
    %2767 = vmatpush1.msra.mxu0 0.0
    %2768 = vmatprep.subr.mxu0 0.0
    %2769 = vmatpush1.msra.mxu0 0.0
    %2770 = vmatprep.subr.mxu0 0.0
    %2771 = vmatpush1.msra.mxu0 0.0
    %2772 = vmatprep.subr.mxu0 0.0
    %2773 = vmatpush1.msra.mxu0 0.0
    %2774 = vmatprep.subr.mxu0 0.0
    %2775 = vmatpush1.msra.mxu0 0.0
    %2776 = vmatprep.subr.mxu0 0.0
    %2777 = vmatpush1.msra.mxu0 0.0
    %2778 = vmatprep.subr.mxu0 0.0
    %2779 = vmatpush1.msra.mxu0 0.0
    %2780 = vmatprep.subr.mxu0 0.0
    %2781 = vmatpush1.msra.mxu0 0.0
    %2782 = vmatprep.subr.mxu0 0.0
    %2783 = vmatpush1.msra.mxu0 0.0
    %2784 = vmatprep.subr.mxu0 0.0
    %2785 = vmatpush1.msra.mxu0 0.0
    %2786 = vmatprep.subr.mxu0 0.0
    %2787 = vmatpush1.msra.mxu0 0.0
    %2788 = vmatprep.subr.mxu0 0.0
    %2789 = vmatpush1.msra.mxu0 0.0
    %2790 = vmatprep.subr.mxu0 0.0
    %2791 = vmatpush1.msra.mxu0 0.0
    %2792 = vmatprep.subr.mxu0 0.0
    %2793 = vmatpush1.msra.mxu0 0.0
    %2794 = vmatprep.subr.mxu0 0.0
    %2795 = vmatpush1.msra.mxu0 0.0
    %2796 = vmatprep.subr.mxu0 0.0
    %2797 = vmatpush1.msra.mxu0 0.0
    %2798 = vmatprep.subr.mxu0 0.0
    %2799 = vmatpush1.msra.mxu0 0.0
    %2800 = vmatprep.subr.mxu0 0.0
    %2801 = vmatpush1.msra.mxu0 0.0
    %2802 = vmatprep.subr.mxu0 0.0
    %2803 = vmatpush1.msra.mxu0 0.0
    %2804 = vmatprep.subr.mxu0 0.0
    %2805 = vmatpush1.msra.mxu0 0.0
    %2806 = vmatprep.subr.mxu0 0.0
    %2807 = vmatpush1.msra.mxu0 0.0
    %2808 = vmatprep.subr.mxu0 0.0
    %2809 = vmatpush1.msra.mxu0 0.0
    %2810 = vmatprep.subr.mxu0 0.0
    %2811 = vmatpush1.msra.mxu0 0.0
    %2812 = vmatprep.subr.mxu0 0.0
    %2813 = vmatpush1.msra.mxu0 0.0
    %2814 = vmatprep.subr.mxu0 0.0
    %2815 = vmatpush1.msra.mxu0 0.0
    %2816 = vmatprep.subr.mxu0 0.0
    %2817 = vmatpush1.msra.mxu0 0.0
    %2818 = vmatprep.subr.mxu0 0.0
    %2819 = vmatpush1.msra.mxu0 0.0
    %2820 = vmatprep.subr.mxu0 0.0
    %2821 = vmatpush1.msra.mxu0 0.0
    %2822 = vmatprep.subr.mxu0 0.0
    %2823 = vmatpush1.msra.mxu0 0.0
    %2824 = vmatprep.mubr.f32.mxu0 0.0
    %2825 = vmatmul.mubr.f32.gmra.mrb[0].mxu0 %v2758
    %v2826 = vpop.f32.mrb[0].mxu0
    %v2827 = vadd.f32 0.0, %v2826
    %v2828 = vpop.f32.mrb[0].mxu0
    %2829 = vdwg.mxu0
    %v2831 = vsel %vm342, %v1734, 0
    %2833 = vmatprep.subr.mxu0 0.0
    %2834 = vmatpush1.msra.mxu0 %v321
    %2835 = vmatprep.subr.mxu0 0.0
    %2836 = vmatpush1.msra.mxu0 0.0
    %2837 = vmatprep.subr.mxu0 0.0
    %2838 = vmatpush1.msra.mxu0 0.0
    %2839 = vmatprep.subr.mxu0 0.0
    %2840 = vmatpush1.msra.mxu0 0.0
    %2841 = vmatprep.subr.mxu0 0.0
    %2842 = vmatpush1.msra.mxu0 0.0
    %2843 = vmatprep.subr.mxu0 0.0
    %2844 = vmatpush1.msra.mxu0 0.0
    %2845 = vmatprep.subr.mxu0 0.0
    %2846 = vmatpush1.msra.mxu0 0.0
    %2847 = vmatprep.subr.mxu0 0.0
    %2848 = vmatpush1.msra.mxu0 0.0
    %2849 = vmatprep.subr.mxu0 0.0
    %2850 = vmatpush1.msra.mxu0 0.0
    %2851 = vmatprep.subr.mxu0 0.0
    %2852 = vmatpush1.msra.mxu0 0.0
    %2853 = vmatprep.subr.mxu0 0.0
    %2854 = vmatpush1.msra.mxu0 0.0
    %2855 = vmatprep.subr.mxu0 0.0
    %2856 = vmatpush1.msra.mxu0 0.0
    %2857 = vmatprep.subr.mxu0 0.0
    %2858 = vmatpush1.msra.mxu0 0.0
    %2859 = vmatprep.subr.mxu0 0.0
    %2860 = vmatpush1.msra.mxu0 0.0
    %2861 = vmatprep.subr.mxu0 0.0
    %2862 = vmatpush1.msra.mxu0 0.0
    %2863 = vmatprep.subr.mxu0 0.0
    %2864 = vmatpush1.msra.mxu0 0.0
    %2865 = vmatprep.subr.mxu0 0.0
    %2866 = vmatpush1.msra.mxu0 0.0
    %2867 = vmatprep.subr.mxu0 0.0
    %2868 = vmatpush1.msra.mxu0 0.0
    %2869 = vmatprep.subr.mxu0 0.0
    %2870 = vmatpush1.msra.mxu0 0.0
    %2871 = vmatprep.subr.mxu0 0.0
    %2872 = vmatpush1.msra.mxu0 0.0
    %2873 = vmatprep.subr.mxu0 0.0
    %2874 = vmatpush1.msra.mxu0 0.0
    %2875 = vmatprep.subr.mxu0 0.0
    %2876 = vmatpush1.msra.mxu0 0.0
    %2877 = vmatprep.subr.mxu0 0.0
    %2878 = vmatpush1.msra.mxu0 0.0
    %2879 = vmatprep.subr.mxu0 0.0
    %2880 = vmatpush1.msra.mxu0 0.0
    %2881 = vmatprep.subr.mxu0 0.0
    %2882 = vmatpush1.msra.mxu0 0.0
    %2883 = vmatprep.subr.mxu0 0.0
    %2884 = vmatpush1.msra.mxu0 0.0
    %2885 = vmatprep.subr.mxu0 0.0
    %2886 = vmatpush1.msra.mxu0 0.0
    %2887 = vmatprep.subr.mxu0 0.0
    %2888 = vmatpush1.msra.mxu0 0.0
    %2889 = vmatprep.subr.mxu0 0.0
    %2890 = vmatpush1.msra.mxu0 0.0
    %2891 = vmatprep.subr.mxu0 0.0
    %2892 = vmatpush1.msra.mxu0 0.0
    %2893 = vmatprep.subr.mxu0 0.0
    %2894 = vmatpush1.msra.mxu0 0.0
    %2895 = vmatprep.subr.mxu0 0.0
    %2896 = vmatpush1.msra.mxu0 0.0
    %2897 = vmatprep.mubr.f32.mxu0 0.0
    %2898 = vmatmul.mubr.f32.gmra.mrb[0].mxu0 %v2831
    %v2899 = vpop.f32.mrb[0].mxu0
    %v2900 = vadd.f32 0.0, %v2899
    %v2901 = vpop.f32.mrb[0].mxu0
    %2902 = vdwg.mxu0
    %2907 = vrot.lane.b32.xlu0 %v2097, 8
    %v2908 = vpop.permute.xlu0 %2907
    %2909 = vrot.lane.b32.xlu0 %v2170, 8
    %v2910 = vpop.permute.xlu0 %2909
    %2911 = vrot.lane.b32.xlu0 %v2243, 8
    %v2912 = vpop.permute.xlu0 %2911
    %2913 = vrot.lane.b32.xlu0 %v2316, 8
    %v2914 = vpop.permute.xlu0 %2913
    %2923 = vrot.lane.b32.xlu0 %v2389, 16
    %v2924 = vpop.permute.xlu0 %2923
    %2925 = vrot.lane.b32.xlu0 %v2462, 16
    %v2926 = vpop.permute.xlu0 %2925
    %2927 = vrot.lane.b32.xlu0 %v2535, 16
    %v2928 = vpop.permute.xlu0 %2927
    %2929 = vrot.lane.b32.xlu0 %v2608, 16
    %v2930 = vpop.permute.xlu0 %2929
    %2939 = vrot.lane.b32.xlu0 %v2681, 24
    %v2940 = vpop.permute.xlu0 %2939
    %2941 = vrot.lane.b32.xlu0 %v2754, 24
    %v2942 = vpop.permute.xlu0 %2941
    %2943 = vrot.lane.b32.xlu0 %v2827, 24
    %v2944 = vpop.permute.xlu0 %2943
    %2945 = vrot.lane.b32.xlu0 %v2900, 24
    %v2946 = vpop.permute.xlu0 %2945
    %v2951 = vsel %vm342, %v1805, %v2908
    %v2952 = vsel %vm342, %v1878, %v2910
    %v2953 = vsel %vm342, %v1951, %v2912
    %v2954 = vsel %vm342, %v2024, %v2914
    %vm2955 = vcmask 130048
    %v2956 = vsel %vm2955, %v2951, %v2924
    %v2957 = vsel %vm2955, %v2952, %v2926
    %v2958 = vsel %vm2955, %v2953, %v2928
    %v2959 = vsel %vm2955, %v2954, %v2930
    %vm2960 = vcmask 195584
    %v2961 = vsel %vm2960, %v2956, %v2940
    %v2962 = vsel %vm2960, %v2957, %v2942
    %v2963 = vsel %vm2960, %v2958, %v2944
    %v2964 = vsel %vm2960, %v2959, %v2946
    %v2965 = vld [vmem:[%s7] sm:$0xff]
    %v2966 = vld [vmem:[%s7 + $0x8] sm:$0xff]
    %v2967 = vld [vmem:[%s7 + $0x10] sm:$0xff]
    %v2968 = vld [vmem:[%s7 + $0x18] sm:$0xff]
    %v2969 = vld [vmem:[%s8] sm:$0x1]
    %v2971 = vlaneseq
    %v2972 = vshrl.u32 %v2971, 7
    %v2973 = vsub.s32 0, %v2972
    %v2974 = vrot.slane %v2969, %v2973
    %v2977 = vsel %vm52, %v2961, 0
    %v2980 = vsel %vm52, %v2962, 0
    %v2983 = vsel %vm52, %v2963, 0
    %v2986 = vsel %vm52, %v2964, 0
    %2988 = vmatprep.subr.mxu0 0.0
    %2989 = vmatpush1.msra.mxu0 %v2965
    %2990 = vmatprep.subr.mxu0 0.0
    %2991 = vmatpush1.msra.mxu0 %v2966
    %2992 = vmatprep.subr.mxu0 0.0
    %2993 = vmatpush1.msra.mxu0 %v2967
    %2994 = vmatprep.subr.mxu0 0.0
    %2995 = vmatpush1.msra.mxu0 %v2968
    %2996 = vmatprep.subr.mxu0 0.0
    %2997 = vmatpush1.msra.mxu0 0.0
    %2998 = vmatprep.subr.mxu0 0.0
    %2999 = vmatpush1.msra.mxu0 0.0
    %3000 = vmatprep.subr.mxu0 0.0
    %3001 = vmatpush1.msra.mxu0 0.0
    %3002 = vmatprep.subr.mxu0 0.0
    %3003 = vmatpush1.msra.mxu0 0.0
    %3004 = vmatprep.subr.mxu0 0.0
    %3005 = vmatpush1.msra.mxu0 0.0
    %3006 = vmatprep.subr.mxu0 0.0
    %3007 = vmatpush1.msra.mxu0 0.0
    %3008 = vmatprep.subr.mxu0 0.0
    %3009 = vmatpush1.msra.mxu0 0.0
    %3010 = vmatprep.subr.mxu0 0.0
    %3011 = vmatpush1.msra.mxu0 0.0
    %3012 = vmatprep.subr.mxu0 0.0
    %3013 = vmatpush1.msra.mxu0 0.0
    %3014 = vmatprep.subr.mxu0 0.0
    %3015 = vmatpush1.msra.mxu0 0.0
    %3016 = vmatprep.subr.mxu0 0.0
    %3017 = vmatpush1.msra.mxu0 0.0
    %3018 = vmatprep.subr.mxu0 0.0
    %3019 = vmatpush1.msra.mxu0 0.0
    %3020 = vmatprep.subr.mxu0 0.0
    %3021 = vmatpush1.msra.mxu0 0.0
    %3022 = vmatprep.subr.mxu0 0.0
    %3023 = vmatpush1.msra.mxu0 0.0
    %3024 = vmatprep.subr.mxu0 0.0
    %3025 = vmatpush1.msra.mxu0 0.0
    %3026 = vmatprep.subr.mxu0 0.0
    %3027 = vmatpush1.msra.mxu0 0.0
    %3028 = vmatprep.subr.mxu0 0.0
    %3029 = vmatpush1.msra.mxu0 0.0
    %3030 = vmatprep.subr.mxu0 0.0
    %3031 = vmatpush1.msra.mxu0 0.0
    %3032 = vmatprep.subr.mxu0 0.0
    %3033 = vmatpush1.msra.mxu0 0.0
    %3034 = vmatprep.subr.mxu0 0.0
    %3035 = vmatpush1.msra.mxu0 0.0
    %3036 = vmatprep.subr.mxu0 0.0
    %3037 = vmatpush1.msra.mxu0 0.0
    %3038 = vmatprep.subr.mxu0 0.0
    %3039 = vmatpush1.msra.mxu0 0.0
    %3040 = vmatprep.subr.mxu0 0.0
    %3041 = vmatpush1.msra.mxu0 0.0
    %3042 = vmatprep.subr.mxu0 0.0
    %3043 = vmatpush1.msra.mxu0 0.0
    %3044 = vmatprep.subr.mxu0 0.0
    %3045 = vmatpush1.msra.mxu0 0.0
    %3046 = vmatprep.subr.mxu0 0.0
    %3047 = vmatpush1.msra.mxu0 0.0
    %3048 = vmatprep.subr.mxu0 0.0
    %3049 = vmatpush1.msra.mxu0 0.0
    %3050 = vmatprep.subr.mxu0 0.0
    %3051 = vmatpush1.msra.mxu0 0.0
    %3052 = vmatprep.mubr.f32.mxu0 0.0
    %3053 = vmatmul.mubr.f32.gmra.mrb[0].mxu0 %v2977
    %v3054 = vpop.f32.mrb[0].mxu0
    %v3055 = vadd.f32 %v2974, %v3054
    %v3056 = vpop.f32.mrb[0].mxu0
    %3057 = vmatprep.mubr.f32.mxu0 0.0
    %3058 = vmatmul.mubr.f32.gmra.mrb[0].mxu0 %v2980
    %v3059 = vpop.f32.mrb[0].mxu0
    %v3060 = vadd.f32 %v2974, %v3059
    %v3061 = vpop.f32.mrb[0].mxu0
    %3062 = vmatprep.mubr.f32.mxu0 0.0
    %3063 = vmatmul.mubr.f32.gmra.mrb[0].mxu0 %v2983
    %v3064 = vpop.f32.mrb[0].mxu0
    %v3065 = vadd.f32 %v2974, %v3064
    %v3066 = vpop.f32.mrb[0].mxu0
    %3067 = vmatprep.mubr.f32.mxu0 0.0
    %3068 = vmatmul.mubr.f32.gmra.mrb[0].mxu0 %v2986
    %v3069 = vpop.f32.mrb[0].mxu0
    %v3070 = vadd.f32 %v2974, %v3069
    %v3071 = vpop.f32.mrb[0].mxu0
    %3072 = vdwg.mxu0
    %3074 = vrot.lane.b32.xlu0 %v3060, 32
    %v3075 = vpop.permute.xlu0 %3074
    %3078 = vrot.lane.b32.xlu0 %v3065, 64
    %v3079 = vpop.permute.xlu0 %3078
    %3082 = vrot.lane.b32.xlu0 %v3070, 96
    %v3083 = vpop.permute.xlu0 %3082
    %v3085 = vsel %vm52, %v3055, %v3075
    %vm3086 = vcmask 523264
    %v3087 = vsel %vm3086, %v3085, %v3079
    %vm3088 = vcmask 785408
    %v3089 = vsel %vm3088, %v3087, %v3083
    %3090 = vst [vmem:[#allocation2] sm:$0xff] %v3089
    // Predicated region
    $region38: #{tpu_custom_call.1} parent=1 // pred_check
      _
    $region39: #{tpu_custom_call.1} parent=1 // pred_check_branch
      %3092 = sbr.rel (0) target = $region41
    $region40: #{tpu_custom_call.1} parent=1 // pred_region
      %s3094 = ssub.s32 128, 128
      %3095 = vsyncadd [#allocation3], %s3094
      %s3097 = sshll.u32 [#allocation2], 4
      %s3098 = int_to_ptr.vmem [resolvable:$true] %s3097
      %3100 = dma.vmem_to_hbm [thread:$0]  %s3098, 128, %s9, [#allocation3]
    $region41: #{tpu_custom_call.1} parent=1 // pred_fallthru
      _
    // Predicated region
    $region42: #{tpu_custom_call.1} parent=1 // pred_check
      _
    $region43: #{tpu_custom_call.1} parent=1 // pred_check_branch
      %3102 = sbr.rel (0) target = $region45
    $region44: #{tpu_custom_call.1} parent=1 // pred_region
      %3103 = dma.done [#allocation3], 128
    $region45: #{tpu_custom_call.1} parent=1 // pred_fallthru
      _
    %3104 = vsyncpa [#allocation3], 1

</llo_original>
